<compile_context>
chip_gen: v7x
topology: tpu7x:2x2x1
jax: 0.10.0
libtpu: 0.0.40
codegen_flags: <defaults>
</compile_context>

<pallas_src>
import jax
import jax.numpy as jnp
from jax import lax
from jax.experimental import pallas as pl
from jax.experimental.pallas import tpu as pltpu


def _round_up(x, m):
    return ((x + m - 1) // m) * m


def _vmem_limit_bytes():
    cap = 64 * 1024 * 1024                      # conservative fallback (v7x)
    try:
        info = pltpu.get_tpu_info()
        cap = int(getattr(info, "vmem_capacity_bytes", cap)) or cap
    except Exception:
        pass
    return int(min(cap * 3 // 4, 96 * 1024 * 1024))


def _build_kernel(H, W, So):
    """Static geometry + kernel closure for one (batch, strip) grid step."""
    H1, W1 = H - 1, W - 1                 # spatial size after the 2x2/s1 pool
    Ho = (H1 - 3) // 3 + 1                # final output rows
    Wo = (W1 - 3) // 3 + 1                # final output cols
    Wp = _round_up(W + 2, 8)              # flat row stride (8-aligned)
    L = 7                                 # lead slack -> store base Wp+8 aligned
    R3 = 3 * So                           # conv3 rows per strip (local row 0 == global 3*o0)
    Rp = R3 + 2                           # pool1 rows per strip  (global 3*o0-1 ..)
    R2 = R3 + 3                           # conv2 rows per strip  (global 3*o0-1 ..)
    R1 = R3 + 5                           # conv1 rows per strip  (global 3*o0-2 ..)
    Rin = R1 + 2                          # padded input rows per strip
    M1 = R1 * Wp
    M2 = R2 * Wp + 8                      # +8 flat slack rows for the shifted pool reads
    Mp = Rp * Wp
    M3 = R3 * Wp
    NIn = (R1 + 2) * Wp + 8               # strip input plane (flat, host zero-padded)
    N2 = _round_up(L + (R1 + 1) * Wp + 8 + 2, 8)   # conv1-out scratch plane
    N3 = _round_up(L + (Rp + 1) * Wp + 2, 8)       # pool1-out scratch plane
    B2 = Wp + 8                           # interior store base (== L + Wp + 1), 8-aligned

    def conv3x3(load, M, w_ref, b_ref):
        # 3x3 conv over a zero-padded flat plane: tap (dy,dx) is the contiguous
        # slice at row offset dy*Wp+dx; 9 chained MXU matmuls, one f32 accumulator.
        acc = None
        for dy in range(3):
            for dx in range(3):
                t = jnp.dot(load(dy * Wp + dx, M), w_ref[dy, dx],
                            preferred_element_type=jnp.float32)
                acc = t if acc is None else acc + t
        return acc + b_ref[...]

    def kernel(xs_ref, w1_ref, b1_ref, w2_ref, b2_ref, w3_ref, b3_ref,
               out_ref, p2_ref, p3_ref):
        base3 = 3 * So * pl.program_id(1)          # global conv3-row of local row 0

        def stage_mask(R, lo_row, hi_row, width):
            # In-kernel validity mask (R*Wp, 1): local rows in [lo_row, hi_row]
            # and flat column < width.  Sublane iotas only (no host arrays).
            q = lax.broadcasted_iota(jnp.int32, (R * Wp, 1), 0)
            row_ok = ((q >= lo_row * Wp) & (q < (hi_row + 1) * Wp))
            row_ok = row_ok.astype(jnp.float32)
            c = lax.broadcasted_iota(jnp.int32, (R, Wp, 1), 1)
            col_ok = (c < width).astype(jnp.float32).reshape(R * Wp, 1)
            return row_ok * col_ok

        # ---- conv_1 : 3 -> 6  (local row 0 == global base3-2) ---------------
        v1 = conv3x3(lambda off, M: xs_ref[0, off:off + M, :], M1,
                     w1_ref, b1_ref)
        m1 = stage_mask(R1, 2 - base3, H + 1 - base3, W)
        p2_ref[0:B2, :] = jnp.zeros((B2, 6), jnp.bfloat16)
        p2_ref[B2:B2 + M1, :] = (v1 * m1).astype(jnp.bfloat16)
        p2_ref[B2 + M1:N2, :] = jnp.zeros((N2 - (B2 + M1), 6), jnp.bfloat16)

        # ---- conv_2 : 6 -> 64  (local row 0 == global base3-1) --------------
        v2 = conv3x3(lambda off, M: p2_ref[L + Wp + off:L + Wp + off + M, :],
                     M2, w2_ref, b2_ref)

        # ---- max_pool2d(2, stride=1): max of 4 shifted slices ----------------
        v3 = jnp.maximum(jnp.maximum(v2[0:Mp], v2[1:Mp + 1]),
                         jnp.maximum(v2[Wp:Wp + Mp], v2[Wp + 1:Wp + 1 + Mp]))
        m3 = stage_mask(Rp, 1 - base3, H - 1 - base3, W - 1)
        p3_ref[0:B2, :] = jnp.zeros((B2, 64), jnp.bfloat16)
        p3_ref[B2:B2 + Mp, :] = (v3 * m3).astype(jnp.bfloat16)
        p3_ref[B2 + Mp:N3, :] = jnp.zeros((N3 - (B2 + Mp), 64), jnp.bfloat16)

        # ---- conv_3 : 64 -> 64 + relu (local row 0 == global base3) ----------
        v4 = conv3x3(lambda off, M: p3_ref[L + Wp + off:L + Wp + off + M, :],
                     M3, w3_ref, b3_ref)
        v5 = jnp.maximum(v4, 0.0)

        # ---- max_pool2d(3, stride=3): vertical 3-max once, then per-row ------
        Mm = M3 - 2 * Wp
        vmax = jnp.maximum(jnp.maximum(v5[0:Mm], v5[Wp:Wp + Mm]),
                           v5[2 * Wp:2 * Wp + Mm])
        for oi in range(So):                     # So <= 8 per strip
            row = vmax[3 * oi * Wp:3 * oi * Wp + 3 * Wo]       # (3*Wo, 64)
            r3 = row.reshape(Wo, 3, 64)
            out_ref[0, oi] = jnp.maximum(jnp.maximum(r3[:, 0, :], r3[:, 1, :]),
                                         r3[:, 2, :])

    dims = dict(H1=H1, W1=W1, Ho=Ho, Wo=Wo, Wp=Wp, Rin=Rin, NIn=NIn,
                N2=N2, N3=N3)
    return kernel, dims


def model_forward(x_nchw, params, *, so_target=8):
    """Forward pass of the PyTorch Model via a strip-tiled Pallas kernel."""
    w1, b1, w2, b2, w3, b3 = params            # HWIO (already flipped) convs, f32
    x = jnp.transpose(x_nchw, (0, 2, 3, 1)).astype(jnp.float32)   # NHWC
    N, H, W, C = x.shape

    Ho = ((H - 1) - 3) // 3 + 1
    So = max(1, min(Ho, so_target))            # final output rows per strip
    S = -(-Ho // So)                           # strips per image
    Ho_pad = S * So

    kernel, d = _build_kernel(H, W, So)
    Wp, Rin, NIn = d["Wp"], d["Rin"], d["NIn"]
    N2, N3, Wo = d["N2"], d["N3"], d["Wo"]

    # Host prep: zero-padded flat image (row stride Wp), then per-strip windows
    # (conv halos duplicated; the 3-channel input is tiny so this is cheap).
    Hp = 3 * Ho_pad + 7
    xp = jnp.zeros((N, Hp, Wp, C), jnp.float32)
    xp = xp.at[:, 3:3 + H, 1:1 + W, :].set(x)
    row_idx = (3 * So * jnp.arange(S))[:, None] + jnp.arange(Rin)[None, :]
    xs = xp[:, row_idx]                                   # (N, S, Rin, Wp, C)
    xs = xs.reshape(N, S, Rin * Wp, C)
    xs = jnp.pad(xs, ((0, 0), (0, 0), (0, NIn - Rin * Wp), (0, 0)))
    xs = xs.reshape(N * S, NIn, C).astype(jnp.bfloat16)   # bf16 MXU operands

    w1b, w2b, w3b = (w.astype(jnp.bfloat16) for w in (w1, w2, w3))
    b1f, b2f, b3f = (b.reshape(1, -1).astype(jnp.float32) for b in (b1, b2, b3))

    out = pl.pallas_call(
        kernel,
        out_shape=jax.ShapeDtypeStruct((N * S, So, Wo, 64), jnp.float32),
        grid_spec=pltpu.PrefetchScalarGridSpec(
            num_scalar_prefetch=0,
            grid=(N, S),
            in_specs=[
                pl.BlockSpec((1, NIn, C), lambda b, s: (b * S + s, 0, 0)),
                pl.BlockSpec((3, 3, 3, 6), lambda b, s: (0, 0, 0, 0)),
                pl.BlockSpec((1, 6), lambda b, s: (0, 0)),
                pl.BlockSpec((3, 3, 6, 64), lambda b, s: (0, 0, 0, 0)),
                pl.BlockSpec((1, 64), lambda b, s: (0, 0)),
                pl.BlockSpec((3, 3, 64, 64), lambda b, s: (0, 0, 0, 0)),
                pl.BlockSpec((1, 64), lambda b, s: (0, 0)),
            ],
            out_specs=pl.BlockSpec((1, So, Wo, 64),
                                   lambda b, s: (b * S + s, 0, 0, 0)),
            scratch_shapes=[
                pltpu.VMEM((N2, 6), jnp.bfloat16),    # padded flat conv1-out plane
                pltpu.VMEM((N3, 64), jnp.bfloat16),   # padded flat pool1-out plane
            ],
        ),
        compiler_params=pltpu.CompilerParams(
            dimension_semantics=("parallel", "parallel"),
            vmem_limit_bytes=_vmem_limit_bytes()),
    )(xs, w1b, b1f, w2b, b2f, w3b, b3f)

    out = out.reshape(N, Ho_pad, Wo, 64)[:, :Ho]          # drop padded strip tail
    return jnp.transpose(out, (0, 3, 1, 2))               # back to NCHW


def to_hwio_flipped(w_pt):
    # PyTorch ConvTranspose2d weight (Cin, Cout, kH, kW) -> equivalent regular
    # conv weight in HWIO, spatially flipped.
    return jnp.transpose(w_pt[:, :, ::-1, ::-1], (2, 3, 0, 1))


def ref_forward(x_nchw, params):
    """Pure-JAX (XLA, f32) reference matching the PyTorch module."""
    w1, b1, w2, b2, w3, b3 = params
    x = jnp.transpose(x_nchw, (0, 2, 3, 1)).astype(jnp.float32)

    def conv(x, w, b):
        y = lax.conv_general_dilated(
            x, w, window_strides=(1, 1), padding=((1, 1), (1, 1)),
            dimension_numbers=('NHWC', 'HWIO', 'NHWC'))
        return y + b.reshape(1, 1, 1, -1)

    v1 = conv(x, w1, b1)
    v2 = conv(v1, w2, b2)
    v3 = lax.reduce_window(v2, -jnp.inf, lax.max,
                           (1, 2, 2, 1), (1, 1, 1, 1), 'VALID')
    v4 = conv(v3, w3, b3)
    v5 = jnp.maximum(v4, 0.0)
    v6 = lax.reduce_window(v5, -jnp.inf, lax.max,
                           (1, 3, 3, 1), (1, 3, 3, 1), 'VALID')
    return jnp.transpose(v6, (0, 3, 1, 2))


if __name__ == "__main__":
    key = jax.random.PRNGKey(0)
    ks = jax.random.split(key, 7)
    N, H, W = 2, 16, 16
    # input in PyTorch NCHW convention (small version of (1, 3, 224, 224))
    x = jax.random.normal(ks[0], (N, 3, H, W), jnp.float32)

    # deterministic synthetic parameters (PyTorch ConvTranspose2d weight layout)
    w1_pt = jax.random.normal(ks[1], (3, 6, 3, 3), jnp.float32) * 0.1
    b1 = jax.random.normal(ks[2], (1, 6), jnp.float32) * 0.1
    w2_pt = jax.random.normal(ks[3], (6, 64, 3, 3), jnp.float32) * 0.1
    b2 = jax.random.normal(ks[4], (1, 64), jnp.float32) * 0.1
    w3_pt = jax.random.normal(ks[5], (64, 64, 3, 3), jnp.float32) * 0.05
    b3 = jax.random.normal(ks[6], (1, 64), jnp.float32) * 0.1

    params = (to_hwio_flipped(w1_pt), b1,
              to_hwio_flipped(w2_pt), b2,
              to_hwio_flipped(w3_pt), b3)

    # so_target=2 -> 3 strips per image at this size, exercising the strip axis
    out = jax.block_until_ready(model_forward(x, params, so_target=2))
    ref = jax.block_until_ready(ref_forward(x, params))

    assert out.shape == (N, 64, 5, 5), out.shape
    err = float(jnp.max(jnp.abs(out - ref)))
    # bf16 matmul operands / bf16 activation planes vs. the f32 reference
    if not jnp.allclose(out, ref, atol=6e-2, rtol=5e-2):
        raise AssertionError(f"mismatch, max abs err {err}")
    print("KERNEL_OK")
</pallas_src>

<mosaic_0001>
module attributes {stable_mosaic.version = 11 : i64} {
  func.func @kernel(%arg0: i32, %arg1: i32, %arg2: memref<1x320x3xbf16, #tpu.memory_space<vmem>>, %arg3: memref<3x3x3x6xbf16, #tpu.memory_space<vmem>>, %arg4: memref<1x6xf32, #tpu.memory_space<vmem>>, %arg5: memref<3x3x6x64xbf16, #tpu.memory_space<vmem>>, %arg6: memref<1x64xf32, #tpu.memory_space<vmem>>, %arg7: memref<3x3x64x64xbf16, #tpu.memory_space<vmem>>, %arg8: memref<1x64xf32, #tpu.memory_space<vmem>>, %arg9: memref<1x2x5x64xf32, #tpu.memory_space<vmem>>, %arg10: memref<312x6xbf16, #tpu.memory_space<vmem>>, %arg11: memref<232x64xbf16, #tpu.memory_space<vmem>>) attributes {dimension_semantics = [#tpu.dimension_semantics<parallel>, #tpu.dimension_semantics<parallel>], iteration_bounds = array<i64: 2, 3>, scalar_prefetch = 0 : i64, scratch_operands = 2 : i64, tpu.core_type = #tpu.core_type<tc>, window_params = [{transform_indices = @transform_0, window_bounds = array<i64: 1, 320, 3>}, {pipeline_mode = #tpu.pipeline_mode<synchronous>, transform_indices = @transform_1, window_bounds = array<i64: 3, 3, 3, 6>}, {pipeline_mode = #tpu.pipeline_mode<synchronous>, transform_indices = @transform_2, window_bounds = array<i64: 1, 6>}, {pipeline_mode = #tpu.pipeline_mode<synchronous>, transform_indices = @transform_3, window_bounds = array<i64: 3, 3, 6, 64>}, {pipeline_mode = #tpu.pipeline_mode<synchronous>, transform_indices = @transform_4, window_bounds = array<i64: 1, 64>}, {pipeline_mode = #tpu.pipeline_mode<synchronous>, transform_indices = @transform_5, window_bounds = array<i64: 3, 3, 64, 64>}, {pipeline_mode = #tpu.pipeline_mode<synchronous>, transform_indices = @transform_6, window_bounds = array<i64: 1, 64>}, {transform_indices = @transform_7, window_bounds = array<i64: 1, 2, 5, 64>}]} {
    %c6_i32 = arith.constant 6 : i32
    %0 = arith.muli %c6_i32, %arg1 : i32
    %c0 = arith.constant 0 : index
    %c0_0 = arith.constant 0 : index
    %c0_1 = arith.constant 0 : index
    %1 = vector.load %arg2[%c0, %c0_0, %c0_1] : memref<1x320x3xbf16, #tpu.memory_space<vmem>>, vector<1x264x3xbf16>
    %2 = vector.shape_cast %1 : vector<1x264x3xbf16> to vector<264x3xbf16>
    %c0_2 = arith.constant 0 : index
    %c0_3 = arith.constant 0 : index
    %c0_4 = arith.constant 0 : index
    %c0_5 = arith.constant 0 : index
    %3 = vector.load %arg3[%c0_2, %c0_3, %c0_4, %c0_5] : memref<3x3x3x6xbf16, #tpu.memory_space<vmem>>, vector<1x1x3x6xbf16>
    %4 = vector.shape_cast %3 : vector<1x1x3x6xbf16> to vector<3x6xbf16>
    %cst = arith.constant dense<0.000000e+00> : vector<264x6xf32>
    %5 = tpu.matmul %2, %4, %cst {dimension_numbers = #tpu.dot_dimension_numbers<[1], [0], [0], [1], [0, 0, 1, 1], [], []>} : vector<264x3xbf16>, vector<3x6xbf16>, vector<264x6xf32> -> vector<264x6xf32>
    %c0_6 = arith.constant 0 : index
    %c1 = arith.constant 1 : index
    %c0_7 = arith.constant 0 : index
    %6 = vector.load %arg2[%c0_6, %c1, %c0_7] : memref<1x320x3xbf16, #tpu.memory_space<vmem>>, vector<1x264x3xbf16>
    %7 = vector.shape_cast %6 : vector<1x264x3xbf16> to vector<264x3xbf16>
    %c0_8 = arith.constant 0 : index
    %c1_9 = arith.constant 1 : index
    %c0_10 = arith.constant 0 : index
    %c0_11 = arith.constant 0 : index
    %8 = vector.load %arg3[%c0_8, %c1_9, %c0_10, %c0_11] : memref<3x3x3x6xbf16, #tpu.memory_space<vmem>>, vector<1x1x3x6xbf16>
    %9 = vector.shape_cast %8 : vector<1x1x3x6xbf16> to vector<3x6xbf16>
    %cst_12 = arith.constant dense<0.000000e+00> : vector<264x6xf32>
    %10 = tpu.matmul %7, %9, %cst_12 {dimension_numbers = #tpu.dot_dimension_numbers<[1], [0], [0], [1], [0, 0, 1, 1], [], []>} : vector<264x3xbf16>, vector<3x6xbf16>, vector<264x6xf32> -> vector<264x6xf32>
    %11 = arith.addf %5, %10 : vector<264x6xf32>
    %c0_13 = arith.constant 0 : index
    %c2 = arith.constant 2 : index
    %c0_14 = arith.constant 0 : index
    %12 = vector.load %arg2[%c0_13, %c2, %c0_14] : memref<1x320x3xbf16, #tpu.memory_space<vmem>>, vector<1x264x3xbf16>
    %13 = vector.shape_cast %12 : vector<1x264x3xbf16> to vector<264x3xbf16>
    %c0_15 = arith.constant 0 : index
    %c2_16 = arith.constant 2 : index
    %c0_17 = arith.constant 0 : index
    %c0_18 = arith.constant 0 : index
    %14 = vector.load %arg3[%c0_15, %c2_16, %c0_17, %c0_18] : memref<3x3x3x6xbf16, #tpu.memory_space<vmem>>, vector<1x1x3x6xbf16>
    %15 = vector.shape_cast %14 : vector<1x1x3x6xbf16> to vector<3x6xbf16>
    %cst_19 = arith.constant dense<0.000000e+00> : vector<264x6xf32>
    %16 = tpu.matmul %13, %15, %cst_19 {dimension_numbers = #tpu.dot_dimension_numbers<[1], [0], [0], [1], [0, 0, 1, 1], [], []>} : vector<264x3xbf16>, vector<3x6xbf16>, vector<264x6xf32> -> vector<264x6xf32>
    %17 = arith.addf %11, %16 : vector<264x6xf32>
    %c0_20 = arith.constant 0 : index
    %c24 = arith.constant 24 : index
    %c0_21 = arith.constant 0 : index
    %18 = vector.load %arg2[%c0_20, %c24, %c0_21] : memref<1x320x3xbf16, #tpu.memory_space<vmem>>, vector<1x264x3xbf16>
    %19 = vector.shape_cast %18 : vector<1x264x3xbf16> to vector<264x3xbf16>
    %c1_22 = arith.constant 1 : index
    %c0_23 = arith.constant 0 : index
    %c0_24 = arith.constant 0 : index
    %c0_25 = arith.constant 0 : index
    %20 = vector.load %arg3[%c1_22, %c0_23, %c0_24, %c0_25] : memref<3x3x3x6xbf16, #tpu.memory_space<vmem>>, vector<1x1x3x6xbf16>
    %21 = vector.shape_cast %20 : vector<1x1x3x6xbf16> to vector<3x6xbf16>
    %cst_26 = arith.constant dense<0.000000e+00> : vector<264x6xf32>
    %22 = tpu.matmul %19, %21, %cst_26 {dimension_numbers = #tpu.dot_dimension_numbers<[1], [0], [0], [1], [0, 0, 1, 1], [], []>} : vector<264x3xbf16>, vector<3x6xbf16>, vector<264x6xf32> -> vector<264x6xf32>
    %23 = arith.addf %17, %22 : vector<264x6xf32>
    %c0_27 = arith.constant 0 : index
    %c25 = arith.constant 25 : index
    %c0_28 = arith.constant 0 : index
    %24 = vector.load %arg2[%c0_27, %c25, %c0_28] : memref<1x320x3xbf16, #tpu.memory_space<vmem>>, vector<1x264x3xbf16>
    %25 = vector.shape_cast %24 : vector<1x264x3xbf16> to vector<264x3xbf16>
    %c1_29 = arith.constant 1 : index
    %c1_30 = arith.constant 1 : index
    %c0_31 = arith.constant 0 : index
    %c0_32 = arith.constant 0 : index
    %26 = vector.load %arg3[%c1_29, %c1_30, %c0_31, %c0_32] : memref<3x3x3x6xbf16, #tpu.memory_space<vmem>>, vector<1x1x3x6xbf16>
    %27 = vector.shape_cast %26 : vector<1x1x3x6xbf16> to vector<3x6xbf16>
    %cst_33 = arith.constant dense<0.000000e+00> : vector<264x6xf32>
    %28 = tpu.matmul %25, %27, %cst_33 {dimension_numbers = #tpu.dot_dimension_numbers<[1], [0], [0], [1], [0, 0, 1, 1], [], []>} : vector<264x3xbf16>, vector<3x6xbf16>, vector<264x6xf32> -> vector<264x6xf32>
    %29 = arith.addf %23, %28 : vector<264x6xf32>
    %c0_34 = arith.constant 0 : index
    %c26 = arith.constant 26 : index
    %c0_35 = arith.constant 0 : index
    %30 = vector.load %arg2[%c0_34, %c26, %c0_35] : memref<1x320x3xbf16, #tpu.memory_space<vmem>>, vector<1x264x3xbf16>
    %31 = vector.shape_cast %30 : vector<1x264x3xbf16> to vector<264x3xbf16>
    %c1_36 = arith.constant 1 : index
    %c2_37 = arith.constant 2 : index
    %c0_38 = arith.constant 0 : index
    %c0_39 = arith.constant 0 : index
    %32 = vector.load %arg3[%c1_36, %c2_37, %c0_38, %c0_39] : memref<3x3x3x6xbf16, #tpu.memory_space<vmem>>, vector<1x1x3x6xbf16>
    %33 = vector.shape_cast %32 : vector<1x1x3x6xbf16> to vector<3x6xbf16>
    %cst_40 = arith.constant dense<0.000000e+00> : vector<264x6xf32>
    %34 = tpu.matmul %31, %33, %cst_40 {dimension_numbers = #tpu.dot_dimension_numbers<[1], [0], [0], [1], [0, 0, 1, 1], [], []>} : vector<264x3xbf16>, vector<3x6xbf16>, vector<264x6xf32> -> vector<264x6xf32>
    %35 = arith.addf %29, %34 : vector<264x6xf32>
    %c0_41 = arith.constant 0 : index
    %c48 = arith.constant 48 : index
    %c0_42 = arith.constant 0 : index
    %36 = vector.load %arg2[%c0_41, %c48, %c0_42] : memref<1x320x3xbf16, #tpu.memory_space<vmem>>, vector<1x264x3xbf16>
    %37 = vector.shape_cast %36 : vector<1x264x3xbf16> to vector<264x3xbf16>
    %c2_43 = arith.constant 2 : index
    %c0_44 = arith.constant 0 : index
    %c0_45 = arith.constant 0 : index
    %c0_46 = arith.constant 0 : index
    %38 = vector.load %arg3[%c2_43, %c0_44, %c0_45, %c0_46] : memref<3x3x3x6xbf16, #tpu.memory_space<vmem>>, vector<1x1x3x6xbf16>
    %39 = vector.shape_cast %38 : vector<1x1x3x6xbf16> to vector<3x6xbf16>
    %cst_47 = arith.constant dense<0.000000e+00> : vector<264x6xf32>
    %40 = tpu.matmul %37, %39, %cst_47 {dimension_numbers = #tpu.dot_dimension_numbers<[1], [0], [0], [1], [0, 0, 1, 1], [], []>} : vector<264x3xbf16>, vector<3x6xbf16>, vector<264x6xf32> -> vector<264x6xf32>
    %41 = arith.addf %35, %40 : vector<264x6xf32>
    %c0_48 = arith.constant 0 : index
    %c49 = arith.constant 49 : index
    %c0_49 = arith.constant 0 : index
    %42 = vector.load %arg2[%c0_48, %c49, %c0_49] : memref<1x320x3xbf16, #tpu.memory_space<vmem>>, vector<1x264x3xbf16>
    %43 = vector.shape_cast %42 : vector<1x264x3xbf16> to vector<264x3xbf16>
    %c2_50 = arith.constant 2 : index
    %c1_51 = arith.constant 1 : index
    %c0_52 = arith.constant 0 : index
    %c0_53 = arith.constant 0 : index
    %44 = vector.load %arg3[%c2_50, %c1_51, %c0_52, %c0_53] : memref<3x3x3x6xbf16, #tpu.memory_space<vmem>>, vector<1x1x3x6xbf16>
    %45 = vector.shape_cast %44 : vector<1x1x3x6xbf16> to vector<3x6xbf16>
    %cst_54 = arith.constant dense<0.000000e+00> : vector<264x6xf32>
    %46 = tpu.matmul %43, %45, %cst_54 {dimension_numbers = #tpu.dot_dimension_numbers<[1], [0], [0], [1], [0, 0, 1, 1], [], []>} : vector<264x3xbf16>, vector<3x6xbf16>, vector<264x6xf32> -> vector<264x6xf32>
    %47 = arith.addf %41, %46 : vector<264x6xf32>
    %c0_55 = arith.constant 0 : index
    %c50 = arith.constant 50 : index
    %c0_56 = arith.constant 0 : index
    %48 = vector.load %arg2[%c0_55, %c50, %c0_56] : memref<1x320x3xbf16, #tpu.memory_space<vmem>>, vector<1x264x3xbf16>
    %49 = vector.shape_cast %48 : vector<1x264x3xbf16> to vector<264x3xbf16>
    %c2_57 = arith.constant 2 : index
    %c2_58 = arith.constant 2 : index
    %c0_59 = arith.constant 0 : index
    %c0_60 = arith.constant 0 : index
    %50 = vector.load %arg3[%c2_57, %c2_58, %c0_59, %c0_60] : memref<3x3x3x6xbf16, #tpu.memory_space<vmem>>, vector<1x1x3x6xbf16>
    %51 = vector.shape_cast %50 : vector<1x1x3x6xbf16> to vector<3x6xbf16>
    %cst_61 = arith.constant dense<0.000000e+00> : vector<264x6xf32>
    %52 = tpu.matmul %49, %51, %cst_61 {dimension_numbers = #tpu.dot_dimension_numbers<[1], [0], [0], [1], [0, 0, 1, 1], [], []>} : vector<264x3xbf16>, vector<3x6xbf16>, vector<264x6xf32> -> vector<264x6xf32>
    %53 = arith.addf %47, %52 : vector<264x6xf32>
    %c0_62 = arith.constant 0 : index
    %c0_63 = arith.constant 0 : index
    %54 = vector.load %arg4[%c0_62, %c0_63] : memref<1x6xf32, #tpu.memory_space<vmem>>, vector<1x6xf32>
    %55 = vector.broadcast %54 : vector<1x6xf32> to vector<264x6xf32>
    %56 = arith.addf %53, %55 : vector<264x6xf32>
    %c2_i32 = arith.constant 2 : i32
    %57 = arith.subi %c2_i32, %0 : i32
    %c17_i32 = arith.constant 17 : i32
    %58 = arith.subi %c17_i32, %0 : i32
    %59 = tpu.iota {dimensions = array<i32: 0>} : vector<264x1xi32>
    %c24_i32 = arith.constant 24 : i32
    %60 = arith.muli %57, %c24_i32 : i32
    %61 = vector.broadcast %60 : i32 to vector<264x1xi32>
    %62 = arith.cmpi sge, %59, %61 : vector<264x1xi32>
    %c1_i32 = arith.constant 1 : i32
    %63 = arith.addi %58, %c1_i32 : i32
    %c24_i32_64 = arith.constant 24 : i32
    %64 = arith.muli %63, %c24_i32_64 : i32
    %65 = vector.broadcast %64 : i32 to vector<264x1xi32>
    %66 = arith.cmpi slt, %59, %65 : vector<264x1xi32>
    %67 = arith.andi %62, %66 : vector<264x1xi1>
    %68 = arith.extui %67 : vector<264x1xi1> to vector<264x1xi32>
    %69 = arith.sitofp %68 : vector<264x1xi32> to vector<264x1xf32>
    %70 = tpu.iota {dimensions = array<i32: 1>} : vector<11x24x1xi32>
    %c16_i32 = arith.constant 16 : i32
    %71 = vector.broadcast %c16_i32 : i32 to vector<11x24x1xi32>
    %72 = arith.cmpi slt, %70, %71 : vector<11x24x1xi32>
    %73 = arith.extui %72 : vector<11x24x1xi1> to vector<11x24x1xi32>
    %74 = arith.sitofp %73 : vector<11x24x1xi32> to vector<11x24x1xf32>
    %75 = vector.shape_cast %74 : vector<11x24x1xf32> to vector<264x1xf32>
    %76 = arith.mulf %69, %75 : vector<264x1xf32>
    %cst_65 = arith.constant 0.000000e+00 : bf16
    %77 = vector.broadcast %cst_65 : bf16 to vector<32x6xbf16>
    %c0_66 = arith.constant 0 : index
    %c0_67 = arith.constant 0 : index
    %78 = vector.load %arg10[%c0_66, %c0_67] : memref<312x6xbf16, #tpu.memory_space<vmem>>, vector<32x6xbf16>
    tpu.vector_store %arg10[%c0_66, %c0_67], %77 {strides = array<i32>} : memref<312x6xbf16, #tpu.memory_space<vmem>>, vector<32x6xbf16>,
    %79 = vector.broadcast %76 : vector<264x1xf32> to vector<264x6xf32>
    %80 = arith.mulf %56, %79 : vector<264x6xf32>
    %81 = arith.truncf %80 : vector<264x6xf32> to vector<264x6xbf16>
    %c32 = arith.constant 32 : index
    %c0_68 = arith.constant 0 : index
    %82 = vector.load %arg10[%c32, %c0_68] : memref<312x6xbf16, #tpu.memory_space<vmem>>, vector<264x6xbf16>
    tpu.vector_store %arg10[%c32, %c0_68], %81 {strides = array<i32>} : memref<312x6xbf16, #tpu.memory_space<vmem>>, vector<264x6xbf16>,
    %cst_69 = arith.constant 0.000000e+00 : bf16
    %83 = vector.broadcast %cst_69 : bf16 to vector<16x6xbf16>
    %c296 = arith.constant 296 : index
    %c0_70 = arith.constant 0 : index
    %84 = vector.load %arg10[%c296, %c0_70] : memref<312x6xbf16, #tpu.memory_space<vmem>>, vector<16x6xbf16>
    tpu.vector_store %arg10[%c296, %c0_70], %83 {strides = array<i32>} : memref<312x6xbf16, #tpu.memory_space<vmem>>, vector<16x6xbf16>,
    %c31 = arith.constant 31 : index
    %c0_71 = arith.constant 0 : index
    %85 = vector.load %arg10[%c31, %c0_71] : memref<312x6xbf16, #tpu.memory_space<vmem>>, vector<224x6xbf16>
    %c0_72 = arith.constant 0 : index
    %c0_73 = arith.constant 0 : index
    %c0_74 = arith.constant 0 : index
    %c0_75 = arith.constant 0 : index
    %86 = vector.load %arg5[%c0_72, %c0_73, %c0_74, %c0_75] : memref<3x3x6x64xbf16, #tpu.memory_space<vmem>>, vector<1x1x6x64xbf16>
    %87 = vector.shape_cast %86 : vector<1x1x6x64xbf16> to vector<6x64xbf16>
    %cst_76 = arith.constant dense<0.000000e+00> : vector<224x64xf32>
    %88 = tpu.matmul %85, %87, %cst_76 {dimension_numbers = #tpu.dot_dimension_numbers<[1], [0], [0], [1], [0, 0, 1, 1], [], []>} : vector<224x6xbf16>, vector<6x64xbf16>, vector<224x64xf32> -> vector<224x64xf32>
    %c32_77 = arith.constant 32 : index
    %c0_78 = arith.constant 0 : index
    %89 = vector.load %arg10[%c32_77, %c0_78] : memref<312x6xbf16, #tpu.memory_space<vmem>>, vector<224x6xbf16>
    %c0_79 = arith.constant 0 : index
    %c1_80 = arith.constant 1 : index
    %c0_81 = arith.constant 0 : index
    %c0_82 = arith.constant 0 : index
    %90 = vector.load %arg5[%c0_79, %c1_80, %c0_81, %c0_82] : memref<3x3x6x64xbf16, #tpu.memory_space<vmem>>, vector<1x1x6x64xbf16>
    %91 = vector.shape_cast %90 : vector<1x1x6x64xbf16> to vector<6x64xbf16>
    %cst_83 = arith.constant dense<0.000000e+00> : vector<224x64xf32>
    %92 = tpu.matmul %89, %91, %cst_83 {dimension_numbers = #tpu.dot_dimension_numbers<[1], [0], [0], [1], [0, 0, 1, 1], [], []>} : vector<224x6xbf16>, vector<6x64xbf16>, vector<224x64xf32> -> vector<224x64xf32>
    %93 = arith.addf %88, %92 : vector<224x64xf32>
    %c33 = arith.constant 33 : index
    %c0_84 = arith.constant 0 : index
    %94 = vector.load %arg10[%c33, %c0_84] : memref<312x6xbf16, #tpu.memory_space<vmem>>, vector<224x6xbf16>
    %c0_85 = arith.constant 0 : index
    %c2_86 = arith.constant 2 : index
    %c0_87 = arith.constant 0 : index
    %c0_88 = arith.constant 0 : index
    %95 = vector.load %arg5[%c0_85, %c2_86, %c0_87, %c0_88] : memref<3x3x6x64xbf16, #tpu.memory_space<vmem>>, vector<1x1x6x64xbf16>
    %96 = vector.shape_cast %95 : vector<1x1x6x64xbf16> to vector<6x64xbf16>
    %cst_89 = arith.constant dense<0.000000e+00> : vector<224x64xf32>
    %97 = tpu.matmul %94, %96, %cst_89 {dimension_numbers = #tpu.dot_dimension_numbers<[1], [0], [0], [1], [0, 0, 1, 1], [], []>} : vector<224x6xbf16>, vector<6x64xbf16>, vector<224x64xf32> -> vector<224x64xf32>
    %98 = arith.addf %93, %97 : vector<224x64xf32>
    %c55 = arith.constant 55 : index
    %c0_90 = arith.constant 0 : index
    %99 = vector.load %arg10[%c55, %c0_90] : memref<312x6xbf16, #tpu.memory_space<vmem>>, vector<224x6xbf16>
    %c1_91 = arith.constant 1 : index
    %c0_92 = arith.constant 0 : index
    %c0_93 = arith.constant 0 : index
    %c0_94 = arith.constant 0 : index
    %100 = vector.load %arg5[%c1_91, %c0_92, %c0_93, %c0_94] : memref<3x3x6x64xbf16, #tpu.memory_space<vmem>>, vector<1x1x6x64xbf16>
    %101 = vector.shape_cast %100 : vector<1x1x6x64xbf16> to vector<6x64xbf16>
    %cst_95 = arith.constant dense<0.000000e+00> : vector<224x64xf32>
    %102 = tpu.matmul %99, %101, %cst_95 {dimension_numbers = #tpu.dot_dimension_numbers<[1], [0], [0], [1], [0, 0, 1, 1], [], []>} : vector<224x6xbf16>, vector<6x64xbf16>, vector<224x64xf32> -> vector<224x64xf32>
    %103 = arith.addf %98, %102 : vector<224x64xf32>
    %c56 = arith.constant 56 : index
    %c0_96 = arith.constant 0 : index
    %104 = vector.load %arg10[%c56, %c0_96] : memref<312x6xbf16, #tpu.memory_space<vmem>>, vector<224x6xbf16>
    %c1_97 = arith.constant 1 : index
    %c1_98 = arith.constant 1 : index
    %c0_99 = arith.constant 0 : index
    %c0_100 = arith.constant 0 : index
    %105 = vector.load %arg5[%c1_97, %c1_98, %c0_99, %c0_100] : memref<3x3x6x64xbf16, #tpu.memory_space<vmem>>, vector<1x1x6x64xbf16>
    %106 = vector.shape_cast %105 : vector<1x1x6x64xbf16> to vector<6x64xbf16>
    %cst_101 = arith.constant dense<0.000000e+00> : vector<224x64xf32>
    %107 = tpu.matmul %104, %106, %cst_101 {dimension_numbers = #tpu.dot_dimension_numbers<[1], [0], [0], [1], [0, 0, 1, 1], [], []>} : vector<224x6xbf16>, vector<6x64xbf16>, vector<224x64xf32> -> vector<224x64xf32>
    %108 = arith.addf %103, %107 : vector<224x64xf32>
    %c57 = arith.constant 57 : index
    %c0_102 = arith.constant 0 : index
    %109 = vector.load %arg10[%c57, %c0_102] : memref<312x6xbf16, #tpu.memory_space<vmem>>, vector<224x6xbf16>
    %c1_103 = arith.constant 1 : index
    %c2_104 = arith.constant 2 : index
    %c0_105 = arith.constant 0 : index
    %c0_106 = arith.constant 0 : index
    %110 = vector.load %arg5[%c1_103, %c2_104, %c0_105, %c0_106] : memref<3x3x6x64xbf16, #tpu.memory_space<vmem>>, vector<1x1x6x64xbf16>
    %111 = vector.shape_cast %110 : vector<1x1x6x64xbf16> to vector<6x64xbf16>
    %cst_107 = arith.constant dense<0.000000e+00> : vector<224x64xf32>
    %112 = tpu.matmul %109, %111, %cst_107 {dimension_numbers = #tpu.dot_dimension_numbers<[1], [0], [0], [1], [0, 0, 1, 1], [], []>} : vector<224x6xbf16>, vector<6x64xbf16>, vector<224x64xf32> -> vector<224x64xf32>
    %113 = arith.addf %108, %112 : vector<224x64xf32>
    %c79 = arith.constant 79 : index
    %c0_108 = arith.constant 0 : index
    %114 = vector.load %arg10[%c79, %c0_108] : memref<312x6xbf16, #tpu.memory_space<vmem>>, vector<224x6xbf16>
    %c2_109 = arith.constant 2 : index
    %c0_110 = arith.constant 0 : index
    %c0_111 = arith.constant 0 : index
    %c0_112 = arith.constant 0 : index
    %115 = vector.load %arg5[%c2_109, %c0_110, %c0_111, %c0_112] : memref<3x3x6x64xbf16, #tpu.memory_space<vmem>>, vector<1x1x6x64xbf16>
    %116 = vector.shape_cast %115 : vector<1x1x6x64xbf16> to vector<6x64xbf16>
    %cst_113 = arith.constant dense<0.000000e+00> : vector<224x64xf32>
    %117 = tpu.matmul %114, %116, %cst_113 {dimension_numbers = #tpu.dot_dimension_numbers<[1], [0], [0], [1], [0, 0, 1, 1], [], []>} : vector<224x6xbf16>, vector<6x64xbf16>, vector<224x64xf32> -> vector<224x64xf32>
    %118 = arith.addf %113, %117 : vector<224x64xf32>
    %c80 = arith.constant 80 : index
    %c0_114 = arith.constant 0 : index
    %119 = vector.load %arg10[%c80, %c0_114] : memref<312x6xbf16, #tpu.memory_space<vmem>>, vector<224x6xbf16>
    %c2_115 = arith.constant 2 : index
    %c1_116 = arith.constant 1 : index
    %c0_117 = arith.constant 0 : index
    %c0_118 = arith.constant 0 : index
    %120 = vector.load %arg5[%c2_115, %c1_116, %c0_117, %c0_118] : memref<3x3x6x64xbf16, #tpu.memory_space<vmem>>, vector<1x1x6x64xbf16>
    %121 = vector.shape_cast %120 : vector<1x1x6x64xbf16> to vector<6x64xbf16>
    %cst_119 = arith.constant dense<0.000000e+00> : vector<224x64xf32>
    %122 = tpu.matmul %119, %121, %cst_119 {dimension_numbers = #tpu.dot_dimension_numbers<[1], [0], [0], [1], [0, 0, 1, 1], [], []>} : vector<224x6xbf16>, vector<6x64xbf16>, vector<224x64xf32> -> vector<224x64xf32>
    %123 = arith.addf %118, %122 : vector<224x64xf32>
    %c81 = arith.constant 81 : index
    %c0_120 = arith.constant 0 : index
    %124 = vector.load %arg10[%c81, %c0_120] : memref<312x6xbf16, #tpu.memory_space<vmem>>, vector<224x6xbf16>
    %c2_121 = arith.constant 2 : index
    %c2_122 = arith.constant 2 : index
    %c0_123 = arith.constant 0 : index
    %c0_124 = arith.constant 0 : index
    %125 = vector.load %arg5[%c2_121, %c2_122, %c0_123, %c0_124] : memref<3x3x6x64xbf16, #tpu.memory_space<vmem>>, vector<1x1x6x64xbf16>
    %126 = vector.shape_cast %125 : vector<1x1x6x64xbf16> to vector<6x64xbf16>
    %cst_125 = arith.constant dense<0.000000e+00> : vector<224x64xf32>
    %127 = tpu.matmul %124, %126, %cst_125 {dimension_numbers = #tpu.dot_dimension_numbers<[1], [0], [0], [1], [0, 0, 1, 1], [], []>} : vector<224x6xbf16>, vector<6x64xbf16>, vector<224x64xf32> -> vector<224x64xf32>
    %128 = arith.addf %123, %127 : vector<224x64xf32>
    %c0_126 = arith.constant 0 : index
    %c0_127 = arith.constant 0 : index
    %129 = vector.load %arg6[%c0_126, %c0_127] : memref<1x64xf32, #tpu.memory_space<vmem>>, vector<1x64xf32>
    %130 = vector.broadcast %129 : vector<1x64xf32> to vector<224x64xf32>
    %131 = arith.addf %128, %130 : vector<224x64xf32>
    %132 = vector.extract_strided_slice %131 {offsets = [0, 0], sizes = [192, 64], strides = [1, 1]} : vector<224x64xf32> to vector<192x64xf32>
    %133 = vector.extract_strided_slice %131 {offsets = [1, 0], sizes = [192, 64], strides = [1, 1]} : vector<224x64xf32> to vector<192x64xf32>
    %134 = arith.maximumf %132, %133 : vector<192x64xf32>
    %135 = vector.extract_strided_slice %131 {offsets = [24, 0], sizes = [192, 64], strides = [1, 1]} : vector<224x64xf32> to vector<192x64xf32>
    %136 = vector.extract_strided_slice %131 {offsets = [25, 0], sizes = [192, 64], strides = [1, 1]} : vector<224x64xf32> to vector<192x64xf32>
    %137 = arith.maximumf %135, %136 : vector<192x64xf32>
    %138 = arith.maximumf %134, %137 : vector<192x64xf32>
    %c1_i32_128 = arith.constant 1 : i32
    %139 = arith.subi %c1_i32_128, %0 : i32
    %c15_i32 = arith.constant 15 : i32
    %140 = arith.subi %c15_i32, %0 : i32
    %141 = tpu.iota {dimensions = array<i32: 0>} : vector<192x1xi32>
    %c24_i32_129 = arith.constant 24 : i32
    %142 = arith.muli %139, %c24_i32_129 : i32
    %143 = vector.broadcast %142 : i32 to vector<192x1xi32>
    %144 = arith.cmpi sge, %141, %143 : vector<192x1xi32>
    %c1_i32_130 = arith.constant 1 : i32
    %145 = arith.addi %140, %c1_i32_130 : i32
    %c24_i32_131 = arith.constant 24 : i32
    %146 = arith.muli %145, %c24_i32_131 : i32
    %147 = vector.broadcast %146 : i32 to vector<192x1xi32>
    %148 = arith.cmpi slt, %141, %147 : vector<192x1xi32>
    %149 = arith.andi %144, %148 : vector<192x1xi1>
    %150 = arith.extui %149 : vector<192x1xi1> to vector<192x1xi32>
    %151 = arith.sitofp %150 : vector<192x1xi32> to vector<192x1xf32>
    %152 = tpu.iota {dimensions = array<i32: 1>} : vector<8x24x1xi32>
    %c15_i32_132 = arith.constant 15 : i32
    %153 = vector.broadcast %c15_i32_132 : i32 to vector<8x24x1xi32>
    %154 = arith.cmpi slt, %152, %153 : vector<8x24x1xi32>
    %155 = arith.extui %154 : vector<8x24x1xi1> to vector<8x24x1xi32>
    %156 = arith.sitofp %155 : vector<8x24x1xi32> to vector<8x24x1xf32>
    %157 = vector.shape_cast %156 : vector<8x24x1xf32> to vector<192x1xf32>
    %158 = arith.mulf %151, %157 : vector<192x1xf32>
    %cst_133 = arith.constant 0.000000e+00 : bf16
    %159 = vector.broadcast %cst_133 : bf16 to vector<32x64xbf16>
    %c0_134 = arith.constant 0 : index
    %c0_135 = arith.constant 0 : index
    %160 = vector.load %arg11[%c0_134, %c0_135] : memref<232x64xbf16, #tpu.memory_space<vmem>>, vector<32x64xbf16>
    tpu.vector_store %arg11[%c0_134, %c0_135], %159 {strides = array<i32>} : memref<232x64xbf16, #tpu.memory_space<vmem>>, vector<32x64xbf16>,
    %161 = vector.broadcast %158 : vector<192x1xf32> to vector<192x64xf32>
    %162 = arith.mulf %138, %161 : vector<192x64xf32>
    %163 = arith.truncf %162 : vector<192x64xf32> to vector<192x64xbf16>
    %c32_136 = arith.constant 32 : index
    %c0_137 = arith.constant 0 : index
    %164 = vector.load %arg11[%c32_136, %c0_137] : memref<232x64xbf16, #tpu.memory_space<vmem>>, vector<192x64xbf16>
    tpu.vector_store %arg11[%c32_136, %c0_137], %163 {strides = array<i32>} : memref<232x64xbf16, #tpu.memory_space<vmem>>, vector<192x64xbf16>,
    %cst_138 = arith.constant 0.000000e+00 : bf16
    %165 = vector.broadcast %cst_138 : bf16 to vector<8x64xbf16>
    %c224 = arith.constant 224 : index
    %c0_139 = arith.constant 0 : index
    %166 = vector.load %arg11[%c224, %c0_139] : memref<232x64xbf16, #tpu.memory_space<vmem>>, vector<8x64xbf16>
    tpu.vector_store %arg11[%c224, %c0_139], %165 {strides = array<i32>} : memref<232x64xbf16, #tpu.memory_space<vmem>>, vector<8x64xbf16>,
    %c31_140 = arith.constant 31 : index
    %c0_141 = arith.constant 0 : index
    %167 = vector.load %arg11[%c31_140, %c0_141] : memref<232x64xbf16, #tpu.memory_space<vmem>>, vector<144x64xbf16>
    %c0_142 = arith.constant 0 : index
    %c0_143 = arith.constant 0 : index
    %c0_144 = arith.constant 0 : index
    %c0_145 = arith.constant 0 : index
    %168 = vector.load %arg7[%c0_142, %c0_143, %c0_144, %c0_145] : memref<3x3x64x64xbf16, #tpu.memory_space<vmem>>, vector<1x1x64x64xbf16>
    %169 = vector.shape_cast %168 : vector<1x1x64x64xbf16> to vector<64x64xbf16>
    %cst_146 = arith.constant dense<0.000000e+00> : vector<144x64xf32>
    %170 = tpu.matmul %167, %169, %cst_146 {dimension_numbers = #tpu.dot_dimension_numbers<[1], [0], [0], [1], [0, 0, 1, 1], [], []>} : vector<144x64xbf16>, vector<64x64xbf16>, vector<144x64xf32> -> vector<144x64xf32>
    %c32_147 = arith.constant 32 : index
    %c0_148 = arith.constant 0 : index
    %171 = vector.load %arg11[%c32_147, %c0_148] : memref<232x64xbf16, #tpu.memory_space<vmem>>, vector<144x64xbf16>
    %c0_149 = arith.constant 0 : index
    %c1_150 = arith.constant 1 : index
    %c0_151 = arith.constant 0 : index
    %c0_152 = arith.constant 0 : index
    %172 = vector.load %arg7[%c0_149, %c1_150, %c0_151, %c0_152] : memref<3x3x64x64xbf16, #tpu.memory_space<vmem>>, vector<1x1x64x64xbf16>
    %173 = vector.shape_cast %172 : vector<1x1x64x64xbf16> to vector<64x64xbf16>
    %cst_153 = arith.constant dense<0.000000e+00> : vector<144x64xf32>
    %174 = tpu.matmul %171, %173, %cst_153 {dimension_numbers = #tpu.dot_dimension_numbers<[1], [0], [0], [1], [0, 0, 1, 1], [], []>} : vector<144x64xbf16>, vector<64x64xbf16>, vector<144x64xf32> -> vector<144x64xf32>
    %175 = arith.addf %170, %174 : vector<144x64xf32>
    %c33_154 = arith.constant 33 : index
    %c0_155 = arith.constant 0 : index
    %176 = vector.load %arg11[%c33_154, %c0_155] : memref<232x64xbf16, #tpu.memory_space<vmem>>, vector<144x64xbf16>
    %c0_156 = arith.constant 0 : index
    %c2_157 = arith.constant 2 : index
    %c0_158 = arith.constant 0 : index
    %c0_159 = arith.constant 0 : index
    %177 = vector.load %arg7[%c0_156, %c2_157, %c0_158, %c0_159] : memref<3x3x64x64xbf16, #tpu.memory_space<vmem>>, vector<1x1x64x64xbf16>
    %178 = vector.shape_cast %177 : vector<1x1x64x64xbf16> to vector<64x64xbf16>
    %cst_160 = arith.constant dense<0.000000e+00> : vector<144x64xf32>
    %179 = tpu.matmul %176, %178, %cst_160 {dimension_numbers = #tpu.dot_dimension_numbers<[1], [0], [0], [1], [0, 0, 1, 1], [], []>} : vector<144x64xbf16>, vector<64x64xbf16>, vector<144x64xf32> -> vector<144x64xf32>
    %180 = arith.addf %175, %179 : vector<144x64xf32>
    %c55_161 = arith.constant 55 : index
    %c0_162 = arith.constant 0 : index
    %181 = vector.load %arg11[%c55_161, %c0_162] : memref<232x64xbf16, #tpu.memory_space<vmem>>, vector<144x64xbf16>
    %c1_163 = arith.constant 1 : index
    %c0_164 = arith.constant 0 : index
    %c0_165 = arith.constant 0 : index
    %c0_166 = arith.constant 0 : index
    %182 = vector.load %arg7[%c1_163, %c0_164, %c0_165, %c0_166] : memref<3x3x64x64xbf16, #tpu.memory_space<vmem>>, vector<1x1x64x64xbf16>
    %183 = vector.shape_cast %182 : vector<1x1x64x64xbf16> to vector<64x64xbf16>
    %cst_167 = arith.constant dense<0.000000e+00> : vector<144x64xf32>
    %184 = tpu.matmul %181, %183, %cst_167 {dimension_numbers = #tpu.dot_dimension_numbers<[1], [0], [0], [1], [0, 0, 1, 1], [], []>} : vector<144x64xbf16>, vector<64x64xbf16>, vector<144x64xf32> -> vector<144x64xf32>
    %185 = arith.addf %180, %184 : vector<144x64xf32>
    %c56_168 = arith.constant 56 : index
    %c0_169 = arith.constant 0 : index
    %186 = vector.load %arg11[%c56_168, %c0_169] : memref<232x64xbf16, #tpu.memory_space<vmem>>, vector<144x64xbf16>
    %c1_170 = arith.constant 1 : index
    %c1_171 = arith.constant 1 : index
    %c0_172 = arith.constant 0 : index
    %c0_173 = arith.constant 0 : index
    %187 = vector.load %arg7[%c1_170, %c1_171, %c0_172, %c0_173] : memref<3x3x64x64xbf16, #tpu.memory_space<vmem>>, vector<1x1x64x64xbf16>
    %188 = vector.shape_cast %187 : vector<1x1x64x64xbf16> to vector<64x64xbf16>
    %cst_174 = arith.constant dense<0.000000e+00> : vector<144x64xf32>
    %189 = tpu.matmul %186, %188, %cst_174 {dimension_numbers = #tpu.dot_dimension_numbers<[1], [0], [0], [1], [0, 0, 1, 1], [], []>} : vector<144x64xbf16>, vector<64x64xbf16>, vector<144x64xf32> -> vector<144x64xf32>
    %190 = arith.addf %185, %189 : vector<144x64xf32>
    %c57_175 = arith.constant 57 : index
    %c0_176 = arith.constant 0 : index
    %191 = vector.load %arg11[%c57_175, %c0_176] : memref<232x64xbf16, #tpu.memory_space<vmem>>, vector<144x64xbf16>
    %c1_177 = arith.constant 1 : index
    %c2_178 = arith.constant 2 : index
    %c0_179 = arith.constant 0 : index
    %c0_180 = arith.constant 0 : index
    %192 = vector.load %arg7[%c1_177, %c2_178, %c0_179, %c0_180] : memref<3x3x64x64xbf16, #tpu.memory_space<vmem>>, vector<1x1x64x64xbf16>
    %193 = vector.shape_cast %192 : vector<1x1x64x64xbf16> to vector<64x64xbf16>
    %cst_181 = arith.constant dense<0.000000e+00> : vector<144x64xf32>
    %194 = tpu.matmul %191, %193, %cst_181 {dimension_numbers = #tpu.dot_dimension_numbers<[1], [0], [0], [1], [0, 0, 1, 1], [], []>} : vector<144x64xbf16>, vector<64x64xbf16>, vector<144x64xf32> -> vector<144x64xf32>
    %195 = arith.addf %190, %194 : vector<144x64xf32>
    %c79_182 = arith.constant 79 : index
    %c0_183 = arith.constant 0 : index
    %196 = vector.load %arg11[%c79_182, %c0_183] : memref<232x64xbf16, #tpu.memory_space<vmem>>, vector<144x64xbf16>
    %c2_184 = arith.constant 2 : index
    %c0_185 = arith.constant 0 : index
    %c0_186 = arith.constant 0 : index
    %c0_187 = arith.constant 0 : index
    %197 = vector.load %arg7[%c2_184, %c0_185, %c0_186, %c0_187] : memref<3x3x64x64xbf16, #tpu.memory_space<vmem>>, vector<1x1x64x64xbf16>
    %198 = vector.shape_cast %197 : vector<1x1x64x64xbf16> to vector<64x64xbf16>
    %cst_188 = arith.constant dense<0.000000e+00> : vector<144x64xf32>
    %199 = tpu.matmul %196, %198, %cst_188 {dimension_numbers = #tpu.dot_dimension_numbers<[1], [0], [0], [1], [0, 0, 1, 1], [], []>} : vector<144x64xbf16>, vector<64x64xbf16>, vector<144x64xf32> -> vector<144x64xf32>
    %200 = arith.addf %195, %199 : vector<144x64xf32>
    %c80_189 = arith.constant 80 : index
    %c0_190 = arith.constant 0 : index
    %201 = vector.load %arg11[%c80_189, %c0_190] : memref<232x64xbf16, #tpu.memory_space<vmem>>, vector<144x64xbf16>
    %c2_191 = arith.constant 2 : index
    %c1_192 = arith.constant 1 : index
    %c0_193 = arith.constant 0 : index
    %c0_194 = arith.constant 0 : index
    %202 = vector.load %arg7[%c2_191, %c1_192, %c0_193, %c0_194] : memref<3x3x64x64xbf16, #tpu.memory_space<vmem>>, vector<1x1x64x64xbf16>
    %203 = vector.shape_cast %202 : vector<1x1x64x64xbf16> to vector<64x64xbf16>
    %cst_195 = arith.constant dense<0.000000e+00> : vector<144x64xf32>
    %204 = tpu.matmul %201, %203, %cst_195 {dimension_numbers = #tpu.dot_dimension_numbers<[1], [0], [0], [1], [0, 0, 1, 1], [], []>} : vector<144x64xbf16>, vector<64x64xbf16>, vector<144x64xf32> -> vector<144x64xf32>
    %205 = arith.addf %200, %204 : vector<144x64xf32>
    %c81_196 = arith.constant 81 : index
    %c0_197 = arith.constant 0 : index
    %206 = vector.load %arg11[%c81_196, %c0_197] : memref<232x64xbf16, #tpu.memory_space<vmem>>, vector<144x64xbf16>
    %c2_198 = arith.constant 2 : index
    %c2_199 = arith.constant 2 : index
    %c0_200 = arith.constant 0 : index
    %c0_201 = arith.constant 0 : index
    %207 = vector.load %arg7[%c2_198, %c2_199, %c0_200, %c0_201] : memref<3x3x64x64xbf16, #tpu.memory_space<vmem>>, vector<1x1x64x64xbf16>
    %208 = vector.shape_cast %207 : vector<1x1x64x64xbf16> to vector<64x64xbf16>
    %cst_202 = arith.constant dense<0.000000e+00> : vector<144x64xf32>
    %209 = tpu.matmul %206, %208, %cst_202 {dimension_numbers = #tpu.dot_dimension_numbers<[1], [0], [0], [1], [0, 0, 1, 1], [], []>} : vector<144x64xbf16>, vector<64x64xbf16>, vector<144x64xf32> -> vector<144x64xf32>
    %210 = arith.addf %205, %209 : vector<144x64xf32>
    %c0_203 = arith.constant 0 : index
    %c0_204 = arith.constant 0 : index
    %211 = vector.load %arg8[%c0_203, %c0_204] : memref<1x64xf32, #tpu.memory_space<vmem>>, vector<1x64xf32>
    %212 = vector.broadcast %211 : vector<1x64xf32> to vector<144x64xf32>
    %213 = arith.addf %210, %212 : vector<144x64xf32>
    %cst_205 = arith.constant 0.000000e+00 : f32
    %214 = vector.broadcast %cst_205 : f32 to vector<144x64xf32>
    %215 = arith.maximumf %213, %214 : vector<144x64xf32>
    %216 = vector.extract_strided_slice %215 {offsets = [0, 0], sizes = [96, 64], strides = [1, 1]} : vector<144x64xf32> to vector<96x64xf32>
    %217 = vector.extract_strided_slice %215 {offsets = [24, 0], sizes = [96, 64], strides = [1, 1]} : vector<144x64xf32> to vector<96x64xf32>
    %218 = arith.maximumf %216, %217 : vector<96x64xf32>
    %219 = vector.extract_strided_slice %215 {offsets = [48, 0], sizes = [96, 64], strides = [1, 1]} : vector<144x64xf32> to vector<96x64xf32>
    %220 = arith.maximumf %218, %219 : vector<96x64xf32>
    %221 = vector.extract_strided_slice %220 {offsets = [0, 0], sizes = [15, 64], strides = [1, 1]} : vector<96x64xf32> to vector<15x64xf32>
    %222 = vector.shape_cast %221 : vector<15x64xf32> to vector<5x3x64xf32>
    %223 = vector.extract_strided_slice %222 {offsets = [0, 0, 0], sizes = [5, 1, 64], strides = [1, 1, 1]} : vector<5x3x64xf32> to vector<5x1x64xf32>
    %224 = vector.shape_cast %223 : vector<5x1x64xf32> to vector<5x64xf32>
    %225 = vector.extract_strided_slice %222 {offsets = [0, 1, 0], sizes = [5, 1, 64], strides = [1, 1, 1]} : vector<5x3x64xf32> to vector<5x1x64xf32>
    %226 = vector.shape_cast %225 : vector<5x1x64xf32> to vector<5x64xf32>
    %227 = arith.maximumf %224, %226 : vector<5x64xf32>
    %228 = vector.extract_strided_slice %222 {offsets = [0, 2, 0], sizes = [5, 1, 64], strides = [1, 1, 1]} : vector<5x3x64xf32> to vector<5x1x64xf32>
    %229 = vector.shape_cast %228 : vector<5x1x64xf32> to vector<5x64xf32>
    %230 = arith.maximumf %227, %229 : vector<5x64xf32>
    %c0_206 = arith.constant 0 : index
    %c0_207 = arith.constant 0 : index
    %c0_208 = arith.constant 0 : index
    %c0_209 = arith.constant 0 : index
    %231 = vector.load %arg9[%c0_206, %c0_207, %c0_208, %c0_209] : memref<1x2x5x64xf32, #tpu.memory_space<vmem>>, vector<1x1x5x64xf32>
    %232 = vector.shape_cast %231 : vector<1x1x5x64xf32> to vector<5x64xf32>
    %233 = vector.shape_cast %230 : vector<5x64xf32> to vector<1x1x5x64xf32>
    tpu.vector_store %arg9[%c0_206, %c0_207, %c0_208, %c0_209], %233 {strides = array<i32>} : memref<1x2x5x64xf32, #tpu.memory_space<vmem>>, vector<1x1x5x64xf32>,
    %234 = vector.extract_strided_slice %220 {offsets = [72, 0], sizes = [15, 64], strides = [1, 1]} : vector<96x64xf32> to vector<15x64xf32>
    %235 = vector.shape_cast %234 : vector<15x64xf32> to vector<5x3x64xf32>
    %236 = vector.extract_strided_slice %235 {offsets = [0, 0, 0], sizes = [5, 1, 64], strides = [1, 1, 1]} : vector<5x3x64xf32> to vector<5x1x64xf32>
    %237 = vector.shape_cast %236 : vector<5x1x64xf32> to vector<5x64xf32>
    %238 = vector.extract_strided_slice %235 {offsets = [0, 1, 0], sizes = [5, 1, 64], strides = [1, 1, 1]} : vector<5x3x64xf32> to vector<5x1x64xf32>
    %239 = vector.shape_cast %238 : vector<5x1x64xf32> to vector<5x64xf32>
    %240 = arith.maximumf %237, %239 : vector<5x64xf32>
    %241 = vector.extract_strided_slice %235 {offsets = [0, 2, 0], sizes = [5, 1, 64], strides = [1, 1, 1]} : vector<5x3x64xf32> to vector<5x1x64xf32>
    %242 = vector.shape_cast %241 : vector<5x1x64xf32> to vector<5x64xf32>
    %243 = arith.maximumf %240, %242 : vector<5x64xf32>
    %c0_210 = arith.constant 0 : index
    %c1_211 = arith.constant 1 : index
    %c0_212 = arith.constant 0 : index
    %c0_213 = arith.constant 0 : index
    %244 = vector.load %arg9[%c0_210, %c1_211, %c0_212, %c0_213] : memref<1x2x5x64xf32, #tpu.memory_space<vmem>>, vector<1x1x5x64xf32>
    %245 = vector.shape_cast %244 : vector<1x1x5x64xf32> to vector<5x64xf32>
    %246 = vector.shape_cast %243 : vector<5x64xf32> to vector<1x1x5x64xf32>
    tpu.vector_store %arg9[%c0_210, %c1_211, %c0_212, %c0_213], %246 {strides = array<i32>} : memref<1x2x5x64xf32, #tpu.memory_space<vmem>>, vector<1x1x5x64xf32>,
    return
  }
  func.func @transform_0(%arg0: i32, %arg1: i32) -> (i32, i32, i32) {
    %c3_i32 = arith.constant 3 : i32
    %0 = arith.muli %arg0, %c3_i32 : i32
    %1 = arith.addi %0, %arg1 : i32
    %c0_i32 = arith.constant 0 : i32
    %c0_i32_0 = arith.constant 0 : i32
    %c0_i32_1 = arith.constant 0 : i32
    return %1, %c0_i32, %c0_i32_0 : i32, i32, i32
  }
  func.func @transform_1(%arg0: i32, %arg1: i32) -> (i32, i32, i32, i32) {
    %c0_i32 = arith.constant 0 : i32
    %c0_i32_0 = arith.constant 0 : i32
    %c0_i32_1 = arith.constant 0 : i32
    %c0_i32_2 = arith.constant 0 : i32
    %c0_i32_3 = arith.constant 0 : i32
    return %c0_i32, %c0_i32_0, %c0_i32_1, %c0_i32_2 : i32, i32, i32, i32
  }
  func.func @transform_2(%arg0: i32, %arg1: i32) -> (i32, i32) {
    %c0_i32 = arith.constant 0 : i32
    %c0_i32_0 = arith.constant 0 : i32
    %c0_i32_1 = arith.constant 0 : i32
    return %c0_i32, %c0_i32_0 : i32, i32
  }
  func.func @transform_3(%arg0: i32, %arg1: i32) -> (i32, i32, i32, i32) {
    %c0_i32 = arith.constant 0 : i32
    %c0_i32_0 = arith.constant 0 : i32
    %c0_i32_1 = arith.constant 0 : i32
    %c0_i32_2 = arith.constant 0 : i32
    %c0_i32_3 = arith.constant 0 : i32
    return %c0_i32, %c0_i32_0, %c0_i32_1, %c0_i32_2 : i32, i32, i32, i32
  }
  func.func @transform_4(%arg0: i32, %arg1: i32) -> (i32, i32) {
    %c0_i32 = arith.constant 0 : i32
    %c0_i32_0 = arith.constant 0 : i32
    %c0_i32_1 = arith.constant 0 : i32
    return %c0_i32, %c0_i32_0 : i32, i32
  }
  func.func @transform_5(%arg0: i32, %arg1: i32) -> (i32, i32, i32, i32) {
    %c0_i32 = arith.constant 0 : i32
    %c0_i32_0 = arith.constant 0 : i32
    %c0_i32_1 = arith.constant 0 : i32
    %c0_i32_2 = arith.constant 0 : i32
    %c0_i32_3 = arith.constant 0 : i32
    return %c0_i32, %c0_i32_0, %c0_i32_1, %c0_i32_2 : i32, i32, i32, i32
  }
  func.func @transform_6(%arg0: i32, %arg1: i32) -> (i32, i32) {
    %c0_i32 = arith.constant 0 : i32
    %c0_i32_0 = arith.constant 0 : i32
    %c0_i32_1 = arith.constant 0 : i32
    return %c0_i32, %c0_i32_0 : i32, i32
  }
  func.func @transform_7(%arg0: i32, %arg1: i32) -> (i32, i32, i32, i32) {
    %c3_i32 = arith.constant 3 : i32
    %0 = arith.muli %arg0, %c3_i32 : i32
    %1 = arith.addi %0, %arg1 : i32
    %c0_i32 = arith.constant 0 : i32
    %c0_i32_0 = arith.constant 0 : i32
    %c0_i32_1 = arith.constant 0 : i32
    %c0_i32_2 = arith.constant 0 : i32
    return %1, %c0_i32, %c0_i32_0, %c0_i32_1 : i32, i32, i32, i32
  }
}

</mosaic_0001>

<llo_original>
// kernel: tpu_custom_call.1
$region0: #{tpu_custom_call.1}
  #allocation0 [shape = 'u32[]', space=smem, size = 0x4, offset = 0x4, fixed_abs, tag = 'smem constant byte address 0x4 - core index']
  #allocation1 [shape = 'u32[144,128]{1,0:T(1,128)}', space=vmem, size = 0x12000, scoped, tag = 'internal scratch']
  #allocation2 [shape = 'bf16[312,6]{1,0:T(8,128)(2,1)}', space=vmem, size = 0x13800, scoped, tag = 'scratch operand']
  #allocation3 [shape = 'bf16[232,64]{1,0:T(8,128)(2,1)}', space=vmem, size = 0xe800, scoped, tag = 'scratch operand']
  %s0 = inlined_call_operand.vmem [shape: bf16[6,320,3], index: 0, kind: input, shape index: {}]
  %s1 = inlined_call_operand.vmem [shape: bf16[3,3,3,6], index: 1, kind: input, shape index: {}]
  %s2 = inlined_call_operand.vmem [shape: f32[1,6], index: 2, kind: input, shape index: {}]
  %s3 = inlined_call_operand.vmem [shape: bf16[3,3,6,64], index: 3, kind: input, shape index: {}]
  %s4 = inlined_call_operand.vmem [shape: f32[1,64], index: 4, kind: input, shape index: {}]
  %s5 = inlined_call_operand.vmem [shape: bf16[3,3,64,64], index: 5, kind: input, shape index: {}]
  %s6 = inlined_call_operand.vmem [shape: f32[1,64], index: 6, kind: input, shape index: {}]
  %s7 = inlined_call_operand.vmem [shape: f32[6,2,5,64], index: 7, kind: output, shape index: {}]
  %s8 = sld [smem:[#allocation0]]
  $region61: #{tpu_custom_call.1} parent=0
    _
  %s10 = ssub.s32 1, %s8
  %s11 = scalar_select 0, %s10, %s8
  loop: start=0, step=1, limit=8
  $region2: #{tpu_custom_call.1} parent=0 // loop_pre_header
    _
  $region3: #{tpu_custom_call.1} parent=0 // loop_header
    %s13 = sphi 0, %s17
    %p14 = scmp.ge.s32.totalorder %s13, 8
    %s20 = sphi 0, %s32
    %s21 = sphi 0, %s28
    %s22 = sphi 0, %s20
    %s23 = sphi 0, %s21
    %s24 = sphi 0, %s22
    %s25 = sphi 0, %s23
    %s39 = sphi 0, %s41
    %s42 = sphi 0, %s39
    %s43 = sphi 0, %s42
    %s59 = sphi 0, %s43
    %s63 = sphi 0, %s63
    %s65 = sphi 0, %s63
    %s66 = sphi 0, %s65
    %s80 = sphi 0, %s66
    %s84 = sphi 0, %s84
    %s86 = sphi 0, %s84
    %s87 = sphi 0, %s86
    %s101 = sphi 0, %s87
    %s105 = sphi 0, %s105
    %s107 = sphi 0, %s105
    %s108 = sphi 0, %s107
    %s122 = sphi 0, %s108
    %s126 = sphi 0, %s126
    %s128 = sphi 0, %s126
    %s129 = sphi 0, %s128
    %s143 = sphi 0, %s129
    %s147 = sphi 0, %s147
    %s149 = sphi 0, %s147
    %s150 = sphi 0, %s149
    %s164 = sphi 0, %s150
    %s168 = sphi 0, %s168
    %s170 = sphi 0, %s168
    %s171 = sphi 0, %s170
    %s185 = sphi 0, %s171
    %s195 = sphi 0, %s197
    %s198 = sphi 0, %s195
    %s199 = sphi 0, %s198
    %s215 = sphi 0, %s199
  $region4: #{tpu_custom_call.1} parent=0 // loop_header_branch
    %16 = sbr.rel (%p14) target = $region8
  $region5: #{tpu_custom_call.1} parent=0 // loop_body
    %s18 = ssub.s32 %s13, 1
    %s19 = ssub.s32 %s13, 2
    %s26 = sadd.s32 1, %s21
    %p27 = scmp.ge.s32.totalorder %s26, 3
    %s28 = scalar_select %p27, 0, %s26
    %s29 = sadd.s32 1, %s20
    %s30 = scalar_select %p27, %s29, %s20
    %p31 = scmp.ge.s32.totalorder %s30, 2
    %s32 = scalar_select %p31, 0, %s30
    %s33 = smul.u32 %s20, 3
    %s34 = sadd.s32 %s33, %s21
    %s35 = smul.u32 %s32, 3
    %s36 = sadd.s32 %s35, %s28
    %s37 = ssub.s32 %s34, %s36
    %p38 = scmp.eq.s32.totalorder %s37, 0
    %s40 = sadd.s32 %s39, 1
    %s41 = scalar_select %p38, %s39, %s40
    %p44 = pneg %p38
    %p45 = scmp.eq.s32.totalorder %s13, 5
    %p46 = por %p44, %p45
    %p47 = scmp.ne.s32.totalorder %s39, %s42
    %p48 = scmp.eq.s32.totalorder %s13, 0
    %p49 = por %p47, %p48
    %p50 = scmp.ne.s32.totalorder %s39, %s42
    %p51 = scmp.eq.s32.totalorder %s18, 5
    %p52 = por %p50, %p51
    %p53 = scmp.ne.s32.totalorder %s42, %s43
    %p54 = scmp.eq.s32.totalorder %s18, 0
    %p55 = por %p53, %p54
    %p56 = scmp.ne.s32.totalorder %s42, %s43
    %p57 = scmp.eq.s32.totalorder %s19, 5
    %p58 = por %p56, %p57
    %p60 = scmp.ne.s32.totalorder %s43, %s59
    %p61 = scmp.eq.s32.totalorder %s19, 0
    %p62 = por %p60, %p61
    %s64 = sadd.s32 %s63, 1
    %p67 = scmp.eq.s32.totalorder %s13, 5
    %p68 = scmp.ne.s32.totalorder %s63, %s65
    %p69 = scmp.eq.s32.totalorder %s13, 0
    %p70 = por %p68, %p69
    %p71 = scmp.ne.s32.totalorder %s63, %s65
    %p72 = scmp.eq.s32.totalorder %s18, 5
    %p73 = por %p71, %p72
    %p74 = scmp.ne.s32.totalorder %s65, %s66
    %p75 = scmp.eq.s32.totalorder %s18, 0
    %p76 = por %p74, %p75
    %p77 = scmp.ne.s32.totalorder %s65, %s66
    %p78 = scmp.eq.s32.totalorder %s19, 5
    %p79 = por %p77, %p78
    %p81 = scmp.ne.s32.totalorder %s66, %s80
    %p82 = scmp.eq.s32.totalorder %s19, 0
    %p83 = por %p81, %p82
    %s85 = sadd.s32 %s84, 1
    %p88 = scmp.eq.s32.totalorder %s13, 5
    %p89 = scmp.ne.s32.totalorder %s84, %s86
    %p90 = scmp.eq.s32.totalorder %s13, 0
    %p91 = por %p89, %p90
    %p92 = scmp.ne.s32.totalorder %s84, %s86
    %p93 = scmp.eq.s32.totalorder %s18, 5
    %p94 = por %p92, %p93
    %p95 = scmp.ne.s32.totalorder %s86, %s87
    %p96 = scmp.eq.s32.totalorder %s18, 0
    %p97 = por %p95, %p96
    %p98 = scmp.ne.s32.totalorder %s86, %s87
    %p99 = scmp.eq.s32.totalorder %s19, 5
    %p100 = por %p98, %p99
    %p102 = scmp.ne.s32.totalorder %s87, %s101
    %p103 = scmp.eq.s32.totalorder %s19, 0
    %p104 = por %p102, %p103
    %s106 = sadd.s32 %s105, 1
    %p109 = scmp.eq.s32.totalorder %s13, 5
    %p110 = scmp.ne.s32.totalorder %s105, %s107
    %p111 = scmp.eq.s32.totalorder %s13, 0
    %p112 = por %p110, %p111
    %p113 = scmp.ne.s32.totalorder %s105, %s107
    %p114 = scmp.eq.s32.totalorder %s18, 5
    %p115 = por %p113, %p114
    %p116 = scmp.ne.s32.totalorder %s107, %s108
    %p117 = scmp.eq.s32.totalorder %s18, 0
    %p118 = por %p116, %p117
    %p119 = scmp.ne.s32.totalorder %s107, %s108
    %p120 = scmp.eq.s32.totalorder %s19, 5
    %p121 = por %p119, %p120
    %p123 = scmp.ne.s32.totalorder %s108, %s122
    %p124 = scmp.eq.s32.totalorder %s19, 0
    %p125 = por %p123, %p124
    %s127 = sadd.s32 %s126, 1
    %p130 = scmp.eq.s32.totalorder %s13, 5
    %p131 = scmp.ne.s32.totalorder %s126, %s128
    %p132 = scmp.eq.s32.totalorder %s13, 0
    %p133 = por %p131, %p132
    %p134 = scmp.ne.s32.totalorder %s126, %s128
    %p135 = scmp.eq.s32.totalorder %s18, 5
    %p136 = por %p134, %p135
    %p137 = scmp.ne.s32.totalorder %s128, %s129
    %p138 = scmp.eq.s32.totalorder %s18, 0
    %p139 = por %p137, %p138
    %p140 = scmp.ne.s32.totalorder %s128, %s129
    %p141 = scmp.eq.s32.totalorder %s19, 5
    %p142 = por %p140, %p141
    %p144 = scmp.ne.s32.totalorder %s129, %s143
    %p145 = scmp.eq.s32.totalorder %s19, 0
    %p146 = por %p144, %p145
    %s148 = sadd.s32 %s147, 1
    %p151 = scmp.eq.s32.totalorder %s13, 5
    %p152 = scmp.ne.s32.totalorder %s147, %s149
    %p153 = scmp.eq.s32.totalorder %s13, 0
    %p154 = por %p152, %p153
    %p155 = scmp.ne.s32.totalorder %s147, %s149
    %p156 = scmp.eq.s32.totalorder %s18, 5
    %p157 = por %p155, %p156
    %p158 = scmp.ne.s32.totalorder %s149, %s150
    %p159 = scmp.eq.s32.totalorder %s18, 0
    %p160 = por %p158, %p159
    %p161 = scmp.ne.s32.totalorder %s149, %s150
    %p162 = scmp.eq.s32.totalorder %s19, 5
    %p163 = por %p161, %p162
    %p165 = scmp.ne.s32.totalorder %s150, %s164
    %p166 = scmp.eq.s32.totalorder %s19, 0
    %p167 = por %p165, %p166
    %s169 = sadd.s32 %s168, 1
    %p172 = scmp.eq.s32.totalorder %s13, 5
    %p173 = scmp.ne.s32.totalorder %s168, %s170
    %p174 = scmp.eq.s32.totalorder %s13, 0
    %p175 = por %p173, %p174
    %p176 = scmp.ne.s32.totalorder %s168, %s170
    %p177 = scmp.eq.s32.totalorder %s18, 5
    %p178 = por %p176, %p177
    %p179 = scmp.ne.s32.totalorder %s170, %s171
    %p180 = scmp.eq.s32.totalorder %s18, 0
    %p181 = por %p179, %p180
    %p182 = scmp.ne.s32.totalorder %s170, %s171
    %p183 = scmp.eq.s32.totalorder %s19, 5
    %p184 = por %p182, %p183
    %p186 = scmp.ne.s32.totalorder %s171, %s185
    %p187 = scmp.eq.s32.totalorder %s19, 0
    %p188 = por %p186, %p187
    %s189 = smul.u32 %s20, 3
    %s190 = sadd.s32 %s189, %s21
    %s191 = smul.u32 %s32, 3
    %s192 = sadd.s32 %s191, %s28
    %s193 = ssub.s32 %s190, %s192
    %p194 = scmp.eq.s32.totalorder %s193, 0
    %s196 = sadd.s32 %s195, 1
    %s197 = scalar_select %p194, %s195, %s196
    %p200 = pneg %p194
    %p201 = scmp.eq.s32.totalorder %s13, 5
    %p202 = por %p200, %p201
    %p203 = scmp.ne.s32.totalorder %s195, %s198
    %p204 = scmp.eq.s32.totalorder %s13, 0
    %p205 = por %p203, %p204
    %p206 = scmp.ne.s32.totalorder %s195, %s198
    %p207 = scmp.eq.s32.totalorder %s18, 5
    %p208 = por %p206, %p207
    %p209 = scmp.ne.s32.totalorder %s198, %s199
    %p210 = scmp.eq.s32.totalorder %s18, 0
    %p211 = por %p209, %p210
    %p212 = scmp.ne.s32.totalorder %s198, %s199
    %p213 = scmp.eq.s32.totalorder %s19, 5
    %p214 = por %p212, %p213
    %p216 = scmp.ne.s32.totalorder %s199, %s215
    %p217 = scmp.eq.s32.totalorder %s19, 0
    %p218 = por %p216, %p217
    %p219 = scmp.le.s32.totalorder 1, %s13
    %p220 = scmp.lt.s32.totalorder %s13, 7
    %p221 = pnand %p219, %p220
    %p222 = pneg %p221
    // Predicated region
    $region9: #{tpu_custom_call.1} parent=5 // pred_check
      _
    $region10: #{tpu_custom_call.1} parent=5 // pred_check_branch
      %224 = sbr.rel (%p221) target = $region12
    $region11: #{tpu_custom_call.1} parent=5 // pred_region
      %s225 = ssub.s32 %s13, 1
      // Predicated region
      $region13: #{tpu_custom_call.1} parent=11 // pred_check
        %p226 = pneg %p76
      $region14: #{tpu_custom_call.1} parent=11 // pred_check_branch
        %228 = sbr.rel (%p226) target = $region16
      $region15: #{tpu_custom_call.1} parent=11 // pred_region
        _
      $region16: #{tpu_custom_call.1} parent=11 // pred_fallthru
        _
      // Predicated region
      $region17: #{tpu_custom_call.1} parent=11 // pred_check
        %p229 = pneg %p97
      $region18: #{tpu_custom_call.1} parent=11 // pred_check_branch
        %231 = sbr.rel (%p229) target = $region20
      $region19: #{tpu_custom_call.1} parent=11 // pred_region
        _
      $region20: #{tpu_custom_call.1} parent=11 // pred_fallthru
        _
      // Predicated region
      $region21: #{tpu_custom_call.1} parent=11 // pred_check
        %p232 = pneg %p118
      $region22: #{tpu_custom_call.1} parent=11 // pred_check_branch
        %234 = sbr.rel (%p232) target = $region24
      $region23: #{tpu_custom_call.1} parent=11 // pred_region
        _
      $region24: #{tpu_custom_call.1} parent=11 // pred_fallthru
        _
      // Predicated region
      $region25: #{tpu_custom_call.1} parent=11 // pred_check
        %p235 = pneg %p139
      $region26: #{tpu_custom_call.1} parent=11 // pred_check_branch
        %237 = sbr.rel (%p235) target = $region28
      $region27: #{tpu_custom_call.1} parent=11 // pred_region
        _
      $region28: #{tpu_custom_call.1} parent=11 // pred_fallthru
        _
      // Predicated region
      $region29: #{tpu_custom_call.1} parent=11 // pred_check
        %p238 = pneg %p160
      $region30: #{tpu_custom_call.1} parent=11 // pred_check_branch
        %240 = sbr.rel (%p238) target = $region32
      $region31: #{tpu_custom_call.1} parent=11 // pred_region
        _
      $region32: #{tpu_custom_call.1} parent=11 // pred_fallthru
        _
      // Predicated region
      $region33: #{tpu_custom_call.1} parent=11 // pred_check
        %p241 = pneg %p181
      $region34: #{tpu_custom_call.1} parent=11 // pred_check_branch
        %243 = sbr.rel (%p241) target = $region36
      $region35: #{tpu_custom_call.1} parent=11 // pred_region
        _
      $region36: #{tpu_custom_call.1} parent=11 // pred_fallthru
        _
    $region12: #{tpu_custom_call.1} parent=5 // pred_fallthru
      _
    %p244 = scmp.lt.s32.totalorder %s13, 6
    // Predicated region
    $region37: #{tpu_custom_call.1} parent=5 // pred_check
      %p245 = pneg %p244
    $region38: #{tpu_custom_call.1} parent=5 // pred_check_branch
      %247 = sbr.rel (%p245) target = $region40
    $region39: #{tpu_custom_call.1} parent=5 // pred_region
      // Predicated region
      $region41: #{tpu_custom_call.1} parent=39 // pred_check
        %p248 = pneg %p49
      $region42: #{tpu_custom_call.1} parent=39 // pred_check_branch
        %250 = sbr.rel (%p248) target = $region44
      $region43: #{tpu_custom_call.1} parent=39 // pred_region
        %s251 = smul.u32 %s20, 3
        %s252 = sadd.s32 %s251, %s21
        %p253 = scmp.lt.s32.totalorder %s252, 5
        %s254 = scalar_select %p253, %s252, 5
        %s255 = smul.addr %s254, 40
        %s256 = smul.addr %s255, 4
        %s257 = scalar_lea.vmem %s0, %s256
        %s258 = smul.u32 %s20, 3
        %s259 = sadd.s32 %s258, %s21
      $region44: #{tpu_custom_call.1} parent=39 // pred_fallthru
        _
    $region40: #{tpu_custom_call.1} parent=5 // pred_fallthru
      _
    %p260 = scmp.le.s32.totalorder 1, %s13
    %p261 = scmp.lt.s32.totalorder %s13, 7
    %p262 = pnand %p260, %p261
    %p263 = pneg %p262
    // Predicated region
    $region45: #{tpu_custom_call.1} parent=5 // pred_check
      _
    $region46: #{tpu_custom_call.1} parent=5 // pred_check_branch
      %265 = sbr.rel (%p262) target = $region48
    $region47: #{tpu_custom_call.1} parent=5 // pred_region
      %s266 = ssub.s32 %s13, 1
      %s267 = smul.u32 %s22, 3
      %s268 = sadd.s32 %s267, %s23
      %p269 = scmp.lt.s32.totalorder %s268, 5
      %s270 = scalar_select %p269, %s268, 5
      %s271 = smul.addr %s270, 40
      %s272 = smul.addr %s271, 4
      %s273 = scalar_lea.vmem %s0, %s272
      %p274 = pneg %p55
      %p275 = pneg %p52
      %p276 = pneg %p76
      %p277 = pneg %p73
      %p278 = pneg %p97
      %p279 = pneg %p94
      %p280 = pneg %p118
      %p281 = pneg %p115
      %p282 = pneg %p139
      %p283 = pneg %p136
      %p284 = pneg %p160
      %p285 = pneg %p157
      %p286 = pneg %p181
      %p287 = pneg %p178
      %p288 = pneg %p211
      %p289 = pneg %p208
      %s290 = smul.u32 %s22, 3
      %s291 = sadd.s32 %s290, %s23
      %p292 = scmp.lt.s32.totalorder %s291, 5
      %s293 = scalar_select %p292, %s291, 5
      %s294 = smul.addr %s293, 2
      %s295 = smul.addr %s294, 8
      %s296 = scalar_lea.vmem %s7, %s295
      %s297 = smul.u32 %s22, 3
      %s298 = sadd.s32 %s297, %s23
      %p299 = scmp.lt.s32.totalorder %s298, 5
      %s300 = scalar_select %p299, %s298, 5
      %s301 = smul.addr %s300, 40
      %s302 = smul.addr %s301, 4
      %s303 = scalar_lea.vmem %s0, %s302
      %s304 = smul.u32 %s22, 3
      %s305 = sadd.s32 %s304, %s23
      %s306 = smul.u32 %s22, 3
      %s307 = sadd.s32 %s306, %s23
      %p308 = scmp.lt.s32.totalorder %s307, 5
      %s309 = scalar_select %p308, %s307, 5
      %s310 = smul.addr %s309, 2
      %s311 = smul.addr %s310, 8
      %s312 = scalar_lea.vmem %s7, %s311
      %s313 = smul.u32 %s22, 3
      %s314 = sadd.s32 %s313, %s23
      %s316 = smul.u32 %s23, 6
      %v317 = vld [vmem:[%s303] sm:$0xf]
      %v318 = vld [vmem:[%s303 + $0x4] sm:$0xf]
      %v319 = vld [vmem:[%s303 + $0x8] sm:$0xf]
      %v320 = vld [vmem:[%s303 + $0xc] sm:$0xf]
      %v321 = vld [vmem:[%s303 + $0x10] sm:$0xf]
      %v322 = vld [vmem:[%s303 + $0x14] sm:$0xf]
      %v323 = vld [vmem:[%s303 + $0x18] sm:$0xf]
      %v324 = vld [vmem:[%s303 + $0x1c] sm:$0xf]
      %v325 = vld [vmem:[%s303 + $0x20] sm:$0xf]
      %v326 = vld [vmem:[%s303 + $0x24] sm:$0xf]
      %v327 = vld [vmem:[%s303 + $0x28] sm:$0xf]
      %v328 = vld [vmem:[%s303 + $0x2c] sm:$0xf]
      %v329 = vld [vmem:[%s303 + $0x30] sm:$0xf]
      %v330 = vld [vmem:[%s303 + $0x34] sm:$0xf]
      %v331 = vld [vmem:[%s303 + $0x38] sm:$0xf]
      %v332 = vld [vmem:[%s303 + $0x3c] sm:$0xf]
      %v333 = vld [vmem:[%s303 + $0x40] sm:$0xf]
      %v334 = vld [vmem:[%s303 + $0x44] sm:$0xf]
      %v335 = vld [vmem:[%s303 + $0x48] sm:$0xf]
      %v336 = vld [vmem:[%s303 + $0x4c] sm:$0xf]
      %v337 = vld [vmem:[%s303 + $0x50] sm:$0xf]
      %v338 = vld [vmem:[%s303 + $0x54] sm:$0xf]
      %v339 = vld [vmem:[%s303 + $0x58] sm:$0xf]
      %v340 = vld [vmem:[%s303 + $0x5c] sm:$0xf]
      %v341 = vld [vmem:[%s303 + $0x60] sm:$0xf]
      %v342 = vld [vmem:[%s303 + $0x64] sm:$0xf]
      %v343 = vld [vmem:[%s303 + $0x68] sm:$0xf]
      %v344 = vld [vmem:[%s303 + $0x6c] sm:$0xf]
      %v345 = vld [vmem:[%s303 + $0x70] sm:$0xf]
      %v346 = vld [vmem:[%s303 + $0x74] sm:$0xf]
      %v347 = vld [vmem:[%s303 + $0x78] sm:$0xf]
      %v348 = vld [vmem:[%s303 + $0x7c] sm:$0xf]
      %v349 = vld [vmem:[%s303 + $0x80] sm:$0xf]
      %v350 = vld [vmem:[%s1] sm:$0x3]
      %v351 = vld [vmem:[%s303 + $0x84] sm:$0x1]
      %s352 = scalar_lea.vmem %s1, 2
      %v353 = vld [vmem:[%s352] sm:$0x3]
      %v388 = vunpack.c.l.b16 %v317
      %v389 = vunpack.c.l.b16 %v318
      %v390 = vunpack.c.l.b16 %v319
      %v391 = vunpack.c.l.b16 %v320
      %v392 = vunpack.c.l.b16 %v321
      %v393 = vunpack.c.l.b16 %v322
      %v394 = vunpack.c.l.b16 %v323
      %v395 = vunpack.c.l.b16 %v324
      %v396 = vunpack.c.l.b16 %v325
      %v397 = vunpack.c.l.b16 %v326
      %v398 = vunpack.c.l.b16 %v327
      %v399 = vunpack.c.l.b16 %v328
      %v400 = vunpack.c.l.b16 %v329
      %v401 = vunpack.c.l.b16 %v330
      %v402 = vunpack.c.l.b16 %v331
      %v403 = vunpack.c.l.b16 %v332
      %v404 = vunpack.c.l.b16 %v333
      %v405 = vunpack.c.l.b16 %v334
      %v406 = vunpack.c.l.b16 %v335
      %v407 = vunpack.c.l.b16 %v336
      %v408 = vunpack.c.l.b16 %v337
      %v409 = vunpack.c.l.b16 %v338
      %v410 = vunpack.c.l.b16 %v339
      %v411 = vunpack.c.l.b16 %v340
      %v412 = vunpack.c.l.b16 %v341
      %v413 = vunpack.c.l.b16 %v342
      %v414 = vunpack.c.l.b16 %v343
      %v415 = vunpack.c.l.b16 %v344
      %v416 = vunpack.c.l.b16 %v345
      %v417 = vunpack.c.l.b16 %v346
      %v418 = vunpack.c.l.b16 %v347
      %v419 = vunpack.c.l.b16 %v348
      %v420 = vunpack.c.l.b16 %v349
      %v421 = vunpack.c.l.b16 %v351
      %v422 = vpack.c.b16 %v389, %v388
      %v423 = vpack.c.b16 %v391, %v390
      %v424 = vpack.c.b16 %v393, %v392
      %v425 = vpack.c.b16 %v395, %v394
      %v426 = vpack.c.b16 %v397, %v396
      %v427 = vpack.c.b16 %v399, %v398
      %v428 = vpack.c.b16 %v401, %v400
      %v429 = vpack.c.b16 %v403, %v402
      %v430 = vpack.c.b16 %v405, %v404
      %v431 = vpack.c.b16 %v407, %v406
      %v432 = vpack.c.b16 %v409, %v408
      %v433 = vpack.c.b16 %v411, %v410
      %v434 = vpack.c.b16 %v413, %v412
      %v435 = vpack.c.b16 %v415, %v414
      %v436 = vpack.c.b16 %v417, %v416
      %v437 = vpack.c.b16 %v419, %v418
      %v438 = vpack.c.b16 %v421, %v420
      %vm439 = vsmask.f32 7424
      %v441 = vshrl.u32 %v422, 16
      %v443 = vshll.u32 %v422, 16
      %v445 = vrot.slane %v443, 1
      %v446 = vor.u32 %v441, %v445
      %v448 = vshll.u32 %v423, 16
      %v450 = vrot.slane %v448, 1
      %v451 = vsel %vm439, %v446, %v450
      %v452 = vshrl.u32 %v423, 16
      %v454 = vor.u32 %v452, %v450
      %v456 = vshll.u32 %v424, 16
      %v458 = vrot.slane %v456, 1
      %v459 = vsel %vm439, %v454, %v458
      %v460 = vshrl.u32 %v424, 16
      %v462 = vor.u32 %v460, %v458
      %v464 = vshll.u32 %v425, 16
      %v466 = vrot.slane %v464, 1
      %v467 = vsel %vm439, %v462, %v466
      %v468 = vshrl.u32 %v425, 16
      %v470 = vor.u32 %v468, %v466
      %v472 = vshll.u32 %v426, 16
      %v474 = vrot.slane %v472, 1
      %v475 = vsel %vm439, %v470, %v474
      %v476 = vshrl.u32 %v426, 16
      %v478 = vor.u32 %v476, %v474
      %v480 = vshll.u32 %v427, 16
      %v482 = vrot.slane %v480, 1
      %v483 = vsel %vm439, %v478, %v482
      %v484 = vshrl.u32 %v427, 16
      %v486 = vor.u32 %v484, %v482
      %v488 = vshll.u32 %v428, 16
      %v490 = vrot.slane %v488, 1
      %v491 = vsel %vm439, %v486, %v490
      %v492 = vshrl.u32 %v428, 16
      %v494 = vor.u32 %v492, %v490
      %v496 = vshll.u32 %v429, 16
      %v498 = vrot.slane %v496, 1
      %v499 = vsel %vm439, %v494, %v498
      %v500 = vshrl.u32 %v429, 16
      %v502 = vor.u32 %v500, %v498
      %v504 = vshll.u32 %v430, 16
      %v506 = vrot.slane %v504, 1
      %v507 = vsel %vm439, %v502, %v506
      %v508 = vshrl.u32 %v430, 16
      %v510 = vor.u32 %v508, %v506
      %v512 = vshll.u32 %v431, 16
      %v514 = vrot.slane %v512, 1
      %v515 = vsel %vm439, %v510, %v514
      %v516 = vshrl.u32 %v431, 16
      %v518 = vor.u32 %v516, %v514
      %v520 = vshll.u32 %v432, 16
      %v522 = vrot.slane %v520, 1
      %v523 = vsel %vm439, %v518, %v522
      %v524 = vshrl.u32 %v432, 16
      %v526 = vor.u32 %v524, %v522
      %v528 = vshll.u32 %v433, 16
      %v530 = vrot.slane %v528, 1
      %v531 = vsel %vm439, %v526, %v530
      %v532 = vshrl.u32 %v433, 16
      %v534 = vor.u32 %v532, %v530
      %v536 = vshll.u32 %v434, 16
      %v538 = vrot.slane %v536, 1
      %v539 = vsel %vm439, %v534, %v538
      %v540 = vshrl.u32 %v434, 16
      %v542 = vor.u32 %v540, %v538
      %v544 = vshll.u32 %v435, 16
      %v546 = vrot.slane %v544, 1
      %v547 = vsel %vm439, %v542, %v546
      %v548 = vshrl.u32 %v435, 16
      %v550 = vor.u32 %v548, %v546
      %v552 = vshll.u32 %v436, 16
      %v554 = vrot.slane %v552, 1
      %v555 = vsel %vm439, %v550, %v554
      %v556 = vshrl.u32 %v436, 16
      %v558 = vor.u32 %v556, %v554
      %v560 = vshll.u32 %v437, 16
      %v562 = vrot.slane %v560, 1
      %v563 = vsel %vm439, %v558, %v562
      %v564 = vshrl.u32 %v437, 16
      %v566 = vor.u32 %v564, %v562
      %v568 = vshll.u32 %v438, 16
      %v570 = vrot.slane %v568, 1
      %v571 = vsel %vm439, %v566, %v570
      %v572 = vshrl.u32 %v438, 16
      %v574 = vor.u32 %v572, %v570
      %vm575 = vcmask 23552
      %v577 = vsel %vm575, %v451, 0
      %v580 = vsel %vm575, %v459, 0
      %v583 = vsel %vm575, %v467, 0
      %v586 = vsel %vm575, %v475, 0
      %v589 = vsel %vm575, %v483, 0
      %v592 = vsel %vm575, %v491, 0
      %v595 = vsel %vm575, %v499, 0
      %v598 = vsel %vm575, %v507, 0
      %v601 = vsel %vm575, %v515, 0
      %v604 = vsel %vm575, %v523, 0
      %v607 = vsel %vm575, %v531, 0
      %v610 = vsel %vm575, %v539, 0
      %v613 = vsel %vm575, %v547, 0
      %v616 = vsel %vm575, %v555, 0
      %v619 = vsel %vm575, %v563, 0
      %v622 = vsel %vm575, %v571, 0
      %v625 = vsel %vm575, %v574, 0
      %vm627 = vcmask 1040384
      %vm628 = vcmask 1041408
      %v629 = vsel %vm627, 4294967295, 65535
      %v630 = vsel %vm628, %v629, 0
      %v632 = vand.u32 %v353, %v630
      %634 = vmatprep.subr.bf16.mxu0 0
      %635 = vmatpush1.bf16.msra.mxu0 %v632
      %636 = vmatprep.subr.bf16.mxu0 0
      %637 = vmatpush1.bf16.msra.mxu0 0
      %638 = vmatprep.subr.bf16.mxu0 0
      %639 = vmatpush1.bf16.msra.mxu0 0
      %640 = vmatprep.subr.bf16.mxu0 0
      %641 = vmatpush1.bf16.msra.mxu0 0
      %642 = vmatprep.subr.bf16.mxu0 0
      %643 = vmatpush1.bf16.msra.mxu0 0
      %644 = vmatprep.subr.bf16.mxu0 0
      %645 = vmatpush1.bf16.msra.mxu0 0
      %646 = vmatprep.subr.bf16.mxu0 0
      %647 = vmatpush1.bf16.msra.mxu0 0
      %648 = vmatprep.subr.bf16.mxu0 0
      %649 = vmatpush1.bf16.msra.mxu0 0
      %650 = vmatprep.subr.bf16.mxu0 0
      %651 = vmatpush1.bf16.msra.mxu0 0
      %652 = vmatprep.subr.bf16.mxu0 0
      %653 = vmatpush1.bf16.msra.mxu0 0
      %654 = vmatprep.subr.bf16.mxu0 0
      %655 = vmatpush1.bf16.msra.mxu0 0
      %656 = vmatprep.subr.bf16.mxu0 0
      %657 = vmatpush1.bf16.msra.mxu0 0
      %658 = vmatprep.subr.bf16.mxu0 0
      %659 = vmatpush1.bf16.msra.mxu0 0
      %660 = vmatprep.subr.bf16.mxu0 0
      %661 = vmatpush1.bf16.msra.mxu0 0
      %662 = vmatprep.subr.bf16.mxu0 0
      %663 = vmatpush1.bf16.msra.mxu0 0
      %664 = vmatprep.subr.bf16.mxu0 0
      %665 = vmatpush1.bf16.msra.mxu0 0
      %666 = vmatprep.mubr.bf16.mxu0 0
      %667 = vmatmul.mubr.bf16.gmra.mrb[0].mxu0 %v577
      %v668 = vpop.f32.mrb[0].mxu0
      %v669 = vadd.f32 0.0, %v668
      %v670 = vpop.f32.mrb[0].mxu0
      %v671 = vpop.f32.mrb[0].mxu0
      %v672 = vadd.f32 0.0, %v671
      %v673 = vpop.f32.mrb[0].mxu0
      %674 = vmatprep.mubr.bf16.mxu0 0
      %675 = vmatmul.mubr.bf16.gmra.mrb[0].mxu0 %v580
      %v676 = vpop.f32.mrb[0].mxu0
      %v677 = vadd.f32 0.0, %v676
      %v678 = vpop.f32.mrb[0].mxu0
      %v679 = vpop.f32.mrb[0].mxu0
      %v680 = vadd.f32 0.0, %v679
      %v681 = vpop.f32.mrb[0].mxu0
      %682 = vmatprep.mubr.bf16.mxu0 0
      %683 = vmatmul.mubr.bf16.gmra.mrb[0].mxu0 %v583
      %v684 = vpop.f32.mrb[0].mxu0
      %v685 = vadd.f32 0.0, %v684
      %v686 = vpop.f32.mrb[0].mxu0
      %v687 = vpop.f32.mrb[0].mxu0
      %v688 = vadd.f32 0.0, %v687
      %v689 = vpop.f32.mrb[0].mxu0
      %690 = vmatprep.mubr.bf16.mxu0 0
      %691 = vmatmul.mubr.bf16.gmra.mrb[0].mxu0 %v586
      %v692 = vpop.f32.mrb[0].mxu0
      %v693 = vadd.f32 0.0, %v692
      %v694 = vpop.f32.mrb[0].mxu0
      %v695 = vpop.f32.mrb[0].mxu0
      %v696 = vadd.f32 0.0, %v695
      %v697 = vpop.f32.mrb[0].mxu0
      %698 = vmatprep.mubr.bf16.mxu0 0
      %699 = vmatmul.mubr.bf16.gmra.mrb[0].mxu0 %v589
      %v700 = vpop.f32.mrb[0].mxu0
      %v701 = vadd.f32 0.0, %v700
      %v702 = vpop.f32.mrb[0].mxu0
      %v703 = vpop.f32.mrb[0].mxu0
      %v704 = vadd.f32 0.0, %v703
      %v705 = vpop.f32.mrb[0].mxu0
      %706 = vmatprep.mubr.bf16.mxu0 0
      %707 = vmatmul.mubr.bf16.gmra.mrb[0].mxu0 %v592
      %v708 = vpop.f32.mrb[0].mxu0
      %v709 = vadd.f32 0.0, %v708
      %v710 = vpop.f32.mrb[0].mxu0
      %v711 = vpop.f32.mrb[0].mxu0
      %v712 = vadd.f32 0.0, %v711
      %v713 = vpop.f32.mrb[0].mxu0
      %714 = vmatprep.mubr.bf16.mxu0 0
      %715 = vmatmul.mubr.bf16.gmra.mrb[0].mxu0 %v595
      %v716 = vpop.f32.mrb[0].mxu0
      %v717 = vadd.f32 0.0, %v716
      %v718 = vpop.f32.mrb[0].mxu0
      %v719 = vpop.f32.mrb[0].mxu0
      %v720 = vadd.f32 0.0, %v719
      %v721 = vpop.f32.mrb[0].mxu0
      %722 = vmatprep.mubr.bf16.mxu0 0
      %723 = vmatmul.mubr.bf16.gmra.mrb[0].mxu0 %v598
      %v724 = vpop.f32.mrb[0].mxu0
      %v725 = vadd.f32 0.0, %v724
      %v726 = vpop.f32.mrb[0].mxu0
      %v727 = vpop.f32.mrb[0].mxu0
      %v728 = vadd.f32 0.0, %v727
      %v729 = vpop.f32.mrb[0].mxu0
      %730 = vmatprep.mubr.bf16.mxu0 0
      %731 = vmatmul.mubr.bf16.gmra.mrb[0].mxu0 %v601
      %v732 = vpop.f32.mrb[0].mxu0
      %v733 = vadd.f32 0.0, %v732
      %v734 = vpop.f32.mrb[0].mxu0
      %v735 = vpop.f32.mrb[0].mxu0
      %v736 = vadd.f32 0.0, %v735
      %v737 = vpop.f32.mrb[0].mxu0
      %738 = vmatprep.mubr.bf16.mxu0 0
      %739 = vmatmul.mubr.bf16.gmra.mrb[0].mxu0 %v604
      %v740 = vpop.f32.mrb[0].mxu0
      %v741 = vadd.f32 0.0, %v740
      %v742 = vpop.f32.mrb[0].mxu0
      %v743 = vpop.f32.mrb[0].mxu0
      %v744 = vadd.f32 0.0, %v743
      %v745 = vpop.f32.mrb[0].mxu0
      %746 = vmatprep.mubr.bf16.mxu0 0
      %747 = vmatmul.mubr.bf16.gmra.mrb[0].mxu0 %v607
      %v748 = vpop.f32.mrb[0].mxu0
      %v749 = vadd.f32 0.0, %v748
      %v750 = vpop.f32.mrb[0].mxu0
      %v751 = vpop.f32.mrb[0].mxu0
      %v752 = vadd.f32 0.0, %v751
      %v753 = vpop.f32.mrb[0].mxu0
      %754 = vmatprep.mubr.bf16.mxu0 0
      %755 = vmatmul.mubr.bf16.gmra.mrb[0].mxu0 %v610
      %v756 = vpop.f32.mrb[0].mxu0
      %v757 = vadd.f32 0.0, %v756
      %v758 = vpop.f32.mrb[0].mxu0
      %v759 = vpop.f32.mrb[0].mxu0
      %v760 = vadd.f32 0.0, %v759
      %v761 = vpop.f32.mrb[0].mxu0
      %762 = vmatprep.mubr.bf16.mxu0 0
      %763 = vmatmul.mubr.bf16.gmra.mrb[0].mxu0 %v613
      %v764 = vpop.f32.mrb[0].mxu0
      %v765 = vadd.f32 0.0, %v764
      %v766 = vpop.f32.mrb[0].mxu0
      %v767 = vpop.f32.mrb[0].mxu0
      %v768 = vadd.f32 0.0, %v767
      %v769 = vpop.f32.mrb[0].mxu0
      %770 = vmatprep.mubr.bf16.mxu0 0
      %771 = vmatmul.mubr.bf16.gmra.mrb[0].mxu0 %v616
      %v772 = vpop.f32.mrb[0].mxu0
      %v773 = vadd.f32 0.0, %v772
      %v774 = vpop.f32.mrb[0].mxu0
      %v775 = vpop.f32.mrb[0].mxu0
      %v776 = vadd.f32 0.0, %v775
      %v777 = vpop.f32.mrb[0].mxu0
      %778 = vmatprep.mubr.bf16.mxu0 0
      %779 = vmatmul.mubr.bf16.gmra.mrb[0].mxu0 %v619
      %v780 = vpop.f32.mrb[0].mxu0
      %v781 = vadd.f32 0.0, %v780
      %v782 = vpop.f32.mrb[0].mxu0
      %v783 = vpop.f32.mrb[0].mxu0
      %v784 = vadd.f32 0.0, %v783
      %v785 = vpop.f32.mrb[0].mxu0
      %786 = vmatprep.mubr.bf16.mxu0 0
      %787 = vmatmul.mubr.bf16.gmra.mrb[0].mxu0 %v622
      %v788 = vpop.f32.mrb[0].mxu0
      %v789 = vadd.f32 0.0, %v788
      %v790 = vpop.f32.mrb[0].mxu0
      %v791 = vpop.f32.mrb[0].mxu0
      %v792 = vadd.f32 0.0, %v791
      %v793 = vpop.f32.mrb[0].mxu0
      %794 = vmatprep.mubr.bf16.mxu0 0
      %795 = vmatmul.mubr.bf16.gmra.mrb[0].mxu0 %v625
      %v796 = vpop.f32.mrb[0].mxu0
      %v797 = vadd.f32 0.0, %v796
      %v798 = vpop.f32.mrb[0].mxu0
      %v799 = vpop.f32.mrb[0].mxu0
      %v800 = vpop.f32.mrb[0].mxu0
      %801 = vdwg.mxu0
      %v802 = vpack.c.b16 %v420, %v420
      %v803 = vsel %vm575, %v422, 0
      %v805 = vsel %vm575, %v423, 0
      %v807 = vsel %vm575, %v424, 0
      %v809 = vsel %vm575, %v425, 0
      %v811 = vsel %vm575, %v426, 0
      %v813 = vsel %vm575, %v427, 0
      %v815 = vsel %vm575, %v428, 0
      %v817 = vsel %vm575, %v429, 0
      %v819 = vsel %vm575, %v430, 0
      %v821 = vsel %vm575, %v431, 0
      %v823 = vsel %vm575, %v432, 0
      %v825 = vsel %vm575, %v433, 0
      %v827 = vsel %vm575, %v434, 0
      %v829 = vsel %vm575, %v435, 0
      %v831 = vsel %vm575, %v436, 0
      %v833 = vsel %vm575, %v437, 0
      %v836 = vsel %vm575, %v802, 0
      %v839 = vand.u32 %v350, %v630
      %841 = vmatprep.subr.bf16.mxu0 0
      %842 = vmatpush1.bf16.msra.mxu0 %v839
      %843 = vmatprep.subr.bf16.mxu0 0
      %844 = vmatpush1.bf16.msra.mxu0 0
      %845 = vmatprep.subr.bf16.mxu0 0
      %846 = vmatpush1.bf16.msra.mxu0 0
      %847 = vmatprep.subr.bf16.mxu0 0
      %848 = vmatpush1.bf16.msra.mxu0 0
      %849 = vmatprep.subr.bf16.mxu0 0
      %850 = vmatpush1.bf16.msra.mxu0 0
      %851 = vmatprep.subr.bf16.mxu0 0
      %852 = vmatpush1.bf16.msra.mxu0 0
      %853 = vmatprep.subr.bf16.mxu0 0
      %854 = vmatpush1.bf16.msra.mxu0 0
      %855 = vmatprep.subr.bf16.mxu0 0
      %856 = vmatpush1.bf16.msra.mxu0 0
      %857 = vmatprep.subr.bf16.mxu0 0
      %858 = vmatpush1.bf16.msra.mxu0 0
      %859 = vmatprep.subr.bf16.mxu0 0
      %860 = vmatpush1.bf16.msra.mxu0 0
      %861 = vmatprep.subr.bf16.mxu0 0
      %862 = vmatpush1.bf16.msra.mxu0 0
      %863 = vmatprep.subr.bf16.mxu0 0
      %864 = vmatpush1.bf16.msra.mxu0 0
      %865 = vmatprep.subr.bf16.mxu0 0
      %866 = vmatpush1.bf16.msra.mxu0 0
      %867 = vmatprep.subr.bf16.mxu0 0
      %868 = vmatpush1.bf16.msra.mxu0 0
      %869 = vmatprep.subr.bf16.mxu0 0
      %870 = vmatpush1.bf16.msra.mxu0 0
      %871 = vmatprep.subr.bf16.mxu0 0
      %872 = vmatpush1.bf16.msra.mxu0 0
      %873 = vmatprep.mubr.bf16.mxu0 0
      %874 = vmatmul.mubr.bf16.gmra.mrb[0].mxu0 %v803
      %v875 = vpop.f32.mrb[0].mxu0
      %v876 = vadd.f32 %v669, %v875
      %v877 = vpop.f32.mrb[0].mxu0
      %v878 = vpop.f32.mrb[0].mxu0
      %v879 = vadd.f32 %v672, %v878
      %v880 = vpop.f32.mrb[0].mxu0
      %881 = vmatprep.mubr.bf16.mxu0 0
      %882 = vmatmul.mubr.bf16.gmra.mrb[0].mxu0 %v805
      %v883 = vpop.f32.mrb[0].mxu0
      %v884 = vadd.f32 %v677, %v883
      %v885 = vpop.f32.mrb[0].mxu0
      %v886 = vpop.f32.mrb[0].mxu0
      %v887 = vadd.f32 %v680, %v886
      %v888 = vpop.f32.mrb[0].mxu0
      %889 = vmatprep.mubr.bf16.mxu0 0
      %890 = vmatmul.mubr.bf16.gmra.mrb[0].mxu0 %v807
      %v891 = vpop.f32.mrb[0].mxu0
      %v892 = vadd.f32 %v685, %v891
      %v893 = vpop.f32.mrb[0].mxu0
      %v894 = vpop.f32.mrb[0].mxu0
      %v895 = vadd.f32 %v688, %v894
      %v896 = vpop.f32.mrb[0].mxu0
      %897 = vmatprep.mubr.bf16.mxu0 0
      %898 = vmatmul.mubr.bf16.gmra.mrb[0].mxu0 %v809
      %v899 = vpop.f32.mrb[0].mxu0
      %v900 = vadd.f32 %v693, %v899
      %v901 = vpop.f32.mrb[0].mxu0
      %v902 = vpop.f32.mrb[0].mxu0
      %v903 = vadd.f32 %v696, %v902
      %v904 = vpop.f32.mrb[0].mxu0
      %905 = vmatprep.mubr.bf16.mxu0 0
      %906 = vmatmul.mubr.bf16.gmra.mrb[0].mxu0 %v811
      %v907 = vpop.f32.mrb[0].mxu0
      %v908 = vadd.f32 %v701, %v907
      %v909 = vpop.f32.mrb[0].mxu0
      %v910 = vpop.f32.mrb[0].mxu0
      %v911 = vadd.f32 %v704, %v910
      %v912 = vpop.f32.mrb[0].mxu0
      %913 = vmatprep.mubr.bf16.mxu0 0
      %914 = vmatmul.mubr.bf16.gmra.mrb[0].mxu0 %v813
      %v915 = vpop.f32.mrb[0].mxu0
      %v916 = vadd.f32 %v709, %v915
      %v917 = vpop.f32.mrb[0].mxu0
      %v918 = vpop.f32.mrb[0].mxu0
      %v919 = vadd.f32 %v712, %v918
      %v920 = vpop.f32.mrb[0].mxu0
      %921 = vmatprep.mubr.bf16.mxu0 0
      %922 = vmatmul.mubr.bf16.gmra.mrb[0].mxu0 %v815
      %v923 = vpop.f32.mrb[0].mxu0
      %v924 = vadd.f32 %v717, %v923
      %v925 = vpop.f32.mrb[0].mxu0
      %v926 = vpop.f32.mrb[0].mxu0
      %v927 = vadd.f32 %v720, %v926
      %v928 = vpop.f32.mrb[0].mxu0
      %929 = vmatprep.mubr.bf16.mxu0 0
      %930 = vmatmul.mubr.bf16.gmra.mrb[0].mxu0 %v817
      %v931 = vpop.f32.mrb[0].mxu0
      %v932 = vadd.f32 %v725, %v931
      %v933 = vpop.f32.mrb[0].mxu0
      %v934 = vpop.f32.mrb[0].mxu0
      %v935 = vadd.f32 %v728, %v934
      %v936 = vpop.f32.mrb[0].mxu0
      %937 = vmatprep.mubr.bf16.mxu0 0
      %938 = vmatmul.mubr.bf16.gmra.mrb[0].mxu0 %v819
      %v939 = vpop.f32.mrb[0].mxu0
      %v940 = vadd.f32 %v733, %v939
      %v941 = vpop.f32.mrb[0].mxu0
      %v942 = vpop.f32.mrb[0].mxu0
      %v943 = vadd.f32 %v736, %v942
      %v944 = vpop.f32.mrb[0].mxu0
      %945 = vmatprep.mubr.bf16.mxu0 0
      %946 = vmatmul.mubr.bf16.gmra.mrb[0].mxu0 %v821
      %v947 = vpop.f32.mrb[0].mxu0
      %v948 = vadd.f32 %v741, %v947
      %v949 = vpop.f32.mrb[0].mxu0
      %v950 = vpop.f32.mrb[0].mxu0
      %v951 = vadd.f32 %v744, %v950
      %v952 = vpop.f32.mrb[0].mxu0
      %953 = vmatprep.mubr.bf16.mxu0 0
      %954 = vmatmul.mubr.bf16.gmra.mrb[0].mxu0 %v823
      %v955 = vpop.f32.mrb[0].mxu0
      %v956 = vadd.f32 %v749, %v955
      %v957 = vpop.f32.mrb[0].mxu0
      %v958 = vpop.f32.mrb[0].mxu0
      %v959 = vadd.f32 %v752, %v958
      %v960 = vpop.f32.mrb[0].mxu0
      %961 = vmatprep.mubr.bf16.mxu0 0
      %962 = vmatmul.mubr.bf16.gmra.mrb[0].mxu0 %v825
      %v963 = vpop.f32.mrb[0].mxu0
      %v964 = vadd.f32 %v757, %v963
      %v965 = vpop.f32.mrb[0].mxu0
      %v966 = vpop.f32.mrb[0].mxu0
      %v967 = vadd.f32 %v760, %v966
      %v968 = vpop.f32.mrb[0].mxu0
      %969 = vmatprep.mubr.bf16.mxu0 0
      %970 = vmatmul.mubr.bf16.gmra.mrb[0].mxu0 %v827
      %v971 = vpop.f32.mrb[0].mxu0
      %v972 = vadd.f32 %v765, %v971
      %v973 = vpop.f32.mrb[0].mxu0
      %v974 = vpop.f32.mrb[0].mxu0
      %v975 = vadd.f32 %v768, %v974
      %v976 = vpop.f32.mrb[0].mxu0
      %977 = vmatprep.mubr.bf16.mxu0 0
      %978 = vmatmul.mubr.bf16.gmra.mrb[0].mxu0 %v829
      %v979 = vpop.f32.mrb[0].mxu0
      %v980 = vadd.f32 %v773, %v979
      %v981 = vpop.f32.mrb[0].mxu0
      %v982 = vpop.f32.mrb[0].mxu0
      %v983 = vadd.f32 %v776, %v982
      %v984 = vpop.f32.mrb[0].mxu0
      %985 = vmatprep.mubr.bf16.mxu0 0
      %986 = vmatmul.mubr.bf16.gmra.mrb[0].mxu0 %v831
      %v987 = vpop.f32.mrb[0].mxu0
      %v988 = vadd.f32 %v781, %v987
      %v989 = vpop.f32.mrb[0].mxu0
      %v990 = vpop.f32.mrb[0].mxu0
      %v991 = vadd.f32 %v784, %v990
      %v992 = vpop.f32.mrb[0].mxu0
      %993 = vmatprep.mubr.bf16.mxu0 0
      %994 = vmatmul.mubr.bf16.gmra.mrb[0].mxu0 %v833
      %v995 = vpop.f32.mrb[0].mxu0
      %v996 = vadd.f32 %v789, %v995
      %v997 = vpop.f32.mrb[0].mxu0
      %v998 = vpop.f32.mrb[0].mxu0
      %v999 = vadd.f32 %v792, %v998
      %v1000 = vpop.f32.mrb[0].mxu0
      %1001 = vmatprep.mubr.bf16.mxu0 0
      %1002 = vmatmul.mubr.bf16.gmra.mrb[0].mxu0 %v836
      %v1003 = vpop.f32.mrb[0].mxu0
      %v1004 = vadd.f32 %v797, %v1003
      %v1005 = vpop.f32.mrb[0].mxu0
      %v1006 = vpop.f32.mrb[0].mxu0
      %v1007 = vpop.f32.mrb[0].mxu0
      %1008 = vdwg.mxu0
      %v1009 = vld [vmem:[%s303] sm:$0xe]
      %s1010 = scalar_lea.vmem %s1, 4
      %v1011 = vld [vmem:[%s1010] sm:$0x3]
      %v1013 = vunpack.c.l.b16 %v1009
      %v1014 = vpack.c.b16 %v389, %v1013
      %vm1015 = vcmask 1046528
      %v1016 = vrot.slane %v1014, 1
      %v1017 = vrot.slane %v423, 1
      %v1018 = vsel %vm1015, %v1016, %v1017
      %v1019 = vrot.slane %v424, 1
      %v1020 = vsel %vm1015, %v1017, %v1019
      %v1021 = vrot.slane %v425, 1
      %v1022 = vsel %vm1015, %v1019, %v1021
      %v1023 = vrot.slane %v426, 1
      %v1024 = vsel %vm1015, %v1021, %v1023
      %v1025 = vrot.slane %v427, 1
      %v1026 = vsel %vm1015, %v1023, %v1025
      %v1027 = vrot.slane %v428, 1
      %v1028 = vsel %vm1015, %v1025, %v1027
      %v1029 = vrot.slane %v429, 1
      %v1030 = vsel %vm1015, %v1027, %v1029
      %v1031 = vrot.slane %v430, 1
      %v1032 = vsel %vm1015, %v1029, %v1031
      %v1033 = vrot.slane %v431, 1
      %v1034 = vsel %vm1015, %v1031, %v1033
      %v1035 = vrot.slane %v432, 1
      %v1036 = vsel %vm1015, %v1033, %v1035
      %v1037 = vrot.slane %v433, 1
      %v1038 = vsel %vm1015, %v1035, %v1037
      %v1039 = vrot.slane %v434, 1
      %v1040 = vsel %vm1015, %v1037, %v1039
      %v1041 = vrot.slane %v435, 1
      %v1042 = vsel %vm1015, %v1039, %v1041
      %v1043 = vrot.slane %v436, 1
      %v1044 = vsel %vm1015, %v1041, %v1043
      %v1045 = vrot.slane %v437, 1
      %v1046 = vsel %vm1015, %v1043, %v1045
      %v1047 = vrot.slane %v438, 1
      %v1048 = vsel %vm1015, %v1045, %v1047
      %v1050 = vsel %vm575, %v1018, 0
      %v1053 = vsel %vm575, %v1020, 0
      %v1056 = vsel %vm575, %v1022, 0
      %v1059 = vsel %vm575, %v1024, 0
      %v1062 = vsel %vm575, %v1026, 0
      %v1065 = vsel %vm575, %v1028, 0
      %v1068 = vsel %vm575, %v1030, 0
      %v1071 = vsel %vm575, %v1032, 0
      %v1074 = vsel %vm575, %v1034, 0
      %v1077 = vsel %vm575, %v1036, 0
      %v1080 = vsel %vm575, %v1038, 0
      %v1083 = vsel %vm575, %v1040, 0
      %v1086 = vsel %vm575, %v1042, 0
      %v1089 = vsel %vm575, %v1044, 0
      %v1092 = vsel %vm575, %v1046, 0
      %v1095 = vsel %vm575, %v1048, 0
      %v1098 = vsel %vm575, %v1047, 0
      %v1101 = vand.u32 %v1011, %v630
      %1103 = vmatprep.subr.bf16.mxu0 0
      %1104 = vmatpush1.bf16.msra.mxu0 %v1101
      %1105 = vmatprep.subr.bf16.mxu0 0
      %1106 = vmatpush1.bf16.msra.mxu0 0
      %1107 = vmatprep.subr.bf16.mxu0 0
      %1108 = vmatpush1.bf16.msra.mxu0 0
      %1109 = vmatprep.subr.bf16.mxu0 0
      %1110 = vmatpush1.bf16.msra.mxu0 0
      %1111 = vmatprep.subr.bf16.mxu0 0
      %1112 = vmatpush1.bf16.msra.mxu0 0
      %1113 = vmatprep.subr.bf16.mxu0 0
      %1114 = vmatpush1.bf16.msra.mxu0 0
      %1115 = vmatprep.subr.bf16.mxu0 0
      %1116 = vmatpush1.bf16.msra.mxu0 0
      %1117 = vmatprep.subr.bf16.mxu0 0
      %1118 = vmatpush1.bf16.msra.mxu0 0
      %1119 = vmatprep.subr.bf16.mxu0 0
      %1120 = vmatpush1.bf16.msra.mxu0 0
      %1121 = vmatprep.subr.bf16.mxu0 0
      %1122 = vmatpush1.bf16.msra.mxu0 0
      %1123 = vmatprep.subr.bf16.mxu0 0
      %1124 = vmatpush1.bf16.msra.mxu0 0
      %1125 = vmatprep.subr.bf16.mxu0 0
      %1126 = vmatpush1.bf16.msra.mxu0 0
      %1127 = vmatprep.subr.bf16.mxu0 0
      %1128 = vmatpush1.bf16.msra.mxu0 0
      %1129 = vmatprep.subr.bf16.mxu0 0
      %1130 = vmatpush1.bf16.msra.mxu0 0
      %1131 = vmatprep.subr.bf16.mxu0 0
      %1132 = vmatpush1.bf16.msra.mxu0 0
      %1133 = vmatprep.subr.bf16.mxu0 0
      %1134 = vmatpush1.bf16.msra.mxu0 0
      %1135 = vmatprep.mubr.bf16.mxu0 0
      %1136 = vmatmul.mubr.bf16.gmra.mrb[0].mxu0 %v1050
      %v1137 = vpop.f32.mrb[0].mxu0
      %v1138 = vadd.f32 0.0, %v1137
      %v1139 = vpop.f32.mrb[0].mxu0
      %v1140 = vpop.f32.mrb[0].mxu0
      %v1141 = vadd.f32 0.0, %v1140
      %v1142 = vpop.f32.mrb[0].mxu0
      %1143 = vmatprep.mubr.bf16.mxu0 0
      %1144 = vmatmul.mubr.bf16.gmra.mrb[0].mxu0 %v1053
      %v1145 = vpop.f32.mrb[0].mxu0
      %v1146 = vadd.f32 0.0, %v1145
      %v1147 = vpop.f32.mrb[0].mxu0
      %v1148 = vpop.f32.mrb[0].mxu0
      %v1149 = vadd.f32 0.0, %v1148
      %v1150 = vpop.f32.mrb[0].mxu0
      %1151 = vmatprep.mubr.bf16.mxu0 0
      %1152 = vmatmul.mubr.bf16.gmra.mrb[0].mxu0 %v1056
      %v1153 = vpop.f32.mrb[0].mxu0
      %v1154 = vadd.f32 0.0, %v1153
      %v1155 = vpop.f32.mrb[0].mxu0
      %v1156 = vpop.f32.mrb[0].mxu0
      %v1157 = vadd.f32 0.0, %v1156
      %v1158 = vpop.f32.mrb[0].mxu0
      %1159 = vmatprep.mubr.bf16.mxu0 0
      %1160 = vmatmul.mubr.bf16.gmra.mrb[0].mxu0 %v1059
      %v1161 = vpop.f32.mrb[0].mxu0
      %v1162 = vadd.f32 0.0, %v1161
      %v1163 = vpop.f32.mrb[0].mxu0
      %v1164 = vpop.f32.mrb[0].mxu0
      %v1165 = vadd.f32 0.0, %v1164
      %v1166 = vpop.f32.mrb[0].mxu0
      %1167 = vmatprep.mubr.bf16.mxu0 0
      %1168 = vmatmul.mubr.bf16.gmra.mrb[0].mxu0 %v1062
      %v1169 = vpop.f32.mrb[0].mxu0
      %v1170 = vadd.f32 0.0, %v1169
      %v1171 = vpop.f32.mrb[0].mxu0
      %v1172 = vpop.f32.mrb[0].mxu0
      %v1173 = vadd.f32 0.0, %v1172
      %v1174 = vpop.f32.mrb[0].mxu0
      %1175 = vmatprep.mubr.bf16.mxu0 0
      %1176 = vmatmul.mubr.bf16.gmra.mrb[0].mxu0 %v1065
      %v1177 = vpop.f32.mrb[0].mxu0
      %v1178 = vadd.f32 0.0, %v1177
      %v1179 = vpop.f32.mrb[0].mxu0
      %v1180 = vpop.f32.mrb[0].mxu0
      %v1181 = vadd.f32 0.0, %v1180
      %v1182 = vpop.f32.mrb[0].mxu0
      %1183 = vmatprep.mubr.bf16.mxu0 0
      %1184 = vmatmul.mubr.bf16.gmra.mrb[0].mxu0 %v1068
      %v1185 = vpop.f32.mrb[0].mxu0
      %v1186 = vadd.f32 0.0, %v1185
      %v1187 = vpop.f32.mrb[0].mxu0
      %v1188 = vpop.f32.mrb[0].mxu0
      %v1189 = vadd.f32 0.0, %v1188
      %v1190 = vpop.f32.mrb[0].mxu0
      %1191 = vmatprep.mubr.bf16.mxu0 0
      %1192 = vmatmul.mubr.bf16.gmra.mrb[0].mxu0 %v1071
      %v1193 = vpop.f32.mrb[0].mxu0
      %v1194 = vadd.f32 0.0, %v1193
      %v1195 = vpop.f32.mrb[0].mxu0
      %v1196 = vpop.f32.mrb[0].mxu0
      %v1197 = vadd.f32 0.0, %v1196
      %v1198 = vpop.f32.mrb[0].mxu0
      %1199 = vmatprep.mubr.bf16.mxu0 0
      %1200 = vmatmul.mubr.bf16.gmra.mrb[0].mxu0 %v1074
      %v1201 = vpop.f32.mrb[0].mxu0
      %v1202 = vadd.f32 0.0, %v1201
      %v1203 = vpop.f32.mrb[0].mxu0
      %v1204 = vpop.f32.mrb[0].mxu0
      %v1205 = vadd.f32 0.0, %v1204
      %v1206 = vpop.f32.mrb[0].mxu0
      %1207 = vmatprep.mubr.bf16.mxu0 0
      %1208 = vmatmul.mubr.bf16.gmra.mrb[0].mxu0 %v1077
      %v1209 = vpop.f32.mrb[0].mxu0
      %v1210 = vadd.f32 0.0, %v1209
      %v1211 = vpop.f32.mrb[0].mxu0
      %v1212 = vpop.f32.mrb[0].mxu0
      %v1213 = vadd.f32 0.0, %v1212
      %v1214 = vpop.f32.mrb[0].mxu0
      %1215 = vmatprep.mubr.bf16.mxu0 0
      %1216 = vmatmul.mubr.bf16.gmra.mrb[0].mxu0 %v1080
      %v1217 = vpop.f32.mrb[0].mxu0
      %v1218 = vadd.f32 0.0, %v1217
      %v1219 = vpop.f32.mrb[0].mxu0
      %v1220 = vpop.f32.mrb[0].mxu0
      %v1221 = vadd.f32 0.0, %v1220
      %v1222 = vpop.f32.mrb[0].mxu0
      %1223 = vmatprep.mubr.bf16.mxu0 0
      %1224 = vmatmul.mubr.bf16.gmra.mrb[0].mxu0 %v1083
      %v1225 = vpop.f32.mrb[0].mxu0
      %v1226 = vadd.f32 0.0, %v1225
      %v1227 = vpop.f32.mrb[0].mxu0
      %v1228 = vpop.f32.mrb[0].mxu0
      %v1229 = vadd.f32 0.0, %v1228
      %v1230 = vpop.f32.mrb[0].mxu0
      %1231 = vmatprep.mubr.bf16.mxu0 0
      %1232 = vmatmul.mubr.bf16.gmra.mrb[0].mxu0 %v1086
      %v1233 = vpop.f32.mrb[0].mxu0
      %v1234 = vadd.f32 0.0, %v1233
      %v1235 = vpop.f32.mrb[0].mxu0
      %v1236 = vpop.f32.mrb[0].mxu0
      %v1237 = vadd.f32 0.0, %v1236
      %v1238 = vpop.f32.mrb[0].mxu0
      %1239 = vmatprep.mubr.bf16.mxu0 0
      %1240 = vmatmul.mubr.bf16.gmra.mrb[0].mxu0 %v1089
      %v1241 = vpop.f32.mrb[0].mxu0
      %v1242 = vadd.f32 0.0, %v1241
      %v1243 = vpop.f32.mrb[0].mxu0
      %v1244 = vpop.f32.mrb[0].mxu0
      %v1245 = vadd.f32 0.0, %v1244
      %v1246 = vpop.f32.mrb[0].mxu0
      %1247 = vmatprep.mubr.bf16.mxu0 0
      %1248 = vmatmul.mubr.bf16.gmra.mrb[0].mxu0 %v1092
      %v1249 = vpop.f32.mrb[0].mxu0
      %v1250 = vadd.f32 0.0, %v1249
      %v1251 = vpop.f32.mrb[0].mxu0
      %v1252 = vpop.f32.mrb[0].mxu0
      %v1253 = vadd.f32 0.0, %v1252
      %v1254 = vpop.f32.mrb[0].mxu0
      %1255 = vmatprep.mubr.bf16.mxu0 0
      %1256 = vmatmul.mubr.bf16.gmra.mrb[0].mxu0 %v1095
      %v1257 = vpop.f32.mrb[0].mxu0
      %v1258 = vadd.f32 0.0, %v1257
      %v1259 = vpop.f32.mrb[0].mxu0
      %v1260 = vpop.f32.mrb[0].mxu0
      %v1261 = vadd.f32 0.0, %v1260
      %v1262 = vpop.f32.mrb[0].mxu0
      %1263 = vmatprep.mubr.bf16.mxu0 0
      %1264 = vmatmul.mubr.bf16.gmra.mrb[0].mxu0 %v1098
      %v1265 = vpop.f32.mrb[0].mxu0
      %v1266 = vadd.f32 0.0, %v1265
      %v1267 = vpop.f32.mrb[0].mxu0
      %v1268 = vpop.f32.mrb[0].mxu0
      %v1269 = vpop.f32.mrb[0].mxu0
      %1270 = vdwg.mxu0
      %v1271 = vadd.f32 %v876, %v1138
      %v1272 = vadd.f32 %v879, %v1141
      %v1273 = vadd.f32 %v884, %v1146
      %v1274 = vadd.f32 %v887, %v1149
      %v1275 = vadd.f32 %v892, %v1154
      %v1276 = vadd.f32 %v895, %v1157
      %v1277 = vadd.f32 %v900, %v1162
      %v1278 = vadd.f32 %v903, %v1165
      %v1279 = vadd.f32 %v908, %v1170
      %v1280 = vadd.f32 %v911, %v1173
      %v1281 = vadd.f32 %v916, %v1178
      %v1282 = vadd.f32 %v919, %v1181
      %v1283 = vadd.f32 %v924, %v1186
      %v1284 = vadd.f32 %v927, %v1189
      %v1285 = vadd.f32 %v932, %v1194
      %v1286 = vadd.f32 %v935, %v1197
      %v1287 = vadd.f32 %v940, %v1202
      %v1288 = vadd.f32 %v943, %v1205
      %v1289 = vadd.f32 %v948, %v1210
      %v1290 = vadd.f32 %v951, %v1213
      %v1291 = vadd.f32 %v956, %v1218
      %v1292 = vadd.f32 %v959, %v1221
      %v1293 = vadd.f32 %v964, %v1226
      %v1294 = vadd.f32 %v967, %v1229
      %v1295 = vadd.f32 %v972, %v1234
      %v1296 = vadd.f32 %v975, %v1237
      %v1297 = vadd.f32 %v980, %v1242
      %v1298 = vadd.f32 %v983, %v1245
      %v1299 = vadd.f32 %v988, %v1250
      %v1300 = vadd.f32 %v991, %v1253
      %v1301 = vadd.f32 %v996, %v1258
      %v1302 = vadd.f32 %v999, %v1261
      %v1303 = vadd.f32 %v1004, %v1266
      %v1304 = vld [vmem:[%s303 + $0xc] sm:$0xf]
      %v1305 = vld [vmem:[%s303 + $0x10] sm:$0xf]
      %v1306 = vld [vmem:[%s303 + $0x14] sm:$0xf]
      %v1307 = vld [vmem:[%s303 + $0x18] sm:$0xf]
      %v1308 = vld [vmem:[%s303 + $0x1c] sm:$0xf]
      %v1309 = vld [vmem:[%s303 + $0x20] sm:$0xf]
      %v1310 = vld [vmem:[%s303 + $0x24] sm:$0xf]
      %v1311 = vld [vmem:[%s303 + $0x28] sm:$0xf]
      %v1312 = vld [vmem:[%s303 + $0x2c] sm:$0xf]
      %v1313 = vld [vmem:[%s303 + $0x30] sm:$0xf]
      %v1314 = vld [vmem:[%s303 + $0x34] sm:$0xf]
      %v1315 = vld [vmem:[%s303 + $0x38] sm:$0xf]
      %v1316 = vld [vmem:[%s303 + $0x3c] sm:$0xf]
      %v1317 = vld [vmem:[%s303 + $0x40] sm:$0xf]
      %v1318 = vld [vmem:[%s303 + $0x44] sm:$0xf]
      %v1319 = vld [vmem:[%s303 + $0x48] sm:$0xf]
      %v1320 = vld [vmem:[%s303 + $0x4c] sm:$0xf]
      %v1321 = vld [vmem:[%s303 + $0x50] sm:$0xf]
      %v1322 = vld [vmem:[%s303 + $0x54] sm:$0xf]
      %v1323 = vld [vmem:[%s303 + $0x58] sm:$0xf]
      %v1324 = vld [vmem:[%s303 + $0x5c] sm:$0xf]
      %v1325 = vld [vmem:[%s303 + $0x60] sm:$0xf]
      %v1326 = vld [vmem:[%s303 + $0x64] sm:$0xf]
      %v1327 = vld [vmem:[%s303 + $0x68] sm:$0xf]
      %v1328 = vld [vmem:[%s303 + $0x6c] sm:$0xf]
      %v1329 = vld [vmem:[%s303 + $0x70] sm:$0xf]
      %v1330 = vld [vmem:[%s303 + $0x74] sm:$0xf]
      %v1331 = vld [vmem:[%s303 + $0x78] sm:$0xf]
      %v1332 = vld [vmem:[%s303 + $0x7c] sm:$0xf]
      %v1333 = vld [vmem:[%s303 + $0x80] sm:$0xf]
      %v1334 = vld [vmem:[%s303 + $0x84] sm:$0xf]
      %v1335 = vld [vmem:[%s303 + $0x88] sm:$0xf]
      %v1336 = vld [vmem:[%s303 + $0x8c] sm:$0xf]
      %s1337 = scalar_lea.vmem %s1, 6
      %v1338 = vld [vmem:[%s1337] sm:$0x3]
      %v1372 = vunpack.c.l.b16 %v1304
      %v1373 = vunpack.c.l.b16 %v1305
      %v1374 = vunpack.c.l.b16 %v1306
      %v1375 = vunpack.c.l.b16 %v1307
      %v1376 = vunpack.c.l.b16 %v1308
      %v1377 = vunpack.c.l.b16 %v1309
      %v1378 = vunpack.c.l.b16 %v1310
      %v1379 = vunpack.c.l.b16 %v1311
      %v1380 = vunpack.c.l.b16 %v1312
      %v1381 = vunpack.c.l.b16 %v1313
      %v1382 = vunpack.c.l.b16 %v1314
      %v1383 = vunpack.c.l.b16 %v1315
      %v1384 = vunpack.c.l.b16 %v1316
      %v1385 = vunpack.c.l.b16 %v1317
      %v1386 = vunpack.c.l.b16 %v1318
      %v1387 = vunpack.c.l.b16 %v1319
      %v1388 = vunpack.c.l.b16 %v1320
      %v1389 = vunpack.c.l.b16 %v1321
      %v1390 = vunpack.c.l.b16 %v1322
      %v1391 = vunpack.c.l.b16 %v1323
      %v1392 = vunpack.c.l.b16 %v1324
      %v1393 = vunpack.c.l.b16 %v1325
      %v1394 = vunpack.c.l.b16 %v1326
      %v1395 = vunpack.c.l.b16 %v1327
      %v1396 = vunpack.c.l.b16 %v1328
      %v1397 = vunpack.c.l.b16 %v1329
      %v1398 = vunpack.c.l.b16 %v1330
      %v1399 = vunpack.c.l.b16 %v1331
      %v1400 = vunpack.c.l.b16 %v1332
      %v1401 = vunpack.c.l.b16 %v1333
      %v1402 = vunpack.c.l.b16 %v1334
      %v1403 = vunpack.c.l.b16 %v1335
      %v1404 = vunpack.c.l.b16 %v1336
      %v1405 = vpack.c.b16 %v1373, %v1372
      %v1406 = vpack.c.b16 %v1375, %v1374
      %v1407 = vpack.c.b16 %v1377, %v1376
      %v1408 = vpack.c.b16 %v1379, %v1378
      %v1409 = vpack.c.b16 %v1381, %v1380
      %v1410 = vpack.c.b16 %v1383, %v1382
      %v1411 = vpack.c.b16 %v1385, %v1384
      %v1412 = vpack.c.b16 %v1387, %v1386
      %v1413 = vpack.c.b16 %v1389, %v1388
      %v1414 = vpack.c.b16 %v1391, %v1390
      %v1415 = vpack.c.b16 %v1393, %v1392
      %v1416 = vpack.c.b16 %v1395, %v1394
      %v1417 = vpack.c.b16 %v1397, %v1396
      %v1418 = vpack.c.b16 %v1399, %v1398
      %v1419 = vpack.c.b16 %v1401, %v1400
      %v1420 = vpack.c.b16 %v1403, %v1402
      %v1421 = vpack.c.b16 %v1404, %v1404
      %v1423 = vsel %vm575, %v1405, 0
      %v1426 = vsel %vm575, %v1406, 0
      %v1429 = vsel %vm575, %v1407, 0
      %v1432 = vsel %vm575, %v1408, 0
      %v1435 = vsel %vm575, %v1409, 0
      %v1438 = vsel %vm575, %v1410, 0
      %v1441 = vsel %vm575, %v1411, 0
      %v1444 = vsel %vm575, %v1412, 0
      %v1447 = vsel %vm575, %v1413, 0
      %v1450 = vsel %vm575, %v1414, 0
      %v1453 = vsel %vm575, %v1415, 0
      %v1456 = vsel %vm575, %v1416, 0
      %v1459 = vsel %vm575, %v1417, 0
      %v1462 = vsel %vm575, %v1418, 0
      %v1465 = vsel %vm575, %v1419, 0
      %v1468 = vsel %vm575, %v1420, 0
      %v1471 = vsel %vm575, %v1421, 0
      %v1474 = vand.u32 %v1338, %v630
      %1476 = vmatprep.subr.bf16.mxu0 0
      %1477 = vmatpush1.bf16.msra.mxu0 %v1474
      %1478 = vmatprep.subr.bf16.mxu0 0
      %1479 = vmatpush1.bf16.msra.mxu0 0
      %1480 = vmatprep.subr.bf16.mxu0 0
      %1481 = vmatpush1.bf16.msra.mxu0 0
      %1482 = vmatprep.subr.bf16.mxu0 0
      %1483 = vmatpush1.bf16.msra.mxu0 0
      %1484 = vmatprep.subr.bf16.mxu0 0
      %1485 = vmatpush1.bf16.msra.mxu0 0
      %1486 = vmatprep.subr.bf16.mxu0 0
      %1487 = vmatpush1.bf16.msra.mxu0 0
      %1488 = vmatprep.subr.bf16.mxu0 0
      %1489 = vmatpush1.bf16.msra.mxu0 0
      %1490 = vmatprep.subr.bf16.mxu0 0
      %1491 = vmatpush1.bf16.msra.mxu0 0
      %1492 = vmatprep.subr.bf16.mxu0 0
      %1493 = vmatpush1.bf16.msra.mxu0 0
      %1494 = vmatprep.subr.bf16.mxu0 0
      %1495 = vmatpush1.bf16.msra.mxu0 0
      %1496 = vmatprep.subr.bf16.mxu0 0
      %1497 = vmatpush1.bf16.msra.mxu0 0
      %1498 = vmatprep.subr.bf16.mxu0 0
      %1499 = vmatpush1.bf16.msra.mxu0 0
      %1500 = vmatprep.subr.bf16.mxu0 0
      %1501 = vmatpush1.bf16.msra.mxu0 0
      %1502 = vmatprep.subr.bf16.mxu0 0
      %1503 = vmatpush1.bf16.msra.mxu0 0
      %1504 = vmatprep.subr.bf16.mxu0 0
      %1505 = vmatpush1.bf16.msra.mxu0 0
      %1506 = vmatprep.subr.bf16.mxu0 0
      %1507 = vmatpush1.bf16.msra.mxu0 0
      %1508 = vmatprep.mubr.bf16.mxu0 0
      %1509 = vmatmul.mubr.bf16.gmra.mrb[0].mxu0 %v1423
      %v1510 = vpop.f32.mrb[0].mxu0
      %v1511 = vadd.f32 0.0, %v1510
      %v1512 = vpop.f32.mrb[0].mxu0
      %v1513 = vpop.f32.mrb[0].mxu0
      %v1514 = vadd.f32 0.0, %v1513
      %v1515 = vpop.f32.mrb[0].mxu0
      %1516 = vmatprep.mubr.bf16.mxu0 0
      %1517 = vmatmul.mubr.bf16.gmra.mrb[0].mxu0 %v1426
      %v1518 = vpop.f32.mrb[0].mxu0
      %v1519 = vadd.f32 0.0, %v1518
      %v1520 = vpop.f32.mrb[0].mxu0
      %v1521 = vpop.f32.mrb[0].mxu0
      %v1522 = vadd.f32 0.0, %v1521
      %v1523 = vpop.f32.mrb[0].mxu0
      %1524 = vmatprep.mubr.bf16.mxu0 0
      %1525 = vmatmul.mubr.bf16.gmra.mrb[0].mxu0 %v1429
      %v1526 = vpop.f32.mrb[0].mxu0
      %v1527 = vadd.f32 0.0, %v1526
      %v1528 = vpop.f32.mrb[0].mxu0
      %v1529 = vpop.f32.mrb[0].mxu0
      %v1530 = vadd.f32 0.0, %v1529
      %v1531 = vpop.f32.mrb[0].mxu0
      %1532 = vmatprep.mubr.bf16.mxu0 0
      %1533 = vmatmul.mubr.bf16.gmra.mrb[0].mxu0 %v1432
      %v1534 = vpop.f32.mrb[0].mxu0
      %v1535 = vadd.f32 0.0, %v1534
      %v1536 = vpop.f32.mrb[0].mxu0
      %v1537 = vpop.f32.mrb[0].mxu0
      %v1538 = vadd.f32 0.0, %v1537
      %v1539 = vpop.f32.mrb[0].mxu0
      %1540 = vmatprep.mubr.bf16.mxu0 0
      %1541 = vmatmul.mubr.bf16.gmra.mrb[0].mxu0 %v1435
      %v1542 = vpop.f32.mrb[0].mxu0
      %v1543 = vadd.f32 0.0, %v1542
      %v1544 = vpop.f32.mrb[0].mxu0
      %v1545 = vpop.f32.mrb[0].mxu0
      %v1546 = vadd.f32 0.0, %v1545
      %v1547 = vpop.f32.mrb[0].mxu0
      %1548 = vmatprep.mubr.bf16.mxu0 0
      %1549 = vmatmul.mubr.bf16.gmra.mrb[0].mxu0 %v1438
      %v1550 = vpop.f32.mrb[0].mxu0
      %v1551 = vadd.f32 0.0, %v1550
      %v1552 = vpop.f32.mrb[0].mxu0
      %v1553 = vpop.f32.mrb[0].mxu0
      %v1554 = vadd.f32 0.0, %v1553
      %v1555 = vpop.f32.mrb[0].mxu0
      %1556 = vmatprep.mubr.bf16.mxu0 0
      %1557 = vmatmul.mubr.bf16.gmra.mrb[0].mxu0 %v1441
      %v1558 = vpop.f32.mrb[0].mxu0
      %v1559 = vadd.f32 0.0, %v1558
      %v1560 = vpop.f32.mrb[0].mxu0
      %v1561 = vpop.f32.mrb[0].mxu0
      %v1562 = vadd.f32 0.0, %v1561
      %v1563 = vpop.f32.mrb[0].mxu0
      %1564 = vmatprep.mubr.bf16.mxu0 0
      %1565 = vmatmul.mubr.bf16.gmra.mrb[0].mxu0 %v1444
      %v1566 = vpop.f32.mrb[0].mxu0
      %v1567 = vadd.f32 0.0, %v1566
      %v1568 = vpop.f32.mrb[0].mxu0
      %v1569 = vpop.f32.mrb[0].mxu0
      %v1570 = vadd.f32 0.0, %v1569
      %v1571 = vpop.f32.mrb[0].mxu0
      %1572 = vmatprep.mubr.bf16.mxu0 0
      %1573 = vmatmul.mubr.bf16.gmra.mrb[0].mxu0 %v1447
      %v1574 = vpop.f32.mrb[0].mxu0
      %v1575 = vadd.f32 0.0, %v1574
      %v1576 = vpop.f32.mrb[0].mxu0
      %v1577 = vpop.f32.mrb[0].mxu0
      %v1578 = vadd.f32 0.0, %v1577
      %v1579 = vpop.f32.mrb[0].mxu0
      %1580 = vmatprep.mubr.bf16.mxu0 0
      %1581 = vmatmul.mubr.bf16.gmra.mrb[0].mxu0 %v1450
      %v1582 = vpop.f32.mrb[0].mxu0
      %v1583 = vadd.f32 0.0, %v1582
      %v1584 = vpop.f32.mrb[0].mxu0
      %v1585 = vpop.f32.mrb[0].mxu0
      %v1586 = vadd.f32 0.0, %v1585
      %v1587 = vpop.f32.mrb[0].mxu0
      %1588 = vmatprep.mubr.bf16.mxu0 0
      %1589 = vmatmul.mubr.bf16.gmra.mrb[0].mxu0 %v1453
      %v1590 = vpop.f32.mrb[0].mxu0
      %v1591 = vadd.f32 0.0, %v1590
      %v1592 = vpop.f32.mrb[0].mxu0
      %v1593 = vpop.f32.mrb[0].mxu0
      %v1594 = vadd.f32 0.0, %v1593
      %v1595 = vpop.f32.mrb[0].mxu0
      %1596 = vmatprep.mubr.bf16.mxu0 0
      %1597 = vmatmul.mubr.bf16.gmra.mrb[0].mxu0 %v1456
      %v1598 = vpop.f32.mrb[0].mxu0
      %v1599 = vadd.f32 0.0, %v1598
      %v1600 = vpop.f32.mrb[0].mxu0
      %v1601 = vpop.f32.mrb[0].mxu0
      %v1602 = vadd.f32 0.0, %v1601
      %v1603 = vpop.f32.mrb[0].mxu0
      %1604 = vmatprep.mubr.bf16.mxu0 0
      %1605 = vmatmul.mubr.bf16.gmra.mrb[0].mxu0 %v1459
      %v1606 = vpop.f32.mrb[0].mxu0
      %v1607 = vadd.f32 0.0, %v1606
      %v1608 = vpop.f32.mrb[0].mxu0
      %v1609 = vpop.f32.mrb[0].mxu0
      %v1610 = vadd.f32 0.0, %v1609
      %v1611 = vpop.f32.mrb[0].mxu0
      %1612 = vmatprep.mubr.bf16.mxu0 0
      %1613 = vmatmul.mubr.bf16.gmra.mrb[0].mxu0 %v1462
      %v1614 = vpop.f32.mrb[0].mxu0
      %v1615 = vadd.f32 0.0, %v1614
      %v1616 = vpop.f32.mrb[0].mxu0
      %v1617 = vpop.f32.mrb[0].mxu0
      %v1618 = vadd.f32 0.0, %v1617
      %v1619 = vpop.f32.mrb[0].mxu0
      %1620 = vmatprep.mubr.bf16.mxu0 0
      %1621 = vmatmul.mubr.bf16.gmra.mrb[0].mxu0 %v1465
      %v1622 = vpop.f32.mrb[0].mxu0
      %v1623 = vadd.f32 0.0, %v1622
      %v1624 = vpop.f32.mrb[0].mxu0
      %v1625 = vpop.f32.mrb[0].mxu0
      %v1626 = vadd.f32 0.0, %v1625
      %v1627 = vpop.f32.mrb[0].mxu0
      %1628 = vmatprep.mubr.bf16.mxu0 0
      %1629 = vmatmul.mubr.bf16.gmra.mrb[0].mxu0 %v1468
      %v1630 = vpop.f32.mrb[0].mxu0
      %v1631 = vadd.f32 0.0, %v1630
      %v1632 = vpop.f32.mrb[0].mxu0
      %v1633 = vpop.f32.mrb[0].mxu0
      %v1634 = vadd.f32 0.0, %v1633
      %v1635 = vpop.f32.mrb[0].mxu0
      %1636 = vmatprep.mubr.bf16.mxu0 0
      %1637 = vmatmul.mubr.bf16.gmra.mrb[0].mxu0 %v1471
      %v1638 = vpop.f32.mrb[0].mxu0
      %v1639 = vadd.f32 0.0, %v1638
      %v1640 = vpop.f32.mrb[0].mxu0
      %v1641 = vpop.f32.mrb[0].mxu0
      %v1642 = vpop.f32.mrb[0].mxu0
      %1643 = vdwg.mxu0
      %v1644 = vadd.f32 %v1271, %v1511
      %v1645 = vadd.f32 %v1272, %v1514
      %v1646 = vadd.f32 %v1273, %v1519
      %v1647 = vadd.f32 %v1274, %v1522
      %v1648 = vadd.f32 %v1275, %v1527
      %v1649 = vadd.f32 %v1276, %v1530
      %v1650 = vadd.f32 %v1277, %v1535
      %v1651 = vadd.f32 %v1278, %v1538
      %v1652 = vadd.f32 %v1279, %v1543
      %v1653 = vadd.f32 %v1280, %v1546
      %v1654 = vadd.f32 %v1281, %v1551
      %v1655 = vadd.f32 %v1282, %v1554
      %v1656 = vadd.f32 %v1283, %v1559
      %v1657 = vadd.f32 %v1284, %v1562
      %v1658 = vadd.f32 %v1285, %v1567
      %v1659 = vadd.f32 %v1286, %v1570
      %v1660 = vadd.f32 %v1287, %v1575
      %v1661 = vadd.f32 %v1288, %v1578
      %v1662 = vadd.f32 %v1289, %v1583
      %v1663 = vadd.f32 %v1290, %v1586
      %v1664 = vadd.f32 %v1291, %v1591
      %v1665 = vadd.f32 %v1292, %v1594
      %v1666 = vadd.f32 %v1293, %v1599
      %v1667 = vadd.f32 %v1294, %v1602
      %v1668 = vadd.f32 %v1295, %v1607
      %v1669 = vadd.f32 %v1296, %v1610
      %v1670 = vadd.f32 %v1297, %v1615
      %v1671 = vadd.f32 %v1298, %v1618
      %v1672 = vadd.f32 %v1299, %v1623
      %v1673 = vadd.f32 %v1300, %v1626
      %v1674 = vadd.f32 %v1301, %v1631
      %v1675 = vadd.f32 %v1302, %v1634
      %v1676 = vadd.f32 %v1303, %v1639
      %v1677 = vld [vmem:[%s303 + $0xc] sm:$0xf]
      %v1678 = vld [vmem:[%s303 + $0x10] sm:$0xf]
      %v1679 = vld [vmem:[%s303 + $0x14] sm:$0xf]
      %v1680 = vld [vmem:[%s303 + $0x18] sm:$0xf]
      %v1681 = vld [vmem:[%s303 + $0x1c] sm:$0xf]
      %v1682 = vld [vmem:[%s303 + $0x20] sm:$0xf]
      %v1683 = vld [vmem:[%s303 + $0x24] sm:$0xf]
      %v1684 = vld [vmem:[%s303 + $0x28] sm:$0xf]
      %v1685 = vld [vmem:[%s303 + $0x2c] sm:$0xf]
      %v1686 = vld [vmem:[%s303 + $0x30] sm:$0xf]
      %v1687 = vld [vmem:[%s303 + $0x34] sm:$0xf]
      %v1688 = vld [vmem:[%s303 + $0x38] sm:$0xf]
      %v1689 = vld [vmem:[%s303 + $0x3c] sm:$0xf]
      %v1690 = vld [vmem:[%s303 + $0x40] sm:$0xf]
      %v1691 = vld [vmem:[%s303 + $0x44] sm:$0xf]
      %v1692 = vld [vmem:[%s303 + $0x48] sm:$0xf]
      %v1693 = vld [vmem:[%s303 + $0x4c] sm:$0xf]
      %v1694 = vld [vmem:[%s303 + $0x50] sm:$0xf]
      %v1695 = vld [vmem:[%s303 + $0x54] sm:$0xf]
      %v1696 = vld [vmem:[%s303 + $0x58] sm:$0xf]
      %v1697 = vld [vmem:[%s303 + $0x5c] sm:$0xf]
      %v1698 = vld [vmem:[%s303 + $0x60] sm:$0xf]
      %v1699 = vld [vmem:[%s303 + $0x64] sm:$0xf]
      %v1700 = vld [vmem:[%s303 + $0x68] sm:$0xf]
      %v1701 = vld [vmem:[%s303 + $0x6c] sm:$0xf]
      %v1702 = vld [vmem:[%s303 + $0x70] sm:$0xf]
      %v1703 = vld [vmem:[%s303 + $0x74] sm:$0xf]
      %v1704 = vld [vmem:[%s303 + $0x78] sm:$0xf]
      %v1705 = vld [vmem:[%s303 + $0x7c] sm:$0xf]
      %v1706 = vld [vmem:[%s303 + $0x80] sm:$0xf]
      %v1707 = vld [vmem:[%s303 + $0x84] sm:$0xf]
      %v1708 = vld [vmem:[%s303 + $0x88] sm:$0xf]
      %v1709 = vld [vmem:[%s303 + $0x8c] sm:$0xf]
      %v1710 = vld [vmem:[%s303 + $0x90] sm:$0x1]
      %s1711 = scalar_lea.vmem %s1, 8
      %v1712 = vld [vmem:[%s1711] sm:$0x3]
      %v1747 = vunpack.c.l.b16 %v1677
      %v1748 = vunpack.c.l.b16 %v1678
      %v1749 = vunpack.c.l.b16 %v1679
      %v1750 = vunpack.c.l.b16 %v1680
      %v1751 = vunpack.c.l.b16 %v1681
      %v1752 = vunpack.c.l.b16 %v1682
      %v1753 = vunpack.c.l.b16 %v1683
      %v1754 = vunpack.c.l.b16 %v1684
      %v1755 = vunpack.c.l.b16 %v1685
      %v1756 = vunpack.c.l.b16 %v1686
      %v1757 = vunpack.c.l.b16 %v1687
      %v1758 = vunpack.c.l.b16 %v1688
      %v1759 = vunpack.c.l.b16 %v1689
      %v1760 = vunpack.c.l.b16 %v1690
      %v1761 = vunpack.c.l.b16 %v1691
      %v1762 = vunpack.c.l.b16 %v1692
      %v1763 = vunpack.c.l.b16 %v1693
      %v1764 = vunpack.c.l.b16 %v1694
      %v1765 = vunpack.c.l.b16 %v1695
      %v1766 = vunpack.c.l.b16 %v1696
      %v1767 = vunpack.c.l.b16 %v1697
      %v1768 = vunpack.c.l.b16 %v1698
      %v1769 = vunpack.c.l.b16 %v1699
      %v1770 = vunpack.c.l.b16 %v1700
      %v1771 = vunpack.c.l.b16 %v1701
      %v1772 = vunpack.c.l.b16 %v1702
      %v1773 = vunpack.c.l.b16 %v1703
      %v1774 = vunpack.c.l.b16 %v1704
      %v1775 = vunpack.c.l.b16 %v1705
      %v1776 = vunpack.c.l.b16 %v1706
      %v1777 = vunpack.c.l.b16 %v1707
      %v1778 = vunpack.c.l.b16 %v1708
      %v1779 = vunpack.c.l.b16 %v1709
      %v1780 = vunpack.c.l.b16 %v1710
      %v1781 = vpack.c.b16 %v1748, %v1747
      %v1782 = vpack.c.b16 %v1750, %v1749
      %v1783 = vpack.c.b16 %v1752, %v1751
      %v1784 = vpack.c.b16 %v1754, %v1753
      %v1785 = vpack.c.b16 %v1756, %v1755
      %v1786 = vpack.c.b16 %v1758, %v1757
      %v1787 = vpack.c.b16 %v1760, %v1759
      %v1788 = vpack.c.b16 %v1762, %v1761
      %v1789 = vpack.c.b16 %v1764, %v1763
      %v1790 = vpack.c.b16 %v1766, %v1765
      %v1791 = vpack.c.b16 %v1768, %v1767
      %v1792 = vpack.c.b16 %v1770, %v1769
      %v1793 = vpack.c.b16 %v1772, %v1771
      %v1794 = vpack.c.b16 %v1774, %v1773
      %v1795 = vpack.c.b16 %v1776, %v1775
      %v1796 = vpack.c.b16 %v1778, %v1777
      %v1797 = vpack.c.b16 %v1780, %v1779
      %v1799 = vshrl.u32 %v1781, 16
      %v1801 = vshll.u32 %v1781, 16
      %v1803 = vrot.slane %v1801, 1
      %v1804 = vor.u32 %v1799, %v1803
      %v1806 = vshll.u32 %v1782, 16
      %v1808 = vrot.slane %v1806, 1
      %v1809 = vsel %vm439, %v1804, %v1808
      %v1810 = vshrl.u32 %v1782, 16
      %v1812 = vor.u32 %v1810, %v1808
      %v1814 = vshll.u32 %v1783, 16
      %v1816 = vrot.slane %v1814, 1
      %v1817 = vsel %vm439, %v1812, %v1816
      %v1818 = vshrl.u32 %v1783, 16
      %v1820 = vor.u32 %v1818, %v1816
      %v1822 = vshll.u32 %v1784, 16
      %v1824 = vrot.slane %v1822, 1
      %v1825 = vsel %vm439, %v1820, %v1824
      %v1826 = vshrl.u32 %v1784, 16
      %v1828 = vor.u32 %v1826, %v1824
      %v1830 = vshll.u32 %v1785, 16
      %v1832 = vrot.slane %v1830, 1
      %v1833 = vsel %vm439, %v1828, %v1832
      %v1834 = vshrl.u32 %v1785, 16
      %v1836 = vor.u32 %v1834, %v1832
      %v1838 = vshll.u32 %v1786, 16
      %v1840 = vrot.slane %v1838, 1
      %v1841 = vsel %vm439, %v1836, %v1840
      %v1842 = vshrl.u32 %v1786, 16
      %v1844 = vor.u32 %v1842, %v1840
      %v1846 = vshll.u32 %v1787, 16
      %v1848 = vrot.slane %v1846, 1
      %v1849 = vsel %vm439, %v1844, %v1848
      %v1850 = vshrl.u32 %v1787, 16
      %v1852 = vor.u32 %v1850, %v1848
      %v1854 = vshll.u32 %v1788, 16
      %v1856 = vrot.slane %v1854, 1
      %v1857 = vsel %vm439, %v1852, %v1856
      %v1858 = vshrl.u32 %v1788, 16
      %v1860 = vor.u32 %v1858, %v1856
      %v1862 = vshll.u32 %v1789, 16
      %v1864 = vrot.slane %v1862, 1
      %v1865 = vsel %vm439, %v1860, %v1864
      %v1866 = vshrl.u32 %v1789, 16
      %v1868 = vor.u32 %v1866, %v1864
      %v1870 = vshll.u32 %v1790, 16
      %v1872 = vrot.slane %v1870, 1
      %v1873 = vsel %vm439, %v1868, %v1872
      %v1874 = vshrl.u32 %v1790, 16
      %v1876 = vor.u32 %v1874, %v1872
      %v1878 = vshll.u32 %v1791, 16
      %v1880 = vrot.slane %v1878, 1
      %v1881 = vsel %vm439, %v1876, %v1880
      %v1882 = vshrl.u32 %v1791, 16
      %v1884 = vor.u32 %v1882, %v1880
      %v1886 = vshll.u32 %v1792, 16
      %v1888 = vrot.slane %v1886, 1
      %v1889 = vsel %vm439, %v1884, %v1888
      %v1890 = vshrl.u32 %v1792, 16
      %v1892 = vor.u32 %v1890, %v1888
      %v1894 = vshll.u32 %v1793, 16
      %v1896 = vrot.slane %v1894, 1
      %v1897 = vsel %vm439, %v1892, %v1896
      %v1898 = vshrl.u32 %v1793, 16
      %v1900 = vor.u32 %v1898, %v1896
      %v1902 = vshll.u32 %v1794, 16
      %v1904 = vrot.slane %v1902, 1
      %v1905 = vsel %vm439, %v1900, %v1904
      %v1906 = vshrl.u32 %v1794, 16
      %v1908 = vor.u32 %v1906, %v1904
      %v1910 = vshll.u32 %v1795, 16
      %v1912 = vrot.slane %v1910, 1
      %v1913 = vsel %vm439, %v1908, %v1912
      %v1914 = vshrl.u32 %v1795, 16
      %v1916 = vor.u32 %v1914, %v1912
      %v1918 = vshll.u32 %v1796, 16
      %v1920 = vrot.slane %v1918, 1
      %v1921 = vsel %vm439, %v1916, %v1920
      %v1922 = vshrl.u32 %v1796, 16
      %v1924 = vor.u32 %v1922, %v1920
      %v1926 = vshll.u32 %v1797, 16
      %v1928 = vrot.slane %v1926, 1
      %v1929 = vsel %vm439, %v1924, %v1928
      %v1930 = vshrl.u32 %v1797, 16
      %v1932 = vor.u32 %v1930, %v1928
      %v1934 = vsel %vm575, %v1809, 0
      %v1937 = vsel %vm575, %v1817, 0
      %v1940 = vsel %vm575, %v1825, 0
      %v1943 = vsel %vm575, %v1833, 0
      %v1946 = vsel %vm575, %v1841, 0
      %v1949 = vsel %vm575, %v1849, 0
      %v1952 = vsel %vm575, %v1857, 0
      %v1955 = vsel %vm575, %v1865, 0
      %v1958 = vsel %vm575, %v1873, 0
      %v1961 = vsel %vm575, %v1881, 0
      %v1964 = vsel %vm575, %v1889, 0
      %v1967 = vsel %vm575, %v1897, 0
      %v1970 = vsel %vm575, %v1905, 0
      %v1973 = vsel %vm575, %v1913, 0
      %v1976 = vsel %vm575, %v1921, 0
      %v1979 = vsel %vm575, %v1929, 0
      %v1982 = vsel %vm575, %v1932, 0
      %v1985 = vand.u32 %v1712, %v630
      %1987 = vmatprep.subr.bf16.mxu0 0
      %1988 = vmatpush1.bf16.msra.mxu0 %v1985
      %1989 = vmatprep.subr.bf16.mxu0 0
      %1990 = vmatpush1.bf16.msra.mxu0 0
      %1991 = vmatprep.subr.bf16.mxu0 0
      %1992 = vmatpush1.bf16.msra.mxu0 0
      %1993 = vmatprep.subr.bf16.mxu0 0
      %1994 = vmatpush1.bf16.msra.mxu0 0
      %1995 = vmatprep.subr.bf16.mxu0 0
      %1996 = vmatpush1.bf16.msra.mxu0 0
      %1997 = vmatprep.subr.bf16.mxu0 0
      %1998 = vmatpush1.bf16.msra.mxu0 0
      %1999 = vmatprep.subr.bf16.mxu0 0
      %2000 = vmatpush1.bf16.msra.mxu0 0
      %2001 = vmatprep.subr.bf16.mxu0 0
      %2002 = vmatpush1.bf16.msra.mxu0 0
      %2003 = vmatprep.subr.bf16.mxu0 0
      %2004 = vmatpush1.bf16.msra.mxu0 0
      %2005 = vmatprep.subr.bf16.mxu0 0
      %2006 = vmatpush1.bf16.msra.mxu0 0
      %2007 = vmatprep.subr.bf16.mxu0 0
      %2008 = vmatpush1.bf16.msra.mxu0 0
      %2009 = vmatprep.subr.bf16.mxu0 0
      %2010 = vmatpush1.bf16.msra.mxu0 0
      %2011 = vmatprep.subr.bf16.mxu0 0
      %2012 = vmatpush1.bf16.msra.mxu0 0
      %2013 = vmatprep.subr.bf16.mxu0 0
      %2014 = vmatpush1.bf16.msra.mxu0 0
      %2015 = vmatprep.subr.bf16.mxu0 0
      %2016 = vmatpush1.bf16.msra.mxu0 0
      %2017 = vmatprep.subr.bf16.mxu0 0
      %2018 = vmatpush1.bf16.msra.mxu0 0
      %2019 = vmatprep.mubr.bf16.mxu0 0
      %2020 = vmatmul.mubr.bf16.gmra.mrb[0].mxu0 %v1934
      %v2021 = vpop.f32.mrb[0].mxu0
      %v2022 = vadd.f32 0.0, %v2021
      %v2023 = vpop.f32.mrb[0].mxu0
      %v2024 = vpop.f32.mrb[0].mxu0
      %v2025 = vadd.f32 0.0, %v2024
      %v2026 = vpop.f32.mrb[0].mxu0
      %2027 = vmatprep.mubr.bf16.mxu0 0
      %2028 = vmatmul.mubr.bf16.gmra.mrb[0].mxu0 %v1937
      %v2029 = vpop.f32.mrb[0].mxu0
      %v2030 = vadd.f32 0.0, %v2029
      %v2031 = vpop.f32.mrb[0].mxu0
      %v2032 = vpop.f32.mrb[0].mxu0
      %v2033 = vadd.f32 0.0, %v2032
      %v2034 = vpop.f32.mrb[0].mxu0
      %2035 = vmatprep.mubr.bf16.mxu0 0
      %2036 = vmatmul.mubr.bf16.gmra.mrb[0].mxu0 %v1940
      %v2037 = vpop.f32.mrb[0].mxu0
      %v2038 = vadd.f32 0.0, %v2037
      %v2039 = vpop.f32.mrb[0].mxu0
      %v2040 = vpop.f32.mrb[0].mxu0
      %v2041 = vadd.f32 0.0, %v2040
      %v2042 = vpop.f32.mrb[0].mxu0
      %2043 = vmatprep.mubr.bf16.mxu0 0
      %2044 = vmatmul.mubr.bf16.gmra.mrb[0].mxu0 %v1943
      %v2045 = vpop.f32.mrb[0].mxu0
      %v2046 = vadd.f32 0.0, %v2045
      %v2047 = vpop.f32.mrb[0].mxu0
      %v2048 = vpop.f32.mrb[0].mxu0
      %v2049 = vadd.f32 0.0, %v2048
      %v2050 = vpop.f32.mrb[0].mxu0
      %2051 = vmatprep.mubr.bf16.mxu0 0
      %2052 = vmatmul.mubr.bf16.gmra.mrb[0].mxu0 %v1946
      %v2053 = vpop.f32.mrb[0].mxu0
      %v2054 = vadd.f32 0.0, %v2053
      %v2055 = vpop.f32.mrb[0].mxu0
      %v2056 = vpop.f32.mrb[0].mxu0
      %v2057 = vadd.f32 0.0, %v2056
      %v2058 = vpop.f32.mrb[0].mxu0
      %2059 = vmatprep.mubr.bf16.mxu0 0
      %2060 = vmatmul.mubr.bf16.gmra.mrb[0].mxu0 %v1949
      %v2061 = vpop.f32.mrb[0].mxu0
      %v2062 = vadd.f32 0.0, %v2061
      %v2063 = vpop.f32.mrb[0].mxu0
      %v2064 = vpop.f32.mrb[0].mxu0
      %v2065 = vadd.f32 0.0, %v2064
      %v2066 = vpop.f32.mrb[0].mxu0
      %2067 = vmatprep.mubr.bf16.mxu0 0
      %2068 = vmatmul.mubr.bf16.gmra.mrb[0].mxu0 %v1952
      %v2069 = vpop.f32.mrb[0].mxu0
      %v2070 = vadd.f32 0.0, %v2069
      %v2071 = vpop.f32.mrb[0].mxu0
      %v2072 = vpop.f32.mrb[0].mxu0
      %v2073 = vadd.f32 0.0, %v2072
      %v2074 = vpop.f32.mrb[0].mxu0
      %2075 = vmatprep.mubr.bf16.mxu0 0
      %2076 = vmatmul.mubr.bf16.gmra.mrb[0].mxu0 %v1955
      %v2077 = vpop.f32.mrb[0].mxu0
      %v2078 = vadd.f32 0.0, %v2077
      %v2079 = vpop.f32.mrb[0].mxu0
      %v2080 = vpop.f32.mrb[0].mxu0
      %v2081 = vadd.f32 0.0, %v2080
      %v2082 = vpop.f32.mrb[0].mxu0
      %2083 = vmatprep.mubr.bf16.mxu0 0
      %2084 = vmatmul.mubr.bf16.gmra.mrb[0].mxu0 %v1958
      %v2085 = vpop.f32.mrb[0].mxu0
      %v2086 = vadd.f32 0.0, %v2085
      %v2087 = vpop.f32.mrb[0].mxu0
      %v2088 = vpop.f32.mrb[0].mxu0
      %v2089 = vadd.f32 0.0, %v2088
      %v2090 = vpop.f32.mrb[0].mxu0
      %2091 = vmatprep.mubr.bf16.mxu0 0
      %2092 = vmatmul.mubr.bf16.gmra.mrb[0].mxu0 %v1961
      %v2093 = vpop.f32.mrb[0].mxu0
      %v2094 = vadd.f32 0.0, %v2093
      %v2095 = vpop.f32.mrb[0].mxu0
      %v2096 = vpop.f32.mrb[0].mxu0
      %v2097 = vadd.f32 0.0, %v2096
      %v2098 = vpop.f32.mrb[0].mxu0
      %2099 = vmatprep.mubr.bf16.mxu0 0
      %2100 = vmatmul.mubr.bf16.gmra.mrb[0].mxu0 %v1964
      %v2101 = vpop.f32.mrb[0].mxu0
      %v2102 = vadd.f32 0.0, %v2101
      %v2103 = vpop.f32.mrb[0].mxu0
      %v2104 = vpop.f32.mrb[0].mxu0
      %v2105 = vadd.f32 0.0, %v2104
      %v2106 = vpop.f32.mrb[0].mxu0
      %2107 = vmatprep.mubr.bf16.mxu0 0
      %2108 = vmatmul.mubr.bf16.gmra.mrb[0].mxu0 %v1967
      %v2109 = vpop.f32.mrb[0].mxu0
      %v2110 = vadd.f32 0.0, %v2109
      %v2111 = vpop.f32.mrb[0].mxu0
      %v2112 = vpop.f32.mrb[0].mxu0
      %v2113 = vadd.f32 0.0, %v2112
      %v2114 = vpop.f32.mrb[0].mxu0
      %2115 = vmatprep.mubr.bf16.mxu0 0
      %2116 = vmatmul.mubr.bf16.gmra.mrb[0].mxu0 %v1970
      %v2117 = vpop.f32.mrb[0].mxu0
      %v2118 = vadd.f32 0.0, %v2117
      %v2119 = vpop.f32.mrb[0].mxu0
      %v2120 = vpop.f32.mrb[0].mxu0
      %v2121 = vadd.f32 0.0, %v2120
      %v2122 = vpop.f32.mrb[0].mxu0
      %2123 = vmatprep.mubr.bf16.mxu0 0
      %2124 = vmatmul.mubr.bf16.gmra.mrb[0].mxu0 %v1973
      %v2125 = vpop.f32.mrb[0].mxu0
      %v2126 = vadd.f32 0.0, %v2125
      %v2127 = vpop.f32.mrb[0].mxu0
      %v2128 = vpop.f32.mrb[0].mxu0
      %v2129 = vadd.f32 0.0, %v2128
      %v2130 = vpop.f32.mrb[0].mxu0
      %2131 = vmatprep.mubr.bf16.mxu0 0
      %2132 = vmatmul.mubr.bf16.gmra.mrb[0].mxu0 %v1976
      %v2133 = vpop.f32.mrb[0].mxu0
      %v2134 = vadd.f32 0.0, %v2133
      %v2135 = vpop.f32.mrb[0].mxu0
      %v2136 = vpop.f32.mrb[0].mxu0
      %v2137 = vadd.f32 0.0, %v2136
      %v2138 = vpop.f32.mrb[0].mxu0
      %2139 = vmatprep.mubr.bf16.mxu0 0
      %2140 = vmatmul.mubr.bf16.gmra.mrb[0].mxu0 %v1979
      %v2141 = vpop.f32.mrb[0].mxu0
      %v2142 = vadd.f32 0.0, %v2141
      %v2143 = vpop.f32.mrb[0].mxu0
      %v2144 = vpop.f32.mrb[0].mxu0
      %v2145 = vadd.f32 0.0, %v2144
      %v2146 = vpop.f32.mrb[0].mxu0
      %2147 = vmatprep.mubr.bf16.mxu0 0
      %2148 = vmatmul.mubr.bf16.gmra.mrb[0].mxu0 %v1982
      %v2149 = vpop.f32.mrb[0].mxu0
      %v2150 = vadd.f32 0.0, %v2149
      %v2151 = vpop.f32.mrb[0].mxu0
      %v2152 = vpop.f32.mrb[0].mxu0
      %v2153 = vpop.f32.mrb[0].mxu0
      %2154 = vdwg.mxu0
      %v2155 = vadd.f32 %v1644, %v2022
      %v2156 = vadd.f32 %v1645, %v2025
      %v2157 = vadd.f32 %v1646, %v2030
      %v2158 = vadd.f32 %v1647, %v2033
      %v2159 = vadd.f32 %v1648, %v2038
      %v2160 = vadd.f32 %v1649, %v2041
      %v2161 = vadd.f32 %v1650, %v2046
      %v2162 = vadd.f32 %v1651, %v2049
      %v2163 = vadd.f32 %v1652, %v2054
      %v2164 = vadd.f32 %v1653, %v2057
      %v2165 = vadd.f32 %v1654, %v2062
      %v2166 = vadd.f32 %v1655, %v2065
      %v2167 = vadd.f32 %v1656, %v2070
      %v2168 = vadd.f32 %v1657, %v2073
      %v2169 = vadd.f32 %v1658, %v2078
      %v2170 = vadd.f32 %v1659, %v2081
      %v2171 = vadd.f32 %v1660, %v2086
      %v2172 = vadd.f32 %v1661, %v2089
      %v2173 = vadd.f32 %v1662, %v2094
      %v2174 = vadd.f32 %v1663, %v2097
      %v2175 = vadd.f32 %v1664, %v2102
      %v2176 = vadd.f32 %v1665, %v2105
      %v2177 = vadd.f32 %v1666, %v2110
      %v2178 = vadd.f32 %v1667, %v2113
      %v2179 = vadd.f32 %v1668, %v2118
      %v2180 = vadd.f32 %v1669, %v2121
      %v2181 = vadd.f32 %v1670, %v2126
      %v2182 = vadd.f32 %v1671, %v2129
      %v2183 = vadd.f32 %v1672, %v2134
      %v2184 = vadd.f32 %v1673, %v2137
      %v2185 = vadd.f32 %v1674, %v2142
      %v2186 = vadd.f32 %v1675, %v2145
      %v2187 = vadd.f32 %v1676, %v2150
      %v2188 = vld [vmem:[%s303 + $0xc] sm:$0xe]
      %s2189 = scalar_lea.vmem %s1, 10
      %v2190 = vld [vmem:[%s2189] sm:$0x3]
      %v2192 = vunpack.c.l.b16 %v2188
      %v2193 = vpack.c.b16 %v1748, %v2192
      %v2194 = vrot.slane %v2193, 1
      %v2195 = vrot.slane %v1782, 1
      %v2196 = vsel %vm1015, %v2194, %v2195
      %v2197 = vrot.slane %v1783, 1
      %v2198 = vsel %vm1015, %v2195, %v2197
      %v2199 = vrot.slane %v1784, 1
      %v2200 = vsel %vm1015, %v2197, %v2199
      %v2201 = vrot.slane %v1785, 1
      %v2202 = vsel %vm1015, %v2199, %v2201
      %v2203 = vrot.slane %v1786, 1
      %v2204 = vsel %vm1015, %v2201, %v2203
      %v2205 = vrot.slane %v1787, 1
      %v2206 = vsel %vm1015, %v2203, %v2205
      %v2207 = vrot.slane %v1788, 1
      %v2208 = vsel %vm1015, %v2205, %v2207
      %v2209 = vrot.slane %v1789, 1
      %v2210 = vsel %vm1015, %v2207, %v2209
      %v2211 = vrot.slane %v1790, 1
      %v2212 = vsel %vm1015, %v2209, %v2211
      %v2213 = vrot.slane %v1791, 1
      %v2214 = vsel %vm1015, %v2211, %v2213
      %v2215 = vrot.slane %v1792, 1
      %v2216 = vsel %vm1015, %v2213, %v2215
      %v2217 = vrot.slane %v1793, 1
      %v2218 = vsel %vm1015, %v2215, %v2217
      %v2219 = vrot.slane %v1794, 1
      %v2220 = vsel %vm1015, %v2217, %v2219
      %v2221 = vrot.slane %v1795, 1
      %v2222 = vsel %vm1015, %v2219, %v2221
      %v2223 = vrot.slane %v1796, 1
      %v2224 = vsel %vm1015, %v2221, %v2223
      %v2225 = vrot.slane %v1797, 1
      %v2226 = vsel %vm1015, %v2223, %v2225
      %v2228 = vsel %vm575, %v2196, 0
      %v2231 = vsel %vm575, %v2198, 0
      %v2234 = vsel %vm575, %v2200, 0
      %v2237 = vsel %vm575, %v2202, 0
      %v2240 = vsel %vm575, %v2204, 0
      %v2243 = vsel %vm575, %v2206, 0
      %v2246 = vsel %vm575, %v2208, 0
      %v2249 = vsel %vm575, %v2210, 0
      %v2252 = vsel %vm575, %v2212, 0
      %v2255 = vsel %vm575, %v2214, 0
      %v2258 = vsel %vm575, %v2216, 0
      %v2261 = vsel %vm575, %v2218, 0
      %v2264 = vsel %vm575, %v2220, 0
      %v2267 = vsel %vm575, %v2222, 0
      %v2270 = vsel %vm575, %v2224, 0
      %v2273 = vsel %vm575, %v2226, 0
      %v2276 = vsel %vm575, %v2225, 0
      %v2279 = vand.u32 %v2190, %v630
      %2281 = vmatprep.subr.bf16.mxu0 0
      %2282 = vmatpush1.bf16.msra.mxu0 %v2279
      %2283 = vmatprep.subr.bf16.mxu0 0
      %2284 = vmatpush1.bf16.msra.mxu0 0
      %2285 = vmatprep.subr.bf16.mxu0 0
      %2286 = vmatpush1.bf16.msra.mxu0 0
      %2287 = vmatprep.subr.bf16.mxu0 0
      %2288 = vmatpush1.bf16.msra.mxu0 0
      %2289 = vmatprep.subr.bf16.mxu0 0
      %2290 = vmatpush1.bf16.msra.mxu0 0
      %2291 = vmatprep.subr.bf16.mxu0 0
      %2292 = vmatpush1.bf16.msra.mxu0 0
      %2293 = vmatprep.subr.bf16.mxu0 0
      %2294 = vmatpush1.bf16.msra.mxu0 0
      %2295 = vmatprep.subr.bf16.mxu0 0
      %2296 = vmatpush1.bf16.msra.mxu0 0
      %2297 = vmatprep.subr.bf16.mxu0 0
      %2298 = vmatpush1.bf16.msra.mxu0 0
      %2299 = vmatprep.subr.bf16.mxu0 0
      %2300 = vmatpush1.bf16.msra.mxu0 0
      %2301 = vmatprep.subr.bf16.mxu0 0
      %2302 = vmatpush1.bf16.msra.mxu0 0
      %2303 = vmatprep.subr.bf16.mxu0 0
      %2304 = vmatpush1.bf16.msra.mxu0 0
      %2305 = vmatprep.subr.bf16.mxu0 0
      %2306 = vmatpush1.bf16.msra.mxu0 0
      %2307 = vmatprep.subr.bf16.mxu0 0
      %2308 = vmatpush1.bf16.msra.mxu0 0
      %2309 = vmatprep.subr.bf16.mxu0 0
      %2310 = vmatpush1.bf16.msra.mxu0 0
      %2311 = vmatprep.subr.bf16.mxu0 0
      %2312 = vmatpush1.bf16.msra.mxu0 0
      %2313 = vmatprep.mubr.bf16.mxu0 0
      %2314 = vmatmul.mubr.bf16.gmra.mrb[0].mxu0 %v2228
      %v2315 = vpop.f32.mrb[0].mxu0
      %v2316 = vadd.f32 0.0, %v2315
      %v2317 = vpop.f32.mrb[0].mxu0
      %v2318 = vpop.f32.mrb[0].mxu0
      %v2319 = vadd.f32 0.0, %v2318
      %v2320 = vpop.f32.mrb[0].mxu0
      %2321 = vmatprep.mubr.bf16.mxu0 0
      %2322 = vmatmul.mubr.bf16.gmra.mrb[0].mxu0 %v2231
      %v2323 = vpop.f32.mrb[0].mxu0
      %v2324 = vadd.f32 0.0, %v2323
      %v2325 = vpop.f32.mrb[0].mxu0
      %v2326 = vpop.f32.mrb[0].mxu0
      %v2327 = vadd.f32 0.0, %v2326
      %v2328 = vpop.f32.mrb[0].mxu0
      %2329 = vmatprep.mubr.bf16.mxu0 0
      %2330 = vmatmul.mubr.bf16.gmra.mrb[0].mxu0 %v2234
      %v2331 = vpop.f32.mrb[0].mxu0
      %v2332 = vadd.f32 0.0, %v2331
      %v2333 = vpop.f32.mrb[0].mxu0
      %v2334 = vpop.f32.mrb[0].mxu0
      %v2335 = vadd.f32 0.0, %v2334
      %v2336 = vpop.f32.mrb[0].mxu0
      %2337 = vmatprep.mubr.bf16.mxu0 0
      %2338 = vmatmul.mubr.bf16.gmra.mrb[0].mxu0 %v2237
      %v2339 = vpop.f32.mrb[0].mxu0
      %v2340 = vadd.f32 0.0, %v2339
      %v2341 = vpop.f32.mrb[0].mxu0
      %v2342 = vpop.f32.mrb[0].mxu0
      %v2343 = vadd.f32 0.0, %v2342
      %v2344 = vpop.f32.mrb[0].mxu0
      %2345 = vmatprep.mubr.bf16.mxu0 0
      %2346 = vmatmul.mubr.bf16.gmra.mrb[0].mxu0 %v2240
      %v2347 = vpop.f32.mrb[0].mxu0
      %v2348 = vadd.f32 0.0, %v2347
      %v2349 = vpop.f32.mrb[0].mxu0
      %v2350 = vpop.f32.mrb[0].mxu0
      %v2351 = vadd.f32 0.0, %v2350
      %v2352 = vpop.f32.mrb[0].mxu0
      %2353 = vmatprep.mubr.bf16.mxu0 0
      %2354 = vmatmul.mubr.bf16.gmra.mrb[0].mxu0 %v2243
      %v2355 = vpop.f32.mrb[0].mxu0
      %v2356 = vadd.f32 0.0, %v2355
      %v2357 = vpop.f32.mrb[0].mxu0
      %v2358 = vpop.f32.mrb[0].mxu0
      %v2359 = vadd.f32 0.0, %v2358
      %v2360 = vpop.f32.mrb[0].mxu0
      %2361 = vmatprep.mubr.bf16.mxu0 0
      %2362 = vmatmul.mubr.bf16.gmra.mrb[0].mxu0 %v2246
      %v2363 = vpop.f32.mrb[0].mxu0
      %v2364 = vadd.f32 0.0, %v2363
      %v2365 = vpop.f32.mrb[0].mxu0
      %v2366 = vpop.f32.mrb[0].mxu0
      %v2367 = vadd.f32 0.0, %v2366
      %v2368 = vpop.f32.mrb[0].mxu0
      %2369 = vmatprep.mubr.bf16.mxu0 0
      %2370 = vmatmul.mubr.bf16.gmra.mrb[0].mxu0 %v2249
      %v2371 = vpop.f32.mrb[0].mxu0
      %v2372 = vadd.f32 0.0, %v2371
      %v2373 = vpop.f32.mrb[0].mxu0
      %v2374 = vpop.f32.mrb[0].mxu0
      %v2375 = vadd.f32 0.0, %v2374
      %v2376 = vpop.f32.mrb[0].mxu0
      %2377 = vmatprep.mubr.bf16.mxu0 0
      %2378 = vmatmul.mubr.bf16.gmra.mrb[0].mxu0 %v2252
      %v2379 = vpop.f32.mrb[0].mxu0
      %v2380 = vadd.f32 0.0, %v2379
      %v2381 = vpop.f32.mrb[0].mxu0
      %v2382 = vpop.f32.mrb[0].mxu0
      %v2383 = vadd.f32 0.0, %v2382
      %v2384 = vpop.f32.mrb[0].mxu0
      %2385 = vmatprep.mubr.bf16.mxu0 0
      %2386 = vmatmul.mubr.bf16.gmra.mrb[0].mxu0 %v2255
      %v2387 = vpop.f32.mrb[0].mxu0
      %v2388 = vadd.f32 0.0, %v2387
      %v2389 = vpop.f32.mrb[0].mxu0
      %v2390 = vpop.f32.mrb[0].mxu0
      %v2391 = vadd.f32 0.0, %v2390
      %v2392 = vpop.f32.mrb[0].mxu0
      %2393 = vmatprep.mubr.bf16.mxu0 0
      %2394 = vmatmul.mubr.bf16.gmra.mrb[0].mxu0 %v2258
      %v2395 = vpop.f32.mrb[0].mxu0
      %v2396 = vadd.f32 0.0, %v2395
      %v2397 = vpop.f32.mrb[0].mxu0
      %v2398 = vpop.f32.mrb[0].mxu0
      %v2399 = vadd.f32 0.0, %v2398
      %v2400 = vpop.f32.mrb[0].mxu0
      %2401 = vmatprep.mubr.bf16.mxu0 0
      %2402 = vmatmul.mubr.bf16.gmra.mrb[0].mxu0 %v2261
      %v2403 = vpop.f32.mrb[0].mxu0
      %v2404 = vadd.f32 0.0, %v2403
      %v2405 = vpop.f32.mrb[0].mxu0
      %v2406 = vpop.f32.mrb[0].mxu0
      %v2407 = vadd.f32 0.0, %v2406
      %v2408 = vpop.f32.mrb[0].mxu0
      %2409 = vmatprep.mubr.bf16.mxu0 0
      %2410 = vmatmul.mubr.bf16.gmra.mrb[0].mxu0 %v2264
      %v2411 = vpop.f32.mrb[0].mxu0
      %v2412 = vadd.f32 0.0, %v2411
      %v2413 = vpop.f32.mrb[0].mxu0
      %v2414 = vpop.f32.mrb[0].mxu0
      %v2415 = vadd.f32 0.0, %v2414
      %v2416 = vpop.f32.mrb[0].mxu0
      %2417 = vmatprep.mubr.bf16.mxu0 0
      %2418 = vmatmul.mubr.bf16.gmra.mrb[0].mxu0 %v2267
      %v2419 = vpop.f32.mrb[0].mxu0
      %v2420 = vadd.f32 0.0, %v2419
      %v2421 = vpop.f32.mrb[0].mxu0
      %v2422 = vpop.f32.mrb[0].mxu0
      %v2423 = vadd.f32 0.0, %v2422
      %v2424 = vpop.f32.mrb[0].mxu0
      %2425 = vmatprep.mubr.bf16.mxu0 0
      %2426 = vmatmul.mubr.bf16.gmra.mrb[0].mxu0 %v2270
      %v2427 = vpop.f32.mrb[0].mxu0
      %v2428 = vadd.f32 0.0, %v2427
      %v2429 = vpop.f32.mrb[0].mxu0
      %v2430 = vpop.f32.mrb[0].mxu0
      %v2431 = vadd.f32 0.0, %v2430
      %v2432 = vpop.f32.mrb[0].mxu0
      %2433 = vmatprep.mubr.bf16.mxu0 0
      %2434 = vmatmul.mubr.bf16.gmra.mrb[0].mxu0 %v2273
      %v2435 = vpop.f32.mrb[0].mxu0
      %v2436 = vadd.f32 0.0, %v2435
      %v2437 = vpop.f32.mrb[0].mxu0
      %v2438 = vpop.f32.mrb[0].mxu0
      %v2439 = vadd.f32 0.0, %v2438
      %v2440 = vpop.f32.mrb[0].mxu0
      %2441 = vmatprep.mubr.bf16.mxu0 0
      %2442 = vmatmul.mubr.bf16.gmra.mrb[0].mxu0 %v2276
      %v2443 = vpop.f32.mrb[0].mxu0
      %v2444 = vadd.f32 0.0, %v2443
      %v2445 = vpop.f32.mrb[0].mxu0
      %v2446 = vpop.f32.mrb[0].mxu0
      %v2447 = vpop.f32.mrb[0].mxu0
      %2448 = vdwg.mxu0
      %v2449 = vadd.f32 %v2155, %v2316
      %v2450 = vadd.f32 %v2156, %v2319
      %v2451 = vadd.f32 %v2157, %v2324
      %v2452 = vadd.f32 %v2158, %v2327
      %v2453 = vadd.f32 %v2159, %v2332
      %v2454 = vadd.f32 %v2160, %v2335
      %v2455 = vadd.f32 %v2161, %v2340
      %v2456 = vadd.f32 %v2162, %v2343
      %v2457 = vadd.f32 %v2163, %v2348
      %v2458 = vadd.f32 %v2164, %v2351
      %v2459 = vadd.f32 %v2165, %v2356
      %v2460 = vadd.f32 %v2166, %v2359
      %v2461 = vadd.f32 %v2167, %v2364
      %v2462 = vadd.f32 %v2168, %v2367
      %v2463 = vadd.f32 %v2169, %v2372
      %v2464 = vadd.f32 %v2170, %v2375
      %v2465 = vadd.f32 %v2171, %v2380
      %v2466 = vadd.f32 %v2172, %v2383
      %v2467 = vadd.f32 %v2173, %v2388
      %v2468 = vadd.f32 %v2174, %v2391
      %v2469 = vadd.f32 %v2175, %v2396
      %v2470 = vadd.f32 %v2176, %v2399
      %v2471 = vadd.f32 %v2177, %v2404
      %v2472 = vadd.f32 %v2178, %v2407
      %v2473 = vadd.f32 %v2179, %v2412
      %v2474 = vadd.f32 %v2180, %v2415
      %v2475 = vadd.f32 %v2181, %v2420
      %v2476 = vadd.f32 %v2182, %v2423
      %v2477 = vadd.f32 %v2183, %v2428
      %v2478 = vadd.f32 %v2184, %v2431
      %v2479 = vadd.f32 %v2185, %v2436
      %v2480 = vadd.f32 %v2186, %v2439
      %v2481 = vadd.f32 %v2187, %v2444
      %v2482 = vld [vmem:[%s303 + $0x18] sm:$0xf]
      %v2483 = vld [vmem:[%s303 + $0x1c] sm:$0xf]
      %v2484 = vld [vmem:[%s303 + $0x20] sm:$0xf]
      %v2485 = vld [vmem:[%s303 + $0x24] sm:$0xf]
      %v2486 = vld [vmem:[%s303 + $0x28] sm:$0xf]
      %v2487 = vld [vmem:[%s303 + $0x2c] sm:$0xf]
      %v2488 = vld [vmem:[%s303 + $0x30] sm:$0xf]
      %v2489 = vld [vmem:[%s303 + $0x34] sm:$0xf]
      %v2490 = vld [vmem:[%s303 + $0x38] sm:$0xf]
      %v2491 = vld [vmem:[%s303 + $0x3c] sm:$0xf]
      %v2492 = vld [vmem:[%s303 + $0x40] sm:$0xf]
      %v2493 = vld [vmem:[%s303 + $0x44] sm:$0xf]
      %v2494 = vld [vmem:[%s303 + $0x48] sm:$0xf]
      %v2495 = vld [vmem:[%s303 + $0x4c] sm:$0xf]
      %v2496 = vld [vmem:[%s303 + $0x50] sm:$0xf]
      %v2497 = vld [vmem:[%s303 + $0x54] sm:$0xf]
      %v2498 = vld [vmem:[%s303 + $0x58] sm:$0xf]
      %v2499 = vld [vmem:[%s303 + $0x5c] sm:$0xf]
      %v2500 = vld [vmem:[%s303 + $0x60] sm:$0xf]
      %v2501 = vld [vmem:[%s303 + $0x64] sm:$0xf]
      %v2502 = vld [vmem:[%s303 + $0x68] sm:$0xf]
      %v2503 = vld [vmem:[%s303 + $0x6c] sm:$0xf]
      %v2504 = vld [vmem:[%s303 + $0x70] sm:$0xf]
      %v2505 = vld [vmem:[%s303 + $0x74] sm:$0xf]
      %v2506 = vld [vmem:[%s303 + $0x78] sm:$0xf]
      %v2507 = vld [vmem:[%s303 + $0x7c] sm:$0xf]
      %v2508 = vld [vmem:[%s303 + $0x80] sm:$0xf]
      %v2509 = vld [vmem:[%s303 + $0x84] sm:$0xf]
      %v2510 = vld [vmem:[%s303 + $0x88] sm:$0xf]
      %v2511 = vld [vmem:[%s303 + $0x8c] sm:$0xf]
      %v2512 = vld [vmem:[%s303 + $0x90] sm:$0xf]
      %v2513 = vld [vmem:[%s303 + $0x94] sm:$0xf]
      %v2514 = vld [vmem:[%s303 + $0x98] sm:$0xf]
      %s2515 = scalar_lea.vmem %s1, 12
      %v2516 = vld [vmem:[%s2515] sm:$0x3]
      %v2550 = vunpack.c.l.b16 %v2482
      %v2551 = vunpack.c.l.b16 %v2483
      %v2552 = vunpack.c.l.b16 %v2484
      %v2553 = vunpack.c.l.b16 %v2485
      %v2554 = vunpack.c.l.b16 %v2486
      %v2555 = vunpack.c.l.b16 %v2487
      %v2556 = vunpack.c.l.b16 %v2488
      %v2557 = vunpack.c.l.b16 %v2489
      %v2558 = vunpack.c.l.b16 %v2490
      %v2559 = vunpack.c.l.b16 %v2491
      %v2560 = vunpack.c.l.b16 %v2492
      %v2561 = vunpack.c.l.b16 %v2493
      %v2562 = vunpack.c.l.b16 %v2494
      %v2563 = vunpack.c.l.b16 %v2495
      %v2564 = vunpack.c.l.b16 %v2496
      %v2565 = vunpack.c.l.b16 %v2497
      %v2566 = vunpack.c.l.b16 %v2498
      %v2567 = vunpack.c.l.b16 %v2499
      %v2568 = vunpack.c.l.b16 %v2500
      %v2569 = vunpack.c.l.b16 %v2501
      %v2570 = vunpack.c.l.b16 %v2502
      %v2571 = vunpack.c.l.b16 %v2503
      %v2572 = vunpack.c.l.b16 %v2504
      %v2573 = vunpack.c.l.b16 %v2505
      %v2574 = vunpack.c.l.b16 %v2506
      %v2575 = vunpack.c.l.b16 %v2507
      %v2576 = vunpack.c.l.b16 %v2508
      %v2577 = vunpack.c.l.b16 %v2509
      %v2578 = vunpack.c.l.b16 %v2510
      %v2579 = vunpack.c.l.b16 %v2511
      %v2580 = vunpack.c.l.b16 %v2512
      %v2581 = vunpack.c.l.b16 %v2513
      %v2582 = vunpack.c.l.b16 %v2514
      %v2583 = vpack.c.b16 %v2551, %v2550
      %v2584 = vpack.c.b16 %v2553, %v2552
      %v2585 = vpack.c.b16 %v2555, %v2554
      %v2586 = vpack.c.b16 %v2557, %v2556
      %v2587 = vpack.c.b16 %v2559, %v2558
      %v2588 = vpack.c.b16 %v2561, %v2560
      %v2589 = vpack.c.b16 %v2563, %v2562
      %v2590 = vpack.c.b16 %v2565, %v2564
      %v2591 = vpack.c.b16 %v2567, %v2566
      %v2592 = vpack.c.b16 %v2569, %v2568
      %v2593 = vpack.c.b16 %v2571, %v2570
      %v2594 = vpack.c.b16 %v2573, %v2572
      %v2595 = vpack.c.b16 %v2575, %v2574
      %v2596 = vpack.c.b16 %v2577, %v2576
      %v2597 = vpack.c.b16 %v2579, %v2578
      %v2598 = vpack.c.b16 %v2581, %v2580
      %v2599 = vpack.c.b16 %v2582, %v2582
      %v2601 = vsel %vm575, %v2583, 0
      %v2604 = vsel %vm575, %v2584, 0
      %v2607 = vsel %vm575, %v2585, 0
      %v2610 = vsel %vm575, %v2586, 0
      %v2613 = vsel %vm575, %v2587, 0
      %v2616 = vsel %vm575, %v2588, 0
      %v2619 = vsel %vm575, %v2589, 0
      %v2622 = vsel %vm575, %v2590, 0
      %v2625 = vsel %vm575, %v2591, 0
      %v2628 = vsel %vm575, %v2592, 0
      %v2631 = vsel %vm575, %v2593, 0
      %v2634 = vsel %vm575, %v2594, 0
      %v2637 = vsel %vm575, %v2595, 0
      %v2640 = vsel %vm575, %v2596, 0
      %v2643 = vsel %vm575, %v2597, 0
      %v2646 = vsel %vm575, %v2598, 0
      %v2649 = vsel %vm575, %v2599, 0
      %v2652 = vand.u32 %v2516, %v630
      %2654 = vmatprep.subr.bf16.mxu0 0
      %2655 = vmatpush1.bf16.msra.mxu0 %v2652
      %2656 = vmatprep.subr.bf16.mxu0 0
      %2657 = vmatpush1.bf16.msra.mxu0 0
      %2658 = vmatprep.subr.bf16.mxu0 0
      %2659 = vmatpush1.bf16.msra.mxu0 0
      %2660 = vmatprep.subr.bf16.mxu0 0
      %2661 = vmatpush1.bf16.msra.mxu0 0
      %2662 = vmatprep.subr.bf16.mxu0 0
      %2663 = vmatpush1.bf16.msra.mxu0 0
      %2664 = vmatprep.subr.bf16.mxu0 0
      %2665 = vmatpush1.bf16.msra.mxu0 0
      %2666 = vmatprep.subr.bf16.mxu0 0
      %2667 = vmatpush1.bf16.msra.mxu0 0
      %2668 = vmatprep.subr.bf16.mxu0 0
      %2669 = vmatpush1.bf16.msra.mxu0 0
      %2670 = vmatprep.subr.bf16.mxu0 0
      %2671 = vmatpush1.bf16.msra.mxu0 0
      %2672 = vmatprep.subr.bf16.mxu0 0
      %2673 = vmatpush1.bf16.msra.mxu0 0
      %2674 = vmatprep.subr.bf16.mxu0 0
      %2675 = vmatpush1.bf16.msra.mxu0 0
      %2676 = vmatprep.subr.bf16.mxu0 0
      %2677 = vmatpush1.bf16.msra.mxu0 0
      %2678 = vmatprep.subr.bf16.mxu0 0
      %2679 = vmatpush1.bf16.msra.mxu0 0
      %2680 = vmatprep.subr.bf16.mxu0 0
      %2681 = vmatpush1.bf16.msra.mxu0 0
      %2682 = vmatprep.subr.bf16.mxu0 0
      %2683 = vmatpush1.bf16.msra.mxu0 0
      %2684 = vmatprep.subr.bf16.mxu0 0
      %2685 = vmatpush1.bf16.msra.mxu0 0
      %2686 = vmatprep.mubr.bf16.mxu0 0
      %2687 = vmatmul.mubr.bf16.gmra.mrb[0].mxu0 %v2601
      %v2688 = vpop.f32.mrb[0].mxu0
      %v2689 = vadd.f32 0.0, %v2688
      %v2690 = vpop.f32.mrb[0].mxu0
      %v2691 = vpop.f32.mrb[0].mxu0
      %v2692 = vadd.f32 0.0, %v2691
      %v2693 = vpop.f32.mrb[0].mxu0
      %2694 = vmatprep.mubr.bf16.mxu0 0
      %2695 = vmatmul.mubr.bf16.gmra.mrb[0].mxu0 %v2604
      %v2696 = vpop.f32.mrb[0].mxu0
      %v2697 = vadd.f32 0.0, %v2696
      %v2698 = vpop.f32.mrb[0].mxu0
      %v2699 = vpop.f32.mrb[0].mxu0
      %v2700 = vadd.f32 0.0, %v2699
      %v2701 = vpop.f32.mrb[0].mxu0
      %2702 = vmatprep.mubr.bf16.mxu0 0
      %2703 = vmatmul.mubr.bf16.gmra.mrb[0].mxu0 %v2607
      %v2704 = vpop.f32.mrb[0].mxu0
      %v2705 = vadd.f32 0.0, %v2704
      %v2706 = vpop.f32.mrb[0].mxu0
      %v2707 = vpop.f32.mrb[0].mxu0
      %v2708 = vadd.f32 0.0, %v2707
      %v2709 = vpop.f32.mrb[0].mxu0
      %2710 = vmatprep.mubr.bf16.mxu0 0
      %2711 = vmatmul.mubr.bf16.gmra.mrb[0].mxu0 %v2610
      %v2712 = vpop.f32.mrb[0].mxu0
      %v2713 = vadd.f32 0.0, %v2712
      %v2714 = vpop.f32.mrb[0].mxu0
      %v2715 = vpop.f32.mrb[0].mxu0
      %v2716 = vadd.f32 0.0, %v2715
      %v2717 = vpop.f32.mrb[0].mxu0
      %2718 = vmatprep.mubr.bf16.mxu0 0
      %2719 = vmatmul.mubr.bf16.gmra.mrb[0].mxu0 %v2613
      %v2720 = vpop.f32.mrb[0].mxu0
      %v2721 = vadd.f32 0.0, %v2720
      %v2722 = vpop.f32.mrb[0].mxu0
      %v2723 = vpop.f32.mrb[0].mxu0
      %v2724 = vadd.f32 0.0, %v2723
      %v2725 = vpop.f32.mrb[0].mxu0
      %2726 = vmatprep.mubr.bf16.mxu0 0
      %2727 = vmatmul.mubr.bf16.gmra.mrb[0].mxu0 %v2616
      %v2728 = vpop.f32.mrb[0].mxu0
      %v2729 = vadd.f32 0.0, %v2728
      %v2730 = vpop.f32.mrb[0].mxu0
      %v2731 = vpop.f32.mrb[0].mxu0
      %v2732 = vadd.f32 0.0, %v2731
      %v2733 = vpop.f32.mrb[0].mxu0
      %2734 = vmatprep.mubr.bf16.mxu0 0
      %2735 = vmatmul.mubr.bf16.gmra.mrb[0].mxu0 %v2619
      %v2736 = vpop.f32.mrb[0].mxu0
      %v2737 = vadd.f32 0.0, %v2736
      %v2738 = vpop.f32.mrb[0].mxu0
      %v2739 = vpop.f32.mrb[0].mxu0
      %v2740 = vadd.f32 0.0, %v2739
      %v2741 = vpop.f32.mrb[0].mxu0
      %2742 = vmatprep.mubr.bf16.mxu0 0
      %2743 = vmatmul.mubr.bf16.gmra.mrb[0].mxu0 %v2622
      %v2744 = vpop.f32.mrb[0].mxu0
      %v2745 = vadd.f32 0.0, %v2744
      %v2746 = vpop.f32.mrb[0].mxu0
      %v2747 = vpop.f32.mrb[0].mxu0
      %v2748 = vadd.f32 0.0, %v2747
      %v2749 = vpop.f32.mrb[0].mxu0
      %2750 = vmatprep.mubr.bf16.mxu0 0
      %2751 = vmatmul.mubr.bf16.gmra.mrb[0].mxu0 %v2625
      %v2752 = vpop.f32.mrb[0].mxu0
      %v2753 = vadd.f32 0.0, %v2752
      %v2754 = vpop.f32.mrb[0].mxu0
      %v2755 = vpop.f32.mrb[0].mxu0
      %v2756 = vadd.f32 0.0, %v2755
      %v2757 = vpop.f32.mrb[0].mxu0
      %2758 = vmatprep.mubr.bf16.mxu0 0
      %2759 = vmatmul.mubr.bf16.gmra.mrb[0].mxu0 %v2628
      %v2760 = vpop.f32.mrb[0].mxu0
      %v2761 = vadd.f32 0.0, %v2760
      %v2762 = vpop.f32.mrb[0].mxu0
      %v2763 = vpop.f32.mrb[0].mxu0
      %v2764 = vadd.f32 0.0, %v2763
      %v2765 = vpop.f32.mrb[0].mxu0
      %2766 = vmatprep.mubr.bf16.mxu0 0
      %2767 = vmatmul.mubr.bf16.gmra.mrb[0].mxu0 %v2631
      %v2768 = vpop.f32.mrb[0].mxu0
      %v2769 = vadd.f32 0.0, %v2768
      %v2770 = vpop.f32.mrb[0].mxu0
      %v2771 = vpop.f32.mrb[0].mxu0
      %v2772 = vadd.f32 0.0, %v2771
      %v2773 = vpop.f32.mrb[0].mxu0
      %2774 = vmatprep.mubr.bf16.mxu0 0
      %2775 = vmatmul.mubr.bf16.gmra.mrb[0].mxu0 %v2634
      %v2776 = vpop.f32.mrb[0].mxu0
      %v2777 = vadd.f32 0.0, %v2776
      %v2778 = vpop.f32.mrb[0].mxu0
      %v2779 = vpop.f32.mrb[0].mxu0
      %v2780 = vadd.f32 0.0, %v2779
      %v2781 = vpop.f32.mrb[0].mxu0
      %2782 = vmatprep.mubr.bf16.mxu0 0
      %2783 = vmatmul.mubr.bf16.gmra.mrb[0].mxu0 %v2637
      %v2784 = vpop.f32.mrb[0].mxu0
      %v2785 = vadd.f32 0.0, %v2784
      %v2786 = vpop.f32.mrb[0].mxu0
      %v2787 = vpop.f32.mrb[0].mxu0
      %v2788 = vadd.f32 0.0, %v2787
      %v2789 = vpop.f32.mrb[0].mxu0
      %2790 = vmatprep.mubr.bf16.mxu0 0
      %2791 = vmatmul.mubr.bf16.gmra.mrb[0].mxu0 %v2640
      %v2792 = vpop.f32.mrb[0].mxu0
      %v2793 = vadd.f32 0.0, %v2792
      %v2794 = vpop.f32.mrb[0].mxu0
      %v2795 = vpop.f32.mrb[0].mxu0
      %v2796 = vadd.f32 0.0, %v2795
      %v2797 = vpop.f32.mrb[0].mxu0
      %2798 = vmatprep.mubr.bf16.mxu0 0
      %2799 = vmatmul.mubr.bf16.gmra.mrb[0].mxu0 %v2643
      %v2800 = vpop.f32.mrb[0].mxu0
      %v2801 = vadd.f32 0.0, %v2800
      %v2802 = vpop.f32.mrb[0].mxu0
      %v2803 = vpop.f32.mrb[0].mxu0
      %v2804 = vadd.f32 0.0, %v2803
      %v2805 = vpop.f32.mrb[0].mxu0
      %2806 = vmatprep.mubr.bf16.mxu0 0
      %2807 = vmatmul.mubr.bf16.gmra.mrb[0].mxu0 %v2646
      %v2808 = vpop.f32.mrb[0].mxu0
      %v2809 = vadd.f32 0.0, %v2808
      %v2810 = vpop.f32.mrb[0].mxu0
      %v2811 = vpop.f32.mrb[0].mxu0
      %v2812 = vadd.f32 0.0, %v2811
      %v2813 = vpop.f32.mrb[0].mxu0
      %2814 = vmatprep.mubr.bf16.mxu0 0
      %2815 = vmatmul.mubr.bf16.gmra.mrb[0].mxu0 %v2649
      %v2816 = vpop.f32.mrb[0].mxu0
      %v2817 = vadd.f32 0.0, %v2816
      %v2818 = vpop.f32.mrb[0].mxu0
      %v2819 = vpop.f32.mrb[0].mxu0
      %v2820 = vpop.f32.mrb[0].mxu0
      %2821 = vdwg.mxu0
      %v2822 = vadd.f32 %v2449, %v2689
      %v2823 = vadd.f32 %v2450, %v2692
      %v2824 = vadd.f32 %v2451, %v2697
      %v2825 = vadd.f32 %v2452, %v2700
      %v2826 = vadd.f32 %v2453, %v2705
      %v2827 = vadd.f32 %v2454, %v2708
      %v2828 = vadd.f32 %v2455, %v2713
      %v2829 = vadd.f32 %v2456, %v2716
      %v2830 = vadd.f32 %v2457, %v2721
      %v2831 = vadd.f32 %v2458, %v2724
      %v2832 = vadd.f32 %v2459, %v2729
      %v2833 = vadd.f32 %v2460, %v2732
      %v2834 = vadd.f32 %v2461, %v2737
      %v2835 = vadd.f32 %v2462, %v2740
      %v2836 = vadd.f32 %v2463, %v2745
      %v2837 = vadd.f32 %v2464, %v2748
      %v2838 = vadd.f32 %v2465, %v2753
      %v2839 = vadd.f32 %v2466, %v2756
      %v2840 = vadd.f32 %v2467, %v2761
      %v2841 = vadd.f32 %v2468, %v2764
      %v2842 = vadd.f32 %v2469, %v2769
      %v2843 = vadd.f32 %v2470, %v2772
      %v2844 = vadd.f32 %v2471, %v2777
      %v2845 = vadd.f32 %v2472, %v2780
      %v2846 = vadd.f32 %v2473, %v2785
      %v2847 = vadd.f32 %v2474, %v2788
      %v2848 = vadd.f32 %v2475, %v2793
      %v2849 = vadd.f32 %v2476, %v2796
      %v2850 = vadd.f32 %v2477, %v2801
      %v2851 = vadd.f32 %v2478, %v2804
      %v2852 = vadd.f32 %v2479, %v2809
      %v2853 = vadd.f32 %v2480, %v2812
      %v2854 = vadd.f32 %v2481, %v2817
      %v2855 = vld [vmem:[%s303 + $0x18] sm:$0xf]
      %v2856 = vld [vmem:[%s303 + $0x1c] sm:$0xf]
      %v2857 = vld [vmem:[%s303 + $0x20] sm:$0xf]
      %v2858 = vld [vmem:[%s303 + $0x24] sm:$0xf]
      %v2859 = vld [vmem:[%s303 + $0x28] sm:$0xf]
      %v2860 = vld [vmem:[%s303 + $0x2c] sm:$0xf]
      %v2861 = vld [vmem:[%s303 + $0x30] sm:$0xf]
      %v2862 = vld [vmem:[%s303 + $0x34] sm:$0xf]
      %v2863 = vld [vmem:[%s303 + $0x38] sm:$0xf]
      %v2864 = vld [vmem:[%s303 + $0x3c] sm:$0xf]
      %v2865 = vld [vmem:[%s303 + $0x40] sm:$0xf]
      %v2866 = vld [vmem:[%s303 + $0x44] sm:$0xf]
      %v2867 = vld [vmem:[%s303 + $0x48] sm:$0xf]
      %v2868 = vld [vmem:[%s303 + $0x4c] sm:$0xf]
      %v2869 = vld [vmem:[%s303 + $0x50] sm:$0xf]
      %v2870 = vld [vmem:[%s303 + $0x54] sm:$0xf]
      %v2871 = vld [vmem:[%s303 + $0x58] sm:$0xf]
      %v2872 = vld [vmem:[%s303 + $0x5c] sm:$0xf]
      %v2873 = vld [vmem:[%s303 + $0x60] sm:$0xf]
      %v2874 = vld [vmem:[%s303 + $0x64] sm:$0xf]
      %v2875 = vld [vmem:[%s303 + $0x68] sm:$0xf]
      %v2876 = vld [vmem:[%s303 + $0x6c] sm:$0xf]
      %v2877 = vld [vmem:[%s303 + $0x70] sm:$0xf]
      %v2878 = vld [vmem:[%s303 + $0x74] sm:$0xf]
      %v2879 = vld [vmem:[%s303 + $0x78] sm:$0xf]
      %v2880 = vld [vmem:[%s303 + $0x7c] sm:$0xf]
      %v2881 = vld [vmem:[%s303 + $0x80] sm:$0xf]
      %v2882 = vld [vmem:[%s303 + $0x84] sm:$0xf]
      %v2883 = vld [vmem:[%s303 + $0x88] sm:$0xf]
      %v2884 = vld [vmem:[%s303 + $0x8c] sm:$0xf]
      %v2885 = vld [vmem:[%s303 + $0x90] sm:$0xf]
      %v2886 = vld [vmem:[%s303 + $0x94] sm:$0xf]
      %v2887 = vld [vmem:[%s303 + $0x98] sm:$0xf]
      %v2888 = vld [vmem:[%s303 + $0x9c] sm:$0x1]
      %s2889 = scalar_lea.vmem %s1, 14
      %v2890 = vld [vmem:[%s2889] sm:$0x3]
      %v2925 = vunpack.c.l.b16 %v2855
      %v2926 = vunpack.c.l.b16 %v2856
      %v2927 = vunpack.c.l.b16 %v2857
      %v2928 = vunpack.c.l.b16 %v2858
      %v2929 = vunpack.c.l.b16 %v2859
      %v2930 = vunpack.c.l.b16 %v2860
      %v2931 = vunpack.c.l.b16 %v2861
      %v2932 = vunpack.c.l.b16 %v2862
      %v2933 = vunpack.c.l.b16 %v2863
      %v2934 = vunpack.c.l.b16 %v2864
      %v2935 = vunpack.c.l.b16 %v2865
      %v2936 = vunpack.c.l.b16 %v2866
      %v2937 = vunpack.c.l.b16 %v2867
      %v2938 = vunpack.c.l.b16 %v2868
      %v2939 = vunpack.c.l.b16 %v2869
      %v2940 = vunpack.c.l.b16 %v2870
      %v2941 = vunpack.c.l.b16 %v2871
      %v2942 = vunpack.c.l.b16 %v2872
      %v2943 = vunpack.c.l.b16 %v2873
      %v2944 = vunpack.c.l.b16 %v2874
      %v2945 = vunpack.c.l.b16 %v2875
      %v2946 = vunpack.c.l.b16 %v2876
      %v2947 = vunpack.c.l.b16 %v2877
      %v2948 = vunpack.c.l.b16 %v2878
      %v2949 = vunpack.c.l.b16 %v2879
      %v2950 = vunpack.c.l.b16 %v2880
      %v2951 = vunpack.c.l.b16 %v2881
      %v2952 = vunpack.c.l.b16 %v2882
      %v2953 = vunpack.c.l.b16 %v2883
      %v2954 = vunpack.c.l.b16 %v2884
      %v2955 = vunpack.c.l.b16 %v2885
      %v2956 = vunpack.c.l.b16 %v2886
      %v2957 = vunpack.c.l.b16 %v2887
      %v2958 = vunpack.c.l.b16 %v2888
      %v2959 = vpack.c.b16 %v2926, %v2925
      %v2960 = vpack.c.b16 %v2928, %v2927
      %v2961 = vpack.c.b16 %v2930, %v2929
      %v2962 = vpack.c.b16 %v2932, %v2931
      %v2963 = vpack.c.b16 %v2934, %v2933
      %v2964 = vpack.c.b16 %v2936, %v2935
      %v2965 = vpack.c.b16 %v2938, %v2937
      %v2966 = vpack.c.b16 %v2940, %v2939
      %v2967 = vpack.c.b16 %v2942, %v2941
      %v2968 = vpack.c.b16 %v2944, %v2943
      %v2969 = vpack.c.b16 %v2946, %v2945
      %v2970 = vpack.c.b16 %v2948, %v2947
      %v2971 = vpack.c.b16 %v2950, %v2949
      %v2972 = vpack.c.b16 %v2952, %v2951
      %v2973 = vpack.c.b16 %v2954, %v2953
      %v2974 = vpack.c.b16 %v2956, %v2955
      %v2975 = vpack.c.b16 %v2958, %v2957
      %v2977 = vshrl.u32 %v2959, 16
      %v2979 = vshll.u32 %v2959, 16
      %v2981 = vrot.slane %v2979, 1
      %v2982 = vor.u32 %v2977, %v2981
      %v2984 = vshll.u32 %v2960, 16
      %v2986 = vrot.slane %v2984, 1
      %v2987 = vsel %vm439, %v2982, %v2986
      %v2988 = vshrl.u32 %v2960, 16
      %v2990 = vor.u32 %v2988, %v2986
      %v2992 = vshll.u32 %v2961, 16
      %v2994 = vrot.slane %v2992, 1
      %v2995 = vsel %vm439, %v2990, %v2994
      %v2996 = vshrl.u32 %v2961, 16
      %v2998 = vor.u32 %v2996, %v2994
      %v3000 = vshll.u32 %v2962, 16
      %v3002 = vrot.slane %v3000, 1
      %v3003 = vsel %vm439, %v2998, %v3002
      %v3004 = vshrl.u32 %v2962, 16
      %v3006 = vor.u32 %v3004, %v3002
      %v3008 = vshll.u32 %v2963, 16
      %v3010 = vrot.slane %v3008, 1
      %v3011 = vsel %vm439, %v3006, %v3010
      %v3012 = vshrl.u32 %v2963, 16
      %v3014 = vor.u32 %v3012, %v3010
      %v3016 = vshll.u32 %v2964, 16
      %v3018 = vrot.slane %v3016, 1
      %v3019 = vsel %vm439, %v3014, %v3018
      %v3020 = vshrl.u32 %v2964, 16
      %v3022 = vor.u32 %v3020, %v3018
      %v3024 = vshll.u32 %v2965, 16
      %v3026 = vrot.slane %v3024, 1
      %v3027 = vsel %vm439, %v3022, %v3026
      %v3028 = vshrl.u32 %v2965, 16
      %v3030 = vor.u32 %v3028, %v3026
      %v3032 = vshll.u32 %v2966, 16
      %v3034 = vrot.slane %v3032, 1
      %v3035 = vsel %vm439, %v3030, %v3034
      %v3036 = vshrl.u32 %v2966, 16
      %v3038 = vor.u32 %v3036, %v3034
      %v3040 = vshll.u32 %v2967, 16
      %v3042 = vrot.slane %v3040, 1
      %v3043 = vsel %vm439, %v3038, %v3042
      %v3044 = vshrl.u32 %v2967, 16
      %v3046 = vor.u32 %v3044, %v3042
      %v3048 = vshll.u32 %v2968, 16
      %v3050 = vrot.slane %v3048, 1
      %v3051 = vsel %vm439, %v3046, %v3050
      %v3052 = vshrl.u32 %v2968, 16
      %v3054 = vor.u32 %v3052, %v3050
      %v3056 = vshll.u32 %v2969, 16
      %v3058 = vrot.slane %v3056, 1
      %v3059 = vsel %vm439, %v3054, %v3058
      %v3060 = vshrl.u32 %v2969, 16
      %v3062 = vor.u32 %v3060, %v3058
      %v3064 = vshll.u32 %v2970, 16
      %v3066 = vrot.slane %v3064, 1
      %v3067 = vsel %vm439, %v3062, %v3066
      %v3068 = vshrl.u32 %v2970, 16
      %v3070 = vor.u32 %v3068, %v3066
      %v3072 = vshll.u32 %v2971, 16
      %v3074 = vrot.slane %v3072, 1
      %v3075 = vsel %vm439, %v3070, %v3074
      %v3076 = vshrl.u32 %v2971, 16
      %v3078 = vor.u32 %v3076, %v3074
      %v3080 = vshll.u32 %v2972, 16
      %v3082 = vrot.slane %v3080, 1
      %v3083 = vsel %vm439, %v3078, %v3082
      %v3084 = vshrl.u32 %v2972, 16
      %v3086 = vor.u32 %v3084, %v3082
      %v3088 = vshll.u32 %v2973, 16
      %v3090 = vrot.slane %v3088, 1
      %v3091 = vsel %vm439, %v3086, %v3090
      %v3092 = vshrl.u32 %v2973, 16
      %v3094 = vor.u32 %v3092, %v3090
      %v3096 = vshll.u32 %v2974, 16
      %v3098 = vrot.slane %v3096, 1
      %v3099 = vsel %vm439, %v3094, %v3098
      %v3100 = vshrl.u32 %v2974, 16
      %v3102 = vor.u32 %v3100, %v3098
      %v3104 = vshll.u32 %v2975, 16
      %v3106 = vrot.slane %v3104, 1
      %v3107 = vsel %vm439, %v3102, %v3106
      %v3108 = vshrl.u32 %v2975, 16
      %v3110 = vor.u32 %v3108, %v3106
      %v3112 = vsel %vm575, %v2987, 0
      %v3115 = vsel %vm575, %v2995, 0
      %v3118 = vsel %vm575, %v3003, 0
      %v3121 = vsel %vm575, %v3011, 0
      %v3124 = vsel %vm575, %v3019, 0
      %v3127 = vsel %vm575, %v3027, 0
      %v3130 = vsel %vm575, %v3035, 0
      %v3133 = vsel %vm575, %v3043, 0
      %v3136 = vsel %vm575, %v3051, 0
      %v3139 = vsel %vm575, %v3059, 0
      %v3142 = vsel %vm575, %v3067, 0
      %v3145 = vsel %vm575, %v3075, 0
      %v3148 = vsel %vm575, %v3083, 0
      %v3151 = vsel %vm575, %v3091, 0
      %v3154 = vsel %vm575, %v3099, 0
      %v3157 = vsel %vm575, %v3107, 0
      %v3160 = vsel %vm575, %v3110, 0
      %v3163 = vand.u32 %v2890, %v630
      %3165 = vmatprep.subr.bf16.mxu0 0
      %3166 = vmatpush1.bf16.msra.mxu0 %v3163
      %3167 = vmatprep.subr.bf16.mxu0 0
      %3168 = vmatpush1.bf16.msra.mxu0 0
      %3169 = vmatprep.subr.bf16.mxu0 0
      %3170 = vmatpush1.bf16.msra.mxu0 0
      %3171 = vmatprep.subr.bf16.mxu0 0
      %3172 = vmatpush1.bf16.msra.mxu0 0
      %3173 = vmatprep.subr.bf16.mxu0 0
      %3174 = vmatpush1.bf16.msra.mxu0 0
      %3175 = vmatprep.subr.bf16.mxu0 0
      %3176 = vmatpush1.bf16.msra.mxu0 0
      %3177 = vmatprep.subr.bf16.mxu0 0
      %3178 = vmatpush1.bf16.msra.mxu0 0
      %3179 = vmatprep.subr.bf16.mxu0 0
      %3180 = vmatpush1.bf16.msra.mxu0 0
      %3181 = vmatprep.subr.bf16.mxu0 0
      %3182 = vmatpush1.bf16.msra.mxu0 0
      %3183 = vmatprep.subr.bf16.mxu0 0
      %3184 = vmatpush1.bf16.msra.mxu0 0
      %3185 = vmatprep.subr.bf16.mxu0 0
      %3186 = vmatpush1.bf16.msra.mxu0 0
      %3187 = vmatprep.subr.bf16.mxu0 0
      %3188 = vmatpush1.bf16.msra.mxu0 0
      %3189 = vmatprep.subr.bf16.mxu0 0
      %3190 = vmatpush1.bf16.msra.mxu0 0
      %3191 = vmatprep.subr.bf16.mxu0 0
      %3192 = vmatpush1.bf16.msra.mxu0 0
      %3193 = vmatprep.subr.bf16.mxu0 0
      %3194 = vmatpush1.bf16.msra.mxu0 0
      %3195 = vmatprep.subr.bf16.mxu0 0
      %3196 = vmatpush1.bf16.msra.mxu0 0
      %3197 = vmatprep.mubr.bf16.mxu0 0
      %3198 = vmatmul.mubr.bf16.gmra.mrb[0].mxu0 %v3112
      %v3199 = vpop.f32.mrb[0].mxu0
      %v3200 = vadd.f32 0.0, %v3199
      %v3201 = vpop.f32.mrb[0].mxu0
      %v3202 = vpop.f32.mrb[0].mxu0
      %v3203 = vadd.f32 0.0, %v3202
      %v3204 = vpop.f32.mrb[0].mxu0
      %3205 = vmatprep.mubr.bf16.mxu0 0
      %3206 = vmatmul.mubr.bf16.gmra.mrb[0].mxu0 %v3115
      %v3207 = vpop.f32.mrb[0].mxu0
      %v3208 = vadd.f32 0.0, %v3207
      %v3209 = vpop.f32.mrb[0].mxu0
      %v3210 = vpop.f32.mrb[0].mxu0
      %v3211 = vadd.f32 0.0, %v3210
      %v3212 = vpop.f32.mrb[0].mxu0
      %3213 = vmatprep.mubr.bf16.mxu0 0
      %3214 = vmatmul.mubr.bf16.gmra.mrb[0].mxu0 %v3118
      %v3215 = vpop.f32.mrb[0].mxu0
      %v3216 = vadd.f32 0.0, %v3215
      %v3217 = vpop.f32.mrb[0].mxu0
      %v3218 = vpop.f32.mrb[0].mxu0
      %v3219 = vadd.f32 0.0, %v3218
      %v3220 = vpop.f32.mrb[0].mxu0
      %3221 = vmatprep.mubr.bf16.mxu0 0
      %3222 = vmatmul.mubr.bf16.gmra.mrb[0].mxu0 %v3121
      %v3223 = vpop.f32.mrb[0].mxu0
      %v3224 = vadd.f32 0.0, %v3223
      %v3225 = vpop.f32.mrb[0].mxu0
      %v3226 = vpop.f32.mrb[0].mxu0
      %v3227 = vadd.f32 0.0, %v3226
      %v3228 = vpop.f32.mrb[0].mxu0
      %3229 = vmatprep.mubr.bf16.mxu0 0
      %3230 = vmatmul.mubr.bf16.gmra.mrb[0].mxu0 %v3124
      %v3231 = vpop.f32.mrb[0].mxu0
      %v3232 = vadd.f32 0.0, %v3231
      %v3233 = vpop.f32.mrb[0].mxu0
      %v3234 = vpop.f32.mrb[0].mxu0
      %v3235 = vadd.f32 0.0, %v3234
      %v3236 = vpop.f32.mrb[0].mxu0
      %3237 = vmatprep.mubr.bf16.mxu0 0
      %3238 = vmatmul.mubr.bf16.gmra.mrb[0].mxu0 %v3127
      %v3239 = vpop.f32.mrb[0].mxu0
      %v3240 = vadd.f32 0.0, %v3239
      %v3241 = vpop.f32.mrb[0].mxu0
      %v3242 = vpop.f32.mrb[0].mxu0
      %v3243 = vadd.f32 0.0, %v3242
      %v3244 = vpop.f32.mrb[0].mxu0
      %3245 = vmatprep.mubr.bf16.mxu0 0
      %3246 = vmatmul.mubr.bf16.gmra.mrb[0].mxu0 %v3130
      %v3247 = vpop.f32.mrb[0].mxu0
      %v3248 = vadd.f32 0.0, %v3247
      %v3249 = vpop.f32.mrb[0].mxu0
      %v3250 = vpop.f32.mrb[0].mxu0
      %v3251 = vadd.f32 0.0, %v3250
      %v3252 = vpop.f32.mrb[0].mxu0
      %3253 = vmatprep.mubr.bf16.mxu0 0
      %3254 = vmatmul.mubr.bf16.gmra.mrb[0].mxu0 %v3133
      %v3255 = vpop.f32.mrb[0].mxu0
      %v3256 = vadd.f32 0.0, %v3255
      %v3257 = vpop.f32.mrb[0].mxu0
      %v3258 = vpop.f32.mrb[0].mxu0
      %v3259 = vadd.f32 0.0, %v3258
      %v3260 = vpop.f32.mrb[0].mxu0
      %3261 = vmatprep.mubr.bf16.mxu0 0
      %3262 = vmatmul.mubr.bf16.gmra.mrb[0].mxu0 %v3136
      %v3263 = vpop.f32.mrb[0].mxu0
      %v3264 = vadd.f32 0.0, %v3263
      %v3265 = vpop.f32.mrb[0].mxu0
      %v3266 = vpop.f32.mrb[0].mxu0
      %v3267 = vadd.f32 0.0, %v3266
      %v3268 = vpop.f32.mrb[0].mxu0
      %3269 = vmatprep.mubr.bf16.mxu0 0
      %3270 = vmatmul.mubr.bf16.gmra.mrb[0].mxu0 %v3139
      %v3271 = vpop.f32.mrb[0].mxu0
      %v3272 = vadd.f32 0.0, %v3271
      %v3273 = vpop.f32.mrb[0].mxu0
      %v3274 = vpop.f32.mrb[0].mxu0
      %v3275 = vadd.f32 0.0, %v3274
      %v3276 = vpop.f32.mrb[0].mxu0
      %3277 = vmatprep.mubr.bf16.mxu0 0
      %3278 = vmatmul.mubr.bf16.gmra.mrb[0].mxu0 %v3142
      %v3279 = vpop.f32.mrb[0].mxu0
      %v3280 = vadd.f32 0.0, %v3279
      %v3281 = vpop.f32.mrb[0].mxu0
      %v3282 = vpop.f32.mrb[0].mxu0
      %v3283 = vadd.f32 0.0, %v3282
      %v3284 = vpop.f32.mrb[0].mxu0
      %3285 = vmatprep.mubr.bf16.mxu0 0
      %3286 = vmatmul.mubr.bf16.gmra.mrb[0].mxu0 %v3145
      %v3287 = vpop.f32.mrb[0].mxu0
      %v3288 = vadd.f32 0.0, %v3287
      %v3289 = vpop.f32.mrb[0].mxu0
      %v3290 = vpop.f32.mrb[0].mxu0
      %v3291 = vadd.f32 0.0, %v3290
      %v3292 = vpop.f32.mrb[0].mxu0
      %3293 = vmatprep.mubr.bf16.mxu0 0
      %3294 = vmatmul.mubr.bf16.gmra.mrb[0].mxu0 %v3148
      %v3295 = vpop.f32.mrb[0].mxu0
      %v3296 = vadd.f32 0.0, %v3295
      %v3297 = vpop.f32.mrb[0].mxu0
      %v3298 = vpop.f32.mrb[0].mxu0
      %v3299 = vadd.f32 0.0, %v3298
      %v3300 = vpop.f32.mrb[0].mxu0
      %3301 = vmatprep.mubr.bf16.mxu0 0
      %3302 = vmatmul.mubr.bf16.gmra.mrb[0].mxu0 %v3151
      %v3303 = vpop.f32.mrb[0].mxu0
      %v3304 = vadd.f32 0.0, %v3303
      %v3305 = vpop.f32.mrb[0].mxu0
      %v3306 = vpop.f32.mrb[0].mxu0
      %v3307 = vadd.f32 0.0, %v3306
      %v3308 = vpop.f32.mrb[0].mxu0
      %3309 = vmatprep.mubr.bf16.mxu0 0
      %3310 = vmatmul.mubr.bf16.gmra.mrb[0].mxu0 %v3154
      %v3311 = vpop.f32.mrb[0].mxu0
      %v3312 = vadd.f32 0.0, %v3311
      %v3313 = vpop.f32.mrb[0].mxu0
      %v3314 = vpop.f32.mrb[0].mxu0
      %v3315 = vadd.f32 0.0, %v3314
      %v3316 = vpop.f32.mrb[0].mxu0
      %3317 = vmatprep.mubr.bf16.mxu0 0
      %3318 = vmatmul.mubr.bf16.gmra.mrb[0].mxu0 %v3157
      %v3319 = vpop.f32.mrb[0].mxu0
      %v3320 = vadd.f32 0.0, %v3319
      %v3321 = vpop.f32.mrb[0].mxu0
      %v3322 = vpop.f32.mrb[0].mxu0
      %v3323 = vadd.f32 0.0, %v3322
      %v3324 = vpop.f32.mrb[0].mxu0
      %3325 = vmatprep.mubr.bf16.mxu0 0
      %3326 = vmatmul.mubr.bf16.gmra.mrb[0].mxu0 %v3160
      %v3327 = vpop.f32.mrb[0].mxu0
      %v3328 = vadd.f32 0.0, %v3327
      %v3329 = vpop.f32.mrb[0].mxu0
      %v3330 = vpop.f32.mrb[0].mxu0
      %v3331 = vpop.f32.mrb[0].mxu0
      %3332 = vdwg.mxu0
      %v3333 = vadd.f32 %v2822, %v3200
      %v3334 = vadd.f32 %v2823, %v3203
      %v3335 = vadd.f32 %v2824, %v3208
      %v3336 = vadd.f32 %v2825, %v3211
      %v3337 = vadd.f32 %v2826, %v3216
      %v3338 = vadd.f32 %v2827, %v3219
      %v3339 = vadd.f32 %v2828, %v3224
      %v3340 = vadd.f32 %v2829, %v3227
      %v3341 = vadd.f32 %v2830, %v3232
      %v3342 = vadd.f32 %v2831, %v3235
      %v3343 = vadd.f32 %v2832, %v3240
      %v3344 = vadd.f32 %v2833, %v3243
      %v3345 = vadd.f32 %v2834, %v3248
      %v3346 = vadd.f32 %v2835, %v3251
      %v3347 = vadd.f32 %v2836, %v3256
      %v3348 = vadd.f32 %v2837, %v3259
      %v3349 = vadd.f32 %v2838, %v3264
      %v3350 = vadd.f32 %v2839, %v3267
      %v3351 = vadd.f32 %v2840, %v3272
      %v3352 = vadd.f32 %v2841, %v3275
      %v3353 = vadd.f32 %v2842, %v3280
      %v3354 = vadd.f32 %v2843, %v3283
      %v3355 = vadd.f32 %v2844, %v3288
      %v3356 = vadd.f32 %v2845, %v3291
      %v3357 = vadd.f32 %v2846, %v3296
      %v3358 = vadd.f32 %v2847, %v3299
      %v3359 = vadd.f32 %v2848, %v3304
      %v3360 = vadd.f32 %v2849, %v3307
      %v3361 = vadd.f32 %v2850, %v3312
      %v3362 = vadd.f32 %v2851, %v3315
      %v3363 = vadd.f32 %v2852, %v3320
      %v3364 = vadd.f32 %v2853, %v3323
      %v3365 = vadd.f32 %v2854, %v3328
      %v3366 = vld [vmem:[%s303 + $0x18] sm:$0xe]
      %s3367 = scalar_lea.vmem %s1, 16
      %v3368 = vld [vmem:[%s3367] sm:$0x3]
      %v3370 = vunpack.c.l.b16 %v3366
      %v3371 = vpack.c.b16 %v2926, %v3370
      %v3372 = vrot.slane %v3371, 1
      %v3373 = vrot.slane %v2960, 1
      %v3374 = vsel %vm1015, %v3372, %v3373
      %v3375 = vrot.slane %v2961, 1
      %v3376 = vsel %vm1015, %v3373, %v3375
      %v3377 = vrot.slane %v2962, 1
      %v3378 = vsel %vm1015, %v3375, %v3377
      %v3379 = vrot.slane %v2963, 1
      %v3380 = vsel %vm1015, %v3377, %v3379
      %v3381 = vrot.slane %v2964, 1
      %v3382 = vsel %vm1015, %v3379, %v3381
      %v3383 = vrot.slane %v2965, 1
      %v3384 = vsel %vm1015, %v3381, %v3383
      %v3385 = vrot.slane %v2966, 1
      %v3386 = vsel %vm1015, %v3383, %v3385
      %v3387 = vrot.slane %v2967, 1
      %v3388 = vsel %vm1015, %v3385, %v3387
      %v3389 = vrot.slane %v2968, 1
      %v3390 = vsel %vm1015, %v3387, %v3389
      %v3391 = vrot.slane %v2969, 1
      %v3392 = vsel %vm1015, %v3389, %v3391
      %v3393 = vrot.slane %v2970, 1
      %v3394 = vsel %vm1015, %v3391, %v3393
      %v3395 = vrot.slane %v2971, 1
      %v3396 = vsel %vm1015, %v3393, %v3395
      %v3397 = vrot.slane %v2972, 1
      %v3398 = vsel %vm1015, %v3395, %v3397
      %v3399 = vrot.slane %v2973, 1
      %v3400 = vsel %vm1015, %v3397, %v3399
      %v3401 = vrot.slane %v2974, 1
      %v3402 = vsel %vm1015, %v3399, %v3401
      %v3403 = vrot.slane %v2975, 1
      %v3404 = vsel %vm1015, %v3401, %v3403
      %v3406 = vsel %vm575, %v3374, 0
      %v3409 = vsel %vm575, %v3376, 0
      %v3412 = vsel %vm575, %v3378, 0
      %v3415 = vsel %vm575, %v3380, 0
      %v3418 = vsel %vm575, %v3382, 0
      %v3421 = vsel %vm575, %v3384, 0
      %v3424 = vsel %vm575, %v3386, 0
      %v3427 = vsel %vm575, %v3388, 0
      %v3430 = vsel %vm575, %v3390, 0
      %v3433 = vsel %vm575, %v3392, 0
      %v3436 = vsel %vm575, %v3394, 0
      %v3439 = vsel %vm575, %v3396, 0
      %v3442 = vsel %vm575, %v3398, 0
      %v3445 = vsel %vm575, %v3400, 0
      %v3448 = vsel %vm575, %v3402, 0
      %v3451 = vsel %vm575, %v3404, 0
      %v3454 = vsel %vm575, %v3403, 0
      %v3457 = vand.u32 %v3368, %v630
      %3459 = vmatprep.subr.bf16.mxu0 0
      %3460 = vmatpush1.bf16.msra.mxu0 %v3457
      %3461 = vmatprep.subr.bf16.mxu0 0
      %3462 = vmatpush1.bf16.msra.mxu0 0
      %3463 = vmatprep.subr.bf16.mxu0 0
      %3464 = vmatpush1.bf16.msra.mxu0 0
      %3465 = vmatprep.subr.bf16.mxu0 0
      %3466 = vmatpush1.bf16.msra.mxu0 0
      %3467 = vmatprep.subr.bf16.mxu0 0
      %3468 = vmatpush1.bf16.msra.mxu0 0
      %3469 = vmatprep.subr.bf16.mxu0 0
      %3470 = vmatpush1.bf16.msra.mxu0 0
      %3471 = vmatprep.subr.bf16.mxu0 0
      %3472 = vmatpush1.bf16.msra.mxu0 0
      %3473 = vmatprep.subr.bf16.mxu0 0
      %3474 = vmatpush1.bf16.msra.mxu0 0
      %3475 = vmatprep.subr.bf16.mxu0 0
      %3476 = vmatpush1.bf16.msra.mxu0 0
      %3477 = vmatprep.subr.bf16.mxu0 0
      %3478 = vmatpush1.bf16.msra.mxu0 0
      %3479 = vmatprep.subr.bf16.mxu0 0
      %3480 = vmatpush1.bf16.msra.mxu0 0
      %3481 = vmatprep.subr.bf16.mxu0 0
      %3482 = vmatpush1.bf16.msra.mxu0 0
      %3483 = vmatprep.subr.bf16.mxu0 0
      %3484 = vmatpush1.bf16.msra.mxu0 0
      %3485 = vmatprep.subr.bf16.mxu0 0
      %3486 = vmatpush1.bf16.msra.mxu0 0
      %3487 = vmatprep.subr.bf16.mxu0 0
      %3488 = vmatpush1.bf16.msra.mxu0 0
      %3489 = vmatprep.subr.bf16.mxu0 0
      %3490 = vmatpush1.bf16.msra.mxu0 0
      %3491 = vmatprep.mubr.bf16.mxu0 0
      %3492 = vmatmul.mubr.bf16.gmra.mrb[0].mxu0 %v3406
      %v3493 = vpop.f32.mrb[0].mxu0
      %v3494 = vadd.f32 0.0, %v3493
      %v3495 = vpop.f32.mrb[0].mxu0
      %v3496 = vpop.f32.mrb[0].mxu0
      %v3497 = vadd.f32 0.0, %v3496
      %v3498 = vpop.f32.mrb[0].mxu0
      %3499 = vmatprep.mubr.bf16.mxu0 0
      %3500 = vmatmul.mubr.bf16.gmra.mrb[0].mxu0 %v3409
      %v3501 = vpop.f32.mrb[0].mxu0
      %v3502 = vadd.f32 0.0, %v3501
      %v3503 = vpop.f32.mrb[0].mxu0
      %v3504 = vpop.f32.mrb[0].mxu0
      %v3505 = vadd.f32 0.0, %v3504
      %v3506 = vpop.f32.mrb[0].mxu0
      %3507 = vmatprep.mubr.bf16.mxu0 0
      %3508 = vmatmul.mubr.bf16.gmra.mrb[0].mxu0 %v3412
      %v3509 = vpop.f32.mrb[0].mxu0
      %v3510 = vadd.f32 0.0, %v3509
      %v3511 = vpop.f32.mrb[0].mxu0
      %v3512 = vpop.f32.mrb[0].mxu0
      %v3513 = vadd.f32 0.0, %v3512
      %v3514 = vpop.f32.mrb[0].mxu0
      %3515 = vmatprep.mubr.bf16.mxu0 0
      %3516 = vmatmul.mubr.bf16.gmra.mrb[0].mxu0 %v3415
      %v3517 = vpop.f32.mrb[0].mxu0
      %v3518 = vadd.f32 0.0, %v3517
      %v3519 = vpop.f32.mrb[0].mxu0
      %v3520 = vpop.f32.mrb[0].mxu0
      %v3521 = vadd.f32 0.0, %v3520
      %v3522 = vpop.f32.mrb[0].mxu0
      %3523 = vmatprep.mubr.bf16.mxu0 0
      %3524 = vmatmul.mubr.bf16.gmra.mrb[0].mxu0 %v3418
      %v3525 = vpop.f32.mrb[0].mxu0
      %v3526 = vadd.f32 0.0, %v3525
      %v3527 = vpop.f32.mrb[0].mxu0
      %v3528 = vpop.f32.mrb[0].mxu0
      %v3529 = vadd.f32 0.0, %v3528
      %v3530 = vpop.f32.mrb[0].mxu0
      %3531 = vmatprep.mubr.bf16.mxu0 0
      %3532 = vmatmul.mubr.bf16.gmra.mrb[0].mxu0 %v3421
      %v3533 = vpop.f32.mrb[0].mxu0
      %v3534 = vadd.f32 0.0, %v3533
      %v3535 = vpop.f32.mrb[0].mxu0
      %v3536 = vpop.f32.mrb[0].mxu0
      %v3537 = vadd.f32 0.0, %v3536
      %v3538 = vpop.f32.mrb[0].mxu0
      %3539 = vmatprep.mubr.bf16.mxu0 0
      %3540 = vmatmul.mubr.bf16.gmra.mrb[0].mxu0 %v3424
      %v3541 = vpop.f32.mrb[0].mxu0
      %v3542 = vadd.f32 0.0, %v3541
      %v3543 = vpop.f32.mrb[0].mxu0
      %v3544 = vpop.f32.mrb[0].mxu0
      %v3545 = vadd.f32 0.0, %v3544
      %v3546 = vpop.f32.mrb[0].mxu0
      %3547 = vmatprep.mubr.bf16.mxu0 0
      %3548 = vmatmul.mubr.bf16.gmra.mrb[0].mxu0 %v3427
      %v3549 = vpop.f32.mrb[0].mxu0
      %v3550 = vadd.f32 0.0, %v3549
      %v3551 = vpop.f32.mrb[0].mxu0
      %v3552 = vpop.f32.mrb[0].mxu0
      %v3553 = vadd.f32 0.0, %v3552
      %v3554 = vpop.f32.mrb[0].mxu0
      %3555 = vmatprep.mubr.bf16.mxu0 0
      %3556 = vmatmul.mubr.bf16.gmra.mrb[0].mxu0 %v3430
      %v3557 = vpop.f32.mrb[0].mxu0
      %v3558 = vadd.f32 0.0, %v3557
      %v3559 = vpop.f32.mrb[0].mxu0
      %v3560 = vpop.f32.mrb[0].mxu0
      %v3561 = vadd.f32 0.0, %v3560
      %v3562 = vpop.f32.mrb[0].mxu0
      %3563 = vmatprep.mubr.bf16.mxu0 0
      %3564 = vmatmul.mubr.bf16.gmra.mrb[0].mxu0 %v3433
      %v3565 = vpop.f32.mrb[0].mxu0
      %v3566 = vadd.f32 0.0, %v3565
      %v3567 = vpop.f32.mrb[0].mxu0
      %v3568 = vpop.f32.mrb[0].mxu0
      %v3569 = vadd.f32 0.0, %v3568
      %v3570 = vpop.f32.mrb[0].mxu0
      %3571 = vmatprep.mubr.bf16.mxu0 0
      %3572 = vmatmul.mubr.bf16.gmra.mrb[0].mxu0 %v3436
      %v3573 = vpop.f32.mrb[0].mxu0
      %v3574 = vadd.f32 0.0, %v3573
      %v3575 = vpop.f32.mrb[0].mxu0
      %v3576 = vpop.f32.mrb[0].mxu0
      %v3577 = vadd.f32 0.0, %v3576
      %v3578 = vpop.f32.mrb[0].mxu0
      %3579 = vmatprep.mubr.bf16.mxu0 0
      %3580 = vmatmul.mubr.bf16.gmra.mrb[0].mxu0 %v3439
      %v3581 = vpop.f32.mrb[0].mxu0
      %v3582 = vadd.f32 0.0, %v3581
      %v3583 = vpop.f32.mrb[0].mxu0
      %v3584 = vpop.f32.mrb[0].mxu0
      %v3585 = vadd.f32 0.0, %v3584
      %v3586 = vpop.f32.mrb[0].mxu0
      %3587 = vmatprep.mubr.bf16.mxu0 0
      %3588 = vmatmul.mubr.bf16.gmra.mrb[0].mxu0 %v3442
      %v3589 = vpop.f32.mrb[0].mxu0
      %v3590 = vadd.f32 0.0, %v3589
      %v3591 = vpop.f32.mrb[0].mxu0
      %v3592 = vpop.f32.mrb[0].mxu0
      %v3593 = vadd.f32 0.0, %v3592
      %v3594 = vpop.f32.mrb[0].mxu0
      %3595 = vmatprep.mubr.bf16.mxu0 0
      %3596 = vmatmul.mubr.bf16.gmra.mrb[0].mxu0 %v3445
      %v3597 = vpop.f32.mrb[0].mxu0
      %v3598 = vadd.f32 0.0, %v3597
      %v3599 = vpop.f32.mrb[0].mxu0
      %v3600 = vpop.f32.mrb[0].mxu0
      %v3601 = vadd.f32 0.0, %v3600
      %v3602 = vpop.f32.mrb[0].mxu0
      %3603 = vmatprep.mubr.bf16.mxu0 0
      %3604 = vmatmul.mubr.bf16.gmra.mrb[0].mxu0 %v3448
      %v3605 = vpop.f32.mrb[0].mxu0
      %v3606 = vadd.f32 0.0, %v3605
      %v3607 = vpop.f32.mrb[0].mxu0
      %v3608 = vpop.f32.mrb[0].mxu0
      %v3609 = vadd.f32 0.0, %v3608
      %v3610 = vpop.f32.mrb[0].mxu0
      %3611 = vmatprep.mubr.bf16.mxu0 0
      %3612 = vmatmul.mubr.bf16.gmra.mrb[0].mxu0 %v3451
      %v3613 = vpop.f32.mrb[0].mxu0
      %v3614 = vadd.f32 0.0, %v3613
      %v3615 = vpop.f32.mrb[0].mxu0
      %v3616 = vpop.f32.mrb[0].mxu0
      %v3617 = vadd.f32 0.0, %v3616
      %v3618 = vpop.f32.mrb[0].mxu0
      %3619 = vmatprep.mubr.bf16.mxu0 0
      %3620 = vmatmul.mubr.bf16.gmra.mrb[0].mxu0 %v3454
      %v3621 = vpop.f32.mrb[0].mxu0
      %v3622 = vadd.f32 0.0, %v3621
      %v3623 = vpop.f32.mrb[0].mxu0
      %v3624 = vpop.f32.mrb[0].mxu0
      %v3625 = vpop.f32.mrb[0].mxu0
      %3626 = vdwg.mxu0
      %v3627 = vadd.f32 %v3333, %v3494
      %v3628 = vadd.f32 %v3334, %v3497
      %v3629 = vadd.f32 %v3335, %v3502
      %v3630 = vadd.f32 %v3336, %v3505
      %v3631 = vadd.f32 %v3337, %v3510
      %v3632 = vadd.f32 %v3338, %v3513
      %v3633 = vadd.f32 %v3339, %v3518
      %v3634 = vadd.f32 %v3340, %v3521
      %v3635 = vadd.f32 %v3341, %v3526
      %v3636 = vadd.f32 %v3342, %v3529
      %v3637 = vadd.f32 %v3343, %v3534
      %v3638 = vadd.f32 %v3344, %v3537
      %v3639 = vadd.f32 %v3345, %v3542
      %v3640 = vadd.f32 %v3346, %v3545
      %v3641 = vadd.f32 %v3347, %v3550
      %v3642 = vadd.f32 %v3348, %v3553
      %v3643 = vadd.f32 %v3349, %v3558
      %v3644 = vadd.f32 %v3350, %v3561
      %v3645 = vadd.f32 %v3351, %v3566
      %v3646 = vadd.f32 %v3352, %v3569
      %v3647 = vadd.f32 %v3353, %v3574
      %v3648 = vadd.f32 %v3354, %v3577
      %v3649 = vadd.f32 %v3355, %v3582
      %v3650 = vadd.f32 %v3356, %v3585
      %v3651 = vadd.f32 %v3357, %v3590
      %v3652 = vadd.f32 %v3358, %v3593
      %v3653 = vadd.f32 %v3359, %v3598
      %v3654 = vadd.f32 %v3360, %v3601
      %v3655 = vadd.f32 %v3361, %v3606
      %v3656 = vadd.f32 %v3362, %v3609
      %v3657 = vadd.f32 %v3363, %v3614
      %v3658 = vadd.f32 %v3364, %v3617
      %v3659 = vadd.f32 %v3365, %v3622
      %v3660 = vld [vmem:[%s2] sm:$0x1]
      %v3662 = vlaneseq
      %v3663 = vshrl.u32 %v3662, 7
      %v3664 = vsub.s32 0, %v3663
      %v3665 = vrot.slane %v3660, %v3664
      %v3667 = vadd.f32 %v3627, %v3665
      %v3668 = vadd.f32 %v3628, %v3665
      %v3669 = vadd.f32 %v3629, %v3665
      %v3670 = vadd.f32 %v3630, %v3665
      %v3671 = vadd.f32 %v3631, %v3665
      %v3672 = vadd.f32 %v3632, %v3665
      %v3673 = vadd.f32 %v3633, %v3665
      %v3674 = vadd.f32 %v3634, %v3665
      %v3675 = vadd.f32 %v3635, %v3665
      %v3676 = vadd.f32 %v3636, %v3665
      %v3677 = vadd.f32 %v3637, %v3665
      %v3678 = vadd.f32 %v3638, %v3665
      %v3679 = vadd.f32 %v3639, %v3665
      %v3680 = vadd.f32 %v3640, %v3665
      %v3681 = vadd.f32 %v3641, %v3665
      %v3682 = vadd.f32 %v3642, %v3665
      %v3683 = vadd.f32 %v3643, %v3665
      %v3684 = vadd.f32 %v3644, %v3665
      %v3685 = vadd.f32 %v3645, %v3665
      %v3686 = vadd.f32 %v3646, %v3665
      %v3687 = vadd.f32 %v3647, %v3665
      %v3688 = vadd.f32 %v3648, %v3665
      %v3689 = vadd.f32 %v3649, %v3665
      %v3690 = vadd.f32 %v3650, %v3665
      %v3691 = vadd.f32 %v3651, %v3665
      %v3692 = vadd.f32 %v3652, %v3665
      %v3693 = vadd.f32 %v3653, %v3665
      %v3694 = vadd.f32 %v3654, %v3665
      %v3695 = vadd.f32 %v3655, %v3665
      %v3696 = vadd.f32 %v3656, %v3665
      %v3697 = vadd.f32 %v3657, %v3665
      %v3698 = vadd.f32 %v3658, %v3665
      %v3699 = vadd.f32 %v3659, %v3665
      %s3700 = ssub.s32 2, %s316
      %v3701 = vlaneseq
      %v3702 = vshrl.u32 %v3701, 7
      %v3703 = vadd.s32 %v3702, 8
      %v3704 = vadd.s32 %v3702, 16
      %v3705 = vadd.s32 %v3702, 24
      %v3706 = vadd.s32 %v3702, 32
      %v3707 = vadd.s32 %v3702, 40
      %v3708 = vadd.s32 %v3702, 48
      %v3709 = vadd.s32 %v3702, 56
      %v3710 = vadd.s32 %v3702, 64
      %v3711 = vadd.s32 %v3702, 72
      %v3712 = vadd.s32 %v3702, 80
      %v3713 = vadd.s32 %v3702, 88
      %v3714 = vadd.s32 %v3702, 96
      %v3715 = vadd.s32 %v3702, 104
      %v3716 = vadd.s32 %v3702, 112
      %v3717 = vadd.s32 %v3702, 120
      %v3718 = vadd.s32 %v3702, 128
      %v3719 = vadd.s32 %v3702, 136
      %v3720 = vadd.s32 %v3702, 144
      %v3721 = vadd.s32 %v3702, 152
      %v3722 = vadd.s32 %v3702, 160
      %v3723 = vadd.s32 %v3702, 168
      %v3724 = vadd.s32 %v3702, 176
      %v3725 = vadd.s32 %v3702, 184
      %v3726 = vadd.s32 %v3702, 192
      %v3727 = vadd.s32 %v3702, 200
      %v3728 = vadd.s32 %v3702, 208
      %v3729 = vadd.s32 %v3702, 216
      %v3730 = vadd.s32 %v3702, 224
      %v3731 = vadd.s32 %v3702, 232
      %v3732 = vadd.s32 %v3702, 240
      %v3733 = vadd.s32 %v3702, 248
      %v3734 = vadd.s32 %v3702, 256
      %s3735 = smul.u32 %s3700, 24
      %v3736 = vstv %s3735
      %vm3737 = vcmp.ge.s32.totalorder %v3702, %v3736
      %vm3738 = vcmp.ge.s32.totalorder %v3703, %v3736
      %vm3739 = vcmp.ge.s32.totalorder %v3704, %v3736
      %vm3740 = vcmp.ge.s32.totalorder %v3705, %v3736
      %vm3741 = vcmp.ge.s32.totalorder %v3706, %v3736
      %vm3742 = vcmp.ge.s32.totalorder %v3707, %v3736
      %vm3743 = vcmp.ge.s32.totalorder %v3708, %v3736
      %vm3744 = vcmp.ge.s32.totalorder %v3709, %v3736
      %vm3745 = vcmp.ge.s32.totalorder %v3710, %v3736
      %vm3746 = vcmp.ge.s32.totalorder %v3711, %v3736
      %vm3747 = vcmp.ge.s32.totalorder %v3712, %v3736
      %vm3748 = vcmp.ge.s32.totalorder %v3713, %v3736
      %vm3749 = vcmp.ge.s32.totalorder %v3714, %v3736
      %vm3750 = vcmp.ge.s32.totalorder %v3715, %v3736
      %vm3751 = vcmp.ge.s32.totalorder %v3716, %v3736
      %vm3752 = vcmp.ge.s32.totalorder %v3717, %v3736
      %vm3753 = vcmp.ge.s32.totalorder %v3718, %v3736
      %vm3754 = vcmp.ge.s32.totalorder %v3719, %v3736
      %vm3755 = vcmp.ge.s32.totalorder %v3720, %v3736
      %vm3756 = vcmp.ge.s32.totalorder %v3721, %v3736
      %vm3757 = vcmp.ge.s32.totalorder %v3722, %v3736
      %vm3758 = vcmp.ge.s32.totalorder %v3723, %v3736
      %vm3759 = vcmp.ge.s32.totalorder %v3724, %v3736
      %vm3760 = vcmp.ge.s32.totalorder %v3725, %v3736
      %vm3761 = vcmp.ge.s32.totalorder %v3726, %v3736
      %vm3762 = vcmp.ge.s32.totalorder %v3727, %v3736
      %vm3763 = vcmp.ge.s32.totalorder %v3728, %v3736
      %vm3764 = vcmp.ge.s32.totalorder %v3729, %v3736
      %vm3765 = vcmp.ge.s32.totalorder %v3730, %v3736
      %vm3766 = vcmp.ge.s32.totalorder %v3731, %v3736
      %vm3767 = vcmp.ge.s32.totalorder %v3732, %v3736
      %vm3768 = vcmp.ge.s32.totalorder %v3733, %v3736
      %vm3769 = vcmp.ge.s32.totalorder %v3734, %v3736
      %s3770 = ssub.s32 18, %s316
      %s3771 = smul.u32 %s3770, 24
      %v3772 = vstv %s3771
      %vm3773 = vcmp.lt.s32.totalorder %v3702, %v3772
      %vm3774 = vcmp.lt.s32.totalorder %v3703, %v3772
      %vm3775 = vcmp.lt.s32.totalorder %v3704, %v3772
      %vm3776 = vcmp.lt.s32.totalorder %v3705, %v3772
      %vm3777 = vcmp.lt.s32.totalorder %v3706, %v3772
      %vm3778 = vcmp.lt.s32.totalorder %v3707, %v3772
      %vm3779 = vcmp.lt.s32.totalorder %v3708, %v3772
      %vm3780 = vcmp.lt.s32.totalorder %v3709, %v3772
      %vm3781 = vcmp.lt.s32.totalorder %v3710, %v3772
      %vm3782 = vcmp.lt.s32.totalorder %v3711, %v3772
      %vm3783 = vcmp.lt.s32.totalorder %v3712, %v3772
      %vm3784 = vcmp.lt.s32.totalorder %v3713, %v3772
      %vm3785 = vcmp.lt.s32.totalorder %v3714, %v3772
      %vm3786 = vcmp.lt.s32.totalorder %v3715, %v3772
      %vm3787 = vcmp.lt.s32.totalorder %v3716, %v3772
      %vm3788 = vcmp.lt.s32.totalorder %v3717, %v3772
      %vm3789 = vcmp.lt.s32.totalorder %v3718, %v3772
      %vm3790 = vcmp.lt.s32.totalorder %v3719, %v3772
      %vm3791 = vcmp.lt.s32.totalorder %v3720, %v3772
      %vm3792 = vcmp.lt.s32.totalorder %v3721, %v3772
      %vm3793 = vcmp.lt.s32.totalorder %v3722, %v3772
      %vm3794 = vcmp.lt.s32.totalorder %v3723, %v3772
      %vm3795 = vcmp.lt.s32.totalorder %v3724, %v3772
      %vm3796 = vcmp.lt.s32.totalorder %v3725, %v3772
      %vm3797 = vcmp.lt.s32.totalorder %v3726, %v3772
      %vm3798 = vcmp.lt.s32.totalorder %v3727, %v3772
      %vm3799 = vcmp.lt.s32.totalorder %v3728, %v3772
      %vm3800 = vcmp.lt.s32.totalorder %v3729, %v3772
      %vm3801 = vcmp.lt.s32.totalorder %v3730, %v3772
      %vm3802 = vcmp.lt.s32.totalorder %v3731, %v3772
      %vm3803 = vcmp.lt.s32.totalorder %v3732, %v3772
      %vm3804 = vcmp.lt.s32.totalorder %v3733, %v3772
      %vm3805 = vcmp.lt.s32.totalorder %v3734, %v3772
      %vm3806 = vmand %vm3737, %vm3773
      %vm3807 = vmand %vm3738, %vm3774
      %vm3808 = vmand %vm3739, %vm3775
      %vm3809 = vmand %vm3740, %vm3776
      %vm3810 = vmand %vm3741, %vm3777
      %vm3811 = vmand %vm3742, %vm3778
      %vm3812 = vmand %vm3743, %vm3779
      %vm3813 = vmand %vm3744, %vm3780
      %vm3814 = vmand %vm3745, %vm3781
      %vm3815 = vmand %vm3746, %vm3782
      %vm3816 = vmand %vm3747, %vm3783
      %vm3817 = vmand %vm3748, %vm3784
      %vm3818 = vmand %vm3749, %vm3785
      %vm3819 = vmand %vm3750, %vm3786
      %vm3820 = vmand %vm3751, %vm3787
      %vm3821 = vmand %vm3752, %vm3788
      %vm3822 = vmand %vm3753, %vm3789
      %vm3823 = vmand %vm3754, %vm3790
      %vm3824 = vmand %vm3755, %vm3791
      %vm3825 = vmand %vm3756, %vm3792
      %vm3826 = vmand %vm3757, %vm3793
      %vm3827 = vmand %vm3758, %vm3794
      %vm3828 = vmand %vm3759, %vm3795
      %vm3829 = vmand %vm3760, %vm3796
      %vm3830 = vmand %vm3761, %vm3797
      %vm3831 = vmand %vm3762, %vm3798
      %vm3832 = vmand %vm3763, %vm3799
      %vm3833 = vmand %vm3764, %vm3800
      %vm3834 = vmand %vm3765, %vm3801
      %vm3835 = vmand %vm3766, %vm3802
      %vm3836 = vmand %vm3767, %vm3803
      %vm3837 = vmand %vm3768, %vm3804
      %vm3838 = vmand %vm3769, %vm3805
      %v3839 = vsel %vm3806, 1, 0
      %v3840 = vsel %vm3807, 1, 0
      %v3841 = vsel %vm3808, 1, 0
      %v3842 = vsel %vm3809, 1, 0
      %v3843 = vsel %vm3810, 1, 0
      %v3844 = vsel %vm3811, 1, 0
      %v3845 = vsel %vm3812, 1, 0
      %v3846 = vsel %vm3813, 1, 0
      %v3847 = vsel %vm3814, 1, 0
      %v3848 = vsel %vm3815, 1, 0
      %v3849 = vsel %vm3816, 1, 0
      %v3850 = vsel %vm3817, 1, 0
      %v3851 = vsel %vm3818, 1, 0
      %v3852 = vsel %vm3819, 1, 0
      %v3853 = vsel %vm3820, 1, 0
      %v3854 = vsel %vm3821, 1, 0
      %v3855 = vsel %vm3822, 1, 0
      %v3856 = vsel %vm3823, 1, 0
      %v3857 = vsel %vm3824, 1, 0
      %v3858 = vsel %vm3825, 1, 0
      %v3859 = vsel %vm3826, 1, 0
      %v3860 = vsel %vm3827, 1, 0
      %v3861 = vsel %vm3828, 1, 0
      %v3862 = vsel %vm3829, 1, 0
      %v3863 = vsel %vm3830, 1, 0
      %v3864 = vsel %vm3831, 1, 0
      %v3865 = vsel %vm3832, 1, 0
      %v3866 = vsel %vm3833, 1, 0
      %v3867 = vsel %vm3834, 1, 0
      %v3868 = vsel %vm3835, 1, 0
      %v3869 = vsel %vm3836, 1, 0
      %v3870 = vsel %vm3837, 1, 0
      %v3871 = vsel %vm3838, 1, 0
      %v3872 = vcvt.s32.f32 %v3839
      %v3873 = vcvt.s32.f32 %v3840
      %v3874 = vcvt.s32.f32 %v3841
      %v3875 = vcvt.s32.f32 %v3842
      %v3876 = vcvt.s32.f32 %v3843
      %v3877 = vcvt.s32.f32 %v3844
      %v3878 = vcvt.s32.f32 %v3845
      %v3879 = vcvt.s32.f32 %v3846
      %v3880 = vcvt.s32.f32 %v3847
      %v3881 = vcvt.s32.f32 %v3848
      %v3882 = vcvt.s32.f32 %v3849
      %v3883 = vcvt.s32.f32 %v3850
      %v3884 = vcvt.s32.f32 %v3851
      %v3885 = vcvt.s32.f32 %v3852
      %v3886 = vcvt.s32.f32 %v3853
      %v3887 = vcvt.s32.f32 %v3854
      %v3888 = vcvt.s32.f32 %v3855
      %v3889 = vcvt.s32.f32 %v3856
      %v3890 = vcvt.s32.f32 %v3857
      %v3891 = vcvt.s32.f32 %v3858
      %v3892 = vcvt.s32.f32 %v3859
      %v3893 = vcvt.s32.f32 %v3860
      %v3894 = vcvt.s32.f32 %v3861
      %v3895 = vcvt.s32.f32 %v3862
      %v3896 = vcvt.s32.f32 %v3863
      %v3897 = vcvt.s32.f32 %v3864
      %v3898 = vcvt.s32.f32 %v3865
      %v3899 = vcvt.s32.f32 %v3866
      %v3900 = vcvt.s32.f32 %v3867
      %v3901 = vcvt.s32.f32 %v3868
      %v3902 = vcvt.s32.f32 %v3869
      %v3903 = vcvt.s32.f32 %v3870
      %v3904 = vcvt.s32.f32 %v3871
      %vm3905 = vcmp.lt.s32.totalorder %v3702, 16
      %vm3906 = vcmp.lt.s32.totalorder %v3703, 16
      %vm3907 = vcmp.lt.s32.totalorder %v3704, 16
      %v3908 = vsel %vm3905, 1, 0
      %v3909 = vsel %vm3906, 1, 0
      %v3910 = vsel %vm3907, 1, 0
      %v3911 = vcvt.s32.f32 %v3908
      %v3912 = vcvt.s32.f32 %v3909
      %v3913 = vcvt.s32.f32 %v3910
      %v3914 = vmul.f32 %v3872, %v3911
      %v3915 = vmul.f32 %v3873, %v3912
      %v3916 = vmul.f32 %v3874, %v3913
      %v3917 = vmul.f32 %v3875, %v3911
      %v3918 = vmul.f32 %v3876, %v3912
      %v3919 = vmul.f32 %v3877, %v3913
      %v3920 = vmul.f32 %v3878, %v3911
      %v3921 = vmul.f32 %v3879, %v3912
      %v3922 = vmul.f32 %v3880, %v3913
      %v3923 = vmul.f32 %v3881, %v3911
      %v3924 = vmul.f32 %v3882, %v3912
      %v3925 = vmul.f32 %v3883, %v3913
      %v3926 = vmul.f32 %v3884, %v3911
      %v3927 = vmul.f32 %v3885, %v3912
      %v3928 = vmul.f32 %v3886, %v3913
      %v3929 = vmul.f32 %v3887, %v3911
      %v3930 = vmul.f32 %v3888, %v3912
      %v3931 = vmul.f32 %v3889, %v3913
      %v3932 = vmul.f32 %v3890, %v3911
      %v3933 = vmul.f32 %v3891, %v3912
      %v3934 = vmul.f32 %v3892, %v3913
      %v3935 = vmul.f32 %v3893, %v3911
      %v3936 = vmul.f32 %v3894, %v3912
      %v3937 = vmul.f32 %v3895, %v3913
      %v3938 = vmul.f32 %v3896, %v3911
      %v3939 = vmul.f32 %v3897, %v3912
      %v3940 = vmul.f32 %v3898, %v3913
      %v3941 = vmul.f32 %v3899, %v3911
      %v3942 = vmul.f32 %v3900, %v3912
      %v3943 = vmul.f32 %v3901, %v3913
      %v3944 = vmul.f32 %v3902, %v3911
      %v3945 = vmul.f32 %v3903, %v3912
      %v3946 = vmul.f32 %v3904, %v3913
      %vm3947 = vcmask 44032
      %3948 = vst.msk [vmem:[#allocation2] sm:$0xf] %vm3947, 0
      %3949 = vst.msk [vmem:[#allocation2 + $0x4] sm:$0xf] %vm3947, 0
      %3950 = vst.msk [vmem:[#allocation2 + $0x8] sm:$0xf] %vm3947, 0
      %3951 = vst.msk [vmem:[#allocation2 + $0xc] sm:$0xf] %vm3947, 0
      %v3952 = vmul.f32 %v3667, %v3914
      %v3953 = vmul.f32 %v3668, %v3915
      %v3954 = vmul.f32 %v3669, %v3916
      %v3955 = vmul.f32 %v3670, %v3917
      %v3956 = vmul.f32 %v3671, %v3918
      %v3957 = vmul.f32 %v3672, %v3919
      %v3958 = vmul.f32 %v3673, %v3920
      %v3959 = vmul.f32 %v3674, %v3921
      %v3960 = vmul.f32 %v3675, %v3922
      %v3961 = vmul.f32 %v3676, %v3923
      %v3962 = vmul.f32 %v3677, %v3924
      %v3963 = vmul.f32 %v3678, %v3925
      %v3964 = vmul.f32 %v3679, %v3926
      %v3965 = vmul.f32 %v3680, %v3927
      %v3966 = vmul.f32 %v3681, %v3928
      %v3967 = vmul.f32 %v3682, %v3929
      %v3968 = vmul.f32 %v3683, %v3930
      %v3969 = vmul.f32 %v3684, %v3931
      %v3970 = vmul.f32 %v3685, %v3932
      %v3971 = vmul.f32 %v3686, %v3933
      %v3972 = vmul.f32 %v3687, %v3934
      %v3973 = vmul.f32 %v3688, %v3935
      %v3974 = vmul.f32 %v3689, %v3936
      %v3975 = vmul.f32 %v3690, %v3937
      %v3976 = vmul.f32 %v3691, %v3938
      %v3977 = vmul.f32 %v3692, %v3939
      %v3978 = vmul.f32 %v3693, %v3940
      %v3979 = vmul.f32 %v3694, %v3941
      %v3980 = vmul.f32 %v3695, %v3942
      %v3981 = vmul.f32 %v3696, %v3943
      %v3982 = vmul.f32 %v3697, %v3944
      %v3983 = vmul.f32 %v3698, %v3945
      %v3984 = vmul.f32 %v3699, %v3946
      %v3985 = vpack.c.bf16 %v3953, %v3952
      %v3986 = vpack.c.bf16 %v3955, %v3954
      %v3987 = vpack.c.bf16 %v3957, %v3956
      %v3988 = vpack.c.bf16 %v3959, %v3958
      %v3989 = vpack.c.bf16 %v3961, %v3960
      %v3990 = vpack.c.bf16 %v3963, %v3962
      %v3991 = vpack.c.bf16 %v3965, %v3964
      %v3992 = vpack.c.bf16 %v3967, %v3966
      %v3993 = vpack.c.bf16 %v3969, %v3968
      %v3994 = vpack.c.bf16 %v3971, %v3970
      %v3995 = vpack.c.bf16 %v3973, %v3972
      %v3996 = vpack.c.bf16 %v3975, %v3974
      %v3997 = vpack.c.bf16 %v3977, %v3976
      %v3998 = vpack.c.bf16 %v3979, %v3978
      %v3999 = vpack.c.bf16 %v3981, %v3980
      %v4000 = vpack.c.bf16 %v3983, %v3982
      %v4001 = vpack.c.bf16 %v3984, %v3984
      %v4019 = vunpack.c.l.b16 %v3985
      %v4020 = vunpack.c.h.b16 %v3985
      %v4021 = vunpack.c.l.b16 %v3986
      %v4022 = vunpack.c.h.b16 %v3986
      %v4023 = vunpack.c.l.b16 %v3987
      %v4024 = vunpack.c.h.b16 %v3987
      %v4025 = vunpack.c.l.b16 %v3988
      %v4026 = vunpack.c.h.b16 %v3988
      %v4027 = vunpack.c.l.b16 %v3989
      %v4028 = vunpack.c.h.b16 %v3989
      %v4029 = vunpack.c.l.b16 %v3990
      %v4030 = vunpack.c.h.b16 %v3990
      %v4031 = vunpack.c.l.b16 %v3991
      %v4032 = vunpack.c.h.b16 %v3991
      %v4033 = vunpack.c.l.b16 %v3992
      %v4034 = vunpack.c.h.b16 %v3992
      %v4035 = vunpack.c.l.b16 %v3993
      %v4036 = vunpack.c.h.b16 %v3993
      %v4037 = vunpack.c.l.b16 %v3994
      %v4038 = vunpack.c.h.b16 %v3994
      %v4039 = vunpack.c.l.b16 %v3995
      %v4040 = vunpack.c.h.b16 %v3995
      %v4041 = vunpack.c.l.b16 %v3996
      %v4042 = vunpack.c.h.b16 %v3996
      %v4043 = vunpack.c.l.b16 %v3997
      %v4044 = vunpack.c.h.b16 %v3997
      %v4045 = vunpack.c.l.b16 %v3998
      %v4046 = vunpack.c.h.b16 %v3998
      %v4047 = vunpack.c.l.b16 %v3999
      %v4048 = vunpack.c.h.b16 %v3999
      %v4049 = vunpack.c.l.b16 %v4000
      %v4050 = vunpack.c.h.b16 %v4000
      %v4051 = vunpack.c.l.b16 %v4001
      %v4052 = vpack.c.b16 %v4019, %v4019
      %v4053 = vpack.c.b16 %v4020, %v4020
      %v4054 = vpack.c.b16 %v4021, %v4021
      %v4055 = vpack.c.b16 %v4022, %v4022
      %v4056 = vpack.c.b16 %v4023, %v4023
      %v4057 = vpack.c.b16 %v4024, %v4024
      %v4058 = vpack.c.b16 %v4025, %v4025
      %v4059 = vpack.c.b16 %v4026, %v4026
      %v4060 = vpack.c.b16 %v4027, %v4027
      %v4061 = vpack.c.b16 %v4028, %v4028
      %v4062 = vpack.c.b16 %v4029, %v4029
      %v4063 = vpack.c.b16 %v4030, %v4030
      %v4064 = vpack.c.b16 %v4031, %v4031
      %v4065 = vpack.c.b16 %v4032, %v4032
      %v4066 = vpack.c.b16 %v4033, %v4033
      %v4067 = vpack.c.b16 %v4034, %v4034
      %v4068 = vpack.c.b16 %v4035, %v4035
      %v4069 = vpack.c.b16 %v4036, %v4036
      %v4070 = vpack.c.b16 %v4037, %v4037
      %v4071 = vpack.c.b16 %v4038, %v4038
      %v4072 = vpack.c.b16 %v4039, %v4039
      %v4073 = vpack.c.b16 %v4040, %v4040
      %v4074 = vpack.c.b16 %v4041, %v4041
      %v4075 = vpack.c.b16 %v4042, %v4042
      %v4076 = vpack.c.b16 %v4043, %v4043
      %v4077 = vpack.c.b16 %v4044, %v4044
      %v4078 = vpack.c.b16 %v4045, %v4045
      %v4079 = vpack.c.b16 %v4046, %v4046
      %v4080 = vpack.c.b16 %v4047, %v4047
      %v4081 = vpack.c.b16 %v4048, %v4048
      %v4082 = vpack.c.b16 %v4049, %v4049
      %v4083 = vpack.c.b16 %v4050, %v4050
      %v4084 = vpack.c.b16 %v4051, %v4051
      %4118 = vst.msk [vmem:[#allocation2 + $0x10] sm:$0xf] %vm3947, %v4052
      %4119 = vst.msk [vmem:[#allocation2 + $0x14] sm:$0xf] %vm3947, %v4053
      %4120 = vst.msk [vmem:[#allocation2 + $0x18] sm:$0xf] %vm3947, %v4054
      %4121 = vst.msk [vmem:[#allocation2 + $0x1c] sm:$0xf] %vm3947, %v4055
      %4122 = vst.msk [vmem:[#allocation2 + $0x20] sm:$0xf] %vm3947, %v4056
      %4123 = vst.msk [vmem:[#allocation2 + $0x24] sm:$0xf] %vm3947, %v4057
      %4124 = vst.msk [vmem:[#allocation2 + $0x28] sm:$0xf] %vm3947, %v4058
      %4125 = vst.msk [vmem:[#allocation2 + $0x2c] sm:$0xf] %vm3947, %v4059
      %4126 = vst.msk [vmem:[#allocation2 + $0x30] sm:$0xf] %vm3947, %v4060
      %4127 = vst.msk [vmem:[#allocation2 + $0x34] sm:$0xf] %vm3947, %v4061
      %4128 = vst.msk [vmem:[#allocation2 + $0x38] sm:$0xf] %vm3947, %v4062
      %4129 = vst.msk [vmem:[#allocation2 + $0x3c] sm:$0xf] %vm3947, %v4063
      %4130 = vst.msk [vmem:[#allocation2 + $0x40] sm:$0xf] %vm3947, %v4064
      %4131 = vst.msk [vmem:[#allocation2 + $0x44] sm:$0xf] %vm3947, %v4065
      %4132 = vst.msk [vmem:[#allocation2 + $0x48] sm:$0xf] %vm3947, %v4066
      %4133 = vst.msk [vmem:[#allocation2 + $0x4c] sm:$0xf] %vm3947, %v4067
      %4134 = vst.msk [vmem:[#allocation2 + $0x50] sm:$0xf] %vm3947, %v4068
      %4135 = vst.msk [vmem:[#allocation2 + $0x54] sm:$0xf] %vm3947, %v4069
      %4136 = vst.msk [vmem:[#allocation2 + $0x58] sm:$0xf] %vm3947, %v4070
      %4137 = vst.msk [vmem:[#allocation2 + $0x5c] sm:$0xf] %vm3947, %v4071
      %4138 = vst.msk [vmem:[#allocation2 + $0x60] sm:$0xf] %vm3947, %v4072
      %4139 = vst.msk [vmem:[#allocation2 + $0x64] sm:$0xf] %vm3947, %v4073
      %4140 = vst.msk [vmem:[#allocation2 + $0x68] sm:$0xf] %vm3947, %v4074
      %4141 = vst.msk [vmem:[#allocation2 + $0x6c] sm:$0xf] %vm3947, %v4075
      %4142 = vst.msk [vmem:[#allocation2 + $0x70] sm:$0xf] %vm3947, %v4076
      %4143 = vst.msk [vmem:[#allocation2 + $0x74] sm:$0xf] %vm3947, %v4077
      %4144 = vst.msk [vmem:[#allocation2 + $0x78] sm:$0xf] %vm3947, %v4078
      %4145 = vst.msk [vmem:[#allocation2 + $0x7c] sm:$0xf] %vm3947, %v4079
      %4146 = vst.msk [vmem:[#allocation2 + $0x80] sm:$0xf] %vm3947, %v4080
      %4147 = vst.msk [vmem:[#allocation2 + $0x84] sm:$0xf] %vm3947, %v4081
      %4148 = vst.msk [vmem:[#allocation2 + $0x88] sm:$0xf] %vm3947, %v4082
      %4149 = vst.msk [vmem:[#allocation2 + $0x8c] sm:$0xf] %vm3947, %v4083
      %4150 = vst.msk [vmem:[#allocation2 + $0x90] sm:$0xf] %vm3947, %v4084
      %4151 = vst.msk [vmem:[#allocation2 + $0x94] sm:$0xf] %vm3947, 0
      %4152 = vst.msk [vmem:[#allocation2 + $0x98] sm:$0xf] %vm3947, 0
      %v4153 = vld [vmem:[#allocation2 + $0xc] sm:$0x8]
      %v4154 = vld [vmem:[#allocation2 + $0x10] sm:$0xf]
      %v4155 = vld [vmem:[#allocation2 + $0x14] sm:$0xf]
      %v4156 = vld [vmem:[#allocation2 + $0x18] sm:$0xf]
      %v4157 = vld [vmem:[#allocation2 + $0x1c] sm:$0xf]
      %v4158 = vld [vmem:[#allocation2 + $0x20] sm:$0xf]
      %v4159 = vld [vmem:[#allocation2 + $0x24] sm:$0xf]
      %v4160 = vld [vmem:[#allocation2 + $0x28] sm:$0xf]
      %v4161 = vld [vmem:[#allocation2 + $0x2c] sm:$0xf]
      %v4162 = vld [vmem:[#allocation2 + $0x30] sm:$0xf]
      %v4163 = vld [vmem:[#allocation2 + $0x34] sm:$0xf]
      %v4164 = vld [vmem:[#allocation2 + $0x38] sm:$0xf]
      %v4165 = vld [vmem:[#allocation2 + $0x3c] sm:$0xf]
      %v4166 = vld [vmem:[#allocation2 + $0x40] sm:$0xf]
      %v4167 = vld [vmem:[#allocation2 + $0x44] sm:$0xf]
      %v4168 = vld [vmem:[#allocation2 + $0x48] sm:$0xf]
      %v4169 = vld [vmem:[#allocation2 + $0x4c] sm:$0xf]
      %v4170 = vld [vmem:[#allocation2 + $0x50] sm:$0xf]
      %v4171 = vld [vmem:[#allocation2 + $0x54] sm:$0xf]
      %v4172 = vld [vmem:[#allocation2 + $0x58] sm:$0xf]
      %v4173 = vld [vmem:[#allocation2 + $0x5c] sm:$0xf]
      %v4174 = vld [vmem:[#allocation2 + $0x60] sm:$0xf]
      %v4175 = vld [vmem:[#allocation2 + $0x64] sm:$0xf]
      %v4176 = vld [vmem:[#allocation2 + $0x68] sm:$0xf]
      %v4177 = vld [vmem:[#allocation2 + $0x6c] sm:$0xf]
      %v4178 = vld [vmem:[#allocation2 + $0x70] sm:$0xf]
      %v4179 = vld [vmem:[#allocation2 + $0x74] sm:$0xf]
      %v4180 = vld [vmem:[#allocation2 + $0x78] sm:$0xf]
      %v4181 = vld [vmem:[#allocation2 + $0x7c] sm:$0xf]
      %v4182 = vld [vmem:[%s3] sm:$0x7]
      %s4183 = scalar_lea.vmem %s3, 4
      %v4184 = vld [vmem:[%s4183] sm:$0x7]
      %v4213 = vunpack.c.l.b16 %v4154
      %v4214 = vunpack.c.l.b16 %v4155
      %v4215 = vunpack.c.l.b16 %v4156
      %v4216 = vunpack.c.l.b16 %v4157
      %v4217 = vunpack.c.l.b16 %v4158
      %v4218 = vunpack.c.l.b16 %v4159
      %v4219 = vunpack.c.l.b16 %v4160
      %v4220 = vunpack.c.l.b16 %v4161
      %v4221 = vunpack.c.l.b16 %v4162
      %v4222 = vunpack.c.l.b16 %v4163
      %v4223 = vunpack.c.l.b16 %v4164
      %v4224 = vunpack.c.l.b16 %v4165
      %v4225 = vunpack.c.l.b16 %v4166
      %v4226 = vunpack.c.l.b16 %v4167
      %v4227 = vunpack.c.l.b16 %v4168
      %v4228 = vunpack.c.l.b16 %v4169
      %v4229 = vunpack.c.l.b16 %v4170
      %v4230 = vunpack.c.l.b16 %v4171
      %v4231 = vunpack.c.l.b16 %v4172
      %v4232 = vunpack.c.l.b16 %v4173
      %v4233 = vunpack.c.l.b16 %v4174
      %v4234 = vunpack.c.l.b16 %v4175
      %v4235 = vunpack.c.l.b16 %v4176
      %v4236 = vunpack.c.l.b16 %v4177
      %v4237 = vunpack.c.l.b16 %v4178
      %v4238 = vunpack.c.l.b16 %v4179
      %v4239 = vunpack.c.l.b16 %v4180
      %v4240 = vunpack.c.l.b16 %v4181
      %v4241 = vpack.c.b16 %v4214, %v4213
      %v4242 = vpack.c.b16 %v4216, %v4215
      %v4243 = vpack.c.b16 %v4218, %v4217
      %v4244 = vpack.c.b16 %v4220, %v4219
      %v4245 = vpack.c.b16 %v4222, %v4221
      %v4246 = vpack.c.b16 %v4224, %v4223
      %v4247 = vpack.c.b16 %v4226, %v4225
      %v4248 = vpack.c.b16 %v4228, %v4227
      %v4249 = vpack.c.b16 %v4230, %v4229
      %v4250 = vpack.c.b16 %v4232, %v4231
      %v4251 = vpack.c.b16 %v4234, %v4233
      %v4252 = vpack.c.b16 %v4236, %v4235
      %v4253 = vpack.c.b16 %v4238, %v4237
      %v4254 = vpack.c.b16 %v4240, %v4239
      %vm4255 = vcmask 48128
      %v4257 = vsel %vm4255, %v4241, 0
      %v4260 = vsel %vm4255, %v4242, 0
      %v4263 = vsel %vm4255, %v4243, 0
      %v4266 = vsel %vm4255, %v4244, 0
      %v4269 = vsel %vm4255, %v4245, 0
      %v4272 = vsel %vm4255, %v4246, 0
      %v4275 = vsel %vm4255, %v4247, 0
      %v4278 = vsel %vm4255, %v4248, 0
      %v4281 = vsel %vm4255, %v4249, 0
      %v4284 = vsel %vm4255, %v4250, 0
      %v4287 = vsel %vm4255, %v4251, 0
      %v4290 = vsel %vm4255, %v4252, 0
      %v4293 = vsel %vm4255, %v4253, 0
      %v4296 = vsel %vm4255, %v4254, 0
      %vm4298 = vcmask 1042432
      %v4300 = vsel %vm4298, %v4184, 0
      %4302 = vmatprep.subr.bf16.mxu0 0
      %4303 = vmatpush1.bf16.msra.mxu0 %v4300
      %4304 = vmatprep.subr.bf16.mxu0 0
      %4305 = vmatpush1.bf16.msra.mxu0 0
      %4306 = vmatprep.subr.bf16.mxu0 0
      %4307 = vmatpush1.bf16.msra.mxu0 0
      %4308 = vmatprep.subr.bf16.mxu0 0
      %4309 = vmatpush1.bf16.msra.mxu0 0
      %4310 = vmatprep.subr.bf16.mxu0 0
      %4311 = vmatpush1.bf16.msra.mxu0 0
      %4312 = vmatprep.subr.bf16.mxu0 0
      %4313 = vmatpush1.bf16.msra.mxu0 0
      %4314 = vmatprep.subr.bf16.mxu0 0
      %4315 = vmatpush1.bf16.msra.mxu0 0
      %4316 = vmatprep.subr.bf16.mxu0 0
      %4317 = vmatpush1.bf16.msra.mxu0 0
      %4318 = vmatprep.subr.bf16.mxu0 0
      %4319 = vmatpush1.bf16.msra.mxu0 0
      %4320 = vmatprep.subr.bf16.mxu0 0
      %4321 = vmatpush1.bf16.msra.mxu0 0
      %4322 = vmatprep.subr.bf16.mxu0 0
      %4323 = vmatpush1.bf16.msra.mxu0 0
      %4324 = vmatprep.subr.bf16.mxu0 0
      %4325 = vmatpush1.bf16.msra.mxu0 0
      %4326 = vmatprep.subr.bf16.mxu0 0
      %4327 = vmatpush1.bf16.msra.mxu0 0
      %4328 = vmatprep.subr.bf16.mxu0 0
      %4329 = vmatpush1.bf16.msra.mxu0 0
      %4330 = vmatprep.subr.bf16.mxu0 0
      %4331 = vmatpush1.bf16.msra.mxu0 0
      %4332 = vmatprep.subr.bf16.mxu0 0
      %4333 = vmatpush1.bf16.msra.mxu0 0
      %4334 = vmatprep.mubr.bf16.mxu0 0
      %4335 = vmatmul.mubr.bf16.gmra.mrb[0].mxu0 %v4257
      %v4336 = vpop.f32.mrb[0].mxu0
      %v4337 = vadd.f32 0.0, %v4336
      %v4338 = vpop.f32.mrb[0].mxu0
      %v4339 = vpop.f32.mrb[0].mxu0
      %v4340 = vadd.f32 0.0, %v4339
      %v4341 = vpop.f32.mrb[0].mxu0
      %4342 = vmatprep.mubr.bf16.mxu0 0
      %4343 = vmatmul.mubr.bf16.gmra.mrb[0].mxu0 %v4260
      %v4344 = vpop.f32.mrb[0].mxu0
      %v4345 = vadd.f32 0.0, %v4344
      %v4346 = vpop.f32.mrb[0].mxu0
      %v4347 = vpop.f32.mrb[0].mxu0
      %v4348 = vadd.f32 0.0, %v4347
      %v4349 = vpop.f32.mrb[0].mxu0
      %4350 = vmatprep.mubr.bf16.mxu0 0
      %4351 = vmatmul.mubr.bf16.gmra.mrb[0].mxu0 %v4263
      %v4352 = vpop.f32.mrb[0].mxu0
      %v4353 = vadd.f32 0.0, %v4352
      %v4354 = vpop.f32.mrb[0].mxu0
      %v4355 = vpop.f32.mrb[0].mxu0
      %v4356 = vadd.f32 0.0, %v4355
      %v4357 = vpop.f32.mrb[0].mxu0
      %4358 = vmatprep.mubr.bf16.mxu0 0
      %4359 = vmatmul.mubr.bf16.gmra.mrb[0].mxu0 %v4266
      %v4360 = vpop.f32.mrb[0].mxu0
      %v4361 = vadd.f32 0.0, %v4360
      %v4362 = vpop.f32.mrb[0].mxu0
      %v4363 = vpop.f32.mrb[0].mxu0
      %v4364 = vadd.f32 0.0, %v4363
      %v4365 = vpop.f32.mrb[0].mxu0
      %4366 = vmatprep.mubr.bf16.mxu0 0
      %4367 = vmatmul.mubr.bf16.gmra.mrb[0].mxu0 %v4269
      %v4368 = vpop.f32.mrb[0].mxu0
      %v4369 = vadd.f32 0.0, %v4368
      %v4370 = vpop.f32.mrb[0].mxu0
      %v4371 = vpop.f32.mrb[0].mxu0
      %v4372 = vadd.f32 0.0, %v4371
      %v4373 = vpop.f32.mrb[0].mxu0
      %4374 = vmatprep.mubr.bf16.mxu0 0
      %4375 = vmatmul.mubr.bf16.gmra.mrb[0].mxu0 %v4272
      %v4376 = vpop.f32.mrb[0].mxu0
      %v4377 = vadd.f32 0.0, %v4376
      %v4378 = vpop.f32.mrb[0].mxu0
      %v4379 = vpop.f32.mrb[0].mxu0
      %v4380 = vadd.f32 0.0, %v4379
      %v4381 = vpop.f32.mrb[0].mxu0
      %4382 = vmatprep.mubr.bf16.mxu0 0
      %4383 = vmatmul.mubr.bf16.gmra.mrb[0].mxu0 %v4275
      %v4384 = vpop.f32.mrb[0].mxu0
      %v4385 = vadd.f32 0.0, %v4384
      %v4386 = vpop.f32.mrb[0].mxu0
      %v4387 = vpop.f32.mrb[0].mxu0
      %v4388 = vadd.f32 0.0, %v4387
      %v4389 = vpop.f32.mrb[0].mxu0
      %4390 = vmatprep.mubr.bf16.mxu0 0
      %4391 = vmatmul.mubr.bf16.gmra.mrb[0].mxu0 %v4278
      %v4392 = vpop.f32.mrb[0].mxu0
      %v4393 = vadd.f32 0.0, %v4392
      %v4394 = vpop.f32.mrb[0].mxu0
      %v4395 = vpop.f32.mrb[0].mxu0
      %v4396 = vadd.f32 0.0, %v4395
      %v4397 = vpop.f32.mrb[0].mxu0
      %4398 = vmatprep.mubr.bf16.mxu0 0
      %4399 = vmatmul.mubr.bf16.gmra.mrb[0].mxu0 %v4281
      %v4400 = vpop.f32.mrb[0].mxu0
      %v4401 = vadd.f32 0.0, %v4400
      %v4402 = vpop.f32.mrb[0].mxu0
      %v4403 = vpop.f32.mrb[0].mxu0
      %v4404 = vadd.f32 0.0, %v4403
      %v4405 = vpop.f32.mrb[0].mxu0
      %4406 = vmatprep.mubr.bf16.mxu0 0
      %4407 = vmatmul.mubr.bf16.gmra.mrb[0].mxu0 %v4284
      %v4408 = vpop.f32.mrb[0].mxu0
      %v4409 = vadd.f32 0.0, %v4408
      %v4410 = vpop.f32.mrb[0].mxu0
      %v4411 = vpop.f32.mrb[0].mxu0
      %v4412 = vadd.f32 0.0, %v4411
      %v4413 = vpop.f32.mrb[0].mxu0
      %4414 = vmatprep.mubr.bf16.mxu0 0
      %4415 = vmatmul.mubr.bf16.gmra.mrb[0].mxu0 %v4287
      %v4416 = vpop.f32.mrb[0].mxu0
      %v4417 = vadd.f32 0.0, %v4416
      %v4418 = vpop.f32.mrb[0].mxu0
      %v4419 = vpop.f32.mrb[0].mxu0
      %v4420 = vadd.f32 0.0, %v4419
      %v4421 = vpop.f32.mrb[0].mxu0
      %4422 = vmatprep.mubr.bf16.mxu0 0
      %4423 = vmatmul.mubr.bf16.gmra.mrb[0].mxu0 %v4290
      %v4424 = vpop.f32.mrb[0].mxu0
      %v4425 = vadd.f32 0.0, %v4424
      %v4426 = vpop.f32.mrb[0].mxu0
      %v4427 = vpop.f32.mrb[0].mxu0
      %v4428 = vadd.f32 0.0, %v4427
      %v4429 = vpop.f32.mrb[0].mxu0
      %4430 = vmatprep.mubr.bf16.mxu0 0
      %4431 = vmatmul.mubr.bf16.gmra.mrb[0].mxu0 %v4293
      %v4432 = vpop.f32.mrb[0].mxu0
      %v4433 = vadd.f32 0.0, %v4432
      %v4434 = vpop.f32.mrb[0].mxu0
      %v4435 = vpop.f32.mrb[0].mxu0
      %v4436 = vadd.f32 0.0, %v4435
      %v4437 = vpop.f32.mrb[0].mxu0
      %4438 = vmatprep.mubr.bf16.mxu0 0
      %4439 = vmatmul.mubr.bf16.gmra.mrb[0].mxu0 %v4296
      %v4440 = vpop.f32.mrb[0].mxu0
      %v4441 = vadd.f32 0.0, %v4440
      %v4442 = vpop.f32.mrb[0].mxu0
      %v4443 = vpop.f32.mrb[0].mxu0
      %v4444 = vadd.f32 0.0, %v4443
      %v4445 = vpop.f32.mrb[0].mxu0
      %4446 = vdwg.mxu0
      %v4448 = vunpack.c.l.b16 %v4153
      %v4449 = vpack.c.b16 %v4213, %v4448
      %v4450 = vpack.c.b16 %v4215, %v4214
      %v4451 = vpack.c.b16 %v4217, %v4216
      %v4452 = vpack.c.b16 %v4219, %v4218
      %v4453 = vpack.c.b16 %v4221, %v4220
      %v4454 = vpack.c.b16 %v4223, %v4222
      %v4455 = vpack.c.b16 %v4225, %v4224
      %v4456 = vpack.c.b16 %v4227, %v4226
      %v4457 = vpack.c.b16 %v4229, %v4228
      %v4458 = vpack.c.b16 %v4231, %v4230
      %v4459 = vpack.c.b16 %v4233, %v4232
      %v4460 = vpack.c.b16 %v4235, %v4234
      %v4461 = vpack.c.b16 %v4237, %v4236
      %v4462 = vpack.c.b16 %v4239, %v4238
      %v4463 = vpack.c.b16 %v4240, %v4240
      %vm4464 = vsmask.f32 4352
      %v4466 = vshrl.u32 %v4449, 16
      %v4468 = vrot.slane %v4466, 3
      %v4469 = vshll.u32 %v4449, 16
      %v4471 = vrot.slane %v4469, 4
      %v4472 = vor.u32 %v4468, %v4471
      %v4474 = vshrl.u32 %v4450, 16
      %v4476 = vrot.slane %v4474, 3
      %v4477 = vshll.u32 %v4450, 16
      %v4479 = vrot.slane %v4477, 4
      %v4480 = vor.u32 %v4476, %v4479
      %v4481 = vsel %vm4464, %v4472, %v4480
      %v4483 = vshrl.u32 %v4451, 16
      %v4485 = vrot.slane %v4483, 3
      %v4486 = vshll.u32 %v4451, 16
      %v4488 = vrot.slane %v4486, 4
      %v4489 = vor.u32 %v4485, %v4488
      %v4490 = vsel %vm4464, %v4480, %v4489
      %v4492 = vshrl.u32 %v4452, 16
      %v4494 = vrot.slane %v4492, 3
      %v4495 = vshll.u32 %v4452, 16
      %v4497 = vrot.slane %v4495, 4
      %v4498 = vor.u32 %v4494, %v4497
      %v4499 = vsel %vm4464, %v4489, %v4498
      %v4501 = vshrl.u32 %v4453, 16
      %v4503 = vrot.slane %v4501, 3
      %v4504 = vshll.u32 %v4453, 16
      %v4506 = vrot.slane %v4504, 4
      %v4507 = vor.u32 %v4503, %v4506
      %v4508 = vsel %vm4464, %v4498, %v4507
      %v4510 = vshrl.u32 %v4454, 16
      %v4512 = vrot.slane %v4510, 3
      %v4513 = vshll.u32 %v4454, 16
      %v4515 = vrot.slane %v4513, 4
      %v4516 = vor.u32 %v4512, %v4515
      %v4517 = vsel %vm4464, %v4507, %v4516
      %v4519 = vshrl.u32 %v4455, 16
      %v4521 = vrot.slane %v4519, 3
      %v4522 = vshll.u32 %v4455, 16
      %v4524 = vrot.slane %v4522, 4
      %v4525 = vor.u32 %v4521, %v4524
      %v4526 = vsel %vm4464, %v4516, %v4525
      %v4528 = vshrl.u32 %v4456, 16
      %v4530 = vrot.slane %v4528, 3
      %v4531 = vshll.u32 %v4456, 16
      %v4533 = vrot.slane %v4531, 4
      %v4534 = vor.u32 %v4530, %v4533
      %v4535 = vsel %vm4464, %v4525, %v4534
      %v4537 = vshrl.u32 %v4457, 16
      %v4539 = vrot.slane %v4537, 3
      %v4540 = vshll.u32 %v4457, 16
      %v4542 = vrot.slane %v4540, 4
      %v4543 = vor.u32 %v4539, %v4542
      %v4544 = vsel %vm4464, %v4534, %v4543
      %v4546 = vshrl.u32 %v4458, 16
      %v4548 = vrot.slane %v4546, 3
      %v4549 = vshll.u32 %v4458, 16
      %v4551 = vrot.slane %v4549, 4
      %v4552 = vor.u32 %v4548, %v4551
      %v4553 = vsel %vm4464, %v4543, %v4552
      %v4555 = vshrl.u32 %v4459, 16
      %v4557 = vrot.slane %v4555, 3
      %v4558 = vshll.u32 %v4459, 16
      %v4560 = vrot.slane %v4558, 4
      %v4561 = vor.u32 %v4557, %v4560
      %v4562 = vsel %vm4464, %v4552, %v4561
      %v4564 = vshrl.u32 %v4460, 16
      %v4566 = vrot.slane %v4564, 3
      %v4567 = vshll.u32 %v4460, 16
      %v4569 = vrot.slane %v4567, 4
      %v4570 = vor.u32 %v4566, %v4569
      %v4571 = vsel %vm4464, %v4561, %v4570
      %v4573 = vshrl.u32 %v4461, 16
      %v4575 = vrot.slane %v4573, 3
      %v4576 = vshll.u32 %v4461, 16
      %v4578 = vrot.slane %v4576, 4
      %v4579 = vor.u32 %v4575, %v4578
      %v4580 = vsel %vm4464, %v4570, %v4579
      %v4582 = vshrl.u32 %v4462, 16
      %v4584 = vrot.slane %v4582, 3
      %v4585 = vshll.u32 %v4462, 16
      %v4587 = vrot.slane %v4585, 4
      %v4588 = vor.u32 %v4584, %v4587
      %v4589 = vsel %vm4464, %v4579, %v4588
      %v4591 = vshrl.u32 %v4463, 16
      %v4593 = vrot.slane %v4591, 3
      %v4594 = vshll.u32 %v4463, 16
      %v4596 = vrot.slane %v4594, 4
      %v4597 = vor.u32 %v4593, %v4596
      %v4598 = vsel %vm4464, %v4588, %v4597
      %v4600 = vsel %vm4255, %v4481, 0
      %v4603 = vsel %vm4255, %v4490, 0
      %v4606 = vsel %vm4255, %v4499, 0
      %v4609 = vsel %vm4255, %v4508, 0
      %v4612 = vsel %vm4255, %v4517, 0
      %v4615 = vsel %vm4255, %v4526, 0
      %v4618 = vsel %vm4255, %v4535, 0
      %v4621 = vsel %vm4255, %v4544, 0
      %v4624 = vsel %vm4255, %v4553, 0
      %v4627 = vsel %vm4255, %v4562, 0
      %v4630 = vsel %vm4255, %v4571, 0
      %v4633 = vsel %vm4255, %v4580, 0
      %v4636 = vsel %vm4255, %v4589, 0
      %v4639 = vsel %vm4255, %v4598, 0
      %v4642 = vsel %vm4298, %v4182, 0
      %4644 = vmatprep.subr.bf16.mxu0 0
      %4645 = vmatpush1.bf16.msra.mxu0 %v4642
      %4646 = vmatprep.subr.bf16.mxu0 0
      %4647 = vmatpush1.bf16.msra.mxu0 0
      %4648 = vmatprep.subr.bf16.mxu0 0
      %4649 = vmatpush1.bf16.msra.mxu0 0
      %4650 = vmatprep.subr.bf16.mxu0 0
      %4651 = vmatpush1.bf16.msra.mxu0 0
      %4652 = vmatprep.subr.bf16.mxu0 0
      %4653 = vmatpush1.bf16.msra.mxu0 0
      %4654 = vmatprep.subr.bf16.mxu0 0
      %4655 = vmatpush1.bf16.msra.mxu0 0
      %4656 = vmatprep.subr.bf16.mxu0 0
      %4657 = vmatpush1.bf16.msra.mxu0 0
      %4658 = vmatprep.subr.bf16.mxu0 0
      %4659 = vmatpush1.bf16.msra.mxu0 0
      %4660 = vmatprep.subr.bf16.mxu0 0
      %4661 = vmatpush1.bf16.msra.mxu0 0
      %4662 = vmatprep.subr.bf16.mxu0 0
      %4663 = vmatpush1.bf16.msra.mxu0 0
      %4664 = vmatprep.subr.bf16.mxu0 0
      %4665 = vmatpush1.bf16.msra.mxu0 0
      %4666 = vmatprep.subr.bf16.mxu0 0
      %4667 = vmatpush1.bf16.msra.mxu0 0
      %4668 = vmatprep.subr.bf16.mxu0 0
      %4669 = vmatpush1.bf16.msra.mxu0 0
      %4670 = vmatprep.subr.bf16.mxu0 0
      %4671 = vmatpush1.bf16.msra.mxu0 0
      %4672 = vmatprep.subr.bf16.mxu0 0
      %4673 = vmatpush1.bf16.msra.mxu0 0
      %4674 = vmatprep.subr.bf16.mxu0 0
      %4675 = vmatpush1.bf16.msra.mxu0 0
      %4676 = vmatprep.mubr.bf16.mxu0 0
      %4677 = vmatmul.mubr.bf16.gmra.mrb[0].mxu0 %v4600
      %v4678 = vpop.f32.mrb[0].mxu0
      %v4679 = vadd.f32 %v4337, %v4678
      %v4680 = vpop.f32.mrb[0].mxu0
      %v4681 = vpop.f32.mrb[0].mxu0
      %v4682 = vadd.f32 %v4340, %v4681
      %v4683 = vpop.f32.mrb[0].mxu0
      %4684 = vmatprep.mubr.bf16.mxu0 0
      %4685 = vmatmul.mubr.bf16.gmra.mrb[0].mxu0 %v4603
      %v4686 = vpop.f32.mrb[0].mxu0
      %v4687 = vadd.f32 %v4345, %v4686
      %v4688 = vpop.f32.mrb[0].mxu0
      %v4689 = vpop.f32.mrb[0].mxu0
      %v4690 = vadd.f32 %v4348, %v4689
      %v4691 = vpop.f32.mrb[0].mxu0
      %4692 = vmatprep.mubr.bf16.mxu0 0
      %4693 = vmatmul.mubr.bf16.gmra.mrb[0].mxu0 %v4606
      %v4694 = vpop.f32.mrb[0].mxu0
      %v4695 = vadd.f32 %v4353, %v4694
      %v4696 = vpop.f32.mrb[0].mxu0
      %v4697 = vpop.f32.mrb[0].mxu0
      %v4698 = vadd.f32 %v4356, %v4697
      %v4699 = vpop.f32.mrb[0].mxu0
      %4700 = vmatprep.mubr.bf16.mxu0 0
      %4701 = vmatmul.mubr.bf16.gmra.mrb[0].mxu0 %v4609
      %v4702 = vpop.f32.mrb[0].mxu0
      %v4703 = vadd.f32 %v4361, %v4702
      %v4704 = vpop.f32.mrb[0].mxu0
      %v4705 = vpop.f32.mrb[0].mxu0
      %v4706 = vadd.f32 %v4364, %v4705
      %v4707 = vpop.f32.mrb[0].mxu0
      %4708 = vmatprep.mubr.bf16.mxu0 0
      %4709 = vmatmul.mubr.bf16.gmra.mrb[0].mxu0 %v4612
      %v4710 = vpop.f32.mrb[0].mxu0
      %v4711 = vadd.f32 %v4369, %v4710
      %v4712 = vpop.f32.mrb[0].mxu0
      %v4713 = vpop.f32.mrb[0].mxu0
      %v4714 = vadd.f32 %v4372, %v4713
      %v4715 = vpop.f32.mrb[0].mxu0
      %4716 = vmatprep.mubr.bf16.mxu0 0
      %4717 = vmatmul.mubr.bf16.gmra.mrb[0].mxu0 %v4615
      %v4718 = vpop.f32.mrb[0].mxu0
      %v4719 = vadd.f32 %v4377, %v4718
      %v4720 = vpop.f32.mrb[0].mxu0
      %v4721 = vpop.f32.mrb[0].mxu0
      %v4722 = vadd.f32 %v4380, %v4721
      %v4723 = vpop.f32.mrb[0].mxu0
      %4724 = vmatprep.mubr.bf16.mxu0 0
      %4725 = vmatmul.mubr.bf16.gmra.mrb[0].mxu0 %v4618
      %v4726 = vpop.f32.mrb[0].mxu0
      %v4727 = vadd.f32 %v4385, %v4726
      %v4728 = vpop.f32.mrb[0].mxu0
      %v4729 = vpop.f32.mrb[0].mxu0
      %v4730 = vadd.f32 %v4388, %v4729
      %v4731 = vpop.f32.mrb[0].mxu0
      %4732 = vmatprep.mubr.bf16.mxu0 0
      %4733 = vmatmul.mubr.bf16.gmra.mrb[0].mxu0 %v4621
      %v4734 = vpop.f32.mrb[0].mxu0
      %v4735 = vadd.f32 %v4393, %v4734
      %v4736 = vpop.f32.mrb[0].mxu0
      %v4737 = vpop.f32.mrb[0].mxu0
      %v4738 = vadd.f32 %v4396, %v4737
      %v4739 = vpop.f32.mrb[0].mxu0
      %4740 = vmatprep.mubr.bf16.mxu0 0
      %4741 = vmatmul.mubr.bf16.gmra.mrb[0].mxu0 %v4624
      %v4742 = vpop.f32.mrb[0].mxu0
      %v4743 = vadd.f32 %v4401, %v4742
      %v4744 = vpop.f32.mrb[0].mxu0
      %v4745 = vpop.f32.mrb[0].mxu0
      %v4746 = vadd.f32 %v4404, %v4745
      %v4747 = vpop.f32.mrb[0].mxu0
      %4748 = vmatprep.mubr.bf16.mxu0 0
      %4749 = vmatmul.mubr.bf16.gmra.mrb[0].mxu0 %v4627
      %v4750 = vpop.f32.mrb[0].mxu0
      %v4751 = vadd.f32 %v4409, %v4750
      %v4752 = vpop.f32.mrb[0].mxu0
      %v4753 = vpop.f32.mrb[0].mxu0
      %v4754 = vadd.f32 %v4412, %v4753
      %v4755 = vpop.f32.mrb[0].mxu0
      %4756 = vmatprep.mubr.bf16.mxu0 0
      %4757 = vmatmul.mubr.bf16.gmra.mrb[0].mxu0 %v4630
      %v4758 = vpop.f32.mrb[0].mxu0
      %v4759 = vadd.f32 %v4417, %v4758
      %v4760 = vpop.f32.mrb[0].mxu0
      %v4761 = vpop.f32.mrb[0].mxu0
      %v4762 = vadd.f32 %v4420, %v4761
      %v4763 = vpop.f32.mrb[0].mxu0
      %4764 = vmatprep.mubr.bf16.mxu0 0
      %4765 = vmatmul.mubr.bf16.gmra.mrb[0].mxu0 %v4633
      %v4766 = vpop.f32.mrb[0].mxu0
      %v4767 = vadd.f32 %v4425, %v4766
      %v4768 = vpop.f32.mrb[0].mxu0
      %v4769 = vpop.f32.mrb[0].mxu0
      %v4770 = vadd.f32 %v4428, %v4769
      %v4771 = vpop.f32.mrb[0].mxu0
      %4772 = vmatprep.mubr.bf16.mxu0 0
      %4773 = vmatmul.mubr.bf16.gmra.mrb[0].mxu0 %v4636
      %v4774 = vpop.f32.mrb[0].mxu0
      %v4775 = vadd.f32 %v4433, %v4774
      %v4776 = vpop.f32.mrb[0].mxu0
      %v4777 = vpop.f32.mrb[0].mxu0
      %v4778 = vadd.f32 %v4436, %v4777
      %v4779 = vpop.f32.mrb[0].mxu0
      %4780 = vmatprep.mubr.bf16.mxu0 0
      %4781 = vmatmul.mubr.bf16.gmra.mrb[0].mxu0 %v4639
      %v4782 = vpop.f32.mrb[0].mxu0
      %v4783 = vadd.f32 %v4441, %v4782
      %v4784 = vpop.f32.mrb[0].mxu0
      %v4785 = vpop.f32.mrb[0].mxu0
      %v4786 = vadd.f32 %v4444, %v4785
      %v4787 = vpop.f32.mrb[0].mxu0
      %4788 = vdwg.mxu0
      %v4789 = vld [vmem:[#allocation2 + $0x10] sm:$0xf]
      %v4790 = vld [vmem:[#allocation2 + $0x14] sm:$0xf]
      %v4791 = vld [vmem:[#allocation2 + $0x18] sm:$0xf]
      %v4792 = vld [vmem:[#allocation2 + $0x1c] sm:$0xf]
      %v4793 = vld [vmem:[#allocation2 + $0x20] sm:$0xf]
      %v4794 = vld [vmem:[#allocation2 + $0x24] sm:$0xf]
      %v4795 = vld [vmem:[#allocation2 + $0x28] sm:$0xf]
      %v4796 = vld [vmem:[#allocation2 + $0x2c] sm:$0xf]
      %v4797 = vld [vmem:[#allocation2 + $0x30] sm:$0xf]
      %v4798 = vld [vmem:[#allocation2 + $0x34] sm:$0xf]
      %v4799 = vld [vmem:[#allocation2 + $0x38] sm:$0xf]
      %v4800 = vld [vmem:[#allocation2 + $0x3c] sm:$0xf]
      %v4801 = vld [vmem:[#allocation2 + $0x40] sm:$0xf]
      %v4802 = vld [vmem:[#allocation2 + $0x44] sm:$0xf]
      %v4803 = vld [vmem:[#allocation2 + $0x48] sm:$0xf]
      %v4804 = vld [vmem:[#allocation2 + $0x4c] sm:$0xf]
      %v4805 = vld [vmem:[#allocation2 + $0x50] sm:$0xf]
      %v4806 = vld [vmem:[#allocation2 + $0x54] sm:$0xf]
      %v4807 = vld [vmem:[#allocation2 + $0x58] sm:$0xf]
      %v4808 = vld [vmem:[#allocation2 + $0x5c] sm:$0xf]
      %v4809 = vld [vmem:[#allocation2 + $0x60] sm:$0xf]
      %v4810 = vld [vmem:[#allocation2 + $0x64] sm:$0xf]
      %v4811 = vld [vmem:[#allocation2 + $0x68] sm:$0xf]
      %v4812 = vld [vmem:[#allocation2 + $0x6c] sm:$0xf]
      %v4813 = vld [vmem:[#allocation2 + $0x70] sm:$0xf]
      %v4814 = vld [vmem:[#allocation2 + $0x74] sm:$0xf]
      %v4815 = vld [vmem:[#allocation2 + $0x78] sm:$0xf]
      %v4816 = vld [vmem:[#allocation2 + $0x7c] sm:$0xf]
      %v4817 = vld [vmem:[#allocation2 + $0x80] sm:$0x1]
      %s4818 = scalar_lea.vmem %s3, 8
      %v4819 = vld [vmem:[%s4818] sm:$0x7]
      %v4849 = vunpack.c.l.b16 %v4789
      %v4850 = vunpack.c.l.b16 %v4790
      %v4851 = vunpack.c.l.b16 %v4791
      %v4852 = vunpack.c.l.b16 %v4792
      %v4853 = vunpack.c.l.b16 %v4793
      %v4854 = vunpack.c.l.b16 %v4794
      %v4855 = vunpack.c.l.b16 %v4795
      %v4856 = vunpack.c.l.b16 %v4796
      %v4857 = vunpack.c.l.b16 %v4797
      %v4858 = vunpack.c.l.b16 %v4798
      %v4859 = vunpack.c.l.b16 %v4799
      %v4860 = vunpack.c.l.b16 %v4800
      %v4861 = vunpack.c.l.b16 %v4801
      %v4862 = vunpack.c.l.b16 %v4802
      %v4863 = vunpack.c.l.b16 %v4803
      %v4864 = vunpack.c.l.b16 %v4804
      %v4865 = vunpack.c.l.b16 %v4805
      %v4866 = vunpack.c.l.b16 %v4806
      %v4867 = vunpack.c.l.b16 %v4807
      %v4868 = vunpack.c.l.b16 %v4808
      %v4869 = vunpack.c.l.b16 %v4809
      %v4870 = vunpack.c.l.b16 %v4810
      %v4871 = vunpack.c.l.b16 %v4811
      %v4872 = vunpack.c.l.b16 %v4812
      %v4873 = vunpack.c.l.b16 %v4813
      %v4874 = vunpack.c.l.b16 %v4814
      %v4875 = vunpack.c.l.b16 %v4815
      %v4876 = vunpack.c.l.b16 %v4816
      %v4877 = vunpack.c.l.b16 %v4817
      %v4878 = vpack.c.b16 %v4850, %v4849
      %v4879 = vpack.c.b16 %v4852, %v4851
      %v4880 = vpack.c.b16 %v4854, %v4853
      %v4881 = vpack.c.b16 %v4856, %v4855
      %v4882 = vpack.c.b16 %v4858, %v4857
      %v4883 = vpack.c.b16 %v4860, %v4859
      %v4884 = vpack.c.b16 %v4862, %v4861
      %v4885 = vpack.c.b16 %v4864, %v4863
      %v4886 = vpack.c.b16 %v4866, %v4865
      %v4887 = vpack.c.b16 %v4868, %v4867
      %v4888 = vpack.c.b16 %v4870, %v4869
      %v4889 = vpack.c.b16 %v4872, %v4871
      %v4890 = vpack.c.b16 %v4874, %v4873
      %v4891 = vpack.c.b16 %v4876, %v4875
      %v4892 = vpack.c.b16 %v4877, %v4877
      %v4894 = vshrl.u32 %v4878, 16
      %v4896 = vshll.u32 %v4878, 16
      %v4898 = vrot.slane %v4896, 1
      %v4899 = vor.u32 %v4894, %v4898
      %v4901 = vshll.u32 %v4879, 16
      %v4903 = vrot.slane %v4901, 1
      %v4904 = vsel %vm439, %v4899, %v4903
      %v4905 = vshrl.u32 %v4879, 16
      %v4907 = vor.u32 %v4905, %v4903
      %v4909 = vshll.u32 %v4880, 16
      %v4911 = vrot.slane %v4909, 1
      %v4912 = vsel %vm439, %v4907, %v4911
      %v4913 = vshrl.u32 %v4880, 16
      %v4915 = vor.u32 %v4913, %v4911
      %v4917 = vshll.u32 %v4881, 16
      %v4919 = vrot.slane %v4917, 1
      %v4920 = vsel %vm439, %v4915, %v4919
      %v4921 = vshrl.u32 %v4881, 16
      %v4923 = vor.u32 %v4921, %v4919
      %v4925 = vshll.u32 %v4882, 16
      %v4927 = vrot.slane %v4925, 1
      %v4928 = vsel %vm439, %v4923, %v4927
      %v4929 = vshrl.u32 %v4882, 16
      %v4931 = vor.u32 %v4929, %v4927
      %v4933 = vshll.u32 %v4883, 16
      %v4935 = vrot.slane %v4933, 1
      %v4936 = vsel %vm439, %v4931, %v4935
      %v4937 = vshrl.u32 %v4883, 16
      %v4939 = vor.u32 %v4937, %v4935
      %v4941 = vshll.u32 %v4884, 16
      %v4943 = vrot.slane %v4941, 1
      %v4944 = vsel %vm439, %v4939, %v4943
      %v4945 = vshrl.u32 %v4884, 16
      %v4947 = vor.u32 %v4945, %v4943
      %v4949 = vshll.u32 %v4885, 16
      %v4951 = vrot.slane %v4949, 1
      %v4952 = vsel %vm439, %v4947, %v4951
      %v4953 = vshrl.u32 %v4885, 16
      %v4955 = vor.u32 %v4953, %v4951
      %v4957 = vshll.u32 %v4886, 16
      %v4959 = vrot.slane %v4957, 1
      %v4960 = vsel %vm439, %v4955, %v4959
      %v4961 = vshrl.u32 %v4886, 16
      %v4963 = vor.u32 %v4961, %v4959
      %v4965 = vshll.u32 %v4887, 16
      %v4967 = vrot.slane %v4965, 1
      %v4968 = vsel %vm439, %v4963, %v4967
      %v4969 = vshrl.u32 %v4887, 16
      %v4971 = vor.u32 %v4969, %v4967
      %v4973 = vshll.u32 %v4888, 16
      %v4975 = vrot.slane %v4973, 1
      %v4976 = vsel %vm439, %v4971, %v4975
      %v4977 = vshrl.u32 %v4888, 16
      %v4979 = vor.u32 %v4977, %v4975
      %v4981 = vshll.u32 %v4889, 16
      %v4983 = vrot.slane %v4981, 1
      %v4984 = vsel %vm439, %v4979, %v4983
      %v4985 = vshrl.u32 %v4889, 16
      %v4987 = vor.u32 %v4985, %v4983
      %v4989 = vshll.u32 %v4890, 16
      %v4991 = vrot.slane %v4989, 1
      %v4992 = vsel %vm439, %v4987, %v4991
      %v4993 = vshrl.u32 %v4890, 16
      %v4995 = vor.u32 %v4993, %v4991
      %v4997 = vshll.u32 %v4891, 16
      %v4999 = vrot.slane %v4997, 1
      %v5000 = vsel %vm439, %v4995, %v4999
      %v5001 = vshrl.u32 %v4891, 16
      %v5003 = vor.u32 %v5001, %v4999
      %v5005 = vshll.u32 %v4892, 16
      %v5007 = vrot.slane %v5005, 1
      %v5008 = vsel %vm439, %v5003, %v5007
      %v5010 = vsel %vm4255, %v4904, 0
      %v5013 = vsel %vm4255, %v4912, 0
      %v5016 = vsel %vm4255, %v4920, 0
      %v5019 = vsel %vm4255, %v4928, 0
      %v5022 = vsel %vm4255, %v4936, 0
      %v5025 = vsel %vm4255, %v4944, 0
      %v5028 = vsel %vm4255, %v4952, 0
      %v5031 = vsel %vm4255, %v4960, 0
      %v5034 = vsel %vm4255, %v4968, 0
      %v5037 = vsel %vm4255, %v4976, 0
      %v5040 = vsel %vm4255, %v4984, 0
      %v5043 = vsel %vm4255, %v4992, 0
      %v5046 = vsel %vm4255, %v5000, 0
      %v5049 = vsel %vm4255, %v5008, 0
      %v5052 = vsel %vm4298, %v4819, 0
      %5054 = vmatprep.subr.bf16.mxu0 0
      %5055 = vmatpush1.bf16.msra.mxu0 %v5052
      %5056 = vmatprep.subr.bf16.mxu0 0
      %5057 = vmatpush1.bf16.msra.mxu0 0
      %5058 = vmatprep.subr.bf16.mxu0 0
      %5059 = vmatpush1.bf16.msra.mxu0 0
      %5060 = vmatprep.subr.bf16.mxu0 0
      %5061 = vmatpush1.bf16.msra.mxu0 0
      %5062 = vmatprep.subr.bf16.mxu0 0
      %5063 = vmatpush1.bf16.msra.mxu0 0
      %5064 = vmatprep.subr.bf16.mxu0 0
      %5065 = vmatpush1.bf16.msra.mxu0 0
      %5066 = vmatprep.subr.bf16.mxu0 0
      %5067 = vmatpush1.bf16.msra.mxu0 0
      %5068 = vmatprep.subr.bf16.mxu0 0
      %5069 = vmatpush1.bf16.msra.mxu0 0
      %5070 = vmatprep.subr.bf16.mxu0 0
      %5071 = vmatpush1.bf16.msra.mxu0 0
      %5072 = vmatprep.subr.bf16.mxu0 0
      %5073 = vmatpush1.bf16.msra.mxu0 0
      %5074 = vmatprep.subr.bf16.mxu0 0
      %5075 = vmatpush1.bf16.msra.mxu0 0
      %5076 = vmatprep.subr.bf16.mxu0 0
      %5077 = vmatpush1.bf16.msra.mxu0 0
      %5078 = vmatprep.subr.bf16.mxu0 0
      %5079 = vmatpush1.bf16.msra.mxu0 0
      %5080 = vmatprep.subr.bf16.mxu0 0
      %5081 = vmatpush1.bf16.msra.mxu0 0
      %5082 = vmatprep.subr.bf16.mxu0 0
      %5083 = vmatpush1.bf16.msra.mxu0 0
      %5084 = vmatprep.subr.bf16.mxu0 0
      %5085 = vmatpush1.bf16.msra.mxu0 0
      %5086 = vmatprep.mubr.bf16.mxu0 0
      %5087 = vmatmul.mubr.bf16.gmra.mrb[0].mxu0 %v5010
      %v5088 = vpop.f32.mrb[0].mxu0
      %v5089 = vadd.f32 0.0, %v5088
      %v5090 = vpop.f32.mrb[0].mxu0
      %v5091 = vpop.f32.mrb[0].mxu0
      %v5092 = vadd.f32 0.0, %v5091
      %v5093 = vpop.f32.mrb[0].mxu0
      %5094 = vmatprep.mubr.bf16.mxu0 0
      %5095 = vmatmul.mubr.bf16.gmra.mrb[0].mxu0 %v5013
      %v5096 = vpop.f32.mrb[0].mxu0
      %v5097 = vadd.f32 0.0, %v5096
      %v5098 = vpop.f32.mrb[0].mxu0
      %v5099 = vpop.f32.mrb[0].mxu0
      %v5100 = vadd.f32 0.0, %v5099
      %v5101 = vpop.f32.mrb[0].mxu0
      %5102 = vmatprep.mubr.bf16.mxu0 0
      %5103 = vmatmul.mubr.bf16.gmra.mrb[0].mxu0 %v5016
      %v5104 = vpop.f32.mrb[0].mxu0
      %v5105 = vadd.f32 0.0, %v5104
      %v5106 = vpop.f32.mrb[0].mxu0
      %v5107 = vpop.f32.mrb[0].mxu0
      %v5108 = vadd.f32 0.0, %v5107
      %v5109 = vpop.f32.mrb[0].mxu0
      %5110 = vmatprep.mubr.bf16.mxu0 0
      %5111 = vmatmul.mubr.bf16.gmra.mrb[0].mxu0 %v5019
      %v5112 = vpop.f32.mrb[0].mxu0
      %v5113 = vadd.f32 0.0, %v5112
      %v5114 = vpop.f32.mrb[0].mxu0
      %v5115 = vpop.f32.mrb[0].mxu0
      %v5116 = vadd.f32 0.0, %v5115
      %v5117 = vpop.f32.mrb[0].mxu0
      %5118 = vmatprep.mubr.bf16.mxu0 0
      %5119 = vmatmul.mubr.bf16.gmra.mrb[0].mxu0 %v5022
      %v5120 = vpop.f32.mrb[0].mxu0
      %v5121 = vadd.f32 0.0, %v5120
      %v5122 = vpop.f32.mrb[0].mxu0
      %v5123 = vpop.f32.mrb[0].mxu0
      %v5124 = vadd.f32 0.0, %v5123
      %v5125 = vpop.f32.mrb[0].mxu0
      %5126 = vmatprep.mubr.bf16.mxu0 0
      %5127 = vmatmul.mubr.bf16.gmra.mrb[0].mxu0 %v5025
      %v5128 = vpop.f32.mrb[0].mxu0
      %v5129 = vadd.f32 0.0, %v5128
      %v5130 = vpop.f32.mrb[0].mxu0
      %v5131 = vpop.f32.mrb[0].mxu0
      %v5132 = vadd.f32 0.0, %v5131
      %v5133 = vpop.f32.mrb[0].mxu0
      %5134 = vmatprep.mubr.bf16.mxu0 0
      %5135 = vmatmul.mubr.bf16.gmra.mrb[0].mxu0 %v5028
      %v5136 = vpop.f32.mrb[0].mxu0
      %v5137 = vadd.f32 0.0, %v5136
      %v5138 = vpop.f32.mrb[0].mxu0
      %v5139 = vpop.f32.mrb[0].mxu0
      %v5140 = vadd.f32 0.0, %v5139
      %v5141 = vpop.f32.mrb[0].mxu0
      %5142 = vmatprep.mubr.bf16.mxu0 0
      %5143 = vmatmul.mubr.bf16.gmra.mrb[0].mxu0 %v5031
      %v5144 = vpop.f32.mrb[0].mxu0
      %v5145 = vadd.f32 0.0, %v5144
      %v5146 = vpop.f32.mrb[0].mxu0
      %v5147 = vpop.f32.mrb[0].mxu0
      %v5148 = vadd.f32 0.0, %v5147
      %v5149 = vpop.f32.mrb[0].mxu0
      %5150 = vmatprep.mubr.bf16.mxu0 0
      %5151 = vmatmul.mubr.bf16.gmra.mrb[0].mxu0 %v5034
      %v5152 = vpop.f32.mrb[0].mxu0
      %v5153 = vadd.f32 0.0, %v5152
      %v5154 = vpop.f32.mrb[0].mxu0
      %v5155 = vpop.f32.mrb[0].mxu0
      %v5156 = vadd.f32 0.0, %v5155
      %v5157 = vpop.f32.mrb[0].mxu0
      %5158 = vmatprep.mubr.bf16.mxu0 0
      %5159 = vmatmul.mubr.bf16.gmra.mrb[0].mxu0 %v5037
      %v5160 = vpop.f32.mrb[0].mxu0
      %v5161 = vadd.f32 0.0, %v5160
      %v5162 = vpop.f32.mrb[0].mxu0
      %v5163 = vpop.f32.mrb[0].mxu0
      %v5164 = vadd.f32 0.0, %v5163
      %v5165 = vpop.f32.mrb[0].mxu0
      %5166 = vmatprep.mubr.bf16.mxu0 0
      %5167 = vmatmul.mubr.bf16.gmra.mrb[0].mxu0 %v5040
      %v5168 = vpop.f32.mrb[0].mxu0
      %v5169 = vadd.f32 0.0, %v5168
      %v5170 = vpop.f32.mrb[0].mxu0
      %v5171 = vpop.f32.mrb[0].mxu0
      %v5172 = vadd.f32 0.0, %v5171
      %v5173 = vpop.f32.mrb[0].mxu0
      %5174 = vmatprep.mubr.bf16.mxu0 0
      %5175 = vmatmul.mubr.bf16.gmra.mrb[0].mxu0 %v5043
      %v5176 = vpop.f32.mrb[0].mxu0
      %v5177 = vadd.f32 0.0, %v5176
      %v5178 = vpop.f32.mrb[0].mxu0
      %v5179 = vpop.f32.mrb[0].mxu0
      %v5180 = vadd.f32 0.0, %v5179
      %v5181 = vpop.f32.mrb[0].mxu0
      %5182 = vmatprep.mubr.bf16.mxu0 0
      %5183 = vmatmul.mubr.bf16.gmra.mrb[0].mxu0 %v5046
      %v5184 = vpop.f32.mrb[0].mxu0
      %v5185 = vadd.f32 0.0, %v5184
      %v5186 = vpop.f32.mrb[0].mxu0
      %v5187 = vpop.f32.mrb[0].mxu0
      %v5188 = vadd.f32 0.0, %v5187
      %v5189 = vpop.f32.mrb[0].mxu0
      %5190 = vmatprep.mubr.bf16.mxu0 0
      %5191 = vmatmul.mubr.bf16.gmra.mrb[0].mxu0 %v5049
      %v5192 = vpop.f32.mrb[0].mxu0
      %v5193 = vadd.f32 0.0, %v5192
      %v5194 = vpop.f32.mrb[0].mxu0
      %v5195 = vpop.f32.mrb[0].mxu0
      %v5196 = vadd.f32 0.0, %v5195
      %v5197 = vpop.f32.mrb[0].mxu0
      %5198 = vdwg.mxu0
      %v5199 = vadd.f32 %v4679, %v5089
      %v5200 = vadd.f32 %v4682, %v5092
      %v5201 = vadd.f32 %v4687, %v5097
      %v5202 = vadd.f32 %v4690, %v5100
      %v5203 = vadd.f32 %v4695, %v5105
      %v5204 = vadd.f32 %v4698, %v5108
      %v5205 = vadd.f32 %v4703, %v5113
      %v5206 = vadd.f32 %v4706, %v5116
      %v5207 = vadd.f32 %v4711, %v5121
      %v5208 = vadd.f32 %v4714, %v5124
      %v5209 = vadd.f32 %v4719, %v5129
      %v5210 = vadd.f32 %v4722, %v5132
      %v5211 = vadd.f32 %v4727, %v5137
      %v5212 = vadd.f32 %v4730, %v5140
      %v5213 = vadd.f32 %v4735, %v5145
      %v5214 = vadd.f32 %v4738, %v5148
      %v5215 = vadd.f32 %v4743, %v5153
      %v5216 = vadd.f32 %v4746, %v5156
      %v5217 = vadd.f32 %v4751, %v5161
      %v5218 = vadd.f32 %v4754, %v5164
      %v5219 = vadd.f32 %v4759, %v5169
      %v5220 = vadd.f32 %v4762, %v5172
      %v5221 = vadd.f32 %v4767, %v5177
      %v5222 = vadd.f32 %v4770, %v5180
      %v5223 = vadd.f32 %v4775, %v5185
      %v5224 = vadd.f32 %v4778, %v5188
      %v5225 = vadd.f32 %v4783, %v5193
      %v5226 = vadd.f32 %v4786, %v5196
      %v5227 = vld [vmem:[#allocation2 + $0x18] sm:$0x8]
      %v5228 = vld [vmem:[#allocation2 + $0x1c] sm:$0xf]
      %v5229 = vld [vmem:[#allocation2 + $0x20] sm:$0xf]
      %v5230 = vld [vmem:[#allocation2 + $0x24] sm:$0xf]
      %v5231 = vld [vmem:[#allocation2 + $0x28] sm:$0xf]
      %v5232 = vld [vmem:[#allocation2 + $0x2c] sm:$0xf]
      %v5233 = vld [vmem:[#allocation2 + $0x30] sm:$0xf]
      %v5234 = vld [vmem:[#allocation2 + $0x34] sm:$0xf]
      %v5235 = vld [vmem:[#allocation2 + $0x38] sm:$0xf]
      %v5236 = vld [vmem:[#allocation2 + $0x3c] sm:$0xf]
      %v5237 = vld [vmem:[#allocation2 + $0x40] sm:$0xf]
      %v5238 = vld [vmem:[#allocation2 + $0x44] sm:$0xf]
      %v5239 = vld [vmem:[#allocation2 + $0x48] sm:$0xf]
      %v5240 = vld [vmem:[#allocation2 + $0x4c] sm:$0xf]
      %v5241 = vld [vmem:[#allocation2 + $0x50] sm:$0xf]
      %v5242 = vld [vmem:[#allocation2 + $0x54] sm:$0xf]
      %v5243 = vld [vmem:[#allocation2 + $0x58] sm:$0xf]
      %v5244 = vld [vmem:[#allocation2 + $0x5c] sm:$0xf]
      %v5245 = vld [vmem:[#allocation2 + $0x60] sm:$0xf]
      %v5246 = vld [vmem:[#allocation2 + $0x64] sm:$0xf]
      %v5247 = vld [vmem:[#allocation2 + $0x68] sm:$0xf]
      %v5248 = vld [vmem:[#allocation2 + $0x6c] sm:$0xf]
      %v5249 = vld [vmem:[#allocation2 + $0x70] sm:$0xf]
      %v5250 = vld [vmem:[#allocation2 + $0x74] sm:$0xf]
      %v5251 = vld [vmem:[#allocation2 + $0x78] sm:$0xf]
      %v5252 = vld [vmem:[#allocation2 + $0x7c] sm:$0xf]
      %v5253 = vld [vmem:[#allocation2 + $0x80] sm:$0xf]
      %v5254 = vld [vmem:[#allocation2 + $0x84] sm:$0xf]
      %v5255 = vld [vmem:[#allocation2 + $0x88] sm:$0xf]
      %s5256 = scalar_lea.vmem %s3, 12
      %v5257 = vld [vmem:[%s5256] sm:$0x7]
      %v5287 = vunpack.c.l.b16 %v5227
      %v5288 = vunpack.c.l.b16 %v5228
      %v5289 = vunpack.c.l.b16 %v5229
      %v5290 = vunpack.c.l.b16 %v5230
      %v5291 = vunpack.c.l.b16 %v5231
      %v5292 = vunpack.c.l.b16 %v5232
      %v5293 = vunpack.c.l.b16 %v5233
      %v5294 = vunpack.c.l.b16 %v5234
      %v5295 = vunpack.c.l.b16 %v5235
      %v5296 = vunpack.c.l.b16 %v5236
      %v5297 = vunpack.c.l.b16 %v5237
      %v5298 = vunpack.c.l.b16 %v5238
      %v5299 = vunpack.c.l.b16 %v5239
      %v5300 = vunpack.c.l.b16 %v5240
      %v5301 = vunpack.c.l.b16 %v5241
      %v5302 = vunpack.c.l.b16 %v5242
      %v5303 = vunpack.c.l.b16 %v5243
      %v5304 = vunpack.c.l.b16 %v5244
      %v5305 = vunpack.c.l.b16 %v5245
      %v5306 = vunpack.c.l.b16 %v5246
      %v5307 = vunpack.c.l.b16 %v5247
      %v5308 = vunpack.c.l.b16 %v5248
      %v5309 = vunpack.c.l.b16 %v5249
      %v5310 = vunpack.c.l.b16 %v5250
      %v5311 = vunpack.c.l.b16 %v5251
      %v5312 = vunpack.c.l.b16 %v5252
      %v5313 = vunpack.c.l.b16 %v5253
      %v5314 = vunpack.c.l.b16 %v5254
      %v5315 = vunpack.c.l.b16 %v5255
      %v5316 = vpack.c.b16 %v5288, %v5287
      %v5317 = vpack.c.b16 %v5290, %v5289
      %v5318 = vpack.c.b16 %v5292, %v5291
      %v5319 = vpack.c.b16 %v5294, %v5293
      %v5320 = vpack.c.b16 %v5296, %v5295
      %v5321 = vpack.c.b16 %v5298, %v5297
      %v5322 = vpack.c.b16 %v5300, %v5299
      %v5323 = vpack.c.b16 %v5302, %v5301
      %v5324 = vpack.c.b16 %v5304, %v5303
      %v5325 = vpack.c.b16 %v5306, %v5305
      %v5326 = vpack.c.b16 %v5308, %v5307
      %v5327 = vpack.c.b16 %v5310, %v5309
      %v5328 = vpack.c.b16 %v5312, %v5311
      %v5329 = vpack.c.b16 %v5314, %v5313
      %v5330 = vpack.c.b16 %v5315, %v5315
      %v5332 = vshrl.u32 %v5316, 16
      %v5334 = vrot.slane %v5332, 3
      %v5335 = vshll.u32 %v5316, 16
      %v5337 = vrot.slane %v5335, 4
      %v5338 = vor.u32 %v5334, %v5337
      %v5340 = vshrl.u32 %v5317, 16
      %v5342 = vrot.slane %v5340, 3
      %v5343 = vshll.u32 %v5317, 16
      %v5345 = vrot.slane %v5343, 4
      %v5346 = vor.u32 %v5342, %v5345
      %v5347 = vsel %vm4464, %v5338, %v5346
      %v5349 = vshrl.u32 %v5318, 16
      %v5351 = vrot.slane %v5349, 3
      %v5352 = vshll.u32 %v5318, 16
      %v5354 = vrot.slane %v5352, 4
      %v5355 = vor.u32 %v5351, %v5354
      %v5356 = vsel %vm4464, %v5346, %v5355
      %v5358 = vshrl.u32 %v5319, 16
      %v5360 = vrot.slane %v5358, 3
      %v5361 = vshll.u32 %v5319, 16
      %v5363 = vrot.slane %v5361, 4
      %v5364 = vor.u32 %v5360, %v5363
      %v5365 = vsel %vm4464, %v5355, %v5364
      %v5367 = vshrl.u32 %v5320, 16
      %v5369 = vrot.slane %v5367, 3
      %v5370 = vshll.u32 %v5320, 16
      %v5372 = vrot.slane %v5370, 4
      %v5373 = vor.u32 %v5369, %v5372
      %v5374 = vsel %vm4464, %v5364, %v5373
      %v5376 = vshrl.u32 %v5321, 16
      %v5378 = vrot.slane %v5376, 3
      %v5379 = vshll.u32 %v5321, 16
      %v5381 = vrot.slane %v5379, 4
      %v5382 = vor.u32 %v5378, %v5381
      %v5383 = vsel %vm4464, %v5373, %v5382
      %v5385 = vshrl.u32 %v5322, 16
      %v5387 = vrot.slane %v5385, 3
      %v5388 = vshll.u32 %v5322, 16
      %v5390 = vrot.slane %v5388, 4
      %v5391 = vor.u32 %v5387, %v5390
      %v5392 = vsel %vm4464, %v5382, %v5391
      %v5394 = vshrl.u32 %v5323, 16
      %v5396 = vrot.slane %v5394, 3
      %v5397 = vshll.u32 %v5323, 16
      %v5399 = vrot.slane %v5397, 4
      %v5400 = vor.u32 %v5396, %v5399
      %v5401 = vsel %vm4464, %v5391, %v5400
      %v5403 = vshrl.u32 %v5324, 16
      %v5405 = vrot.slane %v5403, 3
      %v5406 = vshll.u32 %v5324, 16
      %v5408 = vrot.slane %v5406, 4
      %v5409 = vor.u32 %v5405, %v5408
      %v5410 = vsel %vm4464, %v5400, %v5409
      %v5412 = vshrl.u32 %v5325, 16
      %v5414 = vrot.slane %v5412, 3
      %v5415 = vshll.u32 %v5325, 16
      %v5417 = vrot.slane %v5415, 4
      %v5418 = vor.u32 %v5414, %v5417
      %v5419 = vsel %vm4464, %v5409, %v5418
      %v5421 = vshrl.u32 %v5326, 16
      %v5423 = vrot.slane %v5421, 3
      %v5424 = vshll.u32 %v5326, 16
      %v5426 = vrot.slane %v5424, 4
      %v5427 = vor.u32 %v5423, %v5426
      %v5428 = vsel %vm4464, %v5418, %v5427
      %v5430 = vshrl.u32 %v5327, 16
      %v5432 = vrot.slane %v5430, 3
      %v5433 = vshll.u32 %v5327, 16
      %v5435 = vrot.slane %v5433, 4
      %v5436 = vor.u32 %v5432, %v5435
      %v5437 = vsel %vm4464, %v5427, %v5436
      %v5439 = vshrl.u32 %v5328, 16
      %v5441 = vrot.slane %v5439, 3
      %v5442 = vshll.u32 %v5328, 16
      %v5444 = vrot.slane %v5442, 4
      %v5445 = vor.u32 %v5441, %v5444
      %v5446 = vsel %vm4464, %v5436, %v5445
      %v5448 = vshrl.u32 %v5329, 16
      %v5450 = vrot.slane %v5448, 3
      %v5451 = vshll.u32 %v5329, 16
      %v5453 = vrot.slane %v5451, 4
      %v5454 = vor.u32 %v5450, %v5453
      %v5455 = vsel %vm4464, %v5445, %v5454
      %v5457 = vshrl.u32 %v5330, 16
      %v5459 = vrot.slane %v5457, 3
      %v5460 = vshll.u32 %v5330, 16
      %v5462 = vrot.slane %v5460, 4
      %v5463 = vor.u32 %v5459, %v5462
      %v5464 = vsel %vm4464, %v5454, %v5463
      %v5466 = vsel %vm4255, %v5347, 0
      %v5469 = vsel %vm4255, %v5356, 0
      %v5472 = vsel %vm4255, %v5365, 0
      %v5475 = vsel %vm4255, %v5374, 0
      %v5478 = vsel %vm4255, %v5383, 0
      %v5481 = vsel %vm4255, %v5392, 0
      %v5484 = vsel %vm4255, %v5401, 0
      %v5487 = vsel %vm4255, %v5410, 0
      %v5490 = vsel %vm4255, %v5419, 0
      %v5493 = vsel %vm4255, %v5428, 0
      %v5496 = vsel %vm4255, %v5437, 0
      %v5499 = vsel %vm4255, %v5446, 0
      %v5502 = vsel %vm4255, %v5455, 0
      %v5505 = vsel %vm4255, %v5464, 0
      %v5508 = vsel %vm4298, %v5257, 0
      %5510 = vmatprep.subr.bf16.mxu0 0
      %5511 = vmatpush1.bf16.msra.mxu0 %v5508
      %5512 = vmatprep.subr.bf16.mxu0 0
      %5513 = vmatpush1.bf16.msra.mxu0 0
      %5514 = vmatprep.subr.bf16.mxu0 0
      %5515 = vmatpush1.bf16.msra.mxu0 0
      %5516 = vmatprep.subr.bf16.mxu0 0
      %5517 = vmatpush1.bf16.msra.mxu0 0
      %5518 = vmatprep.subr.bf16.mxu0 0
      %5519 = vmatpush1.bf16.msra.mxu0 0
      %5520 = vmatprep.subr.bf16.mxu0 0
      %5521 = vmatpush1.bf16.msra.mxu0 0
      %5522 = vmatprep.subr.bf16.mxu0 0
      %5523 = vmatpush1.bf16.msra.mxu0 0
      %5524 = vmatprep.subr.bf16.mxu0 0
      %5525 = vmatpush1.bf16.msra.mxu0 0
      %5526 = vmatprep.subr.bf16.mxu0 0
      %5527 = vmatpush1.bf16.msra.mxu0 0
      %5528 = vmatprep.subr.bf16.mxu0 0
      %5529 = vmatpush1.bf16.msra.mxu0 0
      %5530 = vmatprep.subr.bf16.mxu0 0
      %5531 = vmatpush1.bf16.msra.mxu0 0
      %5532 = vmatprep.subr.bf16.mxu0 0
      %5533 = vmatpush1.bf16.msra.mxu0 0
      %5534 = vmatprep.subr.bf16.mxu0 0
      %5535 = vmatpush1.bf16.msra.mxu0 0
      %5536 = vmatprep.subr.bf16.mxu0 0
      %5537 = vmatpush1.bf16.msra.mxu0 0
      %5538 = vmatprep.subr.bf16.mxu0 0
      %5539 = vmatpush1.bf16.msra.mxu0 0
      %5540 = vmatprep.subr.bf16.mxu0 0
      %5541 = vmatpush1.bf16.msra.mxu0 0
      %5542 = vmatprep.mubr.bf16.mxu0 0
      %5543 = vmatmul.mubr.bf16.gmra.mrb[0].mxu0 %v5466
      %v5544 = vpop.f32.mrb[0].mxu0
      %v5545 = vadd.f32 0.0, %v5544
      %v5546 = vpop.f32.mrb[0].mxu0
      %v5547 = vpop.f32.mrb[0].mxu0
      %v5548 = vadd.f32 0.0, %v5547
      %v5549 = vpop.f32.mrb[0].mxu0
      %5550 = vmatprep.mubr.bf16.mxu0 0
      %5551 = vmatmul.mubr.bf16.gmra.mrb[0].mxu0 %v5469
      %v5552 = vpop.f32.mrb[0].mxu0
      %v5553 = vadd.f32 0.0, %v5552
      %v5554 = vpop.f32.mrb[0].mxu0
      %v5555 = vpop.f32.mrb[0].mxu0
      %v5556 = vadd.f32 0.0, %v5555
      %v5557 = vpop.f32.mrb[0].mxu0
      %5558 = vmatprep.mubr.bf16.mxu0 0
      %5559 = vmatmul.mubr.bf16.gmra.mrb[0].mxu0 %v5472
      %v5560 = vpop.f32.mrb[0].mxu0
      %v5561 = vadd.f32 0.0, %v5560
      %v5562 = vpop.f32.mrb[0].mxu0
      %v5563 = vpop.f32.mrb[0].mxu0
      %v5564 = vadd.f32 0.0, %v5563
      %v5565 = vpop.f32.mrb[0].mxu0
      %5566 = vmatprep.mubr.bf16.mxu0 0
      %5567 = vmatmul.mubr.bf16.gmra.mrb[0].mxu0 %v5475
      %v5568 = vpop.f32.mrb[0].mxu0
      %v5569 = vadd.f32 0.0, %v5568
      %v5570 = vpop.f32.mrb[0].mxu0
      %v5571 = vpop.f32.mrb[0].mxu0
      %v5572 = vadd.f32 0.0, %v5571
      %v5573 = vpop.f32.mrb[0].mxu0
      %5574 = vmatprep.mubr.bf16.mxu0 0
      %5575 = vmatmul.mubr.bf16.gmra.mrb[0].mxu0 %v5478
      %v5576 = vpop.f32.mrb[0].mxu0
      %v5577 = vadd.f32 0.0, %v5576
      %v5578 = vpop.f32.mrb[0].mxu0
      %v5579 = vpop.f32.mrb[0].mxu0
      %v5580 = vadd.f32 0.0, %v5579
      %v5581 = vpop.f32.mrb[0].mxu0
      %5582 = vmatprep.mubr.bf16.mxu0 0
      %5583 = vmatmul.mubr.bf16.gmra.mrb[0].mxu0 %v5481
      %v5584 = vpop.f32.mrb[0].mxu0
      %v5585 = vadd.f32 0.0, %v5584
      %v5586 = vpop.f32.mrb[0].mxu0
      %v5587 = vpop.f32.mrb[0].mxu0
      %v5588 = vadd.f32 0.0, %v5587
      %v5589 = vpop.f32.mrb[0].mxu0
      %5590 = vmatprep.mubr.bf16.mxu0 0
      %5591 = vmatmul.mubr.bf16.gmra.mrb[0].mxu0 %v5484
      %v5592 = vpop.f32.mrb[0].mxu0
      %v5593 = vadd.f32 0.0, %v5592
      %v5594 = vpop.f32.mrb[0].mxu0
      %v5595 = vpop.f32.mrb[0].mxu0
      %v5596 = vadd.f32 0.0, %v5595
      %v5597 = vpop.f32.mrb[0].mxu0
      %5598 = vmatprep.mubr.bf16.mxu0 0
      %5599 = vmatmul.mubr.bf16.gmra.mrb[0].mxu0 %v5487
      %v5600 = vpop.f32.mrb[0].mxu0
      %v5601 = vadd.f32 0.0, %v5600
      %v5602 = vpop.f32.mrb[0].mxu0
      %v5603 = vpop.f32.mrb[0].mxu0
      %v5604 = vadd.f32 0.0, %v5603
      %v5605 = vpop.f32.mrb[0].mxu0
      %5606 = vmatprep.mubr.bf16.mxu0 0
      %5607 = vmatmul.mubr.bf16.gmra.mrb[0].mxu0 %v5490
      %v5608 = vpop.f32.mrb[0].mxu0
      %v5609 = vadd.f32 0.0, %v5608
      %v5610 = vpop.f32.mrb[0].mxu0
      %v5611 = vpop.f32.mrb[0].mxu0
      %v5612 = vadd.f32 0.0, %v5611
      %v5613 = vpop.f32.mrb[0].mxu0
      %5614 = vmatprep.mubr.bf16.mxu0 0
      %5615 = vmatmul.mubr.bf16.gmra.mrb[0].mxu0 %v5493
      %v5616 = vpop.f32.mrb[0].mxu0
      %v5617 = vadd.f32 0.0, %v5616
      %v5618 = vpop.f32.mrb[0].mxu0
      %v5619 = vpop.f32.mrb[0].mxu0
      %v5620 = vadd.f32 0.0, %v5619
      %v5621 = vpop.f32.mrb[0].mxu0
      %5622 = vmatprep.mubr.bf16.mxu0 0
      %5623 = vmatmul.mubr.bf16.gmra.mrb[0].mxu0 %v5496
      %v5624 = vpop.f32.mrb[0].mxu0
      %v5625 = vadd.f32 0.0, %v5624
      %v5626 = vpop.f32.mrb[0].mxu0
      %v5627 = vpop.f32.mrb[0].mxu0
      %v5628 = vadd.f32 0.0, %v5627
      %v5629 = vpop.f32.mrb[0].mxu0
      %5630 = vmatprep.mubr.bf16.mxu0 0
      %5631 = vmatmul.mubr.bf16.gmra.mrb[0].mxu0 %v5499
      %v5632 = vpop.f32.mrb[0].mxu0
      %v5633 = vadd.f32 0.0, %v5632
      %v5634 = vpop.f32.mrb[0].mxu0
      %v5635 = vpop.f32.mrb[0].mxu0
      %v5636 = vadd.f32 0.0, %v5635
      %v5637 = vpop.f32.mrb[0].mxu0
      %5638 = vmatprep.mubr.bf16.mxu0 0
      %5639 = vmatmul.mubr.bf16.gmra.mrb[0].mxu0 %v5502
      %v5640 = vpop.f32.mrb[0].mxu0
      %v5641 = vadd.f32 0.0, %v5640
      %v5642 = vpop.f32.mrb[0].mxu0
      %v5643 = vpop.f32.mrb[0].mxu0
      %v5644 = vadd.f32 0.0, %v5643
      %v5645 = vpop.f32.mrb[0].mxu0
      %5646 = vmatprep.mubr.bf16.mxu0 0
      %5647 = vmatmul.mubr.bf16.gmra.mrb[0].mxu0 %v5505
      %v5648 = vpop.f32.mrb[0].mxu0
      %v5649 = vadd.f32 0.0, %v5648
      %v5650 = vpop.f32.mrb[0].mxu0
      %v5651 = vpop.f32.mrb[0].mxu0
      %v5652 = vadd.f32 0.0, %v5651
      %v5653 = vpop.f32.mrb[0].mxu0
      %5654 = vdwg.mxu0
      %v5655 = vadd.f32 %v5199, %v5545
      %v5656 = vadd.f32 %v5200, %v5548
      %v5657 = vadd.f32 %v5201, %v5553
      %v5658 = vadd.f32 %v5202, %v5556
      %v5659 = vadd.f32 %v5203, %v5561
      %v5660 = vadd.f32 %v5204, %v5564
      %v5661 = vadd.f32 %v5205, %v5569
      %v5662 = vadd.f32 %v5206, %v5572
      %v5663 = vadd.f32 %v5207, %v5577
      %v5664 = vadd.f32 %v5208, %v5580
      %v5665 = vadd.f32 %v5209, %v5585
      %v5666 = vadd.f32 %v5210, %v5588
      %v5667 = vadd.f32 %v5211, %v5593
      %v5668 = vadd.f32 %v5212, %v5596
      %v5669 = vadd.f32 %v5213, %v5601
      %v5670 = vadd.f32 %v5214, %v5604
      %v5671 = vadd.f32 %v5215, %v5609
      %v5672 = vadd.f32 %v5216, %v5612
      %v5673 = vadd.f32 %v5217, %v5617
      %v5674 = vadd.f32 %v5218, %v5620
      %v5675 = vadd.f32 %v5219, %v5625
      %v5676 = vadd.f32 %v5220, %v5628
      %v5677 = vadd.f32 %v5221, %v5633
      %v5678 = vadd.f32 %v5222, %v5636
      %v5679 = vadd.f32 %v5223, %v5641
      %v5680 = vadd.f32 %v5224, %v5644
      %v5681 = vadd.f32 %v5225, %v5649
      %v5682 = vadd.f32 %v5226, %v5652
      %s5683 = scalar_lea.vmem %s3, 16
      %v5684 = vld [vmem:[%s5683] sm:$0x7]
      %v5685 = vpack.c.b16 %v5289, %v5288
      %v5686 = vpack.c.b16 %v5291, %v5290
      %v5687 = vpack.c.b16 %v5293, %v5292
      %v5688 = vpack.c.b16 %v5295, %v5294
      %v5689 = vpack.c.b16 %v5297, %v5296
      %v5690 = vpack.c.b16 %v5299, %v5298
      %v5691 = vpack.c.b16 %v5301, %v5300
      %v5692 = vpack.c.b16 %v5303, %v5302
      %v5693 = vpack.c.b16 %v5305, %v5304
      %v5694 = vpack.c.b16 %v5307, %v5306
      %v5695 = vpack.c.b16 %v5309, %v5308
      %v5696 = vpack.c.b16 %v5311, %v5310
      %v5697 = vpack.c.b16 %v5313, %v5312
      %v5698 = vpack.c.b16 %v5315, %v5314
      %v5700 = vsel %vm4255, %v5685, 0
      %v5703 = vsel %vm4255, %v5686, 0
      %v5706 = vsel %vm4255, %v5687, 0
      %v5709 = vsel %vm4255, %v5688, 0
      %v5712 = vsel %vm4255, %v5689, 0
      %v5715 = vsel %vm4255, %v5690, 0
      %v5718 = vsel %vm4255, %v5691, 0
      %v5721 = vsel %vm4255, %v5692, 0
      %v5724 = vsel %vm4255, %v5693, 0
      %v5727 = vsel %vm4255, %v5694, 0
      %v5730 = vsel %vm4255, %v5695, 0
      %v5733 = vsel %vm4255, %v5696, 0
      %v5736 = vsel %vm4255, %v5697, 0
      %v5739 = vsel %vm4255, %v5698, 0
      %v5742 = vsel %vm4298, %v5684, 0
      %5744 = vmatprep.subr.bf16.mxu0 0
      %5745 = vmatpush1.bf16.msra.mxu0 %v5742
      %5746 = vmatprep.subr.bf16.mxu0 0
      %5747 = vmatpush1.bf16.msra.mxu0 0
      %5748 = vmatprep.subr.bf16.mxu0 0
      %5749 = vmatpush1.bf16.msra.mxu0 0
      %5750 = vmatprep.subr.bf16.mxu0 0
      %5751 = vmatpush1.bf16.msra.mxu0 0
      %5752 = vmatprep.subr.bf16.mxu0 0
      %5753 = vmatpush1.bf16.msra.mxu0 0
      %5754 = vmatprep.subr.bf16.mxu0 0
      %5755 = vmatpush1.bf16.msra.mxu0 0
      %5756 = vmatprep.subr.bf16.mxu0 0
      %5757 = vmatpush1.bf16.msra.mxu0 0
      %5758 = vmatprep.subr.bf16.mxu0 0
      %5759 = vmatpush1.bf16.msra.mxu0 0
      %5760 = vmatprep.subr.bf16.mxu0 0
      %5761 = vmatpush1.bf16.msra.mxu0 0
      %5762 = vmatprep.subr.bf16.mxu0 0
      %5763 = vmatpush1.bf16.msra.mxu0 0
      %5764 = vmatprep.subr.bf16.mxu0 0
      %5765 = vmatpush1.bf16.msra.mxu0 0
      %5766 = vmatprep.subr.bf16.mxu0 0
      %5767 = vmatpush1.bf16.msra.mxu0 0
      %5768 = vmatprep.subr.bf16.mxu0 0
      %5769 = vmatpush1.bf16.msra.mxu0 0
      %5770 = vmatprep.subr.bf16.mxu0 0
      %5771 = vmatpush1.bf16.msra.mxu0 0
      %5772 = vmatprep.subr.bf16.mxu0 0
      %5773 = vmatpush1.bf16.msra.mxu0 0
      %5774 = vmatprep.subr.bf16.mxu0 0
      %5775 = vmatpush1.bf16.msra.mxu0 0
      %5776 = vmatprep.mubr.bf16.mxu0 0
      %5777 = vmatmul.mubr.bf16.gmra.mrb[0].mxu0 %v5700
      %v5778 = vpop.f32.mrb[0].mxu0
      %v5779 = vadd.f32 0.0, %v5778
      %v5780 = vpop.f32.mrb[0].mxu0
      %v5781 = vpop.f32.mrb[0].mxu0
      %v5782 = vadd.f32 0.0, %v5781
      %v5783 = vpop.f32.mrb[0].mxu0
      %5784 = vmatprep.mubr.bf16.mxu0 0
      %5785 = vmatmul.mubr.bf16.gmra.mrb[0].mxu0 %v5703
      %v5786 = vpop.f32.mrb[0].mxu0
      %v5787 = vadd.f32 0.0, %v5786
      %v5788 = vpop.f32.mrb[0].mxu0
      %v5789 = vpop.f32.mrb[0].mxu0
      %v5790 = vadd.f32 0.0, %v5789
      %v5791 = vpop.f32.mrb[0].mxu0
      %5792 = vmatprep.mubr.bf16.mxu0 0
      %5793 = vmatmul.mubr.bf16.gmra.mrb[0].mxu0 %v5706
      %v5794 = vpop.f32.mrb[0].mxu0
      %v5795 = vadd.f32 0.0, %v5794
      %v5796 = vpop.f32.mrb[0].mxu0
      %v5797 = vpop.f32.mrb[0].mxu0
      %v5798 = vadd.f32 0.0, %v5797
      %v5799 = vpop.f32.mrb[0].mxu0
      %5800 = vmatprep.mubr.bf16.mxu0 0
      %5801 = vmatmul.mubr.bf16.gmra.mrb[0].mxu0 %v5709
      %v5802 = vpop.f32.mrb[0].mxu0
      %v5803 = vadd.f32 0.0, %v5802
      %v5804 = vpop.f32.mrb[0].mxu0
      %v5805 = vpop.f32.mrb[0].mxu0
      %v5806 = vadd.f32 0.0, %v5805
      %v5807 = vpop.f32.mrb[0].mxu0
      %5808 = vmatprep.mubr.bf16.mxu0 0
      %5809 = vmatmul.mubr.bf16.gmra.mrb[0].mxu0 %v5712
      %v5810 = vpop.f32.mrb[0].mxu0
      %v5811 = vadd.f32 0.0, %v5810
      %v5812 = vpop.f32.mrb[0].mxu0
      %v5813 = vpop.f32.mrb[0].mxu0
      %v5814 = vadd.f32 0.0, %v5813
      %v5815 = vpop.f32.mrb[0].mxu0
      %5816 = vmatprep.mubr.bf16.mxu0 0
      %5817 = vmatmul.mubr.bf16.gmra.mrb[0].mxu0 %v5715
      %v5818 = vpop.f32.mrb[0].mxu0
      %v5819 = vadd.f32 0.0, %v5818
      %v5820 = vpop.f32.mrb[0].mxu0
      %v5821 = vpop.f32.mrb[0].mxu0
      %v5822 = vadd.f32 0.0, %v5821
      %v5823 = vpop.f32.mrb[0].mxu0
      %5824 = vmatprep.mubr.bf16.mxu0 0
      %5825 = vmatmul.mubr.bf16.gmra.mrb[0].mxu0 %v5718
      %v5826 = vpop.f32.mrb[0].mxu0
      %v5827 = vadd.f32 0.0, %v5826
      %v5828 = vpop.f32.mrb[0].mxu0
      %v5829 = vpop.f32.mrb[0].mxu0
      %v5830 = vadd.f32 0.0, %v5829
      %v5831 = vpop.f32.mrb[0].mxu0
      %5832 = vmatprep.mubr.bf16.mxu0 0
      %5833 = vmatmul.mubr.bf16.gmra.mrb[0].mxu0 %v5721
      %v5834 = vpop.f32.mrb[0].mxu0
      %v5835 = vadd.f32 0.0, %v5834
      %v5836 = vpop.f32.mrb[0].mxu0
      %v5837 = vpop.f32.mrb[0].mxu0
      %v5838 = vadd.f32 0.0, %v5837
      %v5839 = vpop.f32.mrb[0].mxu0
      %5840 = vmatprep.mubr.bf16.mxu0 0
      %5841 = vmatmul.mubr.bf16.gmra.mrb[0].mxu0 %v5724
      %v5842 = vpop.f32.mrb[0].mxu0
      %v5843 = vadd.f32 0.0, %v5842
      %v5844 = vpop.f32.mrb[0].mxu0
      %v5845 = vpop.f32.mrb[0].mxu0
      %v5846 = vadd.f32 0.0, %v5845
      %v5847 = vpop.f32.mrb[0].mxu0
      %5848 = vmatprep.mubr.bf16.mxu0 0
      %5849 = vmatmul.mubr.bf16.gmra.mrb[0].mxu0 %v5727
      %v5850 = vpop.f32.mrb[0].mxu0
      %v5851 = vadd.f32 0.0, %v5850
      %v5852 = vpop.f32.mrb[0].mxu0
      %v5853 = vpop.f32.mrb[0].mxu0
      %v5854 = vadd.f32 0.0, %v5853
      %v5855 = vpop.f32.mrb[0].mxu0
      %5856 = vmatprep.mubr.bf16.mxu0 0
      %5857 = vmatmul.mubr.bf16.gmra.mrb[0].mxu0 %v5730
      %v5858 = vpop.f32.mrb[0].mxu0
      %v5859 = vadd.f32 0.0, %v5858
      %v5860 = vpop.f32.mrb[0].mxu0
      %v5861 = vpop.f32.mrb[0].mxu0
      %v5862 = vadd.f32 0.0, %v5861
      %v5863 = vpop.f32.mrb[0].mxu0
      %5864 = vmatprep.mubr.bf16.mxu0 0
      %5865 = vmatmul.mubr.bf16.gmra.mrb[0].mxu0 %v5733
      %v5866 = vpop.f32.mrb[0].mxu0
      %v5867 = vadd.f32 0.0, %v5866
      %v5868 = vpop.f32.mrb[0].mxu0
      %v5869 = vpop.f32.mrb[0].mxu0
      %v5870 = vadd.f32 0.0, %v5869
      %v5871 = vpop.f32.mrb[0].mxu0
      %5872 = vmatprep.mubr.bf16.mxu0 0
      %5873 = vmatmul.mubr.bf16.gmra.mrb[0].mxu0 %v5736
      %v5874 = vpop.f32.mrb[0].mxu0
      %v5875 = vadd.f32 0.0, %v5874
      %v5876 = vpop.f32.mrb[0].mxu0
      %v5877 = vpop.f32.mrb[0].mxu0
      %v5878 = vadd.f32 0.0, %v5877
      %v5879 = vpop.f32.mrb[0].mxu0
      %5880 = vmatprep.mubr.bf16.mxu0 0
      %5881 = vmatmul.mubr.bf16.gmra.mrb[0].mxu0 %v5739
      %v5882 = vpop.f32.mrb[0].mxu0
      %v5883 = vadd.f32 0.0, %v5882
      %v5884 = vpop.f32.mrb[0].mxu0
      %v5885 = vpop.f32.mrb[0].mxu0
      %v5886 = vadd.f32 0.0, %v5885
      %v5887 = vpop.f32.mrb[0].mxu0
      %5888 = vdwg.mxu0
      %v5889 = vadd.f32 %v5655, %v5779
      %v5890 = vadd.f32 %v5656, %v5782
      %v5891 = vadd.f32 %v5657, %v5787
      %v5892 = vadd.f32 %v5658, %v5790
      %v5893 = vadd.f32 %v5659, %v5795
      %v5894 = vadd.f32 %v5660, %v5798
      %v5895 = vadd.f32 %v5661, %v5803
      %v5896 = vadd.f32 %v5662, %v5806
      %v5897 = vadd.f32 %v5663, %v5811
      %v5898 = vadd.f32 %v5664, %v5814
      %v5899 = vadd.f32 %v5665, %v5819
      %v5900 = vadd.f32 %v5666, %v5822
      %v5901 = vadd.f32 %v5667, %v5827
      %v5902 = vadd.f32 %v5668, %v5830
      %v5903 = vadd.f32 %v5669, %v5835
      %v5904 = vadd.f32 %v5670, %v5838
      %v5905 = vadd.f32 %v5671, %v5843
      %v5906 = vadd.f32 %v5672, %v5846
      %v5907 = vadd.f32 %v5673, %v5851
      %v5908 = vadd.f32 %v5674, %v5854
      %v5909 = vadd.f32 %v5675, %v5859
      %v5910 = vadd.f32 %v5676, %v5862
      %v5911 = vadd.f32 %v5677, %v5867
      %v5912 = vadd.f32 %v5678, %v5870
      %v5913 = vadd.f32 %v5679, %v5875
      %v5914 = vadd.f32 %v5680, %v5878
      %v5915 = vadd.f32 %v5681, %v5883
      %v5916 = vadd.f32 %v5682, %v5886
      %v5917 = vld [vmem:[#allocation2 + $0x1c] sm:$0xf]
      %v5918 = vld [vmem:[#allocation2 + $0x20] sm:$0xf]
      %v5919 = vld [vmem:[#allocation2 + $0x24] sm:$0xf]
      %v5920 = vld [vmem:[#allocation2 + $0x28] sm:$0xf]
      %v5921 = vld [vmem:[#allocation2 + $0x2c] sm:$0xf]
      %v5922 = vld [vmem:[#allocation2 + $0x30] sm:$0xf]
      %v5923 = vld [vmem:[#allocation2 + $0x34] sm:$0xf]
      %v5924 = vld [vmem:[#allocation2 + $0x38] sm:$0xf]
      %v5925 = vld [vmem:[#allocation2 + $0x3c] sm:$0xf]
      %v5926 = vld [vmem:[#allocation2 + $0x40] sm:$0xf]
      %v5927 = vld [vmem:[#allocation2 + $0x44] sm:$0xf]
      %v5928 = vld [vmem:[#allocation2 + $0x48] sm:$0xf]
      %v5929 = vld [vmem:[#allocation2 + $0x4c] sm:$0xf]
      %v5930 = vld [vmem:[#allocation2 + $0x50] sm:$0xf]
      %v5931 = vld [vmem:[#allocation2 + $0x54] sm:$0xf]
      %v5932 = vld [vmem:[#allocation2 + $0x58] sm:$0xf]
      %v5933 = vld [vmem:[#allocation2 + $0x5c] sm:$0xf]
      %v5934 = vld [vmem:[#allocation2 + $0x60] sm:$0xf]
      %v5935 = vld [vmem:[#allocation2 + $0x64] sm:$0xf]
      %v5936 = vld [vmem:[#allocation2 + $0x68] sm:$0xf]
      %v5937 = vld [vmem:[#allocation2 + $0x6c] sm:$0xf]
      %v5938 = vld [vmem:[#allocation2 + $0x70] sm:$0xf]
      %v5939 = vld [vmem:[#allocation2 + $0x74] sm:$0xf]
      %v5940 = vld [vmem:[#allocation2 + $0x78] sm:$0xf]
      %v5941 = vld [vmem:[#allocation2 + $0x7c] sm:$0xf]
      %v5942 = vld [vmem:[#allocation2 + $0x80] sm:$0xf]
      %v5943 = vld [vmem:[#allocation2 + $0x84] sm:$0xf]
      %v5944 = vld [vmem:[#allocation2 + $0x88] sm:$0xf]
      %v5945 = vld [vmem:[#allocation2 + $0x8c] sm:$0x1]
      %s5946 = scalar_lea.vmem %s3, 20
      %v5947 = vld [vmem:[%s5946] sm:$0x7]
      %v5977 = vunpack.c.l.b16 %v5917
      %v5978 = vunpack.c.l.b16 %v5918
      %v5979 = vunpack.c.l.b16 %v5919
      %v5980 = vunpack.c.l.b16 %v5920
      %v5981 = vunpack.c.l.b16 %v5921
      %v5982 = vunpack.c.l.b16 %v5922
      %v5983 = vunpack.c.l.b16 %v5923
      %v5984 = vunpack.c.l.b16 %v5924
      %v5985 = vunpack.c.l.b16 %v5925
      %v5986 = vunpack.c.l.b16 %v5926
      %v5987 = vunpack.c.l.b16 %v5927
      %v5988 = vunpack.c.l.b16 %v5928
      %v5989 = vunpack.c.l.b16 %v5929
      %v5990 = vunpack.c.l.b16 %v5930
      %v5991 = vunpack.c.l.b16 %v5931
      %v5992 = vunpack.c.l.b16 %v5932
      %v5993 = vunpack.c.l.b16 %v5933
      %v5994 = vunpack.c.l.b16 %v5934
      %v5995 = vunpack.c.l.b16 %v5935
      %v5996 = vunpack.c.l.b16 %v5936
      %v5997 = vunpack.c.l.b16 %v5937
      %v5998 = vunpack.c.l.b16 %v5938
      %v5999 = vunpack.c.l.b16 %v5939
      %v6000 = vunpack.c.l.b16 %v5940
      %v6001 = vunpack.c.l.b16 %v5941
      %v6002 = vunpack.c.l.b16 %v5942
      %v6003 = vunpack.c.l.b16 %v5943
      %v6004 = vunpack.c.l.b16 %v5944
      %v6005 = vunpack.c.l.b16 %v5945
      %v6006 = vpack.c.b16 %v5978, %v5977
      %v6007 = vpack.c.b16 %v5980, %v5979
      %v6008 = vpack.c.b16 %v5982, %v5981
      %v6009 = vpack.c.b16 %v5984, %v5983
      %v6010 = vpack.c.b16 %v5986, %v5985
      %v6011 = vpack.c.b16 %v5988, %v5987
      %v6012 = vpack.c.b16 %v5990, %v5989
      %v6013 = vpack.c.b16 %v5992, %v5991
      %v6014 = vpack.c.b16 %v5994, %v5993
      %v6015 = vpack.c.b16 %v5996, %v5995
      %v6016 = vpack.c.b16 %v5998, %v5997
      %v6017 = vpack.c.b16 %v6000, %v5999
      %v6018 = vpack.c.b16 %v6002, %v6001
      %v6019 = vpack.c.b16 %v6004, %v6003
      %v6020 = vpack.c.b16 %v6005, %v6005
      %v6022 = vshrl.u32 %v6006, 16
      %v6024 = vshll.u32 %v6006, 16
      %v6026 = vrot.slane %v6024, 1
      %v6027 = vor.u32 %v6022, %v6026
      %v6029 = vshll.u32 %v6007, 16
      %v6031 = vrot.slane %v6029, 1
      %v6032 = vsel %vm439, %v6027, %v6031
      %v6033 = vshrl.u32 %v6007, 16
      %v6035 = vor.u32 %v6033, %v6031
      %v6037 = vshll.u32 %v6008, 16
      %v6039 = vrot.slane %v6037, 1
      %v6040 = vsel %vm439, %v6035, %v6039
      %v6041 = vshrl.u32 %v6008, 16
      %v6043 = vor.u32 %v6041, %v6039
      %v6045 = vshll.u32 %v6009, 16
      %v6047 = vrot.slane %v6045, 1
      %v6048 = vsel %vm439, %v6043, %v6047
      %v6049 = vshrl.u32 %v6009, 16
      %v6051 = vor.u32 %v6049, %v6047
      %v6053 = vshll.u32 %v6010, 16
      %v6055 = vrot.slane %v6053, 1
      %v6056 = vsel %vm439, %v6051, %v6055
      %v6057 = vshrl.u32 %v6010, 16
      %v6059 = vor.u32 %v6057, %v6055
      %v6061 = vshll.u32 %v6011, 16
      %v6063 = vrot.slane %v6061, 1
      %v6064 = vsel %vm439, %v6059, %v6063
      %v6065 = vshrl.u32 %v6011, 16
      %v6067 = vor.u32 %v6065, %v6063
      %v6069 = vshll.u32 %v6012, 16
      %v6071 = vrot.slane %v6069, 1
      %v6072 = vsel %vm439, %v6067, %v6071
      %v6073 = vshrl.u32 %v6012, 16
      %v6075 = vor.u32 %v6073, %v6071
      %v6077 = vshll.u32 %v6013, 16
      %v6079 = vrot.slane %v6077, 1
      %v6080 = vsel %vm439, %v6075, %v6079
      %v6081 = vshrl.u32 %v6013, 16
      %v6083 = vor.u32 %v6081, %v6079
      %v6085 = vshll.u32 %v6014, 16
      %v6087 = vrot.slane %v6085, 1
      %v6088 = vsel %vm439, %v6083, %v6087
      %v6089 = vshrl.u32 %v6014, 16
      %v6091 = vor.u32 %v6089, %v6087
      %v6093 = vshll.u32 %v6015, 16
      %v6095 = vrot.slane %v6093, 1
      %v6096 = vsel %vm439, %v6091, %v6095
      %v6097 = vshrl.u32 %v6015, 16
      %v6099 = vor.u32 %v6097, %v6095
      %v6101 = vshll.u32 %v6016, 16
      %v6103 = vrot.slane %v6101, 1
      %v6104 = vsel %vm439, %v6099, %v6103
      %v6105 = vshrl.u32 %v6016, 16
      %v6107 = vor.u32 %v6105, %v6103
      %v6109 = vshll.u32 %v6017, 16
      %v6111 = vrot.slane %v6109, 1
      %v6112 = vsel %vm439, %v6107, %v6111
      %v6113 = vshrl.u32 %v6017, 16
      %v6115 = vor.u32 %v6113, %v6111
      %v6117 = vshll.u32 %v6018, 16
      %v6119 = vrot.slane %v6117, 1
      %v6120 = vsel %vm439, %v6115, %v6119
      %v6121 = vshrl.u32 %v6018, 16
      %v6123 = vor.u32 %v6121, %v6119
      %v6125 = vshll.u32 %v6019, 16
      %v6127 = vrot.slane %v6125, 1
      %v6128 = vsel %vm439, %v6123, %v6127
      %v6129 = vshrl.u32 %v6019, 16
      %v6131 = vor.u32 %v6129, %v6127
      %v6133 = vshll.u32 %v6020, 16
      %v6135 = vrot.slane %v6133, 1
      %v6136 = vsel %vm439, %v6131, %v6135
      %v6138 = vsel %vm4255, %v6032, 0
      %v6141 = vsel %vm4255, %v6040, 0
      %v6144 = vsel %vm4255, %v6048, 0
      %v6147 = vsel %vm4255, %v6056, 0
      %v6150 = vsel %vm4255, %v6064, 0
      %v6153 = vsel %vm4255, %v6072, 0
      %v6156 = vsel %vm4255, %v6080, 0
      %v6159 = vsel %vm4255, %v6088, 0
      %v6162 = vsel %vm4255, %v6096, 0
      %v6165 = vsel %vm4255, %v6104, 0
      %v6168 = vsel %vm4255, %v6112, 0
      %v6171 = vsel %vm4255, %v6120, 0
      %v6174 = vsel %vm4255, %v6128, 0
      %v6177 = vsel %vm4255, %v6136, 0
      %v6180 = vsel %vm4298, %v5947, 0
      %6182 = vmatprep.subr.bf16.mxu0 0
      %6183 = vmatpush1.bf16.msra.mxu0 %v6180
      %6184 = vmatprep.subr.bf16.mxu0 0
      %6185 = vmatpush1.bf16.msra.mxu0 0
      %6186 = vmatprep.subr.bf16.mxu0 0
      %6187 = vmatpush1.bf16.msra.mxu0 0
      %6188 = vmatprep.subr.bf16.mxu0 0
      %6189 = vmatpush1.bf16.msra.mxu0 0
      %6190 = vmatprep.subr.bf16.mxu0 0
      %6191 = vmatpush1.bf16.msra.mxu0 0
      %6192 = vmatprep.subr.bf16.mxu0 0
      %6193 = vmatpush1.bf16.msra.mxu0 0
      %6194 = vmatprep.subr.bf16.mxu0 0
      %6195 = vmatpush1.bf16.msra.mxu0 0
      %6196 = vmatprep.subr.bf16.mxu0 0
      %6197 = vmatpush1.bf16.msra.mxu0 0
      %6198 = vmatprep.subr.bf16.mxu0 0
      %6199 = vmatpush1.bf16.msra.mxu0 0
      %6200 = vmatprep.subr.bf16.mxu0 0
      %6201 = vmatpush1.bf16.msra.mxu0 0
      %6202 = vmatprep.subr.bf16.mxu0 0
      %6203 = vmatpush1.bf16.msra.mxu0 0
      %6204 = vmatprep.subr.bf16.mxu0 0
      %6205 = vmatpush1.bf16.msra.mxu0 0
      %6206 = vmatprep.subr.bf16.mxu0 0
      %6207 = vmatpush1.bf16.msra.mxu0 0
      %6208 = vmatprep.subr.bf16.mxu0 0
      %6209 = vmatpush1.bf16.msra.mxu0 0
      %6210 = vmatprep.subr.bf16.mxu0 0
      %6211 = vmatpush1.bf16.msra.mxu0 0
      %6212 = vmatprep.subr.bf16.mxu0 0
      %6213 = vmatpush1.bf16.msra.mxu0 0
      %6214 = vmatprep.mubr.bf16.mxu0 0
      %6215 = vmatmul.mubr.bf16.gmra.mrb[0].mxu0 %v6138
      %v6216 = vpop.f32.mrb[0].mxu0
      %v6217 = vadd.f32 0.0, %v6216
      %v6218 = vpop.f32.mrb[0].mxu0
      %v6219 = vpop.f32.mrb[0].mxu0
      %v6220 = vadd.f32 0.0, %v6219
      %v6221 = vpop.f32.mrb[0].mxu0
      %6222 = vmatprep.mubr.bf16.mxu0 0
      %6223 = vmatmul.mubr.bf16.gmra.mrb[0].mxu0 %v6141
      %v6224 = vpop.f32.mrb[0].mxu0
      %v6225 = vadd.f32 0.0, %v6224
      %v6226 = vpop.f32.mrb[0].mxu0
      %v6227 = vpop.f32.mrb[0].mxu0
      %v6228 = vadd.f32 0.0, %v6227
      %v6229 = vpop.f32.mrb[0].mxu0
      %6230 = vmatprep.mubr.bf16.mxu0 0
      %6231 = vmatmul.mubr.bf16.gmra.mrb[0].mxu0 %v6144
      %v6232 = vpop.f32.mrb[0].mxu0
      %v6233 = vadd.f32 0.0, %v6232
      %v6234 = vpop.f32.mrb[0].mxu0
      %v6235 = vpop.f32.mrb[0].mxu0
      %v6236 = vadd.f32 0.0, %v6235
      %v6237 = vpop.f32.mrb[0].mxu0
      %6238 = vmatprep.mubr.bf16.mxu0 0
      %6239 = vmatmul.mubr.bf16.gmra.mrb[0].mxu0 %v6147
      %v6240 = vpop.f32.mrb[0].mxu0
      %v6241 = vadd.f32 0.0, %v6240
      %v6242 = vpop.f32.mrb[0].mxu0
      %v6243 = vpop.f32.mrb[0].mxu0
      %v6244 = vadd.f32 0.0, %v6243
      %v6245 = vpop.f32.mrb[0].mxu0
      %6246 = vmatprep.mubr.bf16.mxu0 0
      %6247 = vmatmul.mubr.bf16.gmra.mrb[0].mxu0 %v6150
      %v6248 = vpop.f32.mrb[0].mxu0
      %v6249 = vadd.f32 0.0, %v6248
      %v6250 = vpop.f32.mrb[0].mxu0
      %v6251 = vpop.f32.mrb[0].mxu0
      %v6252 = vadd.f32 0.0, %v6251
      %v6253 = vpop.f32.mrb[0].mxu0
      %6254 = vmatprep.mubr.bf16.mxu0 0
      %6255 = vmatmul.mubr.bf16.gmra.mrb[0].mxu0 %v6153
      %v6256 = vpop.f32.mrb[0].mxu0
      %v6257 = vadd.f32 0.0, %v6256
      %v6258 = vpop.f32.mrb[0].mxu0
      %v6259 = vpop.f32.mrb[0].mxu0
      %v6260 = vadd.f32 0.0, %v6259
      %v6261 = vpop.f32.mrb[0].mxu0
      %6262 = vmatprep.mubr.bf16.mxu0 0
      %6263 = vmatmul.mubr.bf16.gmra.mrb[0].mxu0 %v6156
      %v6264 = vpop.f32.mrb[0].mxu0
      %v6265 = vadd.f32 0.0, %v6264
      %v6266 = vpop.f32.mrb[0].mxu0
      %v6267 = vpop.f32.mrb[0].mxu0
      %v6268 = vadd.f32 0.0, %v6267
      %v6269 = vpop.f32.mrb[0].mxu0
      %6270 = vmatprep.mubr.bf16.mxu0 0
      %6271 = vmatmul.mubr.bf16.gmra.mrb[0].mxu0 %v6159
      %v6272 = vpop.f32.mrb[0].mxu0
      %v6273 = vadd.f32 0.0, %v6272
      %v6274 = vpop.f32.mrb[0].mxu0
      %v6275 = vpop.f32.mrb[0].mxu0
      %v6276 = vadd.f32 0.0, %v6275
      %v6277 = vpop.f32.mrb[0].mxu0
      %6278 = vmatprep.mubr.bf16.mxu0 0
      %6279 = vmatmul.mubr.bf16.gmra.mrb[0].mxu0 %v6162
      %v6280 = vpop.f32.mrb[0].mxu0
      %v6281 = vadd.f32 0.0, %v6280
      %v6282 = vpop.f32.mrb[0].mxu0
      %v6283 = vpop.f32.mrb[0].mxu0
      %v6284 = vadd.f32 0.0, %v6283
      %v6285 = vpop.f32.mrb[0].mxu0
      %6286 = vmatprep.mubr.bf16.mxu0 0
      %6287 = vmatmul.mubr.bf16.gmra.mrb[0].mxu0 %v6165
      %v6288 = vpop.f32.mrb[0].mxu0
      %v6289 = vadd.f32 0.0, %v6288
      %v6290 = vpop.f32.mrb[0].mxu0
      %v6291 = vpop.f32.mrb[0].mxu0
      %v6292 = vadd.f32 0.0, %v6291
      %v6293 = vpop.f32.mrb[0].mxu0
      %6294 = vmatprep.mubr.bf16.mxu0 0
      %6295 = vmatmul.mubr.bf16.gmra.mrb[0].mxu0 %v6168
      %v6296 = vpop.f32.mrb[0].mxu0
      %v6297 = vadd.f32 0.0, %v6296
      %v6298 = vpop.f32.mrb[0].mxu0
      %v6299 = vpop.f32.mrb[0].mxu0
      %v6300 = vadd.f32 0.0, %v6299
      %v6301 = vpop.f32.mrb[0].mxu0
      %6302 = vmatprep.mubr.bf16.mxu0 0
      %6303 = vmatmul.mubr.bf16.gmra.mrb[0].mxu0 %v6171
      %v6304 = vpop.f32.mrb[0].mxu0
      %v6305 = vadd.f32 0.0, %v6304
      %v6306 = vpop.f32.mrb[0].mxu0
      %v6307 = vpop.f32.mrb[0].mxu0
      %v6308 = vadd.f32 0.0, %v6307
      %v6309 = vpop.f32.mrb[0].mxu0
      %6310 = vmatprep.mubr.bf16.mxu0 0
      %6311 = vmatmul.mubr.bf16.gmra.mrb[0].mxu0 %v6174
      %v6312 = vpop.f32.mrb[0].mxu0
      %v6313 = vadd.f32 0.0, %v6312
      %v6314 = vpop.f32.mrb[0].mxu0
      %v6315 = vpop.f32.mrb[0].mxu0
      %v6316 = vadd.f32 0.0, %v6315
      %v6317 = vpop.f32.mrb[0].mxu0
      %6318 = vmatprep.mubr.bf16.mxu0 0
      %6319 = vmatmul.mubr.bf16.gmra.mrb[0].mxu0 %v6177
      %v6320 = vpop.f32.mrb[0].mxu0
      %v6321 = vadd.f32 0.0, %v6320
      %v6322 = vpop.f32.mrb[0].mxu0
      %v6323 = vpop.f32.mrb[0].mxu0
      %v6324 = vadd.f32 0.0, %v6323
      %v6325 = vpop.f32.mrb[0].mxu0
      %6326 = vdwg.mxu0
      %v6327 = vadd.f32 %v5889, %v6217
      %v6328 = vadd.f32 %v5890, %v6220
      %v6329 = vadd.f32 %v5891, %v6225
      %v6330 = vadd.f32 %v5892, %v6228
      %v6331 = vadd.f32 %v5893, %v6233
      %v6332 = vadd.f32 %v5894, %v6236
      %v6333 = vadd.f32 %v5895, %v6241
      %v6334 = vadd.f32 %v5896, %v6244
      %v6335 = vadd.f32 %v5897, %v6249
      %v6336 = vadd.f32 %v5898, %v6252
      %v6337 = vadd.f32 %v5899, %v6257
      %v6338 = vadd.f32 %v5900, %v6260
      %v6339 = vadd.f32 %v5901, %v6265
      %v6340 = vadd.f32 %v5902, %v6268
      %v6341 = vadd.f32 %v5903, %v6273
      %v6342 = vadd.f32 %v5904, %v6276
      %v6343 = vadd.f32 %v5905, %v6281
      %v6344 = vadd.f32 %v5906, %v6284
      %v6345 = vadd.f32 %v5907, %v6289
      %v6346 = vadd.f32 %v5908, %v6292
      %v6347 = vadd.f32 %v5909, %v6297
      %v6348 = vadd.f32 %v5910, %v6300
      %v6349 = vadd.f32 %v5911, %v6305
      %v6350 = vadd.f32 %v5912, %v6308
      %v6351 = vadd.f32 %v5913, %v6313
      %v6352 = vadd.f32 %v5914, %v6316
      %v6353 = vadd.f32 %v5915, %v6321
      %v6354 = vadd.f32 %v5916, %v6324
      %v6355 = vld [vmem:[#allocation2 + $0x24] sm:$0x8]
      %v6356 = vld [vmem:[#allocation2 + $0x28] sm:$0xf]
      %v6357 = vld [vmem:[#allocation2 + $0x2c] sm:$0xf]
      %v6358 = vld [vmem:[#allocation2 + $0x30] sm:$0xf]
      %v6359 = vld [vmem:[#allocation2 + $0x34] sm:$0xf]
      %v6360 = vld [vmem:[#allocation2 + $0x38] sm:$0xf]
      %v6361 = vld [vmem:[#allocation2 + $0x3c] sm:$0xf]
      %v6362 = vld [vmem:[#allocation2 + $0x40] sm:$0xf]
      %v6363 = vld [vmem:[#allocation2 + $0x44] sm:$0xf]
      %v6364 = vld [vmem:[#allocation2 + $0x48] sm:$0xf]
      %v6365 = vld [vmem:[#allocation2 + $0x4c] sm:$0xf]
      %v6366 = vld [vmem:[#allocation2 + $0x50] sm:$0xf]
      %v6367 = vld [vmem:[#allocation2 + $0x54] sm:$0xf]
      %v6368 = vld [vmem:[#allocation2 + $0x58] sm:$0xf]
      %v6369 = vld [vmem:[#allocation2 + $0x5c] sm:$0xf]
      %v6370 = vld [vmem:[#allocation2 + $0x60] sm:$0xf]
      %v6371 = vld [vmem:[#allocation2 + $0x64] sm:$0xf]
      %v6372 = vld [vmem:[#allocation2 + $0x68] sm:$0xf]
      %v6373 = vld [vmem:[#allocation2 + $0x6c] sm:$0xf]
      %v6374 = vld [vmem:[#allocation2 + $0x70] sm:$0xf]
      %v6375 = vld [vmem:[#allocation2 + $0x74] sm:$0xf]
      %v6376 = vld [vmem:[#allocation2 + $0x78] sm:$0xf]
      %v6377 = vld [vmem:[#allocation2 + $0x7c] sm:$0xf]
      %v6378 = vld [vmem:[#allocation2 + $0x80] sm:$0xf]
      %v6379 = vld [vmem:[#allocation2 + $0x84] sm:$0xf]
      %v6380 = vld [vmem:[#allocation2 + $0x88] sm:$0xf]
      %v6381 = vld [vmem:[#allocation2 + $0x8c] sm:$0xf]
      %v6382 = vld [vmem:[#allocation2 + $0x90] sm:$0xf]
      %v6383 = vld [vmem:[#allocation2 + $0x94] sm:$0xf]
      %s6384 = scalar_lea.vmem %s3, 24
      %v6385 = vld [vmem:[%s6384] sm:$0x7]
      %v6415 = vunpack.c.l.b16 %v6355
      %v6416 = vunpack.c.l.b16 %v6356
      %v6417 = vunpack.c.l.b16 %v6357
      %v6418 = vunpack.c.l.b16 %v6358
      %v6419 = vunpack.c.l.b16 %v6359
      %v6420 = vunpack.c.l.b16 %v6360
      %v6421 = vunpack.c.l.b16 %v6361
      %v6422 = vunpack.c.l.b16 %v6362
      %v6423 = vunpack.c.l.b16 %v6363
      %v6424 = vunpack.c.l.b16 %v6364
      %v6425 = vunpack.c.l.b16 %v6365
      %v6426 = vunpack.c.l.b16 %v6366
      %v6427 = vunpack.c.l.b16 %v6367
      %v6428 = vunpack.c.l.b16 %v6368
      %v6429 = vunpack.c.l.b16 %v6369
      %v6430 = vunpack.c.l.b16 %v6370
      %v6431 = vunpack.c.l.b16 %v6371
      %v6432 = vunpack.c.l.b16 %v6372
      %v6433 = vunpack.c.l.b16 %v6373
      %v6434 = vunpack.c.l.b16 %v6374
      %v6435 = vunpack.c.l.b16 %v6375
      %v6436 = vunpack.c.l.b16 %v6376
      %v6437 = vunpack.c.l.b16 %v6377
      %v6438 = vunpack.c.l.b16 %v6378
      %v6439 = vunpack.c.l.b16 %v6379
      %v6440 = vunpack.c.l.b16 %v6380
      %v6441 = vunpack.c.l.b16 %v6381
      %v6442 = vunpack.c.l.b16 %v6382
      %v6443 = vunpack.c.l.b16 %v6383
      %v6444 = vpack.c.b16 %v6416, %v6415
      %v6445 = vpack.c.b16 %v6418, %v6417
      %v6446 = vpack.c.b16 %v6420, %v6419
      %v6447 = vpack.c.b16 %v6422, %v6421
      %v6448 = vpack.c.b16 %v6424, %v6423
      %v6449 = vpack.c.b16 %v6426, %v6425
      %v6450 = vpack.c.b16 %v6428, %v6427
      %v6451 = vpack.c.b16 %v6430, %v6429
      %v6452 = vpack.c.b16 %v6432, %v6431
      %v6453 = vpack.c.b16 %v6434, %v6433
      %v6454 = vpack.c.b16 %v6436, %v6435
      %v6455 = vpack.c.b16 %v6438, %v6437
      %v6456 = vpack.c.b16 %v6440, %v6439
      %v6457 = vpack.c.b16 %v6442, %v6441
      %v6458 = vpack.c.b16 %v6443, %v6443
      %v6460 = vshrl.u32 %v6444, 16
      %v6462 = vrot.slane %v6460, 3
      %v6463 = vshll.u32 %v6444, 16
      %v6465 = vrot.slane %v6463, 4
      %v6466 = vor.u32 %v6462, %v6465
      %v6468 = vshrl.u32 %v6445, 16
      %v6470 = vrot.slane %v6468, 3
      %v6471 = vshll.u32 %v6445, 16
      %v6473 = vrot.slane %v6471, 4
      %v6474 = vor.u32 %v6470, %v6473
      %v6475 = vsel %vm4464, %v6466, %v6474
      %v6477 = vshrl.u32 %v6446, 16
      %v6479 = vrot.slane %v6477, 3
      %v6480 = vshll.u32 %v6446, 16
      %v6482 = vrot.slane %v6480, 4
      %v6483 = vor.u32 %v6479, %v6482
      %v6484 = vsel %vm4464, %v6474, %v6483
      %v6486 = vshrl.u32 %v6447, 16
      %v6488 = vrot.slane %v6486, 3
      %v6489 = vshll.u32 %v6447, 16
      %v6491 = vrot.slane %v6489, 4
      %v6492 = vor.u32 %v6488, %v6491
      %v6493 = vsel %vm4464, %v6483, %v6492
      %v6495 = vshrl.u32 %v6448, 16
      %v6497 = vrot.slane %v6495, 3
      %v6498 = vshll.u32 %v6448, 16
      %v6500 = vrot.slane %v6498, 4
      %v6501 = vor.u32 %v6497, %v6500
      %v6502 = vsel %vm4464, %v6492, %v6501
      %v6504 = vshrl.u32 %v6449, 16
      %v6506 = vrot.slane %v6504, 3
      %v6507 = vshll.u32 %v6449, 16
      %v6509 = vrot.slane %v6507, 4
      %v6510 = vor.u32 %v6506, %v6509
      %v6511 = vsel %vm4464, %v6501, %v6510
      %v6513 = vshrl.u32 %v6450, 16
      %v6515 = vrot.slane %v6513, 3
      %v6516 = vshll.u32 %v6450, 16
      %v6518 = vrot.slane %v6516, 4
      %v6519 = vor.u32 %v6515, %v6518
      %v6520 = vsel %vm4464, %v6510, %v6519
      %v6522 = vshrl.u32 %v6451, 16
      %v6524 = vrot.slane %v6522, 3
      %v6525 = vshll.u32 %v6451, 16
      %v6527 = vrot.slane %v6525, 4
      %v6528 = vor.u32 %v6524, %v6527
      %v6529 = vsel %vm4464, %v6519, %v6528
      %v6531 = vshrl.u32 %v6452, 16
      %v6533 = vrot.slane %v6531, 3
      %v6534 = vshll.u32 %v6452, 16
      %v6536 = vrot.slane %v6534, 4
      %v6537 = vor.u32 %v6533, %v6536
      %v6538 = vsel %vm4464, %v6528, %v6537
      %v6540 = vshrl.u32 %v6453, 16
      %v6542 = vrot.slane %v6540, 3
      %v6543 = vshll.u32 %v6453, 16
      %v6545 = vrot.slane %v6543, 4
      %v6546 = vor.u32 %v6542, %v6545
      %v6547 = vsel %vm4464, %v6537, %v6546
      %v6549 = vshrl.u32 %v6454, 16
      %v6551 = vrot.slane %v6549, 3
      %v6552 = vshll.u32 %v6454, 16
      %v6554 = vrot.slane %v6552, 4
      %v6555 = vor.u32 %v6551, %v6554
      %v6556 = vsel %vm4464, %v6546, %v6555
      %v6558 = vshrl.u32 %v6455, 16
      %v6560 = vrot.slane %v6558, 3
      %v6561 = vshll.u32 %v6455, 16
      %v6563 = vrot.slane %v6561, 4
      %v6564 = vor.u32 %v6560, %v6563
      %v6565 = vsel %vm4464, %v6555, %v6564
      %v6567 = vshrl.u32 %v6456, 16
      %v6569 = vrot.slane %v6567, 3
      %v6570 = vshll.u32 %v6456, 16
      %v6572 = vrot.slane %v6570, 4
      %v6573 = vor.u32 %v6569, %v6572
      %v6574 = vsel %vm4464, %v6564, %v6573
      %v6576 = vshrl.u32 %v6457, 16
      %v6578 = vrot.slane %v6576, 3
      %v6579 = vshll.u32 %v6457, 16
      %v6581 = vrot.slane %v6579, 4
      %v6582 = vor.u32 %v6578, %v6581
      %v6583 = vsel %vm4464, %v6573, %v6582
      %v6585 = vshrl.u32 %v6458, 16
      %v6587 = vrot.slane %v6585, 3
      %v6588 = vshll.u32 %v6458, 16
      %v6590 = vrot.slane %v6588, 4
      %v6591 = vor.u32 %v6587, %v6590
      %v6592 = vsel %vm4464, %v6582, %v6591
      %v6594 = vsel %vm4255, %v6475, 0
      %v6597 = vsel %vm4255, %v6484, 0
      %v6600 = vsel %vm4255, %v6493, 0
      %v6603 = vsel %vm4255, %v6502, 0
      %v6606 = vsel %vm4255, %v6511, 0
      %v6609 = vsel %vm4255, %v6520, 0
      %v6612 = vsel %vm4255, %v6529, 0
      %v6615 = vsel %vm4255, %v6538, 0
      %v6618 = vsel %vm4255, %v6547, 0
      %v6621 = vsel %vm4255, %v6556, 0
      %v6624 = vsel %vm4255, %v6565, 0
      %v6627 = vsel %vm4255, %v6574, 0
      %v6630 = vsel %vm4255, %v6583, 0
      %v6633 = vsel %vm4255, %v6592, 0
      %v6636 = vsel %vm4298, %v6385, 0
      %6638 = vmatprep.subr.bf16.mxu0 0
      %6639 = vmatpush1.bf16.msra.mxu0 %v6636
      %6640 = vmatprep.subr.bf16.mxu0 0
      %6641 = vmatpush1.bf16.msra.mxu0 0
      %6642 = vmatprep.subr.bf16.mxu0 0
      %6643 = vmatpush1.bf16.msra.mxu0 0
      %6644 = vmatprep.subr.bf16.mxu0 0
      %6645 = vmatpush1.bf16.msra.mxu0 0
      %6646 = vmatprep.subr.bf16.mxu0 0
      %6647 = vmatpush1.bf16.msra.mxu0 0
      %6648 = vmatprep.subr.bf16.mxu0 0
      %6649 = vmatpush1.bf16.msra.mxu0 0
      %6650 = vmatprep.subr.bf16.mxu0 0
      %6651 = vmatpush1.bf16.msra.mxu0 0
      %6652 = vmatprep.subr.bf16.mxu0 0
      %6653 = vmatpush1.bf16.msra.mxu0 0
      %6654 = vmatprep.subr.bf16.mxu0 0
      %6655 = vmatpush1.bf16.msra.mxu0 0
      %6656 = vmatprep.subr.bf16.mxu0 0
      %6657 = vmatpush1.bf16.msra.mxu0 0
      %6658 = vmatprep.subr.bf16.mxu0 0
      %6659 = vmatpush1.bf16.msra.mxu0 0
      %6660 = vmatprep.subr.bf16.mxu0 0
      %6661 = vmatpush1.bf16.msra.mxu0 0
      %6662 = vmatprep.subr.bf16.mxu0 0
      %6663 = vmatpush1.bf16.msra.mxu0 0
      %6664 = vmatprep.subr.bf16.mxu0 0
      %6665 = vmatpush1.bf16.msra.mxu0 0
      %6666 = vmatprep.subr.bf16.mxu0 0
      %6667 = vmatpush1.bf16.msra.mxu0 0
      %6668 = vmatprep.subr.bf16.mxu0 0
      %6669 = vmatpush1.bf16.msra.mxu0 0
      %6670 = vmatprep.mubr.bf16.mxu0 0
      %6671 = vmatmul.mubr.bf16.gmra.mrb[0].mxu0 %v6594
      %v6672 = vpop.f32.mrb[0].mxu0
      %v6673 = vadd.f32 0.0, %v6672
      %v6674 = vpop.f32.mrb[0].mxu0
      %v6675 = vpop.f32.mrb[0].mxu0
      %v6676 = vadd.f32 0.0, %v6675
      %v6677 = vpop.f32.mrb[0].mxu0
      %6678 = vmatprep.mubr.bf16.mxu0 0
      %6679 = vmatmul.mubr.bf16.gmra.mrb[0].mxu0 %v6597
      %v6680 = vpop.f32.mrb[0].mxu0
      %v6681 = vadd.f32 0.0, %v6680
      %v6682 = vpop.f32.mrb[0].mxu0
      %v6683 = vpop.f32.mrb[0].mxu0
      %v6684 = vadd.f32 0.0, %v6683
      %v6685 = vpop.f32.mrb[0].mxu0
      %6686 = vmatprep.mubr.bf16.mxu0 0
      %6687 = vmatmul.mubr.bf16.gmra.mrb[0].mxu0 %v6600
      %v6688 = vpop.f32.mrb[0].mxu0
      %v6689 = vadd.f32 0.0, %v6688
      %v6690 = vpop.f32.mrb[0].mxu0
      %v6691 = vpop.f32.mrb[0].mxu0
      %v6692 = vadd.f32 0.0, %v6691
      %v6693 = vpop.f32.mrb[0].mxu0
      %6694 = vmatprep.mubr.bf16.mxu0 0
      %6695 = vmatmul.mubr.bf16.gmra.mrb[0].mxu0 %v6603
      %v6696 = vpop.f32.mrb[0].mxu0
      %v6697 = vadd.f32 0.0, %v6696
      %v6698 = vpop.f32.mrb[0].mxu0
      %v6699 = vpop.f32.mrb[0].mxu0
      %v6700 = vadd.f32 0.0, %v6699
      %v6701 = vpop.f32.mrb[0].mxu0
      %6702 = vmatprep.mubr.bf16.mxu0 0
      %6703 = vmatmul.mubr.bf16.gmra.mrb[0].mxu0 %v6606
      %v6704 = vpop.f32.mrb[0].mxu0
      %v6705 = vadd.f32 0.0, %v6704
      %v6706 = vpop.f32.mrb[0].mxu0
      %v6707 = vpop.f32.mrb[0].mxu0
      %v6708 = vadd.f32 0.0, %v6707
      %v6709 = vpop.f32.mrb[0].mxu0
      %6710 = vmatprep.mubr.bf16.mxu0 0
      %6711 = vmatmul.mubr.bf16.gmra.mrb[0].mxu0 %v6609
      %v6712 = vpop.f32.mrb[0].mxu0
      %v6713 = vadd.f32 0.0, %v6712
      %v6714 = vpop.f32.mrb[0].mxu0
      %v6715 = vpop.f32.mrb[0].mxu0
      %v6716 = vadd.f32 0.0, %v6715
      %v6717 = vpop.f32.mrb[0].mxu0
      %6718 = vmatprep.mubr.bf16.mxu0 0
      %6719 = vmatmul.mubr.bf16.gmra.mrb[0].mxu0 %v6612
      %v6720 = vpop.f32.mrb[0].mxu0
      %v6721 = vadd.f32 0.0, %v6720
      %v6722 = vpop.f32.mrb[0].mxu0
      %v6723 = vpop.f32.mrb[0].mxu0
      %v6724 = vadd.f32 0.0, %v6723
      %v6725 = vpop.f32.mrb[0].mxu0
      %6726 = vmatprep.mubr.bf16.mxu0 0
      %6727 = vmatmul.mubr.bf16.gmra.mrb[0].mxu0 %v6615
      %v6728 = vpop.f32.mrb[0].mxu0
      %v6729 = vadd.f32 0.0, %v6728
      %v6730 = vpop.f32.mrb[0].mxu0
      %v6731 = vpop.f32.mrb[0].mxu0
      %v6732 = vadd.f32 0.0, %v6731
      %v6733 = vpop.f32.mrb[0].mxu0
      %6734 = vmatprep.mubr.bf16.mxu0 0
      %6735 = vmatmul.mubr.bf16.gmra.mrb[0].mxu0 %v6618
      %v6736 = vpop.f32.mrb[0].mxu0
      %v6737 = vadd.f32 0.0, %v6736
      %v6738 = vpop.f32.mrb[0].mxu0
      %v6739 = vpop.f32.mrb[0].mxu0
      %v6740 = vadd.f32 0.0, %v6739
      %v6741 = vpop.f32.mrb[0].mxu0
      %6742 = vmatprep.mubr.bf16.mxu0 0
      %6743 = vmatmul.mubr.bf16.gmra.mrb[0].mxu0 %v6621
      %v6744 = vpop.f32.mrb[0].mxu0
      %v6745 = vadd.f32 0.0, %v6744
      %v6746 = vpop.f32.mrb[0].mxu0
      %v6747 = vpop.f32.mrb[0].mxu0
      %v6748 = vadd.f32 0.0, %v6747
      %v6749 = vpop.f32.mrb[0].mxu0
      %6750 = vmatprep.mubr.bf16.mxu0 0
      %6751 = vmatmul.mubr.bf16.gmra.mrb[0].mxu0 %v6624
      %v6752 = vpop.f32.mrb[0].mxu0
      %v6753 = vadd.f32 0.0, %v6752
      %v6754 = vpop.f32.mrb[0].mxu0
      %v6755 = vpop.f32.mrb[0].mxu0
      %v6756 = vadd.f32 0.0, %v6755
      %v6757 = vpop.f32.mrb[0].mxu0
      %6758 = vmatprep.mubr.bf16.mxu0 0
      %6759 = vmatmul.mubr.bf16.gmra.mrb[0].mxu0 %v6627
      %v6760 = vpop.f32.mrb[0].mxu0
      %v6761 = vadd.f32 0.0, %v6760
      %v6762 = vpop.f32.mrb[0].mxu0
      %v6763 = vpop.f32.mrb[0].mxu0
      %v6764 = vadd.f32 0.0, %v6763
      %v6765 = vpop.f32.mrb[0].mxu0
      %6766 = vmatprep.mubr.bf16.mxu0 0
      %6767 = vmatmul.mubr.bf16.gmra.mrb[0].mxu0 %v6630
      %v6768 = vpop.f32.mrb[0].mxu0
      %v6769 = vadd.f32 0.0, %v6768
      %v6770 = vpop.f32.mrb[0].mxu0
      %v6771 = vpop.f32.mrb[0].mxu0
      %v6772 = vadd.f32 0.0, %v6771
      %v6773 = vpop.f32.mrb[0].mxu0
      %6774 = vmatprep.mubr.bf16.mxu0 0
      %6775 = vmatmul.mubr.bf16.gmra.mrb[0].mxu0 %v6633
      %v6776 = vpop.f32.mrb[0].mxu0
      %v6777 = vadd.f32 0.0, %v6776
      %v6778 = vpop.f32.mrb[0].mxu0
      %v6779 = vpop.f32.mrb[0].mxu0
      %v6780 = vadd.f32 0.0, %v6779
      %v6781 = vpop.f32.mrb[0].mxu0
      %6782 = vdwg.mxu0
      %v6783 = vadd.f32 %v6327, %v6673
      %v6784 = vadd.f32 %v6328, %v6676
      %v6785 = vadd.f32 %v6329, %v6681
      %v6786 = vadd.f32 %v6330, %v6684
      %v6787 = vadd.f32 %v6331, %v6689
      %v6788 = vadd.f32 %v6332, %v6692
      %v6789 = vadd.f32 %v6333, %v6697
      %v6790 = vadd.f32 %v6334, %v6700
      %v6791 = vadd.f32 %v6335, %v6705
      %v6792 = vadd.f32 %v6336, %v6708
      %v6793 = vadd.f32 %v6337, %v6713
      %v6794 = vadd.f32 %v6338, %v6716
      %v6795 = vadd.f32 %v6339, %v6721
      %v6796 = vadd.f32 %v6340, %v6724
      %v6797 = vadd.f32 %v6341, %v6729
      %v6798 = vadd.f32 %v6342, %v6732
      %v6799 = vadd.f32 %v6343, %v6737
      %v6800 = vadd.f32 %v6344, %v6740
      %v6801 = vadd.f32 %v6345, %v6745
      %v6802 = vadd.f32 %v6346, %v6748
      %v6803 = vadd.f32 %v6347, %v6753
      %v6804 = vadd.f32 %v6348, %v6756
      %v6805 = vadd.f32 %v6349, %v6761
      %v6806 = vadd.f32 %v6350, %v6764
      %v6807 = vadd.f32 %v6351, %v6769
      %v6808 = vadd.f32 %v6352, %v6772
      %v6809 = vadd.f32 %v6353, %v6777
      %v6810 = vadd.f32 %v6354, %v6780
      %s6811 = scalar_lea.vmem %s3, 28
      %v6812 = vld [vmem:[%s6811] sm:$0x7]
      %v6813 = vpack.c.b16 %v6417, %v6416
      %v6814 = vpack.c.b16 %v6419, %v6418
      %v6815 = vpack.c.b16 %v6421, %v6420
      %v6816 = vpack.c.b16 %v6423, %v6422
      %v6817 = vpack.c.b16 %v6425, %v6424
      %v6818 = vpack.c.b16 %v6427, %v6426
      %v6819 = vpack.c.b16 %v6429, %v6428
      %v6820 = vpack.c.b16 %v6431, %v6430
      %v6821 = vpack.c.b16 %v6433, %v6432
      %v6822 = vpack.c.b16 %v6435, %v6434
      %v6823 = vpack.c.b16 %v6437, %v6436
      %v6824 = vpack.c.b16 %v6439, %v6438
      %v6825 = vpack.c.b16 %v6441, %v6440
      %v6826 = vpack.c.b16 %v6443, %v6442
      %v6828 = vsel %vm4255, %v6813, 0
      %v6831 = vsel %vm4255, %v6814, 0
      %v6834 = vsel %vm4255, %v6815, 0
      %v6837 = vsel %vm4255, %v6816, 0
      %v6840 = vsel %vm4255, %v6817, 0
      %v6843 = vsel %vm4255, %v6818, 0
      %v6846 = vsel %vm4255, %v6819, 0
      %v6849 = vsel %vm4255, %v6820, 0
      %v6852 = vsel %vm4255, %v6821, 0
      %v6855 = vsel %vm4255, %v6822, 0
      %v6858 = vsel %vm4255, %v6823, 0
      %v6861 = vsel %vm4255, %v6824, 0
      %v6864 = vsel %vm4255, %v6825, 0
      %v6867 = vsel %vm4255, %v6826, 0
      %v6870 = vsel %vm4298, %v6812, 0
      %6872 = vmatprep.subr.bf16.mxu0 0
      %6873 = vmatpush1.bf16.msra.mxu0 %v6870
      %6874 = vmatprep.subr.bf16.mxu0 0
      %6875 = vmatpush1.bf16.msra.mxu0 0
      %6876 = vmatprep.subr.bf16.mxu0 0
      %6877 = vmatpush1.bf16.msra.mxu0 0
      %6878 = vmatprep.subr.bf16.mxu0 0
      %6879 = vmatpush1.bf16.msra.mxu0 0
      %6880 = vmatprep.subr.bf16.mxu0 0
      %6881 = vmatpush1.bf16.msra.mxu0 0
      %6882 = vmatprep.subr.bf16.mxu0 0
      %6883 = vmatpush1.bf16.msra.mxu0 0
      %6884 = vmatprep.subr.bf16.mxu0 0
      %6885 = vmatpush1.bf16.msra.mxu0 0
      %6886 = vmatprep.subr.bf16.mxu0 0
      %6887 = vmatpush1.bf16.msra.mxu0 0
      %6888 = vmatprep.subr.bf16.mxu0 0
      %6889 = vmatpush1.bf16.msra.mxu0 0
      %6890 = vmatprep.subr.bf16.mxu0 0
      %6891 = vmatpush1.bf16.msra.mxu0 0
      %6892 = vmatprep.subr.bf16.mxu0 0
      %6893 = vmatpush1.bf16.msra.mxu0 0
      %6894 = vmatprep.subr.bf16.mxu0 0
      %6895 = vmatpush1.bf16.msra.mxu0 0
      %6896 = vmatprep.subr.bf16.mxu0 0
      %6897 = vmatpush1.bf16.msra.mxu0 0
      %6898 = vmatprep.subr.bf16.mxu0 0
      %6899 = vmatpush1.bf16.msra.mxu0 0
      %6900 = vmatprep.subr.bf16.mxu0 0
      %6901 = vmatpush1.bf16.msra.mxu0 0
      %6902 = vmatprep.subr.bf16.mxu0 0
      %6903 = vmatpush1.bf16.msra.mxu0 0
      %6904 = vmatprep.mubr.bf16.mxu0 0
      %6905 = vmatmul.mubr.bf16.gmra.mrb[0].mxu0 %v6828
      %v6906 = vpop.f32.mrb[0].mxu0
      %v6907 = vadd.f32 0.0, %v6906
      %v6908 = vpop.f32.mrb[0].mxu0
      %v6909 = vpop.f32.mrb[0].mxu0
      %v6910 = vadd.f32 0.0, %v6909
      %v6911 = vpop.f32.mrb[0].mxu0
      %6912 = vmatprep.mubr.bf16.mxu0 0
      %6913 = vmatmul.mubr.bf16.gmra.mrb[0].mxu0 %v6831
      %v6914 = vpop.f32.mrb[0].mxu0
      %v6915 = vadd.f32 0.0, %v6914
      %v6916 = vpop.f32.mrb[0].mxu0
      %v6917 = vpop.f32.mrb[0].mxu0
      %v6918 = vadd.f32 0.0, %v6917
      %v6919 = vpop.f32.mrb[0].mxu0
      %6920 = vmatprep.mubr.bf16.mxu0 0
      %6921 = vmatmul.mubr.bf16.gmra.mrb[0].mxu0 %v6834
      %v6922 = vpop.f32.mrb[0].mxu0
      %v6923 = vadd.f32 0.0, %v6922
      %v6924 = vpop.f32.mrb[0].mxu0
      %v6925 = vpop.f32.mrb[0].mxu0
      %v6926 = vadd.f32 0.0, %v6925
      %v6927 = vpop.f32.mrb[0].mxu0
      %6928 = vmatprep.mubr.bf16.mxu0 0
      %6929 = vmatmul.mubr.bf16.gmra.mrb[0].mxu0 %v6837
      %v6930 = vpop.f32.mrb[0].mxu0
      %v6931 = vadd.f32 0.0, %v6930
      %v6932 = vpop.f32.mrb[0].mxu0
      %v6933 = vpop.f32.mrb[0].mxu0
      %v6934 = vadd.f32 0.0, %v6933
      %v6935 = vpop.f32.mrb[0].mxu0
      %6936 = vmatprep.mubr.bf16.mxu0 0
      %6937 = vmatmul.mubr.bf16.gmra.mrb[0].mxu0 %v6840
      %v6938 = vpop.f32.mrb[0].mxu0
      %v6939 = vadd.f32 0.0, %v6938
      %v6940 = vpop.f32.mrb[0].mxu0
      %v6941 = vpop.f32.mrb[0].mxu0
      %v6942 = vadd.f32 0.0, %v6941
      %v6943 = vpop.f32.mrb[0].mxu0
      %6944 = vmatprep.mubr.bf16.mxu0 0
      %6945 = vmatmul.mubr.bf16.gmra.mrb[0].mxu0 %v6843
      %v6946 = vpop.f32.mrb[0].mxu0
      %v6947 = vadd.f32 0.0, %v6946
      %v6948 = vpop.f32.mrb[0].mxu0
      %v6949 = vpop.f32.mrb[0].mxu0
      %v6950 = vadd.f32 0.0, %v6949
      %v6951 = vpop.f32.mrb[0].mxu0
      %6952 = vmatprep.mubr.bf16.mxu0 0
      %6953 = vmatmul.mubr.bf16.gmra.mrb[0].mxu0 %v6846
      %v6954 = vpop.f32.mrb[0].mxu0
      %v6955 = vadd.f32 0.0, %v6954
      %v6956 = vpop.f32.mrb[0].mxu0
      %v6957 = vpop.f32.mrb[0].mxu0
      %v6958 = vadd.f32 0.0, %v6957
      %v6959 = vpop.f32.mrb[0].mxu0
      %6960 = vmatprep.mubr.bf16.mxu0 0
      %6961 = vmatmul.mubr.bf16.gmra.mrb[0].mxu0 %v6849
      %v6962 = vpop.f32.mrb[0].mxu0
      %v6963 = vadd.f32 0.0, %v6962
      %v6964 = vpop.f32.mrb[0].mxu0
      %v6965 = vpop.f32.mrb[0].mxu0
      %v6966 = vadd.f32 0.0, %v6965
      %v6967 = vpop.f32.mrb[0].mxu0
      %6968 = vmatprep.mubr.bf16.mxu0 0
      %6969 = vmatmul.mubr.bf16.gmra.mrb[0].mxu0 %v6852
      %v6970 = vpop.f32.mrb[0].mxu0
      %v6971 = vadd.f32 0.0, %v6970
      %v6972 = vpop.f32.mrb[0].mxu0
      %v6973 = vpop.f32.mrb[0].mxu0
      %v6974 = vadd.f32 0.0, %v6973
      %v6975 = vpop.f32.mrb[0].mxu0
      %6976 = vmatprep.mubr.bf16.mxu0 0
      %6977 = vmatmul.mubr.bf16.gmra.mrb[0].mxu0 %v6855
      %v6978 = vpop.f32.mrb[0].mxu0
      %v6979 = vadd.f32 0.0, %v6978
      %v6980 = vpop.f32.mrb[0].mxu0
      %v6981 = vpop.f32.mrb[0].mxu0
      %v6982 = vadd.f32 0.0, %v6981
      %v6983 = vpop.f32.mrb[0].mxu0
      %6984 = vmatprep.mubr.bf16.mxu0 0
      %6985 = vmatmul.mubr.bf16.gmra.mrb[0].mxu0 %v6858
      %v6986 = vpop.f32.mrb[0].mxu0
      %v6987 = vadd.f32 0.0, %v6986
      %v6988 = vpop.f32.mrb[0].mxu0
      %v6989 = vpop.f32.mrb[0].mxu0
      %v6990 = vadd.f32 0.0, %v6989
      %v6991 = vpop.f32.mrb[0].mxu0
      %6992 = vmatprep.mubr.bf16.mxu0 0
      %6993 = vmatmul.mubr.bf16.gmra.mrb[0].mxu0 %v6861
      %v6994 = vpop.f32.mrb[0].mxu0
      %v6995 = vadd.f32 0.0, %v6994
      %v6996 = vpop.f32.mrb[0].mxu0
      %v6997 = vpop.f32.mrb[0].mxu0
      %v6998 = vadd.f32 0.0, %v6997
      %v6999 = vpop.f32.mrb[0].mxu0
      %7000 = vmatprep.mubr.bf16.mxu0 0
      %7001 = vmatmul.mubr.bf16.gmra.mrb[0].mxu0 %v6864
      %v7002 = vpop.f32.mrb[0].mxu0
      %v7003 = vadd.f32 0.0, %v7002
      %v7004 = vpop.f32.mrb[0].mxu0
      %v7005 = vpop.f32.mrb[0].mxu0
      %v7006 = vadd.f32 0.0, %v7005
      %v7007 = vpop.f32.mrb[0].mxu0
      %7008 = vmatprep.mubr.bf16.mxu0 0
      %7009 = vmatmul.mubr.bf16.gmra.mrb[0].mxu0 %v6867
      %v7010 = vpop.f32.mrb[0].mxu0
      %v7011 = vadd.f32 0.0, %v7010
      %v7012 = vpop.f32.mrb[0].mxu0
      %v7013 = vpop.f32.mrb[0].mxu0
      %v7014 = vadd.f32 0.0, %v7013
      %v7015 = vpop.f32.mrb[0].mxu0
      %7016 = vdwg.mxu0
      %v7017 = vadd.f32 %v6783, %v6907
      %v7018 = vadd.f32 %v6784, %v6910
      %v7019 = vadd.f32 %v6785, %v6915
      %v7020 = vadd.f32 %v6786, %v6918
      %v7021 = vadd.f32 %v6787, %v6923
      %v7022 = vadd.f32 %v6788, %v6926
      %v7023 = vadd.f32 %v6789, %v6931
      %v7024 = vadd.f32 %v6790, %v6934
      %v7025 = vadd.f32 %v6791, %v6939
      %v7026 = vadd.f32 %v6792, %v6942
      %v7027 = vadd.f32 %v6793, %v6947
      %v7028 = vadd.f32 %v6794, %v6950
      %v7029 = vadd.f32 %v6795, %v6955
      %v7030 = vadd.f32 %v6796, %v6958
      %v7031 = vadd.f32 %v6797, %v6963
      %v7032 = vadd.f32 %v6798, %v6966
      %v7033 = vadd.f32 %v6799, %v6971
      %v7034 = vadd.f32 %v6800, %v6974
      %v7035 = vadd.f32 %v6801, %v6979
      %v7036 = vadd.f32 %v6802, %v6982
      %v7037 = vadd.f32 %v6803, %v6987
      %v7038 = vadd.f32 %v6804, %v6990
      %v7039 = vadd.f32 %v6805, %v6995
      %v7040 = vadd.f32 %v6806, %v6998
      %v7041 = vadd.f32 %v6807, %v7003
      %v7042 = vadd.f32 %v6808, %v7006
      %v7043 = vadd.f32 %v6809, %v7011
      %v7044 = vadd.f32 %v6810, %v7014
      %v7045 = vld [vmem:[#allocation2 + $0x28] sm:$0xf]
      %v7046 = vld [vmem:[#allocation2 + $0x2c] sm:$0xf]
      %v7047 = vld [vmem:[#allocation2 + $0x30] sm:$0xf]
      %v7048 = vld [vmem:[#allocation2 + $0x34] sm:$0xf]
      %v7049 = vld [vmem:[#allocation2 + $0x38] sm:$0xf]
      %v7050 = vld [vmem:[#allocation2 + $0x3c] sm:$0xf]
      %v7051 = vld [vmem:[#allocation2 + $0x40] sm:$0xf]
      %v7052 = vld [vmem:[#allocation2 + $0x44] sm:$0xf]
      %v7053 = vld [vmem:[#allocation2 + $0x48] sm:$0xf]
      %v7054 = vld [vmem:[#allocation2 + $0x4c] sm:$0xf]
      %v7055 = vld [vmem:[#allocation2 + $0x50] sm:$0xf]
      %v7056 = vld [vmem:[#allocation2 + $0x54] sm:$0xf]
      %v7057 = vld [vmem:[#allocation2 + $0x58] sm:$0xf]
      %v7058 = vld [vmem:[#allocation2 + $0x5c] sm:$0xf]
      %v7059 = vld [vmem:[#allocation2 + $0x60] sm:$0xf]
      %v7060 = vld [vmem:[#allocation2 + $0x64] sm:$0xf]
      %v7061 = vld [vmem:[#allocation2 + $0x68] sm:$0xf]
      %v7062 = vld [vmem:[#allocation2 + $0x6c] sm:$0xf]
      %v7063 = vld [vmem:[#allocation2 + $0x70] sm:$0xf]
      %v7064 = vld [vmem:[#allocation2 + $0x74] sm:$0xf]
      %v7065 = vld [vmem:[#allocation2 + $0x78] sm:$0xf]
      %v7066 = vld [vmem:[#allocation2 + $0x7c] sm:$0xf]
      %v7067 = vld [vmem:[#allocation2 + $0x80] sm:$0xf]
      %v7068 = vld [vmem:[#allocation2 + $0x84] sm:$0xf]
      %v7069 = vld [vmem:[#allocation2 + $0x88] sm:$0xf]
      %v7070 = vld [vmem:[#allocation2 + $0x8c] sm:$0xf]
      %v7071 = vld [vmem:[#allocation2 + $0x90] sm:$0xf]
      %v7072 = vld [vmem:[#allocation2 + $0x94] sm:$0xf]
      %v7073 = vld [vmem:[#allocation2 + $0x98] sm:$0x1]
      %s7074 = scalar_lea.vmem %s3, 32
      %v7075 = vld [vmem:[%s7074] sm:$0x7]
      %v7105 = vunpack.c.l.b16 %v7045
      %v7106 = vunpack.c.l.b16 %v7046
      %v7107 = vunpack.c.l.b16 %v7047
      %v7108 = vunpack.c.l.b16 %v7048
      %v7109 = vunpack.c.l.b16 %v7049
      %v7110 = vunpack.c.l.b16 %v7050
      %v7111 = vunpack.c.l.b16 %v7051
      %v7112 = vunpack.c.l.b16 %v7052
      %v7113 = vunpack.c.l.b16 %v7053
      %v7114 = vunpack.c.l.b16 %v7054
      %v7115 = vunpack.c.l.b16 %v7055
      %v7116 = vunpack.c.l.b16 %v7056
      %v7117 = vunpack.c.l.b16 %v7057
      %v7118 = vunpack.c.l.b16 %v7058
      %v7119 = vunpack.c.l.b16 %v7059
      %v7120 = vunpack.c.l.b16 %v7060
      %v7121 = vunpack.c.l.b16 %v7061
      %v7122 = vunpack.c.l.b16 %v7062
      %v7123 = vunpack.c.l.b16 %v7063
      %v7124 = vunpack.c.l.b16 %v7064
      %v7125 = vunpack.c.l.b16 %v7065
      %v7126 = vunpack.c.l.b16 %v7066
      %v7127 = vunpack.c.l.b16 %v7067
      %v7128 = vunpack.c.l.b16 %v7068
      %v7129 = vunpack.c.l.b16 %v7069
      %v7130 = vunpack.c.l.b16 %v7070
      %v7131 = vunpack.c.l.b16 %v7071
      %v7132 = vunpack.c.l.b16 %v7072
      %v7133 = vunpack.c.l.b16 %v7073
      %v7134 = vpack.c.b16 %v7106, %v7105
      %v7135 = vpack.c.b16 %v7108, %v7107
      %v7136 = vpack.c.b16 %v7110, %v7109
      %v7137 = vpack.c.b16 %v7112, %v7111
      %v7138 = vpack.c.b16 %v7114, %v7113
      %v7139 = vpack.c.b16 %v7116, %v7115
      %v7140 = vpack.c.b16 %v7118, %v7117
      %v7141 = vpack.c.b16 %v7120, %v7119
      %v7142 = vpack.c.b16 %v7122, %v7121
      %v7143 = vpack.c.b16 %v7124, %v7123
      %v7144 = vpack.c.b16 %v7126, %v7125
      %v7145 = vpack.c.b16 %v7128, %v7127
      %v7146 = vpack.c.b16 %v7130, %v7129
      %v7147 = vpack.c.b16 %v7132, %v7131
      %v7148 = vpack.c.b16 %v7133, %v7133
      %v7150 = vshrl.u32 %v7134, 16
      %v7152 = vshll.u32 %v7134, 16
      %v7154 = vrot.slane %v7152, 1
      %v7155 = vor.u32 %v7150, %v7154
      %v7157 = vshll.u32 %v7135, 16
      %v7159 = vrot.slane %v7157, 1
      %v7160 = vsel %vm439, %v7155, %v7159
      %v7161 = vshrl.u32 %v7135, 16
      %v7163 = vor.u32 %v7161, %v7159
      %v7165 = vshll.u32 %v7136, 16
      %v7167 = vrot.slane %v7165, 1
      %v7168 = vsel %vm439, %v7163, %v7167
      %v7169 = vshrl.u32 %v7136, 16
      %v7171 = vor.u32 %v7169, %v7167
      %v7173 = vshll.u32 %v7137, 16
      %v7175 = vrot.slane %v7173, 1
      %v7176 = vsel %vm439, %v7171, %v7175
      %v7177 = vshrl.u32 %v7137, 16
      %v7179 = vor.u32 %v7177, %v7175
      %v7181 = vshll.u32 %v7138, 16
      %v7183 = vrot.slane %v7181, 1
      %v7184 = vsel %vm439, %v7179, %v7183
      %v7185 = vshrl.u32 %v7138, 16
      %v7187 = vor.u32 %v7185, %v7183
      %v7189 = vshll.u32 %v7139, 16
      %v7191 = vrot.slane %v7189, 1
      %v7192 = vsel %vm439, %v7187, %v7191
      %v7193 = vshrl.u32 %v7139, 16
      %v7195 = vor.u32 %v7193, %v7191
      %v7197 = vshll.u32 %v7140, 16
      %v7199 = vrot.slane %v7197, 1
      %v7200 = vsel %vm439, %v7195, %v7199
      %v7201 = vshrl.u32 %v7140, 16
      %v7203 = vor.u32 %v7201, %v7199
      %v7205 = vshll.u32 %v7141, 16
      %v7207 = vrot.slane %v7205, 1
      %v7208 = vsel %vm439, %v7203, %v7207
      %v7209 = vshrl.u32 %v7141, 16
      %v7211 = vor.u32 %v7209, %v7207
      %v7213 = vshll.u32 %v7142, 16
      %v7215 = vrot.slane %v7213, 1
      %v7216 = vsel %vm439, %v7211, %v7215
      %v7217 = vshrl.u32 %v7142, 16
      %v7219 = vor.u32 %v7217, %v7215
      %v7221 = vshll.u32 %v7143, 16
      %v7223 = vrot.slane %v7221, 1
      %v7224 = vsel %vm439, %v7219, %v7223
      %v7225 = vshrl.u32 %v7143, 16
      %v7227 = vor.u32 %v7225, %v7223
      %v7229 = vshll.u32 %v7144, 16
      %v7231 = vrot.slane %v7229, 1
      %v7232 = vsel %vm439, %v7227, %v7231
      %v7233 = vshrl.u32 %v7144, 16
      %v7235 = vor.u32 %v7233, %v7231
      %v7237 = vshll.u32 %v7145, 16
      %v7239 = vrot.slane %v7237, 1
      %v7240 = vsel %vm439, %v7235, %v7239
      %v7241 = vshrl.u32 %v7145, 16
      %v7243 = vor.u32 %v7241, %v7239
      %v7245 = vshll.u32 %v7146, 16
      %v7247 = vrot.slane %v7245, 1
      %v7248 = vsel %vm439, %v7243, %v7247
      %v7249 = vshrl.u32 %v7146, 16
      %v7251 = vor.u32 %v7249, %v7247
      %v7253 = vshll.u32 %v7147, 16
      %v7255 = vrot.slane %v7253, 1
      %v7256 = vsel %vm439, %v7251, %v7255
      %v7257 = vshrl.u32 %v7147, 16
      %v7259 = vor.u32 %v7257, %v7255
      %v7261 = vshll.u32 %v7148, 16
      %v7263 = vrot.slane %v7261, 1
      %v7264 = vsel %vm439, %v7259, %v7263
      %v7266 = vsel %vm4255, %v7160, 0
      %v7269 = vsel %vm4255, %v7168, 0
      %v7272 = vsel %vm4255, %v7176, 0
      %v7275 = vsel %vm4255, %v7184, 0
      %v7278 = vsel %vm4255, %v7192, 0
      %v7281 = vsel %vm4255, %v7200, 0
      %v7284 = vsel %vm4255, %v7208, 0
      %v7287 = vsel %vm4255, %v7216, 0
      %v7290 = vsel %vm4255, %v7224, 0
      %v7293 = vsel %vm4255, %v7232, 0
      %v7296 = vsel %vm4255, %v7240, 0
      %v7299 = vsel %vm4255, %v7248, 0
      %v7302 = vsel %vm4255, %v7256, 0
      %v7305 = vsel %vm4255, %v7264, 0
      %v7308 = vsel %vm4298, %v7075, 0
      %7310 = vmatprep.subr.bf16.mxu0 0
      %7311 = vmatpush1.bf16.msra.mxu0 %v7308
      %7312 = vmatprep.subr.bf16.mxu0 0
      %7313 = vmatpush1.bf16.msra.mxu0 0
      %7314 = vmatprep.subr.bf16.mxu0 0
      %7315 = vmatpush1.bf16.msra.mxu0 0
      %7316 = vmatprep.subr.bf16.mxu0 0
      %7317 = vmatpush1.bf16.msra.mxu0 0
      %7318 = vmatprep.subr.bf16.mxu0 0
      %7319 = vmatpush1.bf16.msra.mxu0 0
      %7320 = vmatprep.subr.bf16.mxu0 0
      %7321 = vmatpush1.bf16.msra.mxu0 0
      %7322 = vmatprep.subr.bf16.mxu0 0
      %7323 = vmatpush1.bf16.msra.mxu0 0
      %7324 = vmatprep.subr.bf16.mxu0 0
      %7325 = vmatpush1.bf16.msra.mxu0 0
      %7326 = vmatprep.subr.bf16.mxu0 0
      %7327 = vmatpush1.bf16.msra.mxu0 0
      %7328 = vmatprep.subr.bf16.mxu0 0
      %7329 = vmatpush1.bf16.msra.mxu0 0
      %7330 = vmatprep.subr.bf16.mxu0 0
      %7331 = vmatpush1.bf16.msra.mxu0 0
      %7332 = vmatprep.subr.bf16.mxu0 0
      %7333 = vmatpush1.bf16.msra.mxu0 0
      %7334 = vmatprep.subr.bf16.mxu0 0
      %7335 = vmatpush1.bf16.msra.mxu0 0
      %7336 = vmatprep.subr.bf16.mxu0 0
      %7337 = vmatpush1.bf16.msra.mxu0 0
      %7338 = vmatprep.subr.bf16.mxu0 0
      %7339 = vmatpush1.bf16.msra.mxu0 0
      %7340 = vmatprep.subr.bf16.mxu0 0
      %7341 = vmatpush1.bf16.msra.mxu0 0
      %7342 = vmatprep.mubr.bf16.mxu0 0
      %7343 = vmatmul.mubr.bf16.gmra.mrb[0].mxu0 %v7266
      %v7344 = vpop.f32.mrb[0].mxu0
      %v7345 = vadd.f32 0.0, %v7344
      %v7346 = vpop.f32.mrb[0].mxu0
      %v7347 = vpop.f32.mrb[0].mxu0
      %v7348 = vadd.f32 0.0, %v7347
      %v7349 = vpop.f32.mrb[0].mxu0
      %7350 = vmatprep.mubr.bf16.mxu0 0
      %7351 = vmatmul.mubr.bf16.gmra.mrb[0].mxu0 %v7269
      %v7352 = vpop.f32.mrb[0].mxu0
      %v7353 = vadd.f32 0.0, %v7352
      %v7354 = vpop.f32.mrb[0].mxu0
      %v7355 = vpop.f32.mrb[0].mxu0
      %v7356 = vadd.f32 0.0, %v7355
      %v7357 = vpop.f32.mrb[0].mxu0
      %7358 = vmatprep.mubr.bf16.mxu0 0
      %7359 = vmatmul.mubr.bf16.gmra.mrb[0].mxu0 %v7272
      %v7360 = vpop.f32.mrb[0].mxu0
      %v7361 = vadd.f32 0.0, %v7360
      %v7362 = vpop.f32.mrb[0].mxu0
      %v7363 = vpop.f32.mrb[0].mxu0
      %v7364 = vadd.f32 0.0, %v7363
      %v7365 = vpop.f32.mrb[0].mxu0
      %7366 = vmatprep.mubr.bf16.mxu0 0
      %7367 = vmatmul.mubr.bf16.gmra.mrb[0].mxu0 %v7275
      %v7368 = vpop.f32.mrb[0].mxu0
      %v7369 = vadd.f32 0.0, %v7368
      %v7370 = vpop.f32.mrb[0].mxu0
      %v7371 = vpop.f32.mrb[0].mxu0
      %v7372 = vadd.f32 0.0, %v7371
      %v7373 = vpop.f32.mrb[0].mxu0
      %7374 = vmatprep.mubr.bf16.mxu0 0
      %7375 = vmatmul.mubr.bf16.gmra.mrb[0].mxu0 %v7278
      %v7376 = vpop.f32.mrb[0].mxu0
      %v7377 = vadd.f32 0.0, %v7376
      %v7378 = vpop.f32.mrb[0].mxu0
      %v7379 = vpop.f32.mrb[0].mxu0
      %v7380 = vadd.f32 0.0, %v7379
      %v7381 = vpop.f32.mrb[0].mxu0
      %7382 = vmatprep.mubr.bf16.mxu0 0
      %7383 = vmatmul.mubr.bf16.gmra.mrb[0].mxu0 %v7281
      %v7384 = vpop.f32.mrb[0].mxu0
      %v7385 = vadd.f32 0.0, %v7384
      %v7386 = vpop.f32.mrb[0].mxu0
      %v7387 = vpop.f32.mrb[0].mxu0
      %v7388 = vadd.f32 0.0, %v7387
      %v7389 = vpop.f32.mrb[0].mxu0
      %7390 = vmatprep.mubr.bf16.mxu0 0
      %7391 = vmatmul.mubr.bf16.gmra.mrb[0].mxu0 %v7284
      %v7392 = vpop.f32.mrb[0].mxu0
      %v7393 = vadd.f32 0.0, %v7392
      %v7394 = vpop.f32.mrb[0].mxu0
      %v7395 = vpop.f32.mrb[0].mxu0
      %v7396 = vadd.f32 0.0, %v7395
      %v7397 = vpop.f32.mrb[0].mxu0
      %7398 = vmatprep.mubr.bf16.mxu0 0
      %7399 = vmatmul.mubr.bf16.gmra.mrb[0].mxu0 %v7287
      %v7400 = vpop.f32.mrb[0].mxu0
      %v7401 = vadd.f32 0.0, %v7400
      %v7402 = vpop.f32.mrb[0].mxu0
      %v7403 = vpop.f32.mrb[0].mxu0
      %v7404 = vadd.f32 0.0, %v7403
      %v7405 = vpop.f32.mrb[0].mxu0
      %7406 = vmatprep.mubr.bf16.mxu0 0
      %7407 = vmatmul.mubr.bf16.gmra.mrb[0].mxu0 %v7290
      %v7408 = vpop.f32.mrb[0].mxu0
      %v7409 = vadd.f32 0.0, %v7408
      %v7410 = vpop.f32.mrb[0].mxu0
      %v7411 = vpop.f32.mrb[0].mxu0
      %v7412 = vadd.f32 0.0, %v7411
      %v7413 = vpop.f32.mrb[0].mxu0
      %7414 = vmatprep.mubr.bf16.mxu0 0
      %7415 = vmatmul.mubr.bf16.gmra.mrb[0].mxu0 %v7293
      %v7416 = vpop.f32.mrb[0].mxu0
      %v7417 = vadd.f32 0.0, %v7416
      %v7418 = vpop.f32.mrb[0].mxu0
      %v7419 = vpop.f32.mrb[0].mxu0
      %v7420 = vadd.f32 0.0, %v7419
      %v7421 = vpop.f32.mrb[0].mxu0
      %7422 = vmatprep.mubr.bf16.mxu0 0
      %7423 = vmatmul.mubr.bf16.gmra.mrb[0].mxu0 %v7296
      %v7424 = vpop.f32.mrb[0].mxu0
      %v7425 = vadd.f32 0.0, %v7424
      %v7426 = vpop.f32.mrb[0].mxu0
      %v7427 = vpop.f32.mrb[0].mxu0
      %v7428 = vadd.f32 0.0, %v7427
      %v7429 = vpop.f32.mrb[0].mxu0
      %7430 = vmatprep.mubr.bf16.mxu0 0
      %7431 = vmatmul.mubr.bf16.gmra.mrb[0].mxu0 %v7299
      %v7432 = vpop.f32.mrb[0].mxu0
      %v7433 = vadd.f32 0.0, %v7432
      %v7434 = vpop.f32.mrb[0].mxu0
      %v7435 = vpop.f32.mrb[0].mxu0
      %v7436 = vadd.f32 0.0, %v7435
      %v7437 = vpop.f32.mrb[0].mxu0
      %7438 = vmatprep.mubr.bf16.mxu0 0
      %7439 = vmatmul.mubr.bf16.gmra.mrb[0].mxu0 %v7302
      %v7440 = vpop.f32.mrb[0].mxu0
      %v7441 = vadd.f32 0.0, %v7440
      %v7442 = vpop.f32.mrb[0].mxu0
      %v7443 = vpop.f32.mrb[0].mxu0
      %v7444 = vadd.f32 0.0, %v7443
      %v7445 = vpop.f32.mrb[0].mxu0
      %7446 = vmatprep.mubr.bf16.mxu0 0
      %7447 = vmatmul.mubr.bf16.gmra.mrb[0].mxu0 %v7305
      %v7448 = vpop.f32.mrb[0].mxu0
      %v7449 = vadd.f32 0.0, %v7448
      %v7450 = vpop.f32.mrb[0].mxu0
      %v7451 = vpop.f32.mrb[0].mxu0
      %v7452 = vadd.f32 0.0, %v7451
      %v7453 = vpop.f32.mrb[0].mxu0
      %7454 = vdwg.mxu0
      %v7455 = vadd.f32 %v7017, %v7345
      %v7456 = vadd.f32 %v7018, %v7348
      %v7457 = vadd.f32 %v7019, %v7353
      %v7458 = vadd.f32 %v7020, %v7356
      %v7459 = vadd.f32 %v7021, %v7361
      %v7460 = vadd.f32 %v7022, %v7364
      %v7461 = vadd.f32 %v7023, %v7369
      %v7462 = vadd.f32 %v7024, %v7372
      %v7463 = vadd.f32 %v7025, %v7377
      %v7464 = vadd.f32 %v7026, %v7380
      %v7465 = vadd.f32 %v7027, %v7385
      %v7466 = vadd.f32 %v7028, %v7388
      %v7467 = vadd.f32 %v7029, %v7393
      %v7468 = vadd.f32 %v7030, %v7396
      %v7469 = vadd.f32 %v7031, %v7401
      %v7470 = vadd.f32 %v7032, %v7404
      %v7471 = vadd.f32 %v7033, %v7409
      %v7472 = vadd.f32 %v7034, %v7412
      %v7473 = vadd.f32 %v7035, %v7417
      %v7474 = vadd.f32 %v7036, %v7420
      %v7475 = vadd.f32 %v7037, %v7425
      %v7476 = vadd.f32 %v7038, %v7428
      %v7477 = vadd.f32 %v7039, %v7433
      %v7478 = vadd.f32 %v7040, %v7436
      %v7479 = vadd.f32 %v7041, %v7441
      %v7480 = vadd.f32 %v7042, %v7444
      %v7481 = vadd.f32 %v7043, %v7449
      %v7482 = vadd.f32 %v7044, %v7452
      %v7483 = vld [vmem:[%s4] sm:$0x1]
      %v7485 = vlaneseq
      %v7486 = vshrl.u32 %v7485, 7
      %v7487 = vsub.s32 0, %v7486
      %v7488 = vrot.slane %v7483, %v7487
      %v7490 = vadd.f32 %v7455, %v7488
      %v7491 = vadd.f32 %v7456, %v7488
      %v7492 = vadd.f32 %v7457, %v7488
      %v7493 = vadd.f32 %v7458, %v7488
      %v7494 = vadd.f32 %v7459, %v7488
      %v7495 = vadd.f32 %v7460, %v7488
      %v7496 = vadd.f32 %v7461, %v7488
      %v7497 = vadd.f32 %v7462, %v7488
      %v7498 = vadd.f32 %v7463, %v7488
      %v7499 = vadd.f32 %v7464, %v7488
      %v7500 = vadd.f32 %v7465, %v7488
      %v7501 = vadd.f32 %v7466, %v7488
      %v7502 = vadd.f32 %v7467, %v7488
      %v7503 = vadd.f32 %v7468, %v7488
      %v7504 = vadd.f32 %v7469, %v7488
      %v7505 = vadd.f32 %v7470, %v7488
      %v7506 = vadd.f32 %v7471, %v7488
      %v7507 = vadd.f32 %v7472, %v7488
      %v7508 = vadd.f32 %v7473, %v7488
      %v7509 = vadd.f32 %v7474, %v7488
      %v7510 = vadd.f32 %v7475, %v7488
      %v7511 = vadd.f32 %v7476, %v7488
      %v7512 = vadd.f32 %v7477, %v7488
      %v7513 = vadd.f32 %v7478, %v7488
      %v7514 = vadd.f32 %v7479, %v7488
      %v7515 = vadd.f32 %v7480, %v7488
      %v7516 = vadd.f32 %v7481, %v7488
      %v7517 = vadd.f32 %v7482, %v7488
      %vm7543 = vcmask 1046528
      %v7544 = vrot.slane %v7490, 1
      %v7545 = vrot.slane %v7491, 1
      %v7546 = vsel %vm7543, %v7544, %v7545
      %v7547 = vrot.slane %v7492, 1
      %v7548 = vsel %vm7543, %v7545, %v7547
      %v7549 = vrot.slane %v7493, 1
      %v7550 = vsel %vm7543, %v7547, %v7549
      %v7551 = vrot.slane %v7494, 1
      %v7552 = vsel %vm7543, %v7549, %v7551
      %v7553 = vrot.slane %v7495, 1
      %v7554 = vsel %vm7543, %v7551, %v7553
      %v7555 = vrot.slane %v7496, 1
      %v7556 = vsel %vm7543, %v7553, %v7555
      %v7557 = vrot.slane %v7497, 1
      %v7558 = vsel %vm7543, %v7555, %v7557
      %v7559 = vrot.slane %v7498, 1
      %v7560 = vsel %vm7543, %v7557, %v7559
      %v7561 = vrot.slane %v7499, 1
      %v7562 = vsel %vm7543, %v7559, %v7561
      %v7563 = vrot.slane %v7500, 1
      %v7564 = vsel %vm7543, %v7561, %v7563
      %v7565 = vrot.slane %v7501, 1
      %v7566 = vsel %vm7543, %v7563, %v7565
      %v7567 = vrot.slane %v7502, 1
      %v7568 = vsel %vm7543, %v7565, %v7567
      %v7569 = vrot.slane %v7503, 1
      %v7570 = vsel %vm7543, %v7567, %v7569
      %v7571 = vrot.slane %v7504, 1
      %v7572 = vsel %vm7543, %v7569, %v7571
      %v7573 = vrot.slane %v7505, 1
      %v7574 = vsel %vm7543, %v7571, %v7573
      %v7575 = vrot.slane %v7506, 1
      %v7576 = vsel %vm7543, %v7573, %v7575
      %v7577 = vrot.slane %v7507, 1
      %v7578 = vsel %vm7543, %v7575, %v7577
      %v7579 = vrot.slane %v7508, 1
      %v7580 = vsel %vm7543, %v7577, %v7579
      %v7581 = vrot.slane %v7509, 1
      %v7582 = vsel %vm7543, %v7579, %v7581
      %v7583 = vrot.slane %v7510, 1
      %v7584 = vsel %vm7543, %v7581, %v7583
      %v7585 = vrot.slane %v7511, 1
      %v7586 = vsel %vm7543, %v7583, %v7585
      %v7587 = vrot.slane %v7512, 1
      %v7588 = vsel %vm7543, %v7585, %v7587
      %v7589 = vrot.slane %v7513, 1
      %v7590 = vsel %vm7543, %v7587, %v7589
      %v7591 = vrot.slane %v7514, 1
      %v7592 = vsel %vm7543, %v7589, %v7591
      %v7617 = vmax.f32 %v7490, %v7546
      %v7618 = vmax.f32 %v7491, %v7548
      %v7619 = vmax.f32 %v7492, %v7550
      %v7620 = vmax.f32 %v7493, %v7552
      %v7621 = vmax.f32 %v7494, %v7554
      %v7622 = vmax.f32 %v7495, %v7556
      %v7623 = vmax.f32 %v7496, %v7558
      %v7624 = vmax.f32 %v7497, %v7560
      %v7625 = vmax.f32 %v7498, %v7562
      %v7626 = vmax.f32 %v7499, %v7564
      %v7627 = vmax.f32 %v7500, %v7566
      %v7628 = vmax.f32 %v7501, %v7568
      %v7629 = vmax.f32 %v7502, %v7570
      %v7630 = vmax.f32 %v7503, %v7572
      %v7631 = vmax.f32 %v7504, %v7574
      %v7632 = vmax.f32 %v7505, %v7576
      %v7633 = vmax.f32 %v7506, %v7578
      %v7634 = vmax.f32 %v7507, %v7580
      %v7635 = vmax.f32 %v7508, %v7582
      %v7636 = vmax.f32 %v7509, %v7584
      %v7637 = vmax.f32 %v7510, %v7586
      %v7638 = vmax.f32 %v7511, %v7588
      %v7639 = vmax.f32 %v7512, %v7590
      %v7640 = vmax.f32 %v7513, %v7592
      %v7644 = vrot.slane %v7515, 1
      %v7645 = vsel %vm7543, %v7591, %v7644
      %v7646 = vrot.slane %v7516, 1
      %v7647 = vsel %vm7543, %v7644, %v7646
      %v7648 = vrot.slane %v7517, 1
      %v7649 = vsel %vm7543, %v7646, %v7648
      %v7653 = vmax.f32 %v7514, %v7645
      %v7654 = vmax.f32 %v7515, %v7647
      %v7655 = vmax.f32 %v7516, %v7649
      %v7656 = vmax.f32 %v7617, %v7620
      %v7657 = vmax.f32 %v7618, %v7621
      %v7658 = vmax.f32 %v7619, %v7622
      %v7659 = vmax.f32 %v7620, %v7623
      %v7660 = vmax.f32 %v7621, %v7624
      %v7661 = vmax.f32 %v7622, %v7625
      %v7662 = vmax.f32 %v7623, %v7626
      %v7663 = vmax.f32 %v7624, %v7627
      %v7664 = vmax.f32 %v7625, %v7628
      %v7665 = vmax.f32 %v7626, %v7629
      %v7666 = vmax.f32 %v7627, %v7630
      %v7667 = vmax.f32 %v7628, %v7631
      %v7668 = vmax.f32 %v7629, %v7632
      %v7669 = vmax.f32 %v7630, %v7633
      %v7670 = vmax.f32 %v7631, %v7634
      %v7671 = vmax.f32 %v7632, %v7635
      %v7672 = vmax.f32 %v7633, %v7636
      %v7673 = vmax.f32 %v7634, %v7637
      %v7674 = vmax.f32 %v7635, %v7638
      %v7675 = vmax.f32 %v7636, %v7639
      %v7676 = vmax.f32 %v7637, %v7640
      %v7677 = vmax.f32 %v7638, %v7653
      %v7678 = vmax.f32 %v7639, %v7654
      %v7679 = vmax.f32 %v7640, %v7655
      %s7680 = ssub.s32 1, %s316
      %s7681 = smul.u32 %s7680, 24
      %v7682 = vstv %s7681
      %vm7683 = vcmp.ge.s32.totalorder %v3702, %v7682
      %vm7684 = vcmp.ge.s32.totalorder %v3703, %v7682
      %vm7685 = vcmp.ge.s32.totalorder %v3704, %v7682
      %vm7686 = vcmp.ge.s32.totalorder %v3705, %v7682
      %vm7687 = vcmp.ge.s32.totalorder %v3706, %v7682
      %vm7688 = vcmp.ge.s32.totalorder %v3707, %v7682
      %vm7689 = vcmp.ge.s32.totalorder %v3708, %v7682
      %vm7690 = vcmp.ge.s32.totalorder %v3709, %v7682
      %vm7691 = vcmp.ge.s32.totalorder %v3710, %v7682
      %vm7692 = vcmp.ge.s32.totalorder %v3711, %v7682
      %vm7693 = vcmp.ge.s32.totalorder %v3712, %v7682
      %vm7694 = vcmp.ge.s32.totalorder %v3713, %v7682
      %vm7695 = vcmp.ge.s32.totalorder %v3714, %v7682
      %vm7696 = vcmp.ge.s32.totalorder %v3715, %v7682
      %vm7697 = vcmp.ge.s32.totalorder %v3716, %v7682
      %vm7698 = vcmp.ge.s32.totalorder %v3717, %v7682
      %vm7699 = vcmp.ge.s32.totalorder %v3718, %v7682
      %vm7700 = vcmp.ge.s32.totalorder %v3719, %v7682
      %vm7701 = vcmp.ge.s32.totalorder %v3720, %v7682
      %vm7702 = vcmp.ge.s32.totalorder %v3721, %v7682
      %vm7703 = vcmp.ge.s32.totalorder %v3722, %v7682
      %vm7704 = vcmp.ge.s32.totalorder %v3723, %v7682
      %vm7705 = vcmp.ge.s32.totalorder %v3724, %v7682
      %vm7706 = vcmp.ge.s32.totalorder %v3725, %v7682
      %s7707 = ssub.s32 16, %s316
      %s7708 = smul.u32 %s7707, 24
      %v7709 = vstv %s7708
      %vm7710 = vcmp.lt.s32.totalorder %v3702, %v7709
      %vm7711 = vcmp.lt.s32.totalorder %v3703, %v7709
      %vm7712 = vcmp.lt.s32.totalorder %v3704, %v7709
      %vm7713 = vcmp.lt.s32.totalorder %v3705, %v7709
      %vm7714 = vcmp.lt.s32.totalorder %v3706, %v7709
      %vm7715 = vcmp.lt.s32.totalorder %v3707, %v7709
      %vm7716 = vcmp.lt.s32.totalorder %v3708, %v7709
      %vm7717 = vcmp.lt.s32.totalorder %v3709, %v7709
      %vm7718 = vcmp.lt.s32.totalorder %v3710, %v7709
      %vm7719 = vcmp.lt.s32.totalorder %v3711, %v7709
      %vm7720 = vcmp.lt.s32.totalorder %v3712, %v7709
      %vm7721 = vcmp.lt.s32.totalorder %v3713, %v7709
      %vm7722 = vcmp.lt.s32.totalorder %v3714, %v7709
      %vm7723 = vcmp.lt.s32.totalorder %v3715, %v7709
      %vm7724 = vcmp.lt.s32.totalorder %v3716, %v7709
      %vm7725 = vcmp.lt.s32.totalorder %v3717, %v7709
      %vm7726 = vcmp.lt.s32.totalorder %v3718, %v7709
      %vm7727 = vcmp.lt.s32.totalorder %v3719, %v7709
      %vm7728 = vcmp.lt.s32.totalorder %v3720, %v7709
      %vm7729 = vcmp.lt.s32.totalorder %v3721, %v7709
      %vm7730 = vcmp.lt.s32.totalorder %v3722, %v7709
      %vm7731 = vcmp.lt.s32.totalorder %v3723, %v7709
      %vm7732 = vcmp.lt.s32.totalorder %v3724, %v7709
      %vm7733 = vcmp.lt.s32.totalorder %v3725, %v7709
      %vm7734 = vmand %vm7683, %vm7710
      %vm7735 = vmand %vm7684, %vm7711
      %vm7736 = vmand %vm7685, %vm7712
      %vm7737 = vmand %vm7686, %vm7713
      %vm7738 = vmand %vm7687, %vm7714
      %vm7739 = vmand %vm7688, %vm7715
      %vm7740 = vmand %vm7689, %vm7716
      %vm7741 = vmand %vm7690, %vm7717
      %vm7742 = vmand %vm7691, %vm7718
      %vm7743 = vmand %vm7692, %vm7719
      %vm7744 = vmand %vm7693, %vm7720
      %vm7745 = vmand %vm7694, %vm7721
      %vm7746 = vmand %vm7695, %vm7722
      %vm7747 = vmand %vm7696, %vm7723
      %vm7748 = vmand %vm7697, %vm7724
      %vm7749 = vmand %vm7698, %vm7725
      %vm7750 = vmand %vm7699, %vm7726
      %vm7751 = vmand %vm7700, %vm7727
      %vm7752 = vmand %vm7701, %vm7728
      %vm7753 = vmand %vm7702, %vm7729
      %vm7754 = vmand %vm7703, %vm7730
      %vm7755 = vmand %vm7704, %vm7731
      %vm7756 = vmand %vm7705, %vm7732
      %vm7757 = vmand %vm7706, %vm7733
      %v7758 = vsel %vm7734, 1, 0
      %v7759 = vsel %vm7735, 1, 0
      %v7760 = vsel %vm7736, 1, 0
      %v7761 = vsel %vm7737, 1, 0
      %v7762 = vsel %vm7738, 1, 0
      %v7763 = vsel %vm7739, 1, 0
      %v7764 = vsel %vm7740, 1, 0
      %v7765 = vsel %vm7741, 1, 0
      %v7766 = vsel %vm7742, 1, 0
      %v7767 = vsel %vm7743, 1, 0
      %v7768 = vsel %vm7744, 1, 0
      %v7769 = vsel %vm7745, 1, 0
      %v7770 = vsel %vm7746, 1, 0
      %v7771 = vsel %vm7747, 1, 0
      %v7772 = vsel %vm7748, 1, 0
      %v7773 = vsel %vm7749, 1, 0
      %v7774 = vsel %vm7750, 1, 0
      %v7775 = vsel %vm7751, 1, 0
      %v7776 = vsel %vm7752, 1, 0
      %v7777 = vsel %vm7753, 1, 0
      %v7778 = vsel %vm7754, 1, 0
      %v7779 = vsel %vm7755, 1, 0
      %v7780 = vsel %vm7756, 1, 0
      %v7781 = vsel %vm7757, 1, 0
      %v7782 = vcvt.s32.f32 %v7758
      %v7783 = vcvt.s32.f32 %v7759
      %v7784 = vcvt.s32.f32 %v7760
      %v7785 = vcvt.s32.f32 %v7761
      %v7786 = vcvt.s32.f32 %v7762
      %v7787 = vcvt.s32.f32 %v7763
      %v7788 = vcvt.s32.f32 %v7764
      %v7789 = vcvt.s32.f32 %v7765
      %v7790 = vcvt.s32.f32 %v7766
      %v7791 = vcvt.s32.f32 %v7767
      %v7792 = vcvt.s32.f32 %v7768
      %v7793 = vcvt.s32.f32 %v7769
      %v7794 = vcvt.s32.f32 %v7770
      %v7795 = vcvt.s32.f32 %v7771
      %v7796 = vcvt.s32.f32 %v7772
      %v7797 = vcvt.s32.f32 %v7773
      %v7798 = vcvt.s32.f32 %v7774
      %v7799 = vcvt.s32.f32 %v7775
      %v7800 = vcvt.s32.f32 %v7776
      %v7801 = vcvt.s32.f32 %v7777
      %v7802 = vcvt.s32.f32 %v7778
      %v7803 = vcvt.s32.f32 %v7779
      %v7804 = vcvt.s32.f32 %v7780
      %v7805 = vcvt.s32.f32 %v7781
      %vm7806 = vcmp.lt.s32.totalorder %v3702, 15
      %vm7807 = vcmp.lt.s32.totalorder %v3703, 15
      %vm7808 = vcmp.lt.s32.totalorder %v3704, 15
      %v7809 = vsel %vm7806, 1, 0
      %v7810 = vsel %vm7807, 1, 0
      %v7811 = vsel %vm7808, 1, 0
      %v7812 = vcvt.s32.f32 %v7809
      %v7813 = vcvt.s32.f32 %v7810
      %v7814 = vcvt.s32.f32 %v7811
      %v7815 = vmul.f32 %v7782, %v7812
      %v7816 = vmul.f32 %v7783, %v7813
      %v7817 = vmul.f32 %v7784, %v7814
      %v7818 = vmul.f32 %v7785, %v7812
      %v7819 = vmul.f32 %v7786, %v7813
      %v7820 = vmul.f32 %v7787, %v7814
      %v7821 = vmul.f32 %v7788, %v7812
      %v7822 = vmul.f32 %v7789, %v7813
      %v7823 = vmul.f32 %v7790, %v7814
      %v7824 = vmul.f32 %v7791, %v7812
      %v7825 = vmul.f32 %v7792, %v7813
      %v7826 = vmul.f32 %v7793, %v7814
      %v7827 = vmul.f32 %v7794, %v7812
      %v7828 = vmul.f32 %v7795, %v7813
      %v7829 = vmul.f32 %v7796, %v7814
      %v7830 = vmul.f32 %v7797, %v7812
      %v7831 = vmul.f32 %v7798, %v7813
      %v7832 = vmul.f32 %v7799, %v7814
      %v7833 = vmul.f32 %v7800, %v7812
      %v7834 = vmul.f32 %v7801, %v7813
      %v7835 = vmul.f32 %v7802, %v7814
      %v7836 = vmul.f32 %v7803, %v7812
      %v7837 = vmul.f32 %v7804, %v7813
      %v7838 = vmul.f32 %v7805, %v7814
      %vm7839 = vcmask 519168
      %7840 = vst.msk [vmem:[#allocation3] sm:$0xf] %vm7839, 0
      %7841 = vst.msk [vmem:[#allocation3 + $0x4] sm:$0xf] %vm7839, 0
      %7842 = vst.msk [vmem:[#allocation3 + $0x8] sm:$0xf] %vm7839, 0
      %7843 = vst.msk [vmem:[#allocation3 + $0xc] sm:$0xf] %vm7839, 0
      %v7844 = vmul.f32 %v7656, %v7815
      %v7845 = vmul.f32 %v7657, %v7816
      %v7846 = vmul.f32 %v7658, %v7817
      %v7847 = vmul.f32 %v7659, %v7818
      %v7848 = vmul.f32 %v7660, %v7819
      %v7849 = vmul.f32 %v7661, %v7820
      %v7850 = vmul.f32 %v7662, %v7821
      %v7851 = vmul.f32 %v7663, %v7822
      %v7852 = vmul.f32 %v7664, %v7823
      %v7853 = vmul.f32 %v7665, %v7824
      %v7854 = vmul.f32 %v7666, %v7825
      %v7855 = vmul.f32 %v7667, %v7826
      %v7856 = vmul.f32 %v7668, %v7827
      %v7857 = vmul.f32 %v7669, %v7828
      %v7858 = vmul.f32 %v7670, %v7829
      %v7859 = vmul.f32 %v7671, %v7830
      %v7860 = vmul.f32 %v7672, %v7831
      %v7861 = vmul.f32 %v7673, %v7832
      %v7862 = vmul.f32 %v7674, %v7833
      %v7863 = vmul.f32 %v7675, %v7834
      %v7864 = vmul.f32 %v7676, %v7835
      %v7865 = vmul.f32 %v7677, %v7836
      %v7866 = vmul.f32 %v7678, %v7837
      %v7867 = vmul.f32 %v7679, %v7838
      %v7868 = vpack.c.bf16 %v7845, %v7844
      %v7869 = vpack.c.bf16 %v7847, %v7846
      %v7870 = vpack.c.bf16 %v7849, %v7848
      %v7871 = vpack.c.bf16 %v7851, %v7850
      %v7872 = vpack.c.bf16 %v7853, %v7852
      %v7873 = vpack.c.bf16 %v7855, %v7854
      %v7874 = vpack.c.bf16 %v7857, %v7856
      %v7875 = vpack.c.bf16 %v7859, %v7858
      %v7876 = vpack.c.bf16 %v7861, %v7860
      %v7877 = vpack.c.bf16 %v7863, %v7862
      %v7878 = vpack.c.bf16 %v7865, %v7864
      %v7879 = vpack.c.bf16 %v7867, %v7866
      %v7892 = vunpack.c.l.b16 %v7868
      %v7893 = vunpack.c.h.b16 %v7868
      %v7894 = vunpack.c.l.b16 %v7869
      %v7895 = vunpack.c.h.b16 %v7869
      %v7896 = vunpack.c.l.b16 %v7870
      %v7897 = vunpack.c.h.b16 %v7870
      %v7898 = vunpack.c.l.b16 %v7871
      %v7899 = vunpack.c.h.b16 %v7871
      %v7900 = vunpack.c.l.b16 %v7872
      %v7901 = vunpack.c.h.b16 %v7872
      %v7902 = vunpack.c.l.b16 %v7873
      %v7903 = vunpack.c.h.b16 %v7873
      %v7904 = vunpack.c.l.b16 %v7874
      %v7905 = vunpack.c.h.b16 %v7874
      %v7906 = vunpack.c.l.b16 %v7875
      %v7907 = vunpack.c.h.b16 %v7875
      %v7908 = vunpack.c.l.b16 %v7876
      %v7909 = vunpack.c.h.b16 %v7876
      %v7910 = vunpack.c.l.b16 %v7877
      %v7911 = vunpack.c.h.b16 %v7877
      %v7912 = vunpack.c.l.b16 %v7878
      %v7913 = vunpack.c.h.b16 %v7878
      %v7914 = vunpack.c.l.b16 %v7879
      %v7915 = vunpack.c.h.b16 %v7879
      %v7916 = vpack.c.b16 %v7892, %v7892
      %v7917 = vpack.c.b16 %v7893, %v7893
      %v7918 = vpack.c.b16 %v7894, %v7894
      %v7919 = vpack.c.b16 %v7895, %v7895
      %v7920 = vpack.c.b16 %v7896, %v7896
      %v7921 = vpack.c.b16 %v7897, %v7897
      %v7922 = vpack.c.b16 %v7898, %v7898
      %v7923 = vpack.c.b16 %v7899, %v7899
      %v7924 = vpack.c.b16 %v7900, %v7900
      %v7925 = vpack.c.b16 %v7901, %v7901
      %v7926 = vpack.c.b16 %v7902, %v7902
      %v7927 = vpack.c.b16 %v7903, %v7903
      %v7928 = vpack.c.b16 %v7904, %v7904
      %v7929 = vpack.c.b16 %v7905, %v7905
      %v7930 = vpack.c.b16 %v7906, %v7906
      %v7931 = vpack.c.b16 %v7907, %v7907
      %v7932 = vpack.c.b16 %v7908, %v7908
      %v7933 = vpack.c.b16 %v7909, %v7909
      %v7934 = vpack.c.b16 %v7910, %v7910
      %v7935 = vpack.c.b16 %v7911, %v7911
      %v7936 = vpack.c.b16 %v7912, %v7912
      %v7937 = vpack.c.b16 %v7913, %v7913
      %v7938 = vpack.c.b16 %v7914, %v7914
      %v7939 = vpack.c.b16 %v7915, %v7915
      %7964 = vst.msk [vmem:[#allocation3 + $0x10] sm:$0xf] %vm7839, %v7916
      %7965 = vst.msk [vmem:[#allocation3 + $0x14] sm:$0xf] %vm7839, %v7917
      %7966 = vst.msk [vmem:[#allocation3 + $0x18] sm:$0xf] %vm7839, %v7918
      %7967 = vst.msk [vmem:[#allocation3 + $0x1c] sm:$0xf] %vm7839, %v7919
      %7968 = vst.msk [vmem:[#allocation3 + $0x20] sm:$0xf] %vm7839, %v7920
      %7969 = vst.msk [vmem:[#allocation3 + $0x24] sm:$0xf] %vm7839, %v7921
      %7970 = vst.msk [vmem:[#allocation3 + $0x28] sm:$0xf] %vm7839, %v7922
      %7971 = vst.msk [vmem:[#allocation3 + $0x2c] sm:$0xf] %vm7839, %v7923
      %7972 = vst.msk [vmem:[#allocation3 + $0x30] sm:$0xf] %vm7839, %v7924
      %7973 = vst.msk [vmem:[#allocation3 + $0x34] sm:$0xf] %vm7839, %v7925
      %7974 = vst.msk [vmem:[#allocation3 + $0x38] sm:$0xf] %vm7839, %v7926
      %7975 = vst.msk [vmem:[#allocation3 + $0x3c] sm:$0xf] %vm7839, %v7927
      %7976 = vst.msk [vmem:[#allocation3 + $0x40] sm:$0xf] %vm7839, %v7928
      %7977 = vst.msk [vmem:[#allocation3 + $0x44] sm:$0xf] %vm7839, %v7929
      %7978 = vst.msk [vmem:[#allocation3 + $0x48] sm:$0xf] %vm7839, %v7930
      %7979 = vst.msk [vmem:[#allocation3 + $0x4c] sm:$0xf] %vm7839, %v7931
      %7980 = vst.msk [vmem:[#allocation3 + $0x50] sm:$0xf] %vm7839, %v7932
      %7981 = vst.msk [vmem:[#allocation3 + $0x54] sm:$0xf] %vm7839, %v7933
      %7982 = vst.msk [vmem:[#allocation3 + $0x58] sm:$0xf] %vm7839, %v7934
      %7983 = vst.msk [vmem:[#allocation3 + $0x5c] sm:$0xf] %vm7839, %v7935
      %7984 = vst.msk [vmem:[#allocation3 + $0x60] sm:$0xf] %vm7839, %v7936
      %7985 = vst.msk [vmem:[#allocation3 + $0x64] sm:$0xf] %vm7839, %v7937
      %7986 = vst.msk [vmem:[#allocation3 + $0x68] sm:$0xf] %vm7839, %v7938
      %7987 = vst.msk [vmem:[#allocation3 + $0x6c] sm:$0xf] %vm7839, %v7939
      %7988 = vst.msk [vmem:[#allocation3 + $0x70] sm:$0xf] %vm7839, 0
      %v7989 = vld [vmem:[#allocation3 + $0xc] sm:$0x8]
      %v7990 = vld [vmem:[#allocation3 + $0x10] sm:$0xf]
      %v7991 = vld [vmem:[#allocation3 + $0x14] sm:$0xf]
      %v7992 = vld [vmem:[#allocation3 + $0x18] sm:$0xf]
      %v7993 = vld [vmem:[#allocation3 + $0x1c] sm:$0xf]
      %v7994 = vld [vmem:[#allocation3 + $0x20] sm:$0xf]
      %v7995 = vld [vmem:[#allocation3 + $0x24] sm:$0xf]
      %v7996 = vld [vmem:[#allocation3 + $0x28] sm:$0xf]
      %v7997 = vld [vmem:[#allocation3 + $0x2c] sm:$0xf]
      %v7998 = vld [vmem:[#allocation3 + $0x30] sm:$0xf]
      %v7999 = vld [vmem:[#allocation3 + $0x34] sm:$0xf]
      %v8000 = vld [vmem:[#allocation3 + $0x38] sm:$0xf]
      %v8001 = vld [vmem:[#allocation3 + $0x3c] sm:$0xf]
      %v8002 = vld [vmem:[#allocation3 + $0x40] sm:$0xf]
      %v8003 = vld [vmem:[#allocation3 + $0x44] sm:$0xf]
      %v8004 = vld [vmem:[#allocation3 + $0x48] sm:$0xf]
      %v8005 = vld [vmem:[#allocation3 + $0x4c] sm:$0xf]
      %v8006 = vld [vmem:[#allocation3 + $0x50] sm:$0xf]
      %v8007 = vld [vmem:[#allocation3 + $0x54] sm:$0xf]
      %v8008 = vld [vmem:[%s5] sm:$0xf]
      %v8009 = vld [vmem:[%s5 + $0x4] sm:$0xf]
      %v8010 = vld [vmem:[%s5 + $0x8] sm:$0xf]
      %v8011 = vld [vmem:[%s5 + $0xc] sm:$0xf]
      %v8012 = vld [vmem:[%s5 + $0x10] sm:$0xf]
      %v8013 = vld [vmem:[%s5 + $0x14] sm:$0xf]
      %v8014 = vld [vmem:[%s5 + $0x18] sm:$0xf]
      %v8015 = vld [vmem:[%s5 + $0x1c] sm:$0xf]
      %s8016 = scalar_lea.vmem %s5, 32
      %v8017 = vld [vmem:[%s8016] sm:$0xf]
      %v8018 = vld [vmem:[%s8016 + $0x4] sm:$0xf]
      %v8019 = vld [vmem:[%s8016 + $0x8] sm:$0xf]
      %v8020 = vld [vmem:[%s8016 + $0xc] sm:$0xf]
      %v8021 = vld [vmem:[%s8016 + $0x10] sm:$0xf]
      %v8022 = vld [vmem:[%s8016 + $0x14] sm:$0xf]
      %v8023 = vld [vmem:[%s8016 + $0x18] sm:$0xf]
      %v8024 = vld [vmem:[%s8016 + $0x1c] sm:$0xf]
      %v8043 = vunpack.c.l.b16 %v7990
      %v8044 = vunpack.c.l.b16 %v7991
      %v8045 = vunpack.c.l.b16 %v7992
      %v8046 = vunpack.c.l.b16 %v7993
      %v8047 = vunpack.c.l.b16 %v7994
      %v8048 = vunpack.c.l.b16 %v7995
      %v8049 = vunpack.c.l.b16 %v7996
      %v8050 = vunpack.c.l.b16 %v7997
      %v8051 = vunpack.c.l.b16 %v7998
      %v8052 = vunpack.c.l.b16 %v7999
      %v8053 = vunpack.c.l.b16 %v8000
      %v8054 = vunpack.c.l.b16 %v8001
      %v8055 = vunpack.c.l.b16 %v8002
      %v8056 = vunpack.c.l.b16 %v8003
      %v8057 = vunpack.c.l.b16 %v8004
      %v8058 = vunpack.c.l.b16 %v8005
      %v8059 = vunpack.c.l.b16 %v8006
      %v8060 = vunpack.c.l.b16 %v8007
      %v8061 = vpack.c.b16 %v8044, %v8043
      %v8062 = vpack.c.b16 %v8046, %v8045
      %v8063 = vpack.c.b16 %v8048, %v8047
      %v8064 = vpack.c.b16 %v8050, %v8049
      %v8065 = vpack.c.b16 %v8052, %v8051
      %v8066 = vpack.c.b16 %v8054, %v8053
      %v8067 = vpack.c.b16 %v8056, %v8055
      %v8068 = vpack.c.b16 %v8058, %v8057
      %v8069 = vpack.c.b16 %v8060, %v8059
      %v8078 = vunpack.c.l.b16 %v8017
      %v8079 = vunpack.c.l.b16 %v8018
      %v8080 = vunpack.c.l.b16 %v8019
      %v8081 = vunpack.c.l.b16 %v8020
      %v8082 = vunpack.c.l.b16 %v8021
      %v8083 = vunpack.c.l.b16 %v8022
      %v8084 = vunpack.c.l.b16 %v8023
      %v8085 = vunpack.c.l.b16 %v8024
      %v8086 = vpack.c.b16 %v8079, %v8078
      %v8087 = vpack.c.b16 %v8081, %v8080
      %v8088 = vpack.c.b16 %v8083, %v8082
      %v8089 = vpack.c.b16 %v8085, %v8084
      %vm8094 = vcmask 523264
      %v8096 = vsel %vm8094, %v8061, 0
      %v8099 = vsel %vm8094, %v8062, 0
      %v8102 = vsel %vm8094, %v8063, 0
      %v8105 = vsel %vm8094, %v8064, 0
      %v8108 = vsel %vm8094, %v8065, 0
      %v8111 = vsel %vm8094, %v8066, 0
      %v8114 = vsel %vm8094, %v8067, 0
      %v8117 = vsel %vm8094, %v8068, 0
      %v8120 = vsel %vm8094, %v8069, 0
      %8122 = vmatprep.subr.bf16.mxu0 0
      %8123 = vmatpush1.bf16.msra.mxu0 %v8086
      %8124 = vmatprep.subr.bf16.mxu0 0
      %8125 = vmatpush1.bf16.msra.mxu0 %v8087
      %8126 = vmatprep.subr.bf16.mxu0 0
      %8127 = vmatpush1.bf16.msra.mxu0 %v8088
      %8128 = vmatprep.subr.bf16.mxu0 0
      %8129 = vmatpush1.bf16.msra.mxu0 %v8089
      %8130 = vmatprep.subr.bf16.mxu0 0
      %8131 = vmatpush1.bf16.msra.mxu0 0
      %8132 = vmatprep.subr.bf16.mxu0 0
      %8133 = vmatpush1.bf16.msra.mxu0 0
      %8134 = vmatprep.subr.bf16.mxu0 0
      %8135 = vmatpush1.bf16.msra.mxu0 0
      %8136 = vmatprep.subr.bf16.mxu0 0
      %8137 = vmatpush1.bf16.msra.mxu0 0
      %8138 = vmatprep.subr.bf16.mxu0 0
      %8139 = vmatpush1.bf16.msra.mxu0 0
      %8140 = vmatprep.subr.bf16.mxu0 0
      %8141 = vmatpush1.bf16.msra.mxu0 0
      %8142 = vmatprep.subr.bf16.mxu0 0
      %8143 = vmatpush1.bf16.msra.mxu0 0
      %8144 = vmatprep.subr.bf16.mxu0 0
      %8145 = vmatpush1.bf16.msra.mxu0 0
      %8146 = vmatprep.subr.bf16.mxu0 0
      %8147 = vmatpush1.bf16.msra.mxu0 0
      %8148 = vmatprep.subr.bf16.mxu0 0
      %8149 = vmatpush1.bf16.msra.mxu0 0
      %8150 = vmatprep.subr.bf16.mxu0 0
      %8151 = vmatpush1.bf16.msra.mxu0 0
      %8152 = vmatprep.subr.bf16.mxu0 0
      %8153 = vmatpush1.bf16.msra.mxu0 0
      %8154 = vmatprep.mubr.bf16.mxu0 0
      %8155 = vmatmul.mubr.bf16.gmra.mrb[0].mxu0 %v8096
      %v8156 = vpop.f32.mrb[0].mxu0
      %v8157 = vadd.f32 0.0, %v8156
      %v8158 = vpop.f32.mrb[0].mxu0
      %v8159 = vpop.f32.mrb[0].mxu0
      %v8160 = vadd.f32 0.0, %v8159
      %v8161 = vpop.f32.mrb[0].mxu0
      %8162 = vmatprep.mubr.bf16.mxu0 0
      %8163 = vmatmul.mubr.bf16.gmra.mrb[0].mxu0 %v8099
      %v8164 = vpop.f32.mrb[0].mxu0
      %v8165 = vpop.f32.mrb[0].mxu0
      %v8166 = vpop.f32.mrb[0].mxu0
      %v8167 = vadd.f32 0.0, %v8166
      %v8168 = vpop.f32.mrb[0].mxu0
      %8169 = vmatprep.mubr.bf16.mxu0 0
      %8170 = vmatmul.mubr.bf16.gmra.mrb[0].mxu0 %v8102
      %v8171 = vpop.f32.mrb[0].mxu0
      %v8172 = vadd.f32 0.0, %v8171
      %v8173 = vpop.f32.mrb[0].mxu0
      %v8174 = vpop.f32.mrb[0].mxu0
      %v8175 = vpop.f32.mrb[0].mxu0
      %8176 = vmatprep.mubr.bf16.mxu0 0
      %8177 = vmatmul.mubr.bf16.gmra.mrb[0].mxu0 %v8105
      %v8178 = vpop.f32.mrb[0].mxu0
      %v8179 = vadd.f32 0.0, %v8178
      %v8180 = vpop.f32.mrb[0].mxu0
      %v8181 = vpop.f32.mrb[0].mxu0
      %v8182 = vadd.f32 0.0, %v8181
      %v8183 = vpop.f32.mrb[0].mxu0
      %8184 = vmatprep.mubr.bf16.mxu0 0
      %8185 = vmatmul.mubr.bf16.gmra.mrb[0].mxu0 %v8108
      %v8186 = vpop.f32.mrb[0].mxu0
      %v8187 = vpop.f32.mrb[0].mxu0
      %v8188 = vpop.f32.mrb[0].mxu0
      %v8189 = vadd.f32 0.0, %v8188
      %v8190 = vpop.f32.mrb[0].mxu0
      %8191 = vmatprep.mubr.bf16.mxu0 0
      %8192 = vmatmul.mubr.bf16.gmra.mrb[0].mxu0 %v8111
      %v8193 = vpop.f32.mrb[0].mxu0
      %v8194 = vadd.f32 0.0, %v8193
      %v8195 = vpop.f32.mrb[0].mxu0
      %v8196 = vpop.f32.mrb[0].mxu0
      %v8197 = vpop.f32.mrb[0].mxu0
      %8198 = vmatprep.mubr.bf16.mxu0 0
      %8199 = vmatmul.mubr.bf16.gmra.mrb[0].mxu0 %v8114
      %v8200 = vpop.f32.mrb[0].mxu0
      %v8201 = vadd.f32 0.0, %v8200
      %v8202 = vpop.f32.mrb[0].mxu0
      %v8203 = vpop.f32.mrb[0].mxu0
      %v8204 = vadd.f32 0.0, %v8203
      %v8205 = vpop.f32.mrb[0].mxu0
      %8206 = vmatprep.mubr.bf16.mxu0 0
      %8207 = vmatmul.mubr.bf16.gmra.mrb[0].mxu0 %v8117
      %v8208 = vpop.f32.mrb[0].mxu0
      %v8209 = vpop.f32.mrb[0].mxu0
      %v8210 = vpop.f32.mrb[0].mxu0
      %v8211 = vadd.f32 0.0, %v8210
      %v8212 = vpop.f32.mrb[0].mxu0
      %8213 = vmatprep.mubr.bf16.mxu0 0
      %8214 = vmatmul.mubr.bf16.gmra.mrb[0].mxu0 %v8120
      %v8215 = vpop.f32.mrb[0].mxu0
      %v8216 = vadd.f32 0.0, %v8215
      %v8217 = vpop.f32.mrb[0].mxu0
      %v8218 = vpop.f32.mrb[0].mxu0
      %v8219 = vpop.f32.mrb[0].mxu0
      %8220 = vdwg.mxu0
      %v8222 = vunpack.c.l.b16 %v7989
      %v8223 = vpack.c.b16 %v8043, %v8222
      %v8224 = vpack.c.b16 %v8045, %v8044
      %v8225 = vpack.c.b16 %v8047, %v8046
      %v8226 = vpack.c.b16 %v8049, %v8048
      %v8227 = vpack.c.b16 %v8051, %v8050
      %v8228 = vpack.c.b16 %v8053, %v8052
      %v8229 = vpack.c.b16 %v8055, %v8054
      %v8230 = vpack.c.b16 %v8057, %v8056
      %v8231 = vpack.c.b16 %v8059, %v8058
      %v8232 = vpack.c.b16 %v8060, %v8060
      %v8234 = vshrl.u32 %v8223, 16
      %v8236 = vrot.slane %v8234, 3
      %v8237 = vshll.u32 %v8223, 16
      %v8239 = vrot.slane %v8237, 4
      %v8240 = vor.u32 %v8236, %v8239
      %v8242 = vshrl.u32 %v8224, 16
      %v8244 = vrot.slane %v8242, 3
      %v8245 = vshll.u32 %v8224, 16
      %v8247 = vrot.slane %v8245, 4
      %v8248 = vor.u32 %v8244, %v8247
      %v8249 = vsel %vm4464, %v8240, %v8248
      %v8251 = vshrl.u32 %v8225, 16
      %v8253 = vrot.slane %v8251, 3
      %v8254 = vshll.u32 %v8225, 16
      %v8256 = vrot.slane %v8254, 4
      %v8257 = vor.u32 %v8253, %v8256
      %v8258 = vsel %vm4464, %v8248, %v8257
      %v8260 = vshrl.u32 %v8226, 16
      %v8262 = vrot.slane %v8260, 3
      %v8263 = vshll.u32 %v8226, 16
      %v8265 = vrot.slane %v8263, 4
      %v8266 = vor.u32 %v8262, %v8265
      %v8267 = vsel %vm4464, %v8257, %v8266
      %v8269 = vshrl.u32 %v8227, 16
      %v8271 = vrot.slane %v8269, 3
      %v8272 = vshll.u32 %v8227, 16
      %v8274 = vrot.slane %v8272, 4
      %v8275 = vor.u32 %v8271, %v8274
      %v8276 = vsel %vm4464, %v8266, %v8275
      %v8278 = vshrl.u32 %v8228, 16
      %v8280 = vrot.slane %v8278, 3
      %v8281 = vshll.u32 %v8228, 16
      %v8283 = vrot.slane %v8281, 4
      %v8284 = vor.u32 %v8280, %v8283
      %v8285 = vsel %vm4464, %v8275, %v8284
      %v8287 = vshrl.u32 %v8229, 16
      %v8289 = vrot.slane %v8287, 3
      %v8290 = vshll.u32 %v8229, 16
      %v8292 = vrot.slane %v8290, 4
      %v8293 = vor.u32 %v8289, %v8292
      %v8294 = vsel %vm4464, %v8284, %v8293
      %v8296 = vshrl.u32 %v8230, 16
      %v8298 = vrot.slane %v8296, 3
      %v8299 = vshll.u32 %v8230, 16
      %v8301 = vrot.slane %v8299, 4
      %v8302 = vor.u32 %v8298, %v8301
      %v8303 = vsel %vm4464, %v8293, %v8302
      %v8305 = vshrl.u32 %v8231, 16
      %v8307 = vrot.slane %v8305, 3
      %v8308 = vshll.u32 %v8231, 16
      %v8310 = vrot.slane %v8308, 4
      %v8311 = vor.u32 %v8307, %v8310
      %v8312 = vsel %vm4464, %v8302, %v8311
      %v8314 = vshrl.u32 %v8232, 16
      %v8316 = vrot.slane %v8314, 3
      %v8317 = vshll.u32 %v8232, 16
      %v8319 = vrot.slane %v8317, 4
      %v8320 = vor.u32 %v8316, %v8319
      %v8321 = vsel %vm4464, %v8311, %v8320
      %v8330 = vunpack.c.l.b16 %v8008
      %v8331 = vunpack.c.l.b16 %v8009
      %v8332 = vunpack.c.l.b16 %v8010
      %v8333 = vunpack.c.l.b16 %v8011
      %v8334 = vunpack.c.l.b16 %v8012
      %v8335 = vunpack.c.l.b16 %v8013
      %v8336 = vunpack.c.l.b16 %v8014
      %v8337 = vunpack.c.l.b16 %v8015
      %v8338 = vpack.c.b16 %v8331, %v8330
      %v8339 = vpack.c.b16 %v8333, %v8332
      %v8340 = vpack.c.b16 %v8335, %v8334
      %v8341 = vpack.c.b16 %v8337, %v8336
      %v8347 = vsel %vm8094, %v8249, 0
      %v8350 = vsel %vm8094, %v8258, 0
      %v8353 = vsel %vm8094, %v8267, 0
      %v8356 = vsel %vm8094, %v8276, 0
      %v8359 = vsel %vm8094, %v8285, 0
      %v8362 = vsel %vm8094, %v8294, 0
      %v8365 = vsel %vm8094, %v8303, 0
      %v8368 = vsel %vm8094, %v8312, 0
      %v8371 = vsel %vm8094, %v8321, 0
      %8373 = vmatprep.subr.bf16.mxu0 0
      %8374 = vmatpush1.bf16.msra.mxu0 %v8338
      %8375 = vmatprep.subr.bf16.mxu0 0
      %8376 = vmatpush1.bf16.msra.mxu0 %v8339
      %8377 = vmatprep.subr.bf16.mxu0 0
      %8378 = vmatpush1.bf16.msra.mxu0 %v8340
      %8379 = vmatprep.subr.bf16.mxu0 0
      %8380 = vmatpush1.bf16.msra.mxu0 %v8341
      %8381 = vmatprep.subr.bf16.mxu0 0
      %8382 = vmatpush1.bf16.msra.mxu0 0
      %8383 = vmatprep.subr.bf16.mxu0 0
      %8384 = vmatpush1.bf16.msra.mxu0 0
      %8385 = vmatprep.subr.bf16.mxu0 0
      %8386 = vmatpush1.bf16.msra.mxu0 0
      %8387 = vmatprep.subr.bf16.mxu0 0
      %8388 = vmatpush1.bf16.msra.mxu0 0
      %8389 = vmatprep.subr.bf16.mxu0 0
      %8390 = vmatpush1.bf16.msra.mxu0 0
      %8391 = vmatprep.subr.bf16.mxu0 0
      %8392 = vmatpush1.bf16.msra.mxu0 0
      %8393 = vmatprep.subr.bf16.mxu0 0
      %8394 = vmatpush1.bf16.msra.mxu0 0
      %8395 = vmatprep.subr.bf16.mxu0 0
      %8396 = vmatpush1.bf16.msra.mxu0 0
      %8397 = vmatprep.subr.bf16.mxu0 0
      %8398 = vmatpush1.bf16.msra.mxu0 0
      %8399 = vmatprep.subr.bf16.mxu0 0
      %8400 = vmatpush1.bf16.msra.mxu0 0
      %8401 = vmatprep.subr.bf16.mxu0 0
      %8402 = vmatpush1.bf16.msra.mxu0 0
      %8403 = vmatprep.subr.bf16.mxu0 0
      %8404 = vmatpush1.bf16.msra.mxu0 0
      %8405 = vmatprep.mubr.bf16.mxu0 0
      %8406 = vmatmul.mubr.bf16.gmra.mrb[0].mxu0 %v8347
      %v8407 = vpop.f32.mrb[0].mxu0
      %v8408 = vadd.f32 %v8157, %v8407
      %v8409 = vpop.f32.mrb[0].mxu0
      %v8410 = vpop.f32.mrb[0].mxu0
      %v8411 = vadd.f32 %v8160, %v8410
      %v8412 = vpop.f32.mrb[0].mxu0
      %8413 = vmatprep.mubr.bf16.mxu0 0
      %8414 = vmatmul.mubr.bf16.gmra.mrb[0].mxu0 %v8350
      %v8415 = vpop.f32.mrb[0].mxu0
      %v8416 = vpop.f32.mrb[0].mxu0
      %v8417 = vpop.f32.mrb[0].mxu0
      %v8418 = vadd.f32 %v8167, %v8417
      %v8419 = vpop.f32.mrb[0].mxu0
      %8420 = vmatprep.mubr.bf16.mxu0 0
      %8421 = vmatmul.mubr.bf16.gmra.mrb[0].mxu0 %v8353
      %v8422 = vpop.f32.mrb[0].mxu0
      %v8423 = vadd.f32 %v8172, %v8422
      %v8424 = vpop.f32.mrb[0].mxu0
      %v8425 = vpop.f32.mrb[0].mxu0
      %v8426 = vpop.f32.mrb[0].mxu0
      %8427 = vmatprep.mubr.bf16.mxu0 0
      %8428 = vmatmul.mubr.bf16.gmra.mrb[0].mxu0 %v8356
      %v8429 = vpop.f32.mrb[0].mxu0
      %v8430 = vadd.f32 %v8179, %v8429
      %v8431 = vpop.f32.mrb[0].mxu0
      %v8432 = vpop.f32.mrb[0].mxu0
      %v8433 = vadd.f32 %v8182, %v8432
      %v8434 = vpop.f32.mrb[0].mxu0
      %8435 = vmatprep.mubr.bf16.mxu0 0
      %8436 = vmatmul.mubr.bf16.gmra.mrb[0].mxu0 %v8359
      %v8437 = vpop.f32.mrb[0].mxu0
      %v8438 = vpop.f32.mrb[0].mxu0
      %v8439 = vpop.f32.mrb[0].mxu0
      %v8440 = vadd.f32 %v8189, %v8439
      %v8441 = vpop.f32.mrb[0].mxu0
      %8442 = vmatprep.mubr.bf16.mxu0 0
      %8443 = vmatmul.mubr.bf16.gmra.mrb[0].mxu0 %v8362
      %v8444 = vpop.f32.mrb[0].mxu0
      %v8445 = vadd.f32 %v8194, %v8444
      %v8446 = vpop.f32.mrb[0].mxu0
      %v8447 = vpop.f32.mrb[0].mxu0
      %v8448 = vpop.f32.mrb[0].mxu0
      %8449 = vmatprep.mubr.bf16.mxu0 0
      %8450 = vmatmul.mubr.bf16.gmra.mrb[0].mxu0 %v8365
      %v8451 = vpop.f32.mrb[0].mxu0
      %v8452 = vadd.f32 %v8201, %v8451
      %v8453 = vpop.f32.mrb[0].mxu0
      %v8454 = vpop.f32.mrb[0].mxu0
      %v8455 = vadd.f32 %v8204, %v8454
      %v8456 = vpop.f32.mrb[0].mxu0
      %8457 = vmatprep.mubr.bf16.mxu0 0
      %8458 = vmatmul.mubr.bf16.gmra.mrb[0].mxu0 %v8368
      %v8459 = vpop.f32.mrb[0].mxu0
      %v8460 = vpop.f32.mrb[0].mxu0
      %v8461 = vpop.f32.mrb[0].mxu0
      %v8462 = vadd.f32 %v8211, %v8461
      %v8463 = vpop.f32.mrb[0].mxu0
      %8464 = vmatprep.mubr.bf16.mxu0 0
      %8465 = vmatmul.mubr.bf16.gmra.mrb[0].mxu0 %v8371
      %v8466 = vpop.f32.mrb[0].mxu0
      %v8467 = vadd.f32 %v8216, %v8466
      %v8468 = vpop.f32.mrb[0].mxu0
      %v8469 = vpop.f32.mrb[0].mxu0
      %v8470 = vpop.f32.mrb[0].mxu0
      %8471 = vdwg.mxu0
      %v8472 = vld [vmem:[#allocation3 + $0x10] sm:$0xf]
      %v8473 = vld [vmem:[#allocation3 + $0x14] sm:$0xf]
      %v8474 = vld [vmem:[#allocation3 + $0x18] sm:$0xf]
      %v8475 = vld [vmem:[#allocation3 + $0x1c] sm:$0xf]
      %v8476 = vld [vmem:[#allocation3 + $0x20] sm:$0xf]
      %v8477 = vld [vmem:[#allocation3 + $0x24] sm:$0xf]
      %v8478 = vld [vmem:[#allocation3 + $0x28] sm:$0xf]
      %v8479 = vld [vmem:[#allocation3 + $0x2c] sm:$0xf]
      %v8480 = vld [vmem:[#allocation3 + $0x30] sm:$0xf]
      %v8481 = vld [vmem:[#allocation3 + $0x34] sm:$0xf]
      %v8482 = vld [vmem:[#allocation3 + $0x38] sm:$0xf]
      %v8483 = vld [vmem:[#allocation3 + $0x3c] sm:$0xf]
      %v8484 = vld [vmem:[#allocation3 + $0x40] sm:$0xf]
      %v8485 = vld [vmem:[#allocation3 + $0x44] sm:$0xf]
      %v8486 = vld [vmem:[#allocation3 + $0x48] sm:$0xf]
      %v8487 = vld [vmem:[#allocation3 + $0x4c] sm:$0xf]
      %v8488 = vld [vmem:[#allocation3 + $0x50] sm:$0xf]
      %v8489 = vld [vmem:[#allocation3 + $0x54] sm:$0xf]
      %v8490 = vld [vmem:[#allocation3 + $0x58] sm:$0x1]
      %s8491 = scalar_lea.vmem %s5, 64
      %v8492 = vld [vmem:[%s8491] sm:$0xf]
      %v8493 = vld [vmem:[%s8491 + $0x4] sm:$0xf]
      %v8494 = vld [vmem:[%s8491 + $0x8] sm:$0xf]
      %v8495 = vld [vmem:[%s8491 + $0xc] sm:$0xf]
      %v8496 = vld [vmem:[%s8491 + $0x10] sm:$0xf]
      %v8497 = vld [vmem:[%s8491 + $0x14] sm:$0xf]
      %v8498 = vld [vmem:[%s8491 + $0x18] sm:$0xf]
      %v8499 = vld [vmem:[%s8491 + $0x1c] sm:$0xf]
      %v8519 = vunpack.c.l.b16 %v8472
      %v8520 = vunpack.c.l.b16 %v8473
      %v8521 = vunpack.c.l.b16 %v8474
      %v8522 = vunpack.c.l.b16 %v8475
      %v8523 = vunpack.c.l.b16 %v8476
      %v8524 = vunpack.c.l.b16 %v8477
      %v8525 = vunpack.c.l.b16 %v8478
      %v8526 = vunpack.c.l.b16 %v8479
      %v8527 = vunpack.c.l.b16 %v8480
      %v8528 = vunpack.c.l.b16 %v8481
      %v8529 = vunpack.c.l.b16 %v8482
      %v8530 = vunpack.c.l.b16 %v8483
      %v8531 = vunpack.c.l.b16 %v8484
      %v8532 = vunpack.c.l.b16 %v8485
      %v8533 = vunpack.c.l.b16 %v8486
      %v8534 = vunpack.c.l.b16 %v8487
      %v8535 = vunpack.c.l.b16 %v8488
      %v8536 = vunpack.c.l.b16 %v8489
      %v8537 = vunpack.c.l.b16 %v8490
      %v8538 = vpack.c.b16 %v8520, %v8519
      %v8539 = vpack.c.b16 %v8522, %v8521
      %v8540 = vpack.c.b16 %v8524, %v8523
      %v8541 = vpack.c.b16 %v8526, %v8525
      %v8542 = vpack.c.b16 %v8528, %v8527
      %v8543 = vpack.c.b16 %v8530, %v8529
      %v8544 = vpack.c.b16 %v8532, %v8531
      %v8545 = vpack.c.b16 %v8534, %v8533
      %v8546 = vpack.c.b16 %v8536, %v8535
      %v8547 = vpack.c.b16 %v8537, %v8537
      %v8549 = vshrl.u32 %v8538, 16
      %v8551 = vshll.u32 %v8538, 16
      %v8553 = vrot.slane %v8551, 1
      %v8554 = vor.u32 %v8549, %v8553
      %v8556 = vshll.u32 %v8539, 16
      %v8558 = vrot.slane %v8556, 1
      %v8559 = vsel %vm439, %v8554, %v8558
      %v8560 = vshrl.u32 %v8539, 16
      %v8562 = vor.u32 %v8560, %v8558
      %v8564 = vshll.u32 %v8540, 16
      %v8566 = vrot.slane %v8564, 1
      %v8567 = vsel %vm439, %v8562, %v8566
      %v8568 = vshrl.u32 %v8540, 16
      %v8570 = vor.u32 %v8568, %v8566
      %v8572 = vshll.u32 %v8541, 16
      %v8574 = vrot.slane %v8572, 1
      %v8575 = vsel %vm439, %v8570, %v8574
      %v8576 = vshrl.u32 %v8541, 16
      %v8578 = vor.u32 %v8576, %v8574
      %v8580 = vshll.u32 %v8542, 16
      %v8582 = vrot.slane %v8580, 1
      %v8583 = vsel %vm439, %v8578, %v8582
      %v8584 = vshrl.u32 %v8542, 16
      %v8586 = vor.u32 %v8584, %v8582
      %v8588 = vshll.u32 %v8543, 16
      %v8590 = vrot.slane %v8588, 1
      %v8591 = vsel %vm439, %v8586, %v8590
      %v8592 = vshrl.u32 %v8543, 16
      %v8594 = vor.u32 %v8592, %v8590
      %v8596 = vshll.u32 %v8544, 16
      %v8598 = vrot.slane %v8596, 1
      %v8599 = vsel %vm439, %v8594, %v8598
      %v8600 = vshrl.u32 %v8544, 16
      %v8602 = vor.u32 %v8600, %v8598
      %v8604 = vshll.u32 %v8545, 16
      %v8606 = vrot.slane %v8604, 1
      %v8607 = vsel %vm439, %v8602, %v8606
      %v8608 = vshrl.u32 %v8545, 16
      %v8610 = vor.u32 %v8608, %v8606
      %v8612 = vshll.u32 %v8546, 16
      %v8614 = vrot.slane %v8612, 1
      %v8615 = vsel %vm439, %v8610, %v8614
      %v8616 = vshrl.u32 %v8546, 16
      %v8618 = vor.u32 %v8616, %v8614
      %v8620 = vshll.u32 %v8547, 16
      %v8622 = vrot.slane %v8620, 1
      %v8623 = vsel %vm439, %v8618, %v8622
      %v8632 = vunpack.c.l.b16 %v8492
      %v8633 = vunpack.c.l.b16 %v8493
      %v8634 = vunpack.c.l.b16 %v8494
      %v8635 = vunpack.c.l.b16 %v8495
      %v8636 = vunpack.c.l.b16 %v8496
      %v8637 = vunpack.c.l.b16 %v8497
      %v8638 = vunpack.c.l.b16 %v8498
      %v8639 = vunpack.c.l.b16 %v8499
      %v8640 = vpack.c.b16 %v8633, %v8632
      %v8641 = vpack.c.b16 %v8635, %v8634
      %v8642 = vpack.c.b16 %v8637, %v8636
      %v8643 = vpack.c.b16 %v8639, %v8638
      %v8649 = vsel %vm8094, %v8559, 0
      %v8652 = vsel %vm8094, %v8567, 0
      %v8655 = vsel %vm8094, %v8575, 0
      %v8658 = vsel %vm8094, %v8583, 0
      %v8661 = vsel %vm8094, %v8591, 0
      %v8664 = vsel %vm8094, %v8599, 0
      %v8667 = vsel %vm8094, %v8607, 0
      %v8670 = vsel %vm8094, %v8615, 0
      %v8673 = vsel %vm8094, %v8623, 0
      %8675 = vmatprep.subr.bf16.mxu0 0
      %8676 = vmatpush1.bf16.msra.mxu0 %v8640
      %8677 = vmatprep.subr.bf16.mxu0 0
      %8678 = vmatpush1.bf16.msra.mxu0 %v8641
      %8679 = vmatprep.subr.bf16.mxu0 0
      %8680 = vmatpush1.bf16.msra.mxu0 %v8642
      %8681 = vmatprep.subr.bf16.mxu0 0
      %8682 = vmatpush1.bf16.msra.mxu0 %v8643
      %8683 = vmatprep.subr.bf16.mxu0 0
      %8684 = vmatpush1.bf16.msra.mxu0 0
      %8685 = vmatprep.subr.bf16.mxu0 0
      %8686 = vmatpush1.bf16.msra.mxu0 0
      %8687 = vmatprep.subr.bf16.mxu0 0
      %8688 = vmatpush1.bf16.msra.mxu0 0
      %8689 = vmatprep.subr.bf16.mxu0 0
      %8690 = vmatpush1.bf16.msra.mxu0 0
      %8691 = vmatprep.subr.bf16.mxu0 0
      %8692 = vmatpush1.bf16.msra.mxu0 0
      %8693 = vmatprep.subr.bf16.mxu0 0
      %8694 = vmatpush1.bf16.msra.mxu0 0
      %8695 = vmatprep.subr.bf16.mxu0 0
      %8696 = vmatpush1.bf16.msra.mxu0 0
      %8697 = vmatprep.subr.bf16.mxu0 0
      %8698 = vmatpush1.bf16.msra.mxu0 0
      %8699 = vmatprep.subr.bf16.mxu0 0
      %8700 = vmatpush1.bf16.msra.mxu0 0
      %8701 = vmatprep.subr.bf16.mxu0 0
      %8702 = vmatpush1.bf16.msra.mxu0 0
      %8703 = vmatprep.subr.bf16.mxu0 0
      %8704 = vmatpush1.bf16.msra.mxu0 0
      %8705 = vmatprep.subr.bf16.mxu0 0
      %8706 = vmatpush1.bf16.msra.mxu0 0
      %8707 = vmatprep.mubr.bf16.mxu0 0
      %8708 = vmatmul.mubr.bf16.gmra.mrb[0].mxu0 %v8649
      %v8709 = vpop.f32.mrb[0].mxu0
      %v8710 = vadd.f32 0.0, %v8709
      %v8711 = vpop.f32.mrb[0].mxu0
      %v8712 = vpop.f32.mrb[0].mxu0
      %v8713 = vadd.f32 0.0, %v8712
      %v8714 = vpop.f32.mrb[0].mxu0
      %8715 = vmatprep.mubr.bf16.mxu0 0
      %8716 = vmatmul.mubr.bf16.gmra.mrb[0].mxu0 %v8652
      %v8717 = vpop.f32.mrb[0].mxu0
      %v8718 = vpop.f32.mrb[0].mxu0
      %v8719 = vpop.f32.mrb[0].mxu0
      %v8720 = vadd.f32 0.0, %v8719
      %v8721 = vpop.f32.mrb[0].mxu0
      %8722 = vmatprep.mubr.bf16.mxu0 0
      %8723 = vmatmul.mubr.bf16.gmra.mrb[0].mxu0 %v8655
      %v8724 = vpop.f32.mrb[0].mxu0
      %v8725 = vadd.f32 0.0, %v8724
      %v8726 = vpop.f32.mrb[0].mxu0
      %v8727 = vpop.f32.mrb[0].mxu0
      %v8728 = vpop.f32.mrb[0].mxu0
      %8729 = vmatprep.mubr.bf16.mxu0 0
      %8730 = vmatmul.mubr.bf16.gmra.mrb[0].mxu0 %v8658
      %v8731 = vpop.f32.mrb[0].mxu0
      %v8732 = vadd.f32 0.0, %v8731
      %v8733 = vpop.f32.mrb[0].mxu0
      %v8734 = vpop.f32.mrb[0].mxu0
      %v8735 = vadd.f32 0.0, %v8734
      %v8736 = vpop.f32.mrb[0].mxu0
      %8737 = vmatprep.mubr.bf16.mxu0 0
      %8738 = vmatmul.mubr.bf16.gmra.mrb[0].mxu0 %v8661
      %v8739 = vpop.f32.mrb[0].mxu0
      %v8740 = vpop.f32.mrb[0].mxu0
      %v8741 = vpop.f32.mrb[0].mxu0
      %v8742 = vadd.f32 0.0, %v8741
      %v8743 = vpop.f32.mrb[0].mxu0
      %8744 = vmatprep.mubr.bf16.mxu0 0
      %8745 = vmatmul.mubr.bf16.gmra.mrb[0].mxu0 %v8664
      %v8746 = vpop.f32.mrb[0].mxu0
      %v8747 = vadd.f32 0.0, %v8746
      %v8748 = vpop.f32.mrb[0].mxu0
      %v8749 = vpop.f32.mrb[0].mxu0
      %v8750 = vpop.f32.mrb[0].mxu0
      %8751 = vmatprep.mubr.bf16.mxu0 0
      %8752 = vmatmul.mubr.bf16.gmra.mrb[0].mxu0 %v8667
      %v8753 = vpop.f32.mrb[0].mxu0
      %v8754 = vadd.f32 0.0, %v8753
      %v8755 = vpop.f32.mrb[0].mxu0
      %v8756 = vpop.f32.mrb[0].mxu0
      %v8757 = vadd.f32 0.0, %v8756
      %v8758 = vpop.f32.mrb[0].mxu0
      %8759 = vmatprep.mubr.bf16.mxu0 0
      %8760 = vmatmul.mubr.bf16.gmra.mrb[0].mxu0 %v8670
      %v8761 = vpop.f32.mrb[0].mxu0
      %v8762 = vpop.f32.mrb[0].mxu0
      %v8763 = vpop.f32.mrb[0].mxu0
      %v8764 = vadd.f32 0.0, %v8763
      %v8765 = vpop.f32.mrb[0].mxu0
      %8766 = vmatprep.mubr.bf16.mxu0 0
      %8767 = vmatmul.mubr.bf16.gmra.mrb[0].mxu0 %v8673
      %v8768 = vpop.f32.mrb[0].mxu0
      %v8769 = vadd.f32 0.0, %v8768
      %v8770 = vpop.f32.mrb[0].mxu0
      %v8771 = vpop.f32.mrb[0].mxu0
      %v8772 = vpop.f32.mrb[0].mxu0
      %8773 = vdwg.mxu0
      %v8774 = vadd.f32 %v8408, %v8710
      %v8775 = vadd.f32 %v8411, %v8713
      %v8776 = vadd.f32 %v8418, %v8720
      %v8777 = vadd.f32 %v8423, %v8725
      %v8778 = vadd.f32 %v8430, %v8732
      %v8779 = vadd.f32 %v8433, %v8735
      %v8780 = vadd.f32 %v8440, %v8742
      %v8781 = vadd.f32 %v8445, %v8747
      %v8782 = vadd.f32 %v8452, %v8754
      %v8783 = vadd.f32 %v8455, %v8757
      %v8784 = vadd.f32 %v8462, %v8764
      %v8785 = vadd.f32 %v8467, %v8769
      %v8786 = vld [vmem:[#allocation3 + $0x18] sm:$0x8]
      %v8787 = vld [vmem:[#allocation3 + $0x1c] sm:$0xf]
      %v8788 = vld [vmem:[#allocation3 + $0x20] sm:$0xf]
      %v8789 = vld [vmem:[#allocation3 + $0x24] sm:$0xf]
      %v8790 = vld [vmem:[#allocation3 + $0x28] sm:$0xf]
      %v8791 = vld [vmem:[#allocation3 + $0x2c] sm:$0xf]
      %v8792 = vld [vmem:[#allocation3 + $0x30] sm:$0xf]
      %v8793 = vld [vmem:[#allocation3 + $0x34] sm:$0xf]
      %v8794 = vld [vmem:[#allocation3 + $0x38] sm:$0xf]
      %v8795 = vld [vmem:[#allocation3 + $0x3c] sm:$0xf]
      %v8796 = vld [vmem:[#allocation3 + $0x40] sm:$0xf]
      %v8797 = vld [vmem:[#allocation3 + $0x44] sm:$0xf]
      %v8798 = vld [vmem:[#allocation3 + $0x48] sm:$0xf]
      %v8799 = vld [vmem:[#allocation3 + $0x4c] sm:$0xf]
      %v8800 = vld [vmem:[#allocation3 + $0x50] sm:$0xf]
      %v8801 = vld [vmem:[#allocation3 + $0x54] sm:$0xf]
      %v8802 = vld [vmem:[#allocation3 + $0x58] sm:$0xf]
      %v8803 = vld [vmem:[#allocation3 + $0x5c] sm:$0xf]
      %v8804 = vld [vmem:[#allocation3 + $0x60] sm:$0xf]
      %s8805 = scalar_lea.vmem %s5, 96
      %v8806 = vld [vmem:[%s8805] sm:$0xf]
      %v8807 = vld [vmem:[%s8805 + $0x4] sm:$0xf]
      %v8808 = vld [vmem:[%s8805 + $0x8] sm:$0xf]
      %v8809 = vld [vmem:[%s8805 + $0xc] sm:$0xf]
      %v8810 = vld [vmem:[%s8805 + $0x10] sm:$0xf]
      %v8811 = vld [vmem:[%s8805 + $0x14] sm:$0xf]
      %v8812 = vld [vmem:[%s8805 + $0x18] sm:$0xf]
      %v8813 = vld [vmem:[%s8805 + $0x1c] sm:$0xf]
      %v8833 = vunpack.c.l.b16 %v8786
      %v8834 = vunpack.c.l.b16 %v8787
      %v8835 = vunpack.c.l.b16 %v8788
      %v8836 = vunpack.c.l.b16 %v8789
      %v8837 = vunpack.c.l.b16 %v8790
      %v8838 = vunpack.c.l.b16 %v8791
      %v8839 = vunpack.c.l.b16 %v8792
      %v8840 = vunpack.c.l.b16 %v8793
      %v8841 = vunpack.c.l.b16 %v8794
      %v8842 = vunpack.c.l.b16 %v8795
      %v8843 = vunpack.c.l.b16 %v8796
      %v8844 = vunpack.c.l.b16 %v8797
      %v8845 = vunpack.c.l.b16 %v8798
      %v8846 = vunpack.c.l.b16 %v8799
      %v8847 = vunpack.c.l.b16 %v8800
      %v8848 = vunpack.c.l.b16 %v8801
      %v8849 = vunpack.c.l.b16 %v8802
      %v8850 = vunpack.c.l.b16 %v8803
      %v8851 = vunpack.c.l.b16 %v8804
      %v8852 = vpack.c.b16 %v8834, %v8833
      %v8853 = vpack.c.b16 %v8836, %v8835
      %v8854 = vpack.c.b16 %v8838, %v8837
      %v8855 = vpack.c.b16 %v8840, %v8839
      %v8856 = vpack.c.b16 %v8842, %v8841
      %v8857 = vpack.c.b16 %v8844, %v8843
      %v8858 = vpack.c.b16 %v8846, %v8845
      %v8859 = vpack.c.b16 %v8848, %v8847
      %v8860 = vpack.c.b16 %v8850, %v8849
      %v8861 = vpack.c.b16 %v8851, %v8851
      %v8863 = vshrl.u32 %v8852, 16
      %v8865 = vrot.slane %v8863, 3
      %v8866 = vshll.u32 %v8852, 16
      %v8868 = vrot.slane %v8866, 4
      %v8869 = vor.u32 %v8865, %v8868
      %v8871 = vshrl.u32 %v8853, 16
      %v8873 = vrot.slane %v8871, 3
      %v8874 = vshll.u32 %v8853, 16
      %v8876 = vrot.slane %v8874, 4
      %v8877 = vor.u32 %v8873, %v8876
      %v8878 = vsel %vm4464, %v8869, %v8877
      %v8880 = vshrl.u32 %v8854, 16
      %v8882 = vrot.slane %v8880, 3
      %v8883 = vshll.u32 %v8854, 16
      %v8885 = vrot.slane %v8883, 4
      %v8886 = vor.u32 %v8882, %v8885
      %v8887 = vsel %vm4464, %v8877, %v8886
      %v8889 = vshrl.u32 %v8855, 16
      %v8891 = vrot.slane %v8889, 3
      %v8892 = vshll.u32 %v8855, 16
      %v8894 = vrot.slane %v8892, 4
      %v8895 = vor.u32 %v8891, %v8894
      %v8896 = vsel %vm4464, %v8886, %v8895
      %v8898 = vshrl.u32 %v8856, 16
      %v8900 = vrot.slane %v8898, 3
      %v8901 = vshll.u32 %v8856, 16
      %v8903 = vrot.slane %v8901, 4
      %v8904 = vor.u32 %v8900, %v8903
      %v8905 = vsel %vm4464, %v8895, %v8904
      %v8907 = vshrl.u32 %v8857, 16
      %v8909 = vrot.slane %v8907, 3
      %v8910 = vshll.u32 %v8857, 16
      %v8912 = vrot.slane %v8910, 4
      %v8913 = vor.u32 %v8909, %v8912
      %v8914 = vsel %vm4464, %v8904, %v8913
      %v8916 = vshrl.u32 %v8858, 16
      %v8918 = vrot.slane %v8916, 3
      %v8919 = vshll.u32 %v8858, 16
      %v8921 = vrot.slane %v8919, 4
      %v8922 = vor.u32 %v8918, %v8921
      %v8923 = vsel %vm4464, %v8913, %v8922
      %v8925 = vshrl.u32 %v8859, 16
      %v8927 = vrot.slane %v8925, 3
      %v8928 = vshll.u32 %v8859, 16
      %v8930 = vrot.slane %v8928, 4
      %v8931 = vor.u32 %v8927, %v8930
      %v8932 = vsel %vm4464, %v8922, %v8931
      %v8934 = vshrl.u32 %v8860, 16
      %v8936 = vrot.slane %v8934, 3
      %v8937 = vshll.u32 %v8860, 16
      %v8939 = vrot.slane %v8937, 4
      %v8940 = vor.u32 %v8936, %v8939
      %v8941 = vsel %vm4464, %v8931, %v8940
      %v8943 = vshrl.u32 %v8861, 16
      %v8945 = vrot.slane %v8943, 3
      %v8946 = vshll.u32 %v8861, 16
      %v8948 = vrot.slane %v8946, 4
      %v8949 = vor.u32 %v8945, %v8948
      %v8950 = vsel %vm4464, %v8940, %v8949
      %v8959 = vunpack.c.l.b16 %v8806
      %v8960 = vunpack.c.l.b16 %v8807
      %v8961 = vunpack.c.l.b16 %v8808
      %v8962 = vunpack.c.l.b16 %v8809
      %v8963 = vunpack.c.l.b16 %v8810
      %v8964 = vunpack.c.l.b16 %v8811
      %v8965 = vunpack.c.l.b16 %v8812
      %v8966 = vunpack.c.l.b16 %v8813
      %v8967 = vpack.c.b16 %v8960, %v8959
      %v8968 = vpack.c.b16 %v8962, %v8961
      %v8969 = vpack.c.b16 %v8964, %v8963
      %v8970 = vpack.c.b16 %v8966, %v8965
      %v8976 = vsel %vm8094, %v8878, 0
      %v8979 = vsel %vm8094, %v8887, 0
      %v8982 = vsel %vm8094, %v8896, 0
      %v8985 = vsel %vm8094, %v8905, 0
      %v8988 = vsel %vm8094, %v8914, 0
      %v8991 = vsel %vm8094, %v8923, 0
      %v8994 = vsel %vm8094, %v8932, 0
      %v8997 = vsel %vm8094, %v8941, 0
      %v9000 = vsel %vm8094, %v8950, 0
      %9002 = vmatprep.subr.bf16.mxu0 0
      %9003 = vmatpush1.bf16.msra.mxu0 %v8967
      %9004 = vmatprep.subr.bf16.mxu0 0
      %9005 = vmatpush1.bf16.msra.mxu0 %v8968
      %9006 = vmatprep.subr.bf16.mxu0 0
      %9007 = vmatpush1.bf16.msra.mxu0 %v8969
      %9008 = vmatprep.subr.bf16.mxu0 0
      %9009 = vmatpush1.bf16.msra.mxu0 %v8970
      %9010 = vmatprep.subr.bf16.mxu0 0
      %9011 = vmatpush1.bf16.msra.mxu0 0
      %9012 = vmatprep.subr.bf16.mxu0 0
      %9013 = vmatpush1.bf16.msra.mxu0 0
      %9014 = vmatprep.subr.bf16.mxu0 0
      %9015 = vmatpush1.bf16.msra.mxu0 0
      %9016 = vmatprep.subr.bf16.mxu0 0
      %9017 = vmatpush1.bf16.msra.mxu0 0
      %9018 = vmatprep.subr.bf16.mxu0 0
      %9019 = vmatpush1.bf16.msra.mxu0 0
      %9020 = vmatprep.subr.bf16.mxu0 0
      %9021 = vmatpush1.bf16.msra.mxu0 0
      %9022 = vmatprep.subr.bf16.mxu0 0
      %9023 = vmatpush1.bf16.msra.mxu0 0
      %9024 = vmatprep.subr.bf16.mxu0 0
      %9025 = vmatpush1.bf16.msra.mxu0 0
      %9026 = vmatprep.subr.bf16.mxu0 0
      %9027 = vmatpush1.bf16.msra.mxu0 0
      %9028 = vmatprep.subr.bf16.mxu0 0
      %9029 = vmatpush1.bf16.msra.mxu0 0
      %9030 = vmatprep.subr.bf16.mxu0 0
      %9031 = vmatpush1.bf16.msra.mxu0 0
      %9032 = vmatprep.subr.bf16.mxu0 0
      %9033 = vmatpush1.bf16.msra.mxu0 0
      %9034 = vmatprep.mubr.bf16.mxu0 0
      %9035 = vmatmul.mubr.bf16.gmra.mrb[0].mxu0 %v8976
      %v9036 = vpop.f32.mrb[0].mxu0
      %v9037 = vadd.f32 0.0, %v9036
      %v9038 = vpop.f32.mrb[0].mxu0
      %v9039 = vpop.f32.mrb[0].mxu0
      %v9040 = vadd.f32 0.0, %v9039
      %v9041 = vpop.f32.mrb[0].mxu0
      %9042 = vmatprep.mubr.bf16.mxu0 0
      %9043 = vmatmul.mubr.bf16.gmra.mrb[0].mxu0 %v8979
      %v9044 = vpop.f32.mrb[0].mxu0
      %v9045 = vpop.f32.mrb[0].mxu0
      %v9046 = vpop.f32.mrb[0].mxu0
      %v9047 = vadd.f32 0.0, %v9046
      %v9048 = vpop.f32.mrb[0].mxu0
      %9049 = vmatprep.mubr.bf16.mxu0 0
      %9050 = vmatmul.mubr.bf16.gmra.mrb[0].mxu0 %v8982
      %v9051 = vpop.f32.mrb[0].mxu0
      %v9052 = vadd.f32 0.0, %v9051
      %v9053 = vpop.f32.mrb[0].mxu0
      %v9054 = vpop.f32.mrb[0].mxu0
      %v9055 = vpop.f32.mrb[0].mxu0
      %9056 = vmatprep.mubr.bf16.mxu0 0
      %9057 = vmatmul.mubr.bf16.gmra.mrb[0].mxu0 %v8985
      %v9058 = vpop.f32.mrb[0].mxu0
      %v9059 = vadd.f32 0.0, %v9058
      %v9060 = vpop.f32.mrb[0].mxu0
      %v9061 = vpop.f32.mrb[0].mxu0
      %v9062 = vadd.f32 0.0, %v9061
      %v9063 = vpop.f32.mrb[0].mxu0
      %9064 = vmatprep.mubr.bf16.mxu0 0
      %9065 = vmatmul.mubr.bf16.gmra.mrb[0].mxu0 %v8988
      %v9066 = vpop.f32.mrb[0].mxu0
      %v9067 = vpop.f32.mrb[0].mxu0
      %v9068 = vpop.f32.mrb[0].mxu0
      %v9069 = vadd.f32 0.0, %v9068
      %v9070 = vpop.f32.mrb[0].mxu0
      %9071 = vmatprep.mubr.bf16.mxu0 0
      %9072 = vmatmul.mubr.bf16.gmra.mrb[0].mxu0 %v8991
      %v9073 = vpop.f32.mrb[0].mxu0
      %v9074 = vadd.f32 0.0, %v9073
      %v9075 = vpop.f32.mrb[0].mxu0
      %v9076 = vpop.f32.mrb[0].mxu0
      %v9077 = vpop.f32.mrb[0].mxu0
      %9078 = vmatprep.mubr.bf16.mxu0 0
      %9079 = vmatmul.mubr.bf16.gmra.mrb[0].mxu0 %v8994
      %v9080 = vpop.f32.mrb[0].mxu0
      %v9081 = vadd.f32 0.0, %v9080
      %v9082 = vpop.f32.mrb[0].mxu0
      %v9083 = vpop.f32.mrb[0].mxu0
      %v9084 = vadd.f32 0.0, %v9083
      %v9085 = vpop.f32.mrb[0].mxu0
      %9086 = vmatprep.mubr.bf16.mxu0 0
      %9087 = vmatmul.mubr.bf16.gmra.mrb[0].mxu0 %v8997
      %v9088 = vpop.f32.mrb[0].mxu0
      %v9089 = vpop.f32.mrb[0].mxu0
      %v9090 = vpop.f32.mrb[0].mxu0
      %v9091 = vadd.f32 0.0, %v9090
      %v9092 = vpop.f32.mrb[0].mxu0
      %9093 = vmatprep.mubr.bf16.mxu0 0
      %9094 = vmatmul.mubr.bf16.gmra.mrb[0].mxu0 %v9000
      %v9095 = vpop.f32.mrb[0].mxu0
      %v9096 = vadd.f32 0.0, %v9095
      %v9097 = vpop.f32.mrb[0].mxu0
      %v9098 = vpop.f32.mrb[0].mxu0
      %v9099 = vpop.f32.mrb[0].mxu0
      %9100 = vdwg.mxu0
      %v9101 = vadd.f32 %v8774, %v9037
      %v9102 = vadd.f32 %v8775, %v9040
      %v9103 = vadd.f32 %v8776, %v9047
      %v9104 = vadd.f32 %v8777, %v9052
      %v9105 = vadd.f32 %v8778, %v9059
      %v9106 = vadd.f32 %v8779, %v9062
      %v9107 = vadd.f32 %v8780, %v9069
      %v9108 = vadd.f32 %v8781, %v9074
      %v9109 = vadd.f32 %v8782, %v9081
      %v9110 = vadd.f32 %v8783, %v9084
      %v9111 = vadd.f32 %v8784, %v9091
      %v9112 = vadd.f32 %v8785, %v9096
      %s9113 = scalar_lea.vmem %s5, 128
      %v9114 = vld [vmem:[%s9113] sm:$0xf]
      %v9115 = vld [vmem:[%s9113 + $0x4] sm:$0xf]
      %v9116 = vld [vmem:[%s9113 + $0x8] sm:$0xf]
      %v9117 = vld [vmem:[%s9113 + $0xc] sm:$0xf]
      %v9118 = vld [vmem:[%s9113 + $0x10] sm:$0xf]
      %v9119 = vld [vmem:[%s9113 + $0x14] sm:$0xf]
      %v9120 = vld [vmem:[%s9113 + $0x18] sm:$0xf]
      %v9121 = vld [vmem:[%s9113 + $0x1c] sm:$0xf]
      %v9122 = vpack.c.b16 %v8835, %v8834
      %v9123 = vpack.c.b16 %v8837, %v8836
      %v9124 = vpack.c.b16 %v8839, %v8838
      %v9125 = vpack.c.b16 %v8841, %v8840
      %v9126 = vpack.c.b16 %v8843, %v8842
      %v9127 = vpack.c.b16 %v8845, %v8844
      %v9128 = vpack.c.b16 %v8847, %v8846
      %v9129 = vpack.c.b16 %v8849, %v8848
      %v9130 = vpack.c.b16 %v8851, %v8850
      %v9139 = vunpack.c.l.b16 %v9114
      %v9140 = vunpack.c.l.b16 %v9115
      %v9141 = vunpack.c.l.b16 %v9116
      %v9142 = vunpack.c.l.b16 %v9117
      %v9143 = vunpack.c.l.b16 %v9118
      %v9144 = vunpack.c.l.b16 %v9119
      %v9145 = vunpack.c.l.b16 %v9120
      %v9146 = vunpack.c.l.b16 %v9121
      %v9147 = vpack.c.b16 %v9140, %v9139
      %v9148 = vpack.c.b16 %v9142, %v9141
      %v9149 = vpack.c.b16 %v9144, %v9143
      %v9150 = vpack.c.b16 %v9146, %v9145
      %v9156 = vsel %vm8094, %v9122, 0
      %v9159 = vsel %vm8094, %v9123, 0
      %v9162 = vsel %vm8094, %v9124, 0
      %v9165 = vsel %vm8094, %v9125, 0
      %v9168 = vsel %vm8094, %v9126, 0
      %v9171 = vsel %vm8094, %v9127, 0
      %v9174 = vsel %vm8094, %v9128, 0
      %v9177 = vsel %vm8094, %v9129, 0
      %v9180 = vsel %vm8094, %v9130, 0
      %9182 = vmatprep.subr.bf16.mxu0 0
      %9183 = vmatpush1.bf16.msra.mxu0 %v9147
      %9184 = vmatprep.subr.bf16.mxu0 0
      %9185 = vmatpush1.bf16.msra.mxu0 %v9148
      %9186 = vmatprep.subr.bf16.mxu0 0
      %9187 = vmatpush1.bf16.msra.mxu0 %v9149
      %9188 = vmatprep.subr.bf16.mxu0 0
      %9189 = vmatpush1.bf16.msra.mxu0 %v9150
      %9190 = vmatprep.subr.bf16.mxu0 0
      %9191 = vmatpush1.bf16.msra.mxu0 0
      %9192 = vmatprep.subr.bf16.mxu0 0
      %9193 = vmatpush1.bf16.msra.mxu0 0
      %9194 = vmatprep.subr.bf16.mxu0 0
      %9195 = vmatpush1.bf16.msra.mxu0 0
      %9196 = vmatprep.subr.bf16.mxu0 0
      %9197 = vmatpush1.bf16.msra.mxu0 0
      %9198 = vmatprep.subr.bf16.mxu0 0
      %9199 = vmatpush1.bf16.msra.mxu0 0
      %9200 = vmatprep.subr.bf16.mxu0 0
      %9201 = vmatpush1.bf16.msra.mxu0 0
      %9202 = vmatprep.subr.bf16.mxu0 0
      %9203 = vmatpush1.bf16.msra.mxu0 0
      %9204 = vmatprep.subr.bf16.mxu0 0
      %9205 = vmatpush1.bf16.msra.mxu0 0
      %9206 = vmatprep.subr.bf16.mxu0 0
      %9207 = vmatpush1.bf16.msra.mxu0 0
      %9208 = vmatprep.subr.bf16.mxu0 0
      %9209 = vmatpush1.bf16.msra.mxu0 0
      %9210 = vmatprep.subr.bf16.mxu0 0
      %9211 = vmatpush1.bf16.msra.mxu0 0
      %9212 = vmatprep.subr.bf16.mxu0 0
      %9213 = vmatpush1.bf16.msra.mxu0 0
      %9214 = vmatprep.mubr.bf16.mxu0 0
      %9215 = vmatmul.mubr.bf16.gmra.mrb[0].mxu0 %v9156
      %v9216 = vpop.f32.mrb[0].mxu0
      %v9217 = vadd.f32 0.0, %v9216
      %v9218 = vpop.f32.mrb[0].mxu0
      %v9219 = vpop.f32.mrb[0].mxu0
      %v9220 = vadd.f32 0.0, %v9219
      %v9221 = vpop.f32.mrb[0].mxu0
      %9222 = vmatprep.mubr.bf16.mxu0 0
      %9223 = vmatmul.mubr.bf16.gmra.mrb[0].mxu0 %v9159
      %v9224 = vpop.f32.mrb[0].mxu0
      %v9225 = vpop.f32.mrb[0].mxu0
      %v9226 = vpop.f32.mrb[0].mxu0
      %v9227 = vadd.f32 0.0, %v9226
      %v9228 = vpop.f32.mrb[0].mxu0
      %9229 = vmatprep.mubr.bf16.mxu0 0
      %9230 = vmatmul.mubr.bf16.gmra.mrb[0].mxu0 %v9162
      %v9231 = vpop.f32.mrb[0].mxu0
      %v9232 = vadd.f32 0.0, %v9231
      %v9233 = vpop.f32.mrb[0].mxu0
      %v9234 = vpop.f32.mrb[0].mxu0
      %v9235 = vpop.f32.mrb[0].mxu0
      %9236 = vmatprep.mubr.bf16.mxu0 0
      %9237 = vmatmul.mubr.bf16.gmra.mrb[0].mxu0 %v9165
      %v9238 = vpop.f32.mrb[0].mxu0
      %v9239 = vadd.f32 0.0, %v9238
      %v9240 = vpop.f32.mrb[0].mxu0
      %v9241 = vpop.f32.mrb[0].mxu0
      %v9242 = vadd.f32 0.0, %v9241
      %v9243 = vpop.f32.mrb[0].mxu0
      %9244 = vmatprep.mubr.bf16.mxu0 0
      %9245 = vmatmul.mubr.bf16.gmra.mrb[0].mxu0 %v9168
      %v9246 = vpop.f32.mrb[0].mxu0
      %v9247 = vpop.f32.mrb[0].mxu0
      %v9248 = vpop.f32.mrb[0].mxu0
      %v9249 = vadd.f32 0.0, %v9248
      %v9250 = vpop.f32.mrb[0].mxu0
      %9251 = vmatprep.mubr.bf16.mxu0 0
      %9252 = vmatmul.mubr.bf16.gmra.mrb[0].mxu0 %v9171
      %v9253 = vpop.f32.mrb[0].mxu0
      %v9254 = vadd.f32 0.0, %v9253
      %v9255 = vpop.f32.mrb[0].mxu0
      %v9256 = vpop.f32.mrb[0].mxu0
      %v9257 = vpop.f32.mrb[0].mxu0
      %9258 = vmatprep.mubr.bf16.mxu0 0
      %9259 = vmatmul.mubr.bf16.gmra.mrb[0].mxu0 %v9174
      %v9260 = vpop.f32.mrb[0].mxu0
      %v9261 = vadd.f32 0.0, %v9260
      %v9262 = vpop.f32.mrb[0].mxu0
      %v9263 = vpop.f32.mrb[0].mxu0
      %v9264 = vadd.f32 0.0, %v9263
      %v9265 = vpop.f32.mrb[0].mxu0
      %9266 = vmatprep.mubr.bf16.mxu0 0
      %9267 = vmatmul.mubr.bf16.gmra.mrb[0].mxu0 %v9177
      %v9268 = vpop.f32.mrb[0].mxu0
      %v9269 = vpop.f32.mrb[0].mxu0
      %v9270 = vpop.f32.mrb[0].mxu0
      %v9271 = vadd.f32 0.0, %v9270
      %v9272 = vpop.f32.mrb[0].mxu0
      %9273 = vmatprep.mubr.bf16.mxu0 0
      %9274 = vmatmul.mubr.bf16.gmra.mrb[0].mxu0 %v9180
      %v9275 = vpop.f32.mrb[0].mxu0
      %v9276 = vadd.f32 0.0, %v9275
      %v9277 = vpop.f32.mrb[0].mxu0
      %v9278 = vpop.f32.mrb[0].mxu0
      %v9279 = vpop.f32.mrb[0].mxu0
      %9280 = vdwg.mxu0
      %v9281 = vadd.f32 %v9101, %v9217
      %v9282 = vadd.f32 %v9102, %v9220
      %v9283 = vadd.f32 %v9103, %v9227
      %v9284 = vadd.f32 %v9104, %v9232
      %v9285 = vadd.f32 %v9105, %v9239
      %v9286 = vadd.f32 %v9106, %v9242
      %v9287 = vadd.f32 %v9107, %v9249
      %v9288 = vadd.f32 %v9108, %v9254
      %v9289 = vadd.f32 %v9109, %v9261
      %v9290 = vadd.f32 %v9110, %v9264
      %v9291 = vadd.f32 %v9111, %v9271
      %v9292 = vadd.f32 %v9112, %v9276
      %v9293 = vld [vmem:[#allocation3 + $0x1c] sm:$0xf]
      %v9294 = vld [vmem:[#allocation3 + $0x20] sm:$0xf]
      %v9295 = vld [vmem:[#allocation3 + $0x24] sm:$0xf]
      %v9296 = vld [vmem:[#allocation3 + $0x28] sm:$0xf]
      %v9297 = vld [vmem:[#allocation3 + $0x2c] sm:$0xf]
      %v9298 = vld [vmem:[#allocation3 + $0x30] sm:$0xf]
      %v9299 = vld [vmem:[#allocation3 + $0x34] sm:$0xf]
      %v9300 = vld [vmem:[#allocation3 + $0x38] sm:$0xf]
      %v9301 = vld [vmem:[#allocation3 + $0x3c] sm:$0xf]
      %v9302 = vld [vmem:[#allocation3 + $0x40] sm:$0xf]
      %v9303 = vld [vmem:[#allocation3 + $0x44] sm:$0xf]
      %v9304 = vld [vmem:[#allocation3 + $0x48] sm:$0xf]
      %v9305 = vld [vmem:[#allocation3 + $0x4c] sm:$0xf]
      %v9306 = vld [vmem:[#allocation3 + $0x50] sm:$0xf]
      %v9307 = vld [vmem:[#allocation3 + $0x54] sm:$0xf]
      %v9308 = vld [vmem:[#allocation3 + $0x58] sm:$0xf]
      %v9309 = vld [vmem:[#allocation3 + $0x5c] sm:$0xf]
      %v9310 = vld [vmem:[#allocation3 + $0x60] sm:$0xf]
      %v9311 = vld [vmem:[#allocation3 + $0x64] sm:$0x1]
      %s9312 = scalar_lea.vmem %s5, 160
      %v9313 = vld [vmem:[%s9312] sm:$0xf]
      %v9314 = vld [vmem:[%s9312 + $0x4] sm:$0xf]
      %v9315 = vld [vmem:[%s9312 + $0x8] sm:$0xf]
      %v9316 = vld [vmem:[%s9312 + $0xc] sm:$0xf]
      %v9317 = vld [vmem:[%s9312 + $0x10] sm:$0xf]
      %v9318 = vld [vmem:[%s9312 + $0x14] sm:$0xf]
      %v9319 = vld [vmem:[%s9312 + $0x18] sm:$0xf]
      %v9320 = vld [vmem:[%s9312 + $0x1c] sm:$0xf]
      %v9340 = vunpack.c.l.b16 %v9293
      %v9341 = vunpack.c.l.b16 %v9294
      %v9342 = vunpack.c.l.b16 %v9295
      %v9343 = vunpack.c.l.b16 %v9296
      %v9344 = vunpack.c.l.b16 %v9297
      %v9345 = vunpack.c.l.b16 %v9298
      %v9346 = vunpack.c.l.b16 %v9299
      %v9347 = vunpack.c.l.b16 %v9300
      %v9348 = vunpack.c.l.b16 %v9301
      %v9349 = vunpack.c.l.b16 %v9302
      %v9350 = vunpack.c.l.b16 %v9303
      %v9351 = vunpack.c.l.b16 %v9304
      %v9352 = vunpack.c.l.b16 %v9305
      %v9353 = vunpack.c.l.b16 %v9306
      %v9354 = vunpack.c.l.b16 %v9307
      %v9355 = vunpack.c.l.b16 %v9308
      %v9356 = vunpack.c.l.b16 %v9309
      %v9357 = vunpack.c.l.b16 %v9310
      %v9358 = vunpack.c.l.b16 %v9311
      %v9359 = vpack.c.b16 %v9341, %v9340
      %v9360 = vpack.c.b16 %v9343, %v9342
      %v9361 = vpack.c.b16 %v9345, %v9344
      %v9362 = vpack.c.b16 %v9347, %v9346
      %v9363 = vpack.c.b16 %v9349, %v9348
      %v9364 = vpack.c.b16 %v9351, %v9350
      %v9365 = vpack.c.b16 %v9353, %v9352
      %v9366 = vpack.c.b16 %v9355, %v9354
      %v9367 = vpack.c.b16 %v9357, %v9356
      %v9368 = vpack.c.b16 %v9358, %v9358
      %v9370 = vshrl.u32 %v9359, 16
      %v9372 = vshll.u32 %v9359, 16
      %v9374 = vrot.slane %v9372, 1
      %v9375 = vor.u32 %v9370, %v9374
      %v9377 = vshll.u32 %v9360, 16
      %v9379 = vrot.slane %v9377, 1
      %v9380 = vsel %vm439, %v9375, %v9379
      %v9381 = vshrl.u32 %v9360, 16
      %v9383 = vor.u32 %v9381, %v9379
      %v9385 = vshll.u32 %v9361, 16
      %v9387 = vrot.slane %v9385, 1
      %v9388 = vsel %vm439, %v9383, %v9387
      %v9389 = vshrl.u32 %v9361, 16
      %v9391 = vor.u32 %v9389, %v9387
      %v9393 = vshll.u32 %v9362, 16
      %v9395 = vrot.slane %v9393, 1
      %v9396 = vsel %vm439, %v9391, %v9395
      %v9397 = vshrl.u32 %v9362, 16
      %v9399 = vor.u32 %v9397, %v9395
      %v9401 = vshll.u32 %v9363, 16
      %v9403 = vrot.slane %v9401, 1
      %v9404 = vsel %vm439, %v9399, %v9403
      %v9405 = vshrl.u32 %v9363, 16
      %v9407 = vor.u32 %v9405, %v9403
      %v9409 = vshll.u32 %v9364, 16
      %v9411 = vrot.slane %v9409, 1
      %v9412 = vsel %vm439, %v9407, %v9411
      %v9413 = vshrl.u32 %v9364, 16
      %v9415 = vor.u32 %v9413, %v9411
      %v9417 = vshll.u32 %v9365, 16
      %v9419 = vrot.slane %v9417, 1
      %v9420 = vsel %vm439, %v9415, %v9419
      %v9421 = vshrl.u32 %v9365, 16
      %v9423 = vor.u32 %v9421, %v9419
      %v9425 = vshll.u32 %v9366, 16
      %v9427 = vrot.slane %v9425, 1
      %v9428 = vsel %vm439, %v9423, %v9427
      %v9429 = vshrl.u32 %v9366, 16
      %v9431 = vor.u32 %v9429, %v9427
      %v9433 = vshll.u32 %v9367, 16
      %v9435 = vrot.slane %v9433, 1
      %v9436 = vsel %vm439, %v9431, %v9435
      %v9437 = vshrl.u32 %v9367, 16
      %v9439 = vor.u32 %v9437, %v9435
      %v9441 = vshll.u32 %v9368, 16
      %v9443 = vrot.slane %v9441, 1
      %v9444 = vsel %vm439, %v9439, %v9443
      %v9453 = vunpack.c.l.b16 %v9313
      %v9454 = vunpack.c.l.b16 %v9314
      %v9455 = vunpack.c.l.b16 %v9315
      %v9456 = vunpack.c.l.b16 %v9316
      %v9457 = vunpack.c.l.b16 %v9317
      %v9458 = vunpack.c.l.b16 %v9318
      %v9459 = vunpack.c.l.b16 %v9319
      %v9460 = vunpack.c.l.b16 %v9320
      %v9461 = vpack.c.b16 %v9454, %v9453
      %v9462 = vpack.c.b16 %v9456, %v9455
      %v9463 = vpack.c.b16 %v9458, %v9457
      %v9464 = vpack.c.b16 %v9460, %v9459
      %v9470 = vsel %vm8094, %v9380, 0
      %v9473 = vsel %vm8094, %v9388, 0
      %v9476 = vsel %vm8094, %v9396, 0
      %v9479 = vsel %vm8094, %v9404, 0
      %v9482 = vsel %vm8094, %v9412, 0
      %v9485 = vsel %vm8094, %v9420, 0
      %v9488 = vsel %vm8094, %v9428, 0
      %v9491 = vsel %vm8094, %v9436, 0
      %v9494 = vsel %vm8094, %v9444, 0
      %9496 = vmatprep.subr.bf16.mxu0 0
      %9497 = vmatpush1.bf16.msra.mxu0 %v9461
      %9498 = vmatprep.subr.bf16.mxu0 0
      %9499 = vmatpush1.bf16.msra.mxu0 %v9462
      %9500 = vmatprep.subr.bf16.mxu0 0
      %9501 = vmatpush1.bf16.msra.mxu0 %v9463
      %9502 = vmatprep.subr.bf16.mxu0 0
      %9503 = vmatpush1.bf16.msra.mxu0 %v9464
      %9504 = vmatprep.subr.bf16.mxu0 0
      %9505 = vmatpush1.bf16.msra.mxu0 0
      %9506 = vmatprep.subr.bf16.mxu0 0
      %9507 = vmatpush1.bf16.msra.mxu0 0
      %9508 = vmatprep.subr.bf16.mxu0 0
      %9509 = vmatpush1.bf16.msra.mxu0 0
      %9510 = vmatprep.subr.bf16.mxu0 0
      %9511 = vmatpush1.bf16.msra.mxu0 0
      %9512 = vmatprep.subr.bf16.mxu0 0
      %9513 = vmatpush1.bf16.msra.mxu0 0
      %9514 = vmatprep.subr.bf16.mxu0 0
      %9515 = vmatpush1.bf16.msra.mxu0 0
      %9516 = vmatprep.subr.bf16.mxu0 0
      %9517 = vmatpush1.bf16.msra.mxu0 0
      %9518 = vmatprep.subr.bf16.mxu0 0
      %9519 = vmatpush1.bf16.msra.mxu0 0
      %9520 = vmatprep.subr.bf16.mxu0 0
      %9521 = vmatpush1.bf16.msra.mxu0 0
      %9522 = vmatprep.subr.bf16.mxu0 0
      %9523 = vmatpush1.bf16.msra.mxu0 0
      %9524 = vmatprep.subr.bf16.mxu0 0
      %9525 = vmatpush1.bf16.msra.mxu0 0
      %9526 = vmatprep.subr.bf16.mxu0 0
      %9527 = vmatpush1.bf16.msra.mxu0 0
      %9528 = vmatprep.mubr.bf16.mxu0 0
      %9529 = vmatmul.mubr.bf16.gmra.mrb[0].mxu0 %v9470
      %v9530 = vpop.f32.mrb[0].mxu0
      %v9531 = vadd.f32 0.0, %v9530
      %v9532 = vpop.f32.mrb[0].mxu0
      %v9533 = vpop.f32.mrb[0].mxu0
      %v9534 = vadd.f32 0.0, %v9533
      %v9535 = vpop.f32.mrb[0].mxu0
      %9536 = vmatprep.mubr.bf16.mxu0 0
      %9537 = vmatmul.mubr.bf16.gmra.mrb[0].mxu0 %v9473
      %v9538 = vpop.f32.mrb[0].mxu0
      %v9539 = vpop.f32.mrb[0].mxu0
      %v9540 = vpop.f32.mrb[0].mxu0
      %v9541 = vadd.f32 0.0, %v9540
      %v9542 = vpop.f32.mrb[0].mxu0
      %9543 = vmatprep.mubr.bf16.mxu0 0
      %9544 = vmatmul.mubr.bf16.gmra.mrb[0].mxu0 %v9476
      %v9545 = vpop.f32.mrb[0].mxu0
      %v9546 = vadd.f32 0.0, %v9545
      %v9547 = vpop.f32.mrb[0].mxu0
      %v9548 = vpop.f32.mrb[0].mxu0
      %v9549 = vpop.f32.mrb[0].mxu0
      %9550 = vmatprep.mubr.bf16.mxu0 0
      %9551 = vmatmul.mubr.bf16.gmra.mrb[0].mxu0 %v9479
      %v9552 = vpop.f32.mrb[0].mxu0
      %v9553 = vadd.f32 0.0, %v9552
      %v9554 = vpop.f32.mrb[0].mxu0
      %v9555 = vpop.f32.mrb[0].mxu0
      %v9556 = vadd.f32 0.0, %v9555
      %v9557 = vpop.f32.mrb[0].mxu0
      %9558 = vmatprep.mubr.bf16.mxu0 0
      %9559 = vmatmul.mubr.bf16.gmra.mrb[0].mxu0 %v9482
      %v9560 = vpop.f32.mrb[0].mxu0
      %v9561 = vpop.f32.mrb[0].mxu0
      %v9562 = vpop.f32.mrb[0].mxu0
      %v9563 = vadd.f32 0.0, %v9562
      %v9564 = vpop.f32.mrb[0].mxu0
      %9565 = vmatprep.mubr.bf16.mxu0 0
      %9566 = vmatmul.mubr.bf16.gmra.mrb[0].mxu0 %v9485
      %v9567 = vpop.f32.mrb[0].mxu0
      %v9568 = vadd.f32 0.0, %v9567
      %v9569 = vpop.f32.mrb[0].mxu0
      %v9570 = vpop.f32.mrb[0].mxu0
      %v9571 = vpop.f32.mrb[0].mxu0
      %9572 = vmatprep.mubr.bf16.mxu0 0
      %9573 = vmatmul.mubr.bf16.gmra.mrb[0].mxu0 %v9488
      %v9574 = vpop.f32.mrb[0].mxu0
      %v9575 = vadd.f32 0.0, %v9574
      %v9576 = vpop.f32.mrb[0].mxu0
      %v9577 = vpop.f32.mrb[0].mxu0
      %v9578 = vadd.f32 0.0, %v9577
      %v9579 = vpop.f32.mrb[0].mxu0
      %9580 = vmatprep.mubr.bf16.mxu0 0
      %9581 = vmatmul.mubr.bf16.gmra.mrb[0].mxu0 %v9491
      %v9582 = vpop.f32.mrb[0].mxu0
      %v9583 = vpop.f32.mrb[0].mxu0
      %v9584 = vpop.f32.mrb[0].mxu0
      %v9585 = vadd.f32 0.0, %v9584
      %v9586 = vpop.f32.mrb[0].mxu0
      %9587 = vmatprep.mubr.bf16.mxu0 0
      %9588 = vmatmul.mubr.bf16.gmra.mrb[0].mxu0 %v9494
      %v9589 = vpop.f32.mrb[0].mxu0
      %v9590 = vadd.f32 0.0, %v9589
      %v9591 = vpop.f32.mrb[0].mxu0
      %v9592 = vpop.f32.mrb[0].mxu0
      %v9593 = vpop.f32.mrb[0].mxu0
      %9594 = vdwg.mxu0
      %v9595 = vadd.f32 %v9281, %v9531
      %v9596 = vadd.f32 %v9282, %v9534
      %v9597 = vadd.f32 %v9283, %v9541
      %v9598 = vadd.f32 %v9284, %v9546
      %v9599 = vadd.f32 %v9285, %v9553
      %v9600 = vadd.f32 %v9286, %v9556
      %v9601 = vadd.f32 %v9287, %v9563
      %v9602 = vadd.f32 %v9288, %v9568
      %v9603 = vadd.f32 %v9289, %v9575
      %v9604 = vadd.f32 %v9290, %v9578
      %v9605 = vadd.f32 %v9291, %v9585
      %v9606 = vadd.f32 %v9292, %v9590
      %v9607 = vld [vmem:[#allocation3 + $0x24] sm:$0x8]
      %v9608 = vld [vmem:[#allocation3 + $0x28] sm:$0xf]
      %v9609 = vld [vmem:[#allocation3 + $0x2c] sm:$0xf]
      %v9610 = vld [vmem:[#allocation3 + $0x30] sm:$0xf]
      %v9611 = vld [vmem:[#allocation3 + $0x34] sm:$0xf]
      %v9612 = vld [vmem:[#allocation3 + $0x38] sm:$0xf]
      %v9613 = vld [vmem:[#allocation3 + $0x3c] sm:$0xf]
      %v9614 = vld [vmem:[#allocation3 + $0x40] sm:$0xf]
      %v9615 = vld [vmem:[#allocation3 + $0x44] sm:$0xf]
      %v9616 = vld [vmem:[#allocation3 + $0x48] sm:$0xf]
      %v9617 = vld [vmem:[#allocation3 + $0x4c] sm:$0xf]
      %v9618 = vld [vmem:[#allocation3 + $0x50] sm:$0xf]
      %v9619 = vld [vmem:[#allocation3 + $0x54] sm:$0xf]
      %v9620 = vld [vmem:[#allocation3 + $0x58] sm:$0xf]
      %v9621 = vld [vmem:[#allocation3 + $0x5c] sm:$0xf]
      %v9622 = vld [vmem:[#allocation3 + $0x60] sm:$0xf]
      %v9623 = vld [vmem:[#allocation3 + $0x64] sm:$0xf]
      %v9624 = vld [vmem:[#allocation3 + $0x68] sm:$0xf]
      %v9625 = vld [vmem:[#allocation3 + $0x6c] sm:$0xf]
      %s9626 = scalar_lea.vmem %s5, 192
      %v9627 = vld [vmem:[%s9626] sm:$0xf]
      %v9628 = vld [vmem:[%s9626 + $0x4] sm:$0xf]
      %v9629 = vld [vmem:[%s9626 + $0x8] sm:$0xf]
      %v9630 = vld [vmem:[%s9626 + $0xc] sm:$0xf]
      %v9631 = vld [vmem:[%s9626 + $0x10] sm:$0xf]
      %v9632 = vld [vmem:[%s9626 + $0x14] sm:$0xf]
      %v9633 = vld [vmem:[%s9626 + $0x18] sm:$0xf]
      %v9634 = vld [vmem:[%s9626 + $0x1c] sm:$0xf]
      %v9654 = vunpack.c.l.b16 %v9607
      %v9655 = vunpack.c.l.b16 %v9608
      %v9656 = vunpack.c.l.b16 %v9609
      %v9657 = vunpack.c.l.b16 %v9610
      %v9658 = vunpack.c.l.b16 %v9611
      %v9659 = vunpack.c.l.b16 %v9612
      %v9660 = vunpack.c.l.b16 %v9613
      %v9661 = vunpack.c.l.b16 %v9614
      %v9662 = vunpack.c.l.b16 %v9615
      %v9663 = vunpack.c.l.b16 %v9616
      %v9664 = vunpack.c.l.b16 %v9617
      %v9665 = vunpack.c.l.b16 %v9618
      %v9666 = vunpack.c.l.b16 %v9619
      %v9667 = vunpack.c.l.b16 %v9620
      %v9668 = vunpack.c.l.b16 %v9621
      %v9669 = vunpack.c.l.b16 %v9622
      %v9670 = vunpack.c.l.b16 %v9623
      %v9671 = vunpack.c.l.b16 %v9624
      %v9672 = vunpack.c.l.b16 %v9625
      %v9673 = vpack.c.b16 %v9655, %v9654
      %v9674 = vpack.c.b16 %v9657, %v9656
      %v9675 = vpack.c.b16 %v9659, %v9658
      %v9676 = vpack.c.b16 %v9661, %v9660
      %v9677 = vpack.c.b16 %v9663, %v9662
      %v9678 = vpack.c.b16 %v9665, %v9664
      %v9679 = vpack.c.b16 %v9667, %v9666
      %v9680 = vpack.c.b16 %v9669, %v9668
      %v9681 = vpack.c.b16 %v9671, %v9670
      %v9682 = vpack.c.b16 %v9672, %v9672
      %v9684 = vshrl.u32 %v9673, 16
      %v9686 = vrot.slane %v9684, 3
      %v9687 = vshll.u32 %v9673, 16
      %v9689 = vrot.slane %v9687, 4
      %v9690 = vor.u32 %v9686, %v9689
      %v9692 = vshrl.u32 %v9674, 16
      %v9694 = vrot.slane %v9692, 3
      %v9695 = vshll.u32 %v9674, 16
      %v9697 = vrot.slane %v9695, 4
      %v9698 = vor.u32 %v9694, %v9697
      %v9699 = vsel %vm4464, %v9690, %v9698
      %v9701 = vshrl.u32 %v9675, 16
      %v9703 = vrot.slane %v9701, 3
      %v9704 = vshll.u32 %v9675, 16
      %v9706 = vrot.slane %v9704, 4
      %v9707 = vor.u32 %v9703, %v9706
      %v9708 = vsel %vm4464, %v9698, %v9707
      %v9710 = vshrl.u32 %v9676, 16
      %v9712 = vrot.slane %v9710, 3
      %v9713 = vshll.u32 %v9676, 16
      %v9715 = vrot.slane %v9713, 4
      %v9716 = vor.u32 %v9712, %v9715
      %v9717 = vsel %vm4464, %v9707, %v9716
      %v9719 = vshrl.u32 %v9677, 16
      %v9721 = vrot.slane %v9719, 3
      %v9722 = vshll.u32 %v9677, 16
      %v9724 = vrot.slane %v9722, 4
      %v9725 = vor.u32 %v9721, %v9724
      %v9726 = vsel %vm4464, %v9716, %v9725
      %v9728 = vshrl.u32 %v9678, 16
      %v9730 = vrot.slane %v9728, 3
      %v9731 = vshll.u32 %v9678, 16
      %v9733 = vrot.slane %v9731, 4
      %v9734 = vor.u32 %v9730, %v9733
      %v9735 = vsel %vm4464, %v9725, %v9734
      %v9737 = vshrl.u32 %v9679, 16
      %v9739 = vrot.slane %v9737, 3
      %v9740 = vshll.u32 %v9679, 16
      %v9742 = vrot.slane %v9740, 4
      %v9743 = vor.u32 %v9739, %v9742
      %v9744 = vsel %vm4464, %v9734, %v9743
      %v9746 = vshrl.u32 %v9680, 16
      %v9748 = vrot.slane %v9746, 3
      %v9749 = vshll.u32 %v9680, 16
      %v9751 = vrot.slane %v9749, 4
      %v9752 = vor.u32 %v9748, %v9751
      %v9753 = vsel %vm4464, %v9743, %v9752
      %v9755 = vshrl.u32 %v9681, 16
      %v9757 = vrot.slane %v9755, 3
      %v9758 = vshll.u32 %v9681, 16
      %v9760 = vrot.slane %v9758, 4
      %v9761 = vor.u32 %v9757, %v9760
      %v9762 = vsel %vm4464, %v9752, %v9761
      %v9764 = vshrl.u32 %v9682, 16
      %v9766 = vrot.slane %v9764, 3
      %v9767 = vshll.u32 %v9682, 16
      %v9769 = vrot.slane %v9767, 4
      %v9770 = vor.u32 %v9766, %v9769
      %v9771 = vsel %vm4464, %v9761, %v9770
      %v9780 = vunpack.c.l.b16 %v9627
      %v9781 = vunpack.c.l.b16 %v9628
      %v9782 = vunpack.c.l.b16 %v9629
      %v9783 = vunpack.c.l.b16 %v9630
      %v9784 = vunpack.c.l.b16 %v9631
      %v9785 = vunpack.c.l.b16 %v9632
      %v9786 = vunpack.c.l.b16 %v9633
      %v9787 = vunpack.c.l.b16 %v9634
      %v9788 = vpack.c.b16 %v9781, %v9780
      %v9789 = vpack.c.b16 %v9783, %v9782
      %v9790 = vpack.c.b16 %v9785, %v9784
      %v9791 = vpack.c.b16 %v9787, %v9786
      %v9797 = vsel %vm8094, %v9699, 0
      %v9800 = vsel %vm8094, %v9708, 0
      %v9803 = vsel %vm8094, %v9717, 0
      %v9806 = vsel %vm8094, %v9726, 0
      %v9809 = vsel %vm8094, %v9735, 0
      %v9812 = vsel %vm8094, %v9744, 0
      %v9815 = vsel %vm8094, %v9753, 0
      %v9818 = vsel %vm8094, %v9762, 0
      %v9821 = vsel %vm8094, %v9771, 0
      %9823 = vmatprep.subr.bf16.mxu0 0
      %9824 = vmatpush1.bf16.msra.mxu0 %v9788
      %9825 = vmatprep.subr.bf16.mxu0 0
      %9826 = vmatpush1.bf16.msra.mxu0 %v9789
      %9827 = vmatprep.subr.bf16.mxu0 0
      %9828 = vmatpush1.bf16.msra.mxu0 %v9790
      %9829 = vmatprep.subr.bf16.mxu0 0
      %9830 = vmatpush1.bf16.msra.mxu0 %v9791
      %9831 = vmatprep.subr.bf16.mxu0 0
      %9832 = vmatpush1.bf16.msra.mxu0 0
      %9833 = vmatprep.subr.bf16.mxu0 0
      %9834 = vmatpush1.bf16.msra.mxu0 0
      %9835 = vmatprep.subr.bf16.mxu0 0
      %9836 = vmatpush1.bf16.msra.mxu0 0
      %9837 = vmatprep.subr.bf16.mxu0 0
      %9838 = vmatpush1.bf16.msra.mxu0 0
      %9839 = vmatprep.subr.bf16.mxu0 0
      %9840 = vmatpush1.bf16.msra.mxu0 0
      %9841 = vmatprep.subr.bf16.mxu0 0
      %9842 = vmatpush1.bf16.msra.mxu0 0
      %9843 = vmatprep.subr.bf16.mxu0 0
      %9844 = vmatpush1.bf16.msra.mxu0 0
      %9845 = vmatprep.subr.bf16.mxu0 0
      %9846 = vmatpush1.bf16.msra.mxu0 0
      %9847 = vmatprep.subr.bf16.mxu0 0
      %9848 = vmatpush1.bf16.msra.mxu0 0
      %9849 = vmatprep.subr.bf16.mxu0 0
      %9850 = vmatpush1.bf16.msra.mxu0 0
      %9851 = vmatprep.subr.bf16.mxu0 0
      %9852 = vmatpush1.bf16.msra.mxu0 0
      %9853 = vmatprep.subr.bf16.mxu0 0
      %9854 = vmatpush1.bf16.msra.mxu0 0
      %9855 = vmatprep.mubr.bf16.mxu0 0
      %9856 = vmatmul.mubr.bf16.gmra.mrb[0].mxu0 %v9797
      %v9857 = vpop.f32.mrb[0].mxu0
      %v9858 = vadd.f32 0.0, %v9857
      %v9859 = vpop.f32.mrb[0].mxu0
      %v9860 = vpop.f32.mrb[0].mxu0
      %v9861 = vadd.f32 0.0, %v9860
      %v9862 = vpop.f32.mrb[0].mxu0
      %9863 = vmatprep.mubr.bf16.mxu0 0
      %9864 = vmatmul.mubr.bf16.gmra.mrb[0].mxu0 %v9800
      %v9865 = vpop.f32.mrb[0].mxu0
      %v9866 = vpop.f32.mrb[0].mxu0
      %v9867 = vpop.f32.mrb[0].mxu0
      %v9868 = vadd.f32 0.0, %v9867
      %v9869 = vpop.f32.mrb[0].mxu0
      %9870 = vmatprep.mubr.bf16.mxu0 0
      %9871 = vmatmul.mubr.bf16.gmra.mrb[0].mxu0 %v9803
      %v9872 = vpop.f32.mrb[0].mxu0
      %v9873 = vadd.f32 0.0, %v9872
      %v9874 = vpop.f32.mrb[0].mxu0
      %v9875 = vpop.f32.mrb[0].mxu0
      %v9876 = vpop.f32.mrb[0].mxu0
      %9877 = vmatprep.mubr.bf16.mxu0 0
      %9878 = vmatmul.mubr.bf16.gmra.mrb[0].mxu0 %v9806
      %v9879 = vpop.f32.mrb[0].mxu0
      %v9880 = vadd.f32 0.0, %v9879
      %v9881 = vpop.f32.mrb[0].mxu0
      %v9882 = vpop.f32.mrb[0].mxu0
      %v9883 = vadd.f32 0.0, %v9882
      %v9884 = vpop.f32.mrb[0].mxu0
      %9885 = vmatprep.mubr.bf16.mxu0 0
      %9886 = vmatmul.mubr.bf16.gmra.mrb[0].mxu0 %v9809
      %v9887 = vpop.f32.mrb[0].mxu0
      %v9888 = vpop.f32.mrb[0].mxu0
      %v9889 = vpop.f32.mrb[0].mxu0
      %v9890 = vadd.f32 0.0, %v9889
      %v9891 = vpop.f32.mrb[0].mxu0
      %9892 = vmatprep.mubr.bf16.mxu0 0
      %9893 = vmatmul.mubr.bf16.gmra.mrb[0].mxu0 %v9812
      %v9894 = vpop.f32.mrb[0].mxu0
      %v9895 = vadd.f32 0.0, %v9894
      %v9896 = vpop.f32.mrb[0].mxu0
      %v9897 = vpop.f32.mrb[0].mxu0
      %v9898 = vpop.f32.mrb[0].mxu0
      %9899 = vmatprep.mubr.bf16.mxu0 0
      %9900 = vmatmul.mubr.bf16.gmra.mrb[0].mxu0 %v9815
      %v9901 = vpop.f32.mrb[0].mxu0
      %v9902 = vadd.f32 0.0, %v9901
      %v9903 = vpop.f32.mrb[0].mxu0
      %v9904 = vpop.f32.mrb[0].mxu0
      %v9905 = vadd.f32 0.0, %v9904
      %v9906 = vpop.f32.mrb[0].mxu0
      %9907 = vmatprep.mubr.bf16.mxu0 0
      %9908 = vmatmul.mubr.bf16.gmra.mrb[0].mxu0 %v9818
      %v9909 = vpop.f32.mrb[0].mxu0
      %v9910 = vpop.f32.mrb[0].mxu0
      %v9911 = vpop.f32.mrb[0].mxu0
      %v9912 = vadd.f32 0.0, %v9911
      %v9913 = vpop.f32.mrb[0].mxu0
      %9914 = vmatprep.mubr.bf16.mxu0 0
      %9915 = vmatmul.mubr.bf16.gmra.mrb[0].mxu0 %v9821
      %v9916 = vpop.f32.mrb[0].mxu0
      %v9917 = vadd.f32 0.0, %v9916
      %v9918 = vpop.f32.mrb[0].mxu0
      %v9919 = vpop.f32.mrb[0].mxu0
      %v9920 = vpop.f32.mrb[0].mxu0
      %9921 = vdwg.mxu0
      %v9922 = vadd.f32 %v9595, %v9858
      %v9923 = vadd.f32 %v9596, %v9861
      %v9924 = vadd.f32 %v9597, %v9868
      %v9925 = vadd.f32 %v9598, %v9873
      %v9926 = vadd.f32 %v9599, %v9880
      %v9927 = vadd.f32 %v9600, %v9883
      %v9928 = vadd.f32 %v9601, %v9890
      %v9929 = vadd.f32 %v9602, %v9895
      %v9930 = vadd.f32 %v9603, %v9902
      %v9931 = vadd.f32 %v9604, %v9905
      %v9932 = vadd.f32 %v9605, %v9912
      %v9933 = vadd.f32 %v9606, %v9917
      %s9934 = scalar_lea.vmem %s5, 224
      %v9935 = vld [vmem:[%s9934] sm:$0xf]
      %v9936 = vld [vmem:[%s9934 + $0x4] sm:$0xf]
      %v9937 = vld [vmem:[%s9934 + $0x8] sm:$0xf]
      %v9938 = vld [vmem:[%s9934 + $0xc] sm:$0xf]
      %v9939 = vld [vmem:[%s9934 + $0x10] sm:$0xf]
      %v9940 = vld [vmem:[%s9934 + $0x14] sm:$0xf]
      %v9941 = vld [vmem:[%s9934 + $0x18] sm:$0xf]
      %v9942 = vld [vmem:[%s9934 + $0x1c] sm:$0xf]
      %v9943 = vpack.c.b16 %v9656, %v9655
      %v9944 = vpack.c.b16 %v9658, %v9657
      %v9945 = vpack.c.b16 %v9660, %v9659
      %v9946 = vpack.c.b16 %v9662, %v9661
      %v9947 = vpack.c.b16 %v9664, %v9663
      %v9948 = vpack.c.b16 %v9666, %v9665
      %v9949 = vpack.c.b16 %v9668, %v9667
      %v9950 = vpack.c.b16 %v9670, %v9669
      %v9951 = vpack.c.b16 %v9672, %v9671
      %v9960 = vunpack.c.l.b16 %v9935
      %v9961 = vunpack.c.l.b16 %v9936
      %v9962 = vunpack.c.l.b16 %v9937
      %v9963 = vunpack.c.l.b16 %v9938
      %v9964 = vunpack.c.l.b16 %v9939
      %v9965 = vunpack.c.l.b16 %v9940
      %v9966 = vunpack.c.l.b16 %v9941
      %v9967 = vunpack.c.l.b16 %v9942
      %v9968 = vpack.c.b16 %v9961, %v9960
      %v9969 = vpack.c.b16 %v9963, %v9962
      %v9970 = vpack.c.b16 %v9965, %v9964
      %v9971 = vpack.c.b16 %v9967, %v9966
      %v9977 = vsel %vm8094, %v9943, 0
      %v9980 = vsel %vm8094, %v9944, 0
      %v9983 = vsel %vm8094, %v9945, 0
      %v9986 = vsel %vm8094, %v9946, 0
      %v9989 = vsel %vm8094, %v9947, 0
      %v9992 = vsel %vm8094, %v9948, 0
      %v9995 = vsel %vm8094, %v9949, 0
      %v9998 = vsel %vm8094, %v9950, 0
      %v10001 = vsel %vm8094, %v9951, 0
      %10003 = vmatprep.subr.bf16.mxu0 0
      %10004 = vmatpush1.bf16.msra.mxu0 %v9968
      %10005 = vmatprep.subr.bf16.mxu0 0
      %10006 = vmatpush1.bf16.msra.mxu0 %v9969
      %10007 = vmatprep.subr.bf16.mxu0 0
      %10008 = vmatpush1.bf16.msra.mxu0 %v9970
      %10009 = vmatprep.subr.bf16.mxu0 0
      %10010 = vmatpush1.bf16.msra.mxu0 %v9971
      %10011 = vmatprep.subr.bf16.mxu0 0
      %10012 = vmatpush1.bf16.msra.mxu0 0
      %10013 = vmatprep.subr.bf16.mxu0 0
      %10014 = vmatpush1.bf16.msra.mxu0 0
      %10015 = vmatprep.subr.bf16.mxu0 0
      %10016 = vmatpush1.bf16.msra.mxu0 0
      %10017 = vmatprep.subr.bf16.mxu0 0
      %10018 = vmatpush1.bf16.msra.mxu0 0
      %10019 = vmatprep.subr.bf16.mxu0 0
      %10020 = vmatpush1.bf16.msra.mxu0 0
      %10021 = vmatprep.subr.bf16.mxu0 0
      %10022 = vmatpush1.bf16.msra.mxu0 0
      %10023 = vmatprep.subr.bf16.mxu0 0
      %10024 = vmatpush1.bf16.msra.mxu0 0
      %10025 = vmatprep.subr.bf16.mxu0 0
      %10026 = vmatpush1.bf16.msra.mxu0 0
      %10027 = vmatprep.subr.bf16.mxu0 0
      %10028 = vmatpush1.bf16.msra.mxu0 0
      %10029 = vmatprep.subr.bf16.mxu0 0
      %10030 = vmatpush1.bf16.msra.mxu0 0
      %10031 = vmatprep.subr.bf16.mxu0 0
      %10032 = vmatpush1.bf16.msra.mxu0 0
      %10033 = vmatprep.subr.bf16.mxu0 0
      %10034 = vmatpush1.bf16.msra.mxu0 0
      %10035 = vmatprep.mubr.bf16.mxu0 0
      %10036 = vmatmul.mubr.bf16.gmra.mrb[0].mxu0 %v9977
      %v10037 = vpop.f32.mrb[0].mxu0
      %v10038 = vadd.f32 0.0, %v10037
      %v10039 = vpop.f32.mrb[0].mxu0
      %v10040 = vpop.f32.mrb[0].mxu0
      %v10041 = vadd.f32 0.0, %v10040
      %v10042 = vpop.f32.mrb[0].mxu0
      %10043 = vmatprep.mubr.bf16.mxu0 0
      %10044 = vmatmul.mubr.bf16.gmra.mrb[0].mxu0 %v9980
      %v10045 = vpop.f32.mrb[0].mxu0
      %v10046 = vpop.f32.mrb[0].mxu0
      %v10047 = vpop.f32.mrb[0].mxu0
      %v10048 = vadd.f32 0.0, %v10047
      %v10049 = vpop.f32.mrb[0].mxu0
      %10050 = vmatprep.mubr.bf16.mxu0 0
      %10051 = vmatmul.mubr.bf16.gmra.mrb[0].mxu0 %v9983
      %v10052 = vpop.f32.mrb[0].mxu0
      %v10053 = vadd.f32 0.0, %v10052
      %v10054 = vpop.f32.mrb[0].mxu0
      %v10055 = vpop.f32.mrb[0].mxu0
      %v10056 = vpop.f32.mrb[0].mxu0
      %10057 = vmatprep.mubr.bf16.mxu0 0
      %10058 = vmatmul.mubr.bf16.gmra.mrb[0].mxu0 %v9986
      %v10059 = vpop.f32.mrb[0].mxu0
      %v10060 = vadd.f32 0.0, %v10059
      %v10061 = vpop.f32.mrb[0].mxu0
      %v10062 = vpop.f32.mrb[0].mxu0
      %v10063 = vadd.f32 0.0, %v10062
      %v10064 = vpop.f32.mrb[0].mxu0
      %10065 = vmatprep.mubr.bf16.mxu0 0
      %10066 = vmatmul.mubr.bf16.gmra.mrb[0].mxu0 %v9989
      %v10067 = vpop.f32.mrb[0].mxu0
      %v10068 = vpop.f32.mrb[0].mxu0
      %v10069 = vpop.f32.mrb[0].mxu0
      %v10070 = vadd.f32 0.0, %v10069
      %v10071 = vpop.f32.mrb[0].mxu0
      %10072 = vmatprep.mubr.bf16.mxu0 0
      %10073 = vmatmul.mubr.bf16.gmra.mrb[0].mxu0 %v9992
      %v10074 = vpop.f32.mrb[0].mxu0
      %v10075 = vadd.f32 0.0, %v10074
      %v10076 = vpop.f32.mrb[0].mxu0
      %v10077 = vpop.f32.mrb[0].mxu0
      %v10078 = vpop.f32.mrb[0].mxu0
      %10079 = vmatprep.mubr.bf16.mxu0 0
      %10080 = vmatmul.mubr.bf16.gmra.mrb[0].mxu0 %v9995
      %v10081 = vpop.f32.mrb[0].mxu0
      %v10082 = vadd.f32 0.0, %v10081
      %v10083 = vpop.f32.mrb[0].mxu0
      %v10084 = vpop.f32.mrb[0].mxu0
      %v10085 = vadd.f32 0.0, %v10084
      %v10086 = vpop.f32.mrb[0].mxu0
      %10087 = vmatprep.mubr.bf16.mxu0 0
      %10088 = vmatmul.mubr.bf16.gmra.mrb[0].mxu0 %v9998
      %v10089 = vpop.f32.mrb[0].mxu0
      %v10090 = vpop.f32.mrb[0].mxu0
      %v10091 = vpop.f32.mrb[0].mxu0
      %v10092 = vadd.f32 0.0, %v10091
      %v10093 = vpop.f32.mrb[0].mxu0
      %10094 = vmatprep.mubr.bf16.mxu0 0
      %10095 = vmatmul.mubr.bf16.gmra.mrb[0].mxu0 %v10001
      %v10096 = vpop.f32.mrb[0].mxu0
      %v10097 = vadd.f32 0.0, %v10096
      %v10098 = vpop.f32.mrb[0].mxu0
      %v10099 = vpop.f32.mrb[0].mxu0
      %v10100 = vpop.f32.mrb[0].mxu0
      %10101 = vdwg.mxu0
      %v10102 = vadd.f32 %v9922, %v10038
      %v10103 = vadd.f32 %v9923, %v10041
      %v10104 = vadd.f32 %v9924, %v10048
      %v10105 = vadd.f32 %v9925, %v10053
      %v10106 = vadd.f32 %v9926, %v10060
      %v10107 = vadd.f32 %v9927, %v10063
      %v10108 = vadd.f32 %v9928, %v10070
      %v10109 = vadd.f32 %v9929, %v10075
      %v10110 = vadd.f32 %v9930, %v10082
      %v10111 = vadd.f32 %v9931, %v10085
      %v10112 = vadd.f32 %v9932, %v10092
      %v10113 = vadd.f32 %v9933, %v10097
      %v10114 = vld [vmem:[#allocation3 + $0x28] sm:$0xf]
      %v10115 = vld [vmem:[#allocation3 + $0x2c] sm:$0xf]
      %v10116 = vld [vmem:[#allocation3 + $0x30] sm:$0xf]
      %v10117 = vld [vmem:[#allocation3 + $0x34] sm:$0xf]
      %v10118 = vld [vmem:[#allocation3 + $0x38] sm:$0xf]
      %v10119 = vld [vmem:[#allocation3 + $0x3c] sm:$0xf]
      %v10120 = vld [vmem:[#allocation3 + $0x40] sm:$0xf]
      %v10121 = vld [vmem:[#allocation3 + $0x44] sm:$0xf]
      %v10122 = vld [vmem:[#allocation3 + $0x48] sm:$0xf]
      %v10123 = vld [vmem:[#allocation3 + $0x4c] sm:$0xf]
      %v10124 = vld [vmem:[#allocation3 + $0x50] sm:$0xf]
      %v10125 = vld [vmem:[#allocation3 + $0x54] sm:$0xf]
      %v10126 = vld [vmem:[#allocation3 + $0x58] sm:$0xf]
      %v10127 = vld [vmem:[#allocation3 + $0x5c] sm:$0xf]
      %v10128 = vld [vmem:[#allocation3 + $0x60] sm:$0xf]
      %v10129 = vld [vmem:[#allocation3 + $0x64] sm:$0xf]
      %v10130 = vld [vmem:[#allocation3 + $0x68] sm:$0xf]
      %v10131 = vld [vmem:[#allocation3 + $0x6c] sm:$0xf]
      %v10132 = vld [vmem:[#allocation3 + $0x70] sm:$0x1]
      %s10133 = scalar_lea.vmem %s5, 256
      %v10134 = vld [vmem:[%s10133] sm:$0xf]
      %v10135 = vld [vmem:[%s10133 + $0x4] sm:$0xf]
      %v10136 = vld [vmem:[%s10133 + $0x8] sm:$0xf]
      %v10137 = vld [vmem:[%s10133 + $0xc] sm:$0xf]
      %v10138 = vld [vmem:[%s10133 + $0x10] sm:$0xf]
      %v10139 = vld [vmem:[%s10133 + $0x14] sm:$0xf]
      %v10140 = vld [vmem:[%s10133 + $0x18] sm:$0xf]
      %v10141 = vld [vmem:[%s10133 + $0x1c] sm:$0xf]
      %v10161 = vunpack.c.l.b16 %v10114
      %v10162 = vunpack.c.l.b16 %v10115
      %v10163 = vunpack.c.l.b16 %v10116
      %v10164 = vunpack.c.l.b16 %v10117
      %v10165 = vunpack.c.l.b16 %v10118
      %v10166 = vunpack.c.l.b16 %v10119
      %v10167 = vunpack.c.l.b16 %v10120
      %v10168 = vunpack.c.l.b16 %v10121
      %v10169 = vunpack.c.l.b16 %v10122
      %v10170 = vunpack.c.l.b16 %v10123
      %v10171 = vunpack.c.l.b16 %v10124
      %v10172 = vunpack.c.l.b16 %v10125
      %v10173 = vunpack.c.l.b16 %v10126
      %v10174 = vunpack.c.l.b16 %v10127
      %v10175 = vunpack.c.l.b16 %v10128
      %v10176 = vunpack.c.l.b16 %v10129
      %v10177 = vunpack.c.l.b16 %v10130
      %v10178 = vunpack.c.l.b16 %v10131
      %v10179 = vunpack.c.l.b16 %v10132
      %v10180 = vpack.c.b16 %v10162, %v10161
      %v10181 = vpack.c.b16 %v10164, %v10163
      %v10182 = vpack.c.b16 %v10166, %v10165
      %v10183 = vpack.c.b16 %v10168, %v10167
      %v10184 = vpack.c.b16 %v10170, %v10169
      %v10185 = vpack.c.b16 %v10172, %v10171
      %v10186 = vpack.c.b16 %v10174, %v10173
      %v10187 = vpack.c.b16 %v10176, %v10175
      %v10188 = vpack.c.b16 %v10178, %v10177
      %v10189 = vpack.c.b16 %v10179, %v10179
      %v10191 = vshrl.u32 %v10180, 16
      %v10193 = vshll.u32 %v10180, 16
      %v10195 = vrot.slane %v10193, 1
      %v10196 = vor.u32 %v10191, %v10195
      %v10198 = vshll.u32 %v10181, 16
      %v10200 = vrot.slane %v10198, 1
      %v10201 = vsel %vm439, %v10196, %v10200
      %v10202 = vshrl.u32 %v10181, 16
      %v10204 = vor.u32 %v10202, %v10200
      %v10206 = vshll.u32 %v10182, 16
      %v10208 = vrot.slane %v10206, 1
      %v10209 = vsel %vm439, %v10204, %v10208
      %v10210 = vshrl.u32 %v10182, 16
      %v10212 = vor.u32 %v10210, %v10208
      %v10214 = vshll.u32 %v10183, 16
      %v10216 = vrot.slane %v10214, 1
      %v10217 = vsel %vm439, %v10212, %v10216
      %v10218 = vshrl.u32 %v10183, 16
      %v10220 = vor.u32 %v10218, %v10216
      %v10222 = vshll.u32 %v10184, 16
      %v10224 = vrot.slane %v10222, 1
      %v10225 = vsel %vm439, %v10220, %v10224
      %v10226 = vshrl.u32 %v10184, 16
      %v10228 = vor.u32 %v10226, %v10224
      %v10230 = vshll.u32 %v10185, 16
      %v10232 = vrot.slane %v10230, 1
      %v10233 = vsel %vm439, %v10228, %v10232
      %v10234 = vshrl.u32 %v10185, 16
      %v10236 = vor.u32 %v10234, %v10232
      %v10238 = vshll.u32 %v10186, 16
      %v10240 = vrot.slane %v10238, 1
      %v10241 = vsel %vm439, %v10236, %v10240
      %v10242 = vshrl.u32 %v10186, 16
      %v10244 = vor.u32 %v10242, %v10240
      %v10246 = vshll.u32 %v10187, 16
      %v10248 = vrot.slane %v10246, 1
      %v10249 = vsel %vm439, %v10244, %v10248
      %v10250 = vshrl.u32 %v10187, 16
      %v10252 = vor.u32 %v10250, %v10248
      %v10254 = vshll.u32 %v10188, 16
      %v10256 = vrot.slane %v10254, 1
      %v10257 = vsel %vm439, %v10252, %v10256
      %v10258 = vshrl.u32 %v10188, 16
      %v10260 = vor.u32 %v10258, %v10256
      %v10262 = vshll.u32 %v10189, 16
      %v10264 = vrot.slane %v10262, 1
      %v10265 = vsel %vm439, %v10260, %v10264
      %v10274 = vunpack.c.l.b16 %v10134
      %v10275 = vunpack.c.l.b16 %v10135
      %v10276 = vunpack.c.l.b16 %v10136
      %v10277 = vunpack.c.l.b16 %v10137
      %v10278 = vunpack.c.l.b16 %v10138
      %v10279 = vunpack.c.l.b16 %v10139
      %v10280 = vunpack.c.l.b16 %v10140
      %v10281 = vunpack.c.l.b16 %v10141
      %v10282 = vpack.c.b16 %v10275, %v10274
      %v10283 = vpack.c.b16 %v10277, %v10276
      %v10284 = vpack.c.b16 %v10279, %v10278
      %v10285 = vpack.c.b16 %v10281, %v10280
      %v10291 = vsel %vm8094, %v10201, 0
      %v10294 = vsel %vm8094, %v10209, 0
      %v10297 = vsel %vm8094, %v10217, 0
      %v10300 = vsel %vm8094, %v10225, 0
      %v10303 = vsel %vm8094, %v10233, 0
      %v10306 = vsel %vm8094, %v10241, 0
      %v10309 = vsel %vm8094, %v10249, 0
      %v10312 = vsel %vm8094, %v10257, 0
      %v10315 = vsel %vm8094, %v10265, 0
      %10317 = vmatprep.subr.bf16.mxu0 0
      %10318 = vmatpush1.bf16.msra.mxu0 %v10282
      %10319 = vmatprep.subr.bf16.mxu0 0
      %10320 = vmatpush1.bf16.msra.mxu0 %v10283
      %10321 = vmatprep.subr.bf16.mxu0 0
      %10322 = vmatpush1.bf16.msra.mxu0 %v10284
      %10323 = vmatprep.subr.bf16.mxu0 0
      %10324 = vmatpush1.bf16.msra.mxu0 %v10285
      %10325 = vmatprep.subr.bf16.mxu0 0
      %10326 = vmatpush1.bf16.msra.mxu0 0
      %10327 = vmatprep.subr.bf16.mxu0 0
      %10328 = vmatpush1.bf16.msra.mxu0 0
      %10329 = vmatprep.subr.bf16.mxu0 0
      %10330 = vmatpush1.bf16.msra.mxu0 0
      %10331 = vmatprep.subr.bf16.mxu0 0
      %10332 = vmatpush1.bf16.msra.mxu0 0
      %10333 = vmatprep.subr.bf16.mxu0 0
      %10334 = vmatpush1.bf16.msra.mxu0 0
      %10335 = vmatprep.subr.bf16.mxu0 0
      %10336 = vmatpush1.bf16.msra.mxu0 0
      %10337 = vmatprep.subr.bf16.mxu0 0
      %10338 = vmatpush1.bf16.msra.mxu0 0
      %10339 = vmatprep.subr.bf16.mxu0 0
      %10340 = vmatpush1.bf16.msra.mxu0 0
      %10341 = vmatprep.subr.bf16.mxu0 0
      %10342 = vmatpush1.bf16.msra.mxu0 0
      %10343 = vmatprep.subr.bf16.mxu0 0
      %10344 = vmatpush1.bf16.msra.mxu0 0
      %10345 = vmatprep.subr.bf16.mxu0 0
      %10346 = vmatpush1.bf16.msra.mxu0 0
      %10347 = vmatprep.subr.bf16.mxu0 0
      %10348 = vmatpush1.bf16.msra.mxu0 0
      %10349 = vmatprep.mubr.bf16.mxu0 0
      %10350 = vmatmul.mubr.bf16.gmra.mrb[0].mxu0 %v10291
      %v10351 = vpop.f32.mrb[0].mxu0
      %v10352 = vadd.f32 0.0, %v10351
      %v10353 = vpop.f32.mrb[0].mxu0
      %v10354 = vpop.f32.mrb[0].mxu0
      %v10355 = vadd.f32 0.0, %v10354
      %v10356 = vpop.f32.mrb[0].mxu0
      %10357 = vmatprep.mubr.bf16.mxu0 0
      %10358 = vmatmul.mubr.bf16.gmra.mrb[0].mxu0 %v10294
      %v10359 = vpop.f32.mrb[0].mxu0
      %v10360 = vpop.f32.mrb[0].mxu0
      %v10361 = vpop.f32.mrb[0].mxu0
      %v10362 = vadd.f32 0.0, %v10361
      %v10363 = vpop.f32.mrb[0].mxu0
      %10364 = vmatprep.mubr.bf16.mxu0 0
      %10365 = vmatmul.mubr.bf16.gmra.mrb[0].mxu0 %v10297
      %v10366 = vpop.f32.mrb[0].mxu0
      %v10367 = vadd.f32 0.0, %v10366
      %v10368 = vpop.f32.mrb[0].mxu0
      %v10369 = vpop.f32.mrb[0].mxu0
      %v10370 = vpop.f32.mrb[0].mxu0
      %10371 = vmatprep.mubr.bf16.mxu0 0
      %10372 = vmatmul.mubr.bf16.gmra.mrb[0].mxu0 %v10300
      %v10373 = vpop.f32.mrb[0].mxu0
      %v10374 = vadd.f32 0.0, %v10373
      %v10375 = vpop.f32.mrb[0].mxu0
      %v10376 = vpop.f32.mrb[0].mxu0
      %v10377 = vadd.f32 0.0, %v10376
      %v10378 = vpop.f32.mrb[0].mxu0
      %10379 = vmatprep.mubr.bf16.mxu0 0
      %10380 = vmatmul.mubr.bf16.gmra.mrb[0].mxu0 %v10303
      %v10381 = vpop.f32.mrb[0].mxu0
      %v10382 = vpop.f32.mrb[0].mxu0
      %v10383 = vpop.f32.mrb[0].mxu0
      %v10384 = vadd.f32 0.0, %v10383
      %v10385 = vpop.f32.mrb[0].mxu0
      %10386 = vmatprep.mubr.bf16.mxu0 0
      %10387 = vmatmul.mubr.bf16.gmra.mrb[0].mxu0 %v10306
      %v10388 = vpop.f32.mrb[0].mxu0
      %v10389 = vadd.f32 0.0, %v10388
      %v10390 = vpop.f32.mrb[0].mxu0
      %v10391 = vpop.f32.mrb[0].mxu0
      %v10392 = vpop.f32.mrb[0].mxu0
      %10393 = vmatprep.mubr.bf16.mxu0 0
      %10394 = vmatmul.mubr.bf16.gmra.mrb[0].mxu0 %v10309
      %v10395 = vpop.f32.mrb[0].mxu0
      %v10396 = vadd.f32 0.0, %v10395
      %v10397 = vpop.f32.mrb[0].mxu0
      %v10398 = vpop.f32.mrb[0].mxu0
      %v10399 = vadd.f32 0.0, %v10398
      %v10400 = vpop.f32.mrb[0].mxu0
      %10401 = vmatprep.mubr.bf16.mxu0 0
      %10402 = vmatmul.mubr.bf16.gmra.mrb[0].mxu0 %v10312
      %v10403 = vpop.f32.mrb[0].mxu0
      %v10404 = vpop.f32.mrb[0].mxu0
      %v10405 = vpop.f32.mrb[0].mxu0
      %v10406 = vadd.f32 0.0, %v10405
      %v10407 = vpop.f32.mrb[0].mxu0
      %10408 = vmatprep.mubr.bf16.mxu0 0
      %10409 = vmatmul.mubr.bf16.gmra.mrb[0].mxu0 %v10315
      %v10410 = vpop.f32.mrb[0].mxu0
      %v10411 = vadd.f32 0.0, %v10410
      %v10412 = vpop.f32.mrb[0].mxu0
      %v10413 = vpop.f32.mrb[0].mxu0
      %v10414 = vpop.f32.mrb[0].mxu0
      %10415 = vdwg.mxu0
      %v10416 = vadd.f32 %v10102, %v10352
      %v10417 = vadd.f32 %v10103, %v10355
      %v10418 = vadd.f32 %v10104, %v10362
      %v10419 = vadd.f32 %v10105, %v10367
      %v10420 = vadd.f32 %v10106, %v10374
      %v10421 = vadd.f32 %v10107, %v10377
      %v10422 = vadd.f32 %v10108, %v10384
      %v10423 = vadd.f32 %v10109, %v10389
      %v10424 = vadd.f32 %v10110, %v10396
      %v10425 = vadd.f32 %v10111, %v10399
      %v10426 = vadd.f32 %v10112, %v10406
      %v10427 = vadd.f32 %v10113, %v10411
      %v10428 = vld [vmem:[%s6] sm:$0x1]
      %v10430 = vlaneseq
      %v10431 = vshrl.u32 %v10430, 7
      %v10432 = vsub.s32 0, %v10431
      %v10433 = vrot.slane %v10428, %v10432
      %v10435 = vadd.f32 %v10416, %v10433
      %v10436 = vadd.f32 %v10417, %v10433
      %v10437 = vadd.f32 %v10418, %v10433
      %v10438 = vadd.f32 %v10419, %v10433
      %v10439 = vadd.f32 %v10420, %v10433
      %v10440 = vadd.f32 %v10421, %v10433
      %v10441 = vadd.f32 %v10422, %v10433
      %v10442 = vadd.f32 %v10423, %v10433
      %v10443 = vadd.f32 %v10424, %v10433
      %v10444 = vadd.f32 %v10425, %v10433
      %v10445 = vadd.f32 %v10426, %v10433
      %v10446 = vadd.f32 %v10427, %v10433
      %v10447 = vmax.f32 %v10435, 0.0
      %v10448 = vmax.f32 %v10436, 0.0
      %v10449 = vmax.f32 %v10437, 0.0
      %v10450 = vmax.f32 %v10438, 0.0
      %v10451 = vmax.f32 %v10439, 0.0
      %v10452 = vmax.f32 %v10440, 0.0
      %v10453 = vmax.f32 %v10441, 0.0
      %v10454 = vmax.f32 %v10442, 0.0
      %v10455 = vmax.f32 %v10443, 0.0
      %v10456 = vmax.f32 %v10444, 0.0
      %v10457 = vmax.f32 %v10445, 0.0
      %v10458 = vmax.f32 %v10446, 0.0
      %v10459 = vmax.f32 %v10447, %v10449
      %v10460 = vmax.f32 %v10448, %v10450
      %v10461 = vmax.f32 %v10453, %v10455
      %v10462 = vmax.f32 %v10454, %v10456
      %v10463 = vmax.f32 %v10459, %v10451
      %v10464 = vmax.f32 %v10460, %v10452
      %v10465 = vmax.f32 %v10461, %v10457
      %v10466 = vmax.f32 %v10462, %v10458
      %v10469 = vcombine.high %v10463, %v10463
      %v10471 = vunpack.c.l.s4 1966171168
      %v10472 = vunpack.c.0.s8 %v10471
      %v10473 = vlaneseq
      %v10474 = vshrl.u32 %v10473, 7
      %v10475 = vsub.s32 %v10472, %v10474
      %v10476 = vrot.slane %v10463, %v10475
      %v10478 = vunpack.c.l.s4 1966171168
      %v10479 = vunpack.c.0.s8 %v10478
      %v10480 = vlaneseq
      %v10481 = vshrl.u32 %v10480, 7
      %v10482 = vsub.s32 %v10479, %v10481
      %v10483 = vrot.slane %v10469, %v10482
      %v10484 = vcombine.high %v10476, %v10476
      %v10485 = vcombine.high %v10483, %v10483
      %v10487 = vunpack.c.l.s4 1966171168
      %v10488 = vunpack.c.0.s8 %v10487
      %v10489 = vlaneseq
      %v10490 = vshrl.u32 %v10489, 7
      %v10491 = vsub.s32 %v10488, %v10490
      %v10492 = vrot.slane %v10476, %v10491
      %v10494 = vunpack.c.l.s4 1966171168
      %v10495 = vunpack.c.0.s8 %v10494
      %v10496 = vlaneseq
      %v10497 = vshrl.u32 %v10496, 7
      %v10498 = vsub.s32 %v10495, %v10497
      %v10499 = vrot.slane %v10483, %v10498
      %v10501 = vunpack.c.l.s4 1966171168
      %v10502 = vunpack.c.0.s8 %v10501
      %v10503 = vlaneseq
      %v10504 = vshrl.u32 %v10503, 7
      %v10505 = vsub.s32 %v10502, %v10504
      %v10506 = vrot.slane %v10484, %v10505
      %v10508 = vunpack.c.l.s4 1966171168
      %v10509 = vunpack.c.0.s8 %v10508
      %v10510 = vlaneseq
      %v10511 = vshrl.u32 %v10510, 7
      %v10512 = vsub.s32 %v10509, %v10511
      %v10513 = vrot.slane %v10485, %v10512
      %v10514 = vcombine.high %v10492, %v10492
      %v10515 = vcombine.high %v10499, %v10499
      %v10516 = vcombine.high %v10506, %v10506
      %v10517 = vcombine.high %v10513, %v10513
      %v10518 = vcombine.high %v10464, %v10464
      %v10520 = vunpack.c.l.s4 1966171168
      %v10521 = vunpack.c.0.s8 %v10520
      %v10522 = vlaneseq
      %v10523 = vshrl.u32 %v10522, 7
      %v10524 = vsub.s32 %v10521, %v10523
      %v10525 = vrot.slane %v10464, %v10524
      %v10527 = vunpack.c.l.s4 1966171168
      %v10528 = vunpack.c.0.s8 %v10527
      %v10529 = vlaneseq
      %v10530 = vshrl.u32 %v10529, 7
      %v10531 = vsub.s32 %v10528, %v10530
      %v10532 = vrot.slane %v10518, %v10531
      %v10533 = vcombine.high %v10525, %v10525
      %v10534 = vcombine.high %v10532, %v10532
      %v10536 = vunpack.c.l.s4 1966171168
      %v10537 = vunpack.c.0.s8 %v10536
      %v10538 = vlaneseq
      %v10539 = vshrl.u32 %v10538, 7
      %v10540 = vsub.s32 %v10537, %v10539
      %v10541 = vrot.slane %v10525, %v10540
      %v10543 = vunpack.c.l.s4 1966171168
      %v10544 = vunpack.c.0.s8 %v10543
      %v10545 = vlaneseq
      %v10546 = vshrl.u32 %v10545, 7
      %v10547 = vsub.s32 %v10544, %v10546
      %v10548 = vrot.slane %v10532, %v10547
      %v10550 = vunpack.c.l.s4 1966171168
      %v10551 = vunpack.c.0.s8 %v10550
      %v10552 = vlaneseq
      %v10553 = vshrl.u32 %v10552, 7
      %v10554 = vsub.s32 %v10551, %v10553
      %v10555 = vrot.slane %v10533, %v10554
      %v10557 = vunpack.c.l.s4 1966171168
      %v10558 = vunpack.c.0.s8 %v10557
      %v10559 = vlaneseq
      %v10560 = vshrl.u32 %v10559, 7
      %v10561 = vsub.s32 %v10558, %v10560
      %v10562 = vrot.slane %v10534, %v10561
      %v10563 = vcombine.high %v10541, %v10541
      %v10564 = vcombine.high %v10548, %v10548
      %v10565 = vcombine.high %v10555, %v10555
      %v10581 = vmax.f32 %v10492, %v10506
      %v10582 = vmax.f32 %v10516, %v10499
      %v10583 = vmax.f32 %v10515, %v10517
      %v10584 = vmax.f32 %v10555, %v10563
      %v10585 = vmax.f32 %v10548, %v10562
      %v10586 = vmax.f32 %v10581, %v10514
      %v10587 = vmax.f32 %v10582, %v10513
      %v10588 = vmax.f32 %v10583, %v10541
      %v10589 = vmax.f32 %v10584, %v10565
      %v10590 = vmax.f32 %v10585, %v10564
      %v10596 = vcombine.low %v10586, %v10587
      %v10597 = vcombine.low %v10588, %v10589
      %v10599 = vunpack.c.l.s4 1966171168
      %v10600 = vunpack.c.0.s8 %v10599
      %v10601 = vlaneseq
      %v10602 = vshrl.u32 %v10601, 7
      %v10603 = vsub.s32 %v10600, %v10602
      %v10604 = vrot.slane %v10596, %v10603
      %v10606 = vunpack.c.l.s4 1966171168
      %v10607 = vunpack.c.0.s8 %v10606
      %v10608 = vlaneseq
      %v10609 = vshrl.u32 %v10608, 7
      %v10610 = vsub.s32 %v10607, %v10609
      %v10611 = vrot.slane %v10597, %v10610
      %v10613 = vunpack.c.l.s4 1966171168
      %v10614 = vunpack.c.0.s8 %v10613
      %v10615 = vlaneseq
      %v10616 = vshrl.u32 %v10615, 7
      %v10617 = vsub.s32 %v10614, %v10616
      %v10618 = vrot.slane %v10590, %v10617
      %v10619 = vcombine.low %v10604, %v10611
      %v10621 = vunpack.c.l.s4 1966171168
      %v10622 = vunpack.c.0.s8 %v10621
      %v10623 = vlaneseq
      %v10624 = vshrl.u32 %v10623, 7
      %v10625 = vsub.s32 %v10622, %v10624
      %v10626 = vrot.slane %v10619, %v10625
      %v10628 = vunpack.c.l.s4 1966171168
      %v10629 = vunpack.c.0.s8 %v10628
      %v10630 = vlaneseq
      %v10631 = vshrl.u32 %v10630, 7
      %v10632 = vsub.s32 %v10629, %v10631
      %v10633 = vrot.slane %v10618, %v10632
      %v10634 = vcombine.low %v10626, %v10633
      %vm10636 = vcmask 520192
      %10637 = vst.msk [vmem:[%s312] sm:$0x1f] %vm10636, %v10634
      %v10640 = vcombine.high %v10465, %v10465
      %v10642 = vunpack.c.l.s4 1966171168
      %v10643 = vunpack.c.0.s8 %v10642
      %v10644 = vlaneseq
      %v10645 = vshrl.u32 %v10644, 7
      %v10646 = vsub.s32 %v10643, %v10645
      %v10647 = vrot.slane %v10465, %v10646
      %v10649 = vunpack.c.l.s4 1966171168
      %v10650 = vunpack.c.0.s8 %v10649
      %v10651 = vlaneseq
      %v10652 = vshrl.u32 %v10651, 7
      %v10653 = vsub.s32 %v10650, %v10652
      %v10654 = vrot.slane %v10640, %v10653
      %v10655 = vcombine.high %v10647, %v10647
      %v10656 = vcombine.high %v10654, %v10654
      %v10658 = vunpack.c.l.s4 1966171168
      %v10659 = vunpack.c.0.s8 %v10658
      %v10660 = vlaneseq
      %v10661 = vshrl.u32 %v10660, 7
      %v10662 = vsub.s32 %v10659, %v10661
      %v10663 = vrot.slane %v10647, %v10662
      %v10665 = vunpack.c.l.s4 1966171168
      %v10666 = vunpack.c.0.s8 %v10665
      %v10667 = vlaneseq
      %v10668 = vshrl.u32 %v10667, 7
      %v10669 = vsub.s32 %v10666, %v10668
      %v10670 = vrot.slane %v10654, %v10669
      %v10672 = vunpack.c.l.s4 1966171168
      %v10673 = vunpack.c.0.s8 %v10672
      %v10674 = vlaneseq
      %v10675 = vshrl.u32 %v10674, 7
      %v10676 = vsub.s32 %v10673, %v10675
      %v10677 = vrot.slane %v10655, %v10676
      %v10679 = vunpack.c.l.s4 1966171168
      %v10680 = vunpack.c.0.s8 %v10679
      %v10681 = vlaneseq
      %v10682 = vshrl.u32 %v10681, 7
      %v10683 = vsub.s32 %v10680, %v10682
      %v10684 = vrot.slane %v10656, %v10683
      %v10685 = vcombine.high %v10663, %v10663
      %v10686 = vcombine.high %v10670, %v10670
      %v10687 = vcombine.high %v10677, %v10677
      %v10688 = vcombine.high %v10684, %v10684
      %v10689 = vcombine.high %v10466, %v10466
      %v10691 = vunpack.c.l.s4 1966171168
      %v10692 = vunpack.c.0.s8 %v10691
      %v10693 = vlaneseq
      %v10694 = vshrl.u32 %v10693, 7
      %v10695 = vsub.s32 %v10692, %v10694
      %v10696 = vrot.slane %v10466, %v10695
      %v10698 = vunpack.c.l.s4 1966171168
      %v10699 = vunpack.c.0.s8 %v10698
      %v10700 = vlaneseq
      %v10701 = vshrl.u32 %v10700, 7
      %v10702 = vsub.s32 %v10699, %v10701
      %v10703 = vrot.slane %v10689, %v10702
      %v10704 = vcombine.high %v10696, %v10696
      %v10705 = vcombine.high %v10703, %v10703
      %v10707 = vunpack.c.l.s4 1966171168
      %v10708 = vunpack.c.0.s8 %v10707
      %v10709 = vlaneseq
      %v10710 = vshrl.u32 %v10709, 7
      %v10711 = vsub.s32 %v10708, %v10710
      %v10712 = vrot.slane %v10696, %v10711
      %v10714 = vunpack.c.l.s4 1966171168
      %v10715 = vunpack.c.0.s8 %v10714
      %v10716 = vlaneseq
      %v10717 = vshrl.u32 %v10716, 7
      %v10718 = vsub.s32 %v10715, %v10717
      %v10719 = vrot.slane %v10703, %v10718
      %v10721 = vunpack.c.l.s4 1966171168
      %v10722 = vunpack.c.0.s8 %v10721
      %v10723 = vlaneseq
      %v10724 = vshrl.u32 %v10723, 7
      %v10725 = vsub.s32 %v10722, %v10724
      %v10726 = vrot.slane %v10704, %v10725
      %v10728 = vunpack.c.l.s4 1966171168
      %v10729 = vunpack.c.0.s8 %v10728
      %v10730 = vlaneseq
      %v10731 = vshrl.u32 %v10730, 7
      %v10732 = vsub.s32 %v10729, %v10731
      %v10733 = vrot.slane %v10705, %v10732
      %v10734 = vcombine.high %v10712, %v10712
      %v10735 = vcombine.high %v10719, %v10719
      %v10736 = vcombine.high %v10726, %v10726
      %v10752 = vmax.f32 %v10663, %v10677
      %v10753 = vmax.f32 %v10687, %v10670
      %v10754 = vmax.f32 %v10686, %v10688
      %v10755 = vmax.f32 %v10726, %v10734
      %v10756 = vmax.f32 %v10719, %v10733
      %v10757 = vmax.f32 %v10752, %v10685
      %v10758 = vmax.f32 %v10753, %v10684
      %v10759 = vmax.f32 %v10754, %v10712
      %v10760 = vmax.f32 %v10755, %v10736
      %v10761 = vmax.f32 %v10756, %v10735
      %v10767 = vcombine.low %v10757, %v10758
      %v10768 = vcombine.low %v10759, %v10760
      %v10770 = vunpack.c.l.s4 1966171168
      %v10771 = vunpack.c.0.s8 %v10770
      %v10772 = vlaneseq
      %v10773 = vshrl.u32 %v10772, 7
      %v10774 = vsub.s32 %v10771, %v10773
      %v10775 = vrot.slane %v10767, %v10774
      %v10777 = vunpack.c.l.s4 1966171168
      %v10778 = vunpack.c.0.s8 %v10777
      %v10779 = vlaneseq
      %v10780 = vshrl.u32 %v10779, 7
      %v10781 = vsub.s32 %v10778, %v10780
      %v10782 = vrot.slane %v10768, %v10781
      %v10784 = vunpack.c.l.s4 1966171168
      %v10785 = vunpack.c.0.s8 %v10784
      %v10786 = vlaneseq
      %v10787 = vshrl.u32 %v10786, 7
      %v10788 = vsub.s32 %v10785, %v10787
      %v10789 = vrot.slane %v10761, %v10788
      %v10790 = vcombine.low %v10775, %v10782
      %v10792 = vunpack.c.l.s4 1966171168
      %v10793 = vunpack.c.0.s8 %v10792
      %v10794 = vlaneseq
      %v10795 = vshrl.u32 %v10794, 7
      %v10796 = vsub.s32 %v10793, %v10795
      %v10797 = vrot.slane %v10790, %v10796
      %v10799 = vunpack.c.l.s4 1966171168
      %v10800 = vunpack.c.0.s8 %v10799
      %v10801 = vlaneseq
      %v10802 = vshrl.u32 %v10801, 7
      %v10803 = vsub.s32 %v10800, %v10802
      %v10804 = vrot.slane %v10789, %v10803
      %v10805 = vcombine.low %v10797, %v10804
      %s10807 = scalar_lea.vmem %s312, 8
      %10808 = vst.msk [vmem:[%s10807] sm:$0x1f] %vm10636, %v10805
      %s10809 = smul.u32 %s22, 3
      %s10810 = sadd.s32 %s10809, %s23
      %p10811 = scmp.lt.s32.totalorder %s10810, 5
      %s10812 = scalar_select %p10811, %s10810, 5
      %s10813 = smul.addr %s10812, 2
      %s10814 = smul.addr %s10813, 8
      %s10815 = scalar_lea.vmem %s7, %s10814
      // Predicated region
      $region49: #{tpu_custom_call.1} parent=47 // pred_check
        %p10816 = pneg %p208
      $region50: #{tpu_custom_call.1} parent=47 // pred_check_branch
        %10818 = sbr.rel (%p10816) target = $region52
      $region51: #{tpu_custom_call.1} parent=47 // pred_region
        %s10819 = smul.u32 %s22, 3
        %s10820 = sadd.s32 %s10819, %s23
      $region52: #{tpu_custom_call.1} parent=47 // pred_fallthru
        _
    $region48: #{tpu_custom_call.1} parent=5 // pred_fallthru
      _
    %p10821 = scmp.le.s32.totalorder 2, %s13
    // Predicated region
    $region53: #{tpu_custom_call.1} parent=5 // pred_check
      %p10822 = pneg %p10821
    $region54: #{tpu_custom_call.1} parent=5 // pred_check_branch
      %10824 = sbr.rel (%p10822) target = $region56
    $region55: #{tpu_custom_call.1} parent=5 // pred_region
      %s10825 = ssub.s32 %s13, 2
      // Predicated region
      $region57: #{tpu_custom_call.1} parent=55 // pred_check
        %p10826 = pneg %p214
      $region58: #{tpu_custom_call.1} parent=55 // pred_check_branch
        %10828 = sbr.rel (%p10826) target = $region60
      $region59: #{tpu_custom_call.1} parent=55 // pred_region
        %s10829 = smul.u32 %s24, 3
        %s10830 = sadd.s32 %s10829, %s25
        %p10831 = scmp.lt.s32.totalorder %s10830, 5
        %s10832 = scalar_select %p10831, %s10830, 5
        %s10833 = smul.addr %s10832, 2
        %s10834 = smul.addr %s10833, 8
        %s10835 = scalar_lea.vmem %s7, %s10834
      $region60: #{tpu_custom_call.1} parent=55 // pred_fallthru
        _
    $region56: #{tpu_custom_call.1} parent=5 // pred_fallthru
      _
  $region6: #{tpu_custom_call.1} parent=0 // loop_footer
    %s17 = sadd.s32 1, %s13
  $region7: #{tpu_custom_call.1} parent=0 // loop_footer_branch
    %12 = sbr.rel target = $region3
  $region8: #{tpu_custom_call.1} parent=0 // loop_exit
    _

</llo_original>
